<compile_context>
chip_gen: v5e
topology: v5e:2x2
jax: 0.10.0
libtpu: 0.0.40
codegen_flags: <defaults>
</compile_context>

<pallas_src>
import jax
import jax.numpy as jnp
from jax.experimental import pallas as pl
from jax.experimental.pallas import tpu as pltpu

BN_EPS = 1e-5


# ---------------------------------------------------------------------------
# helpers
# ---------------------------------------------------------------------------
def _sigmoid(x):
    return 1.0 / (1.0 + jnp.exp(-x))


def _conv3x3_taps(w):
    """PyTorch conv weight (Cout, Cin, 3, 3) -> tap-major (9, Cin, Cout)."""
    cout, cin = w.shape[0], w.shape[1]
    return jnp.transpose(w, (2, 3, 1, 0)).reshape(9, cin, cout)


def _adaptive_pool_matrix(in_size, out_size):
    """(out, in) row-stochastic matrix implementing AdaptiveAvgPool1d regions."""
    i = jnp.arange(out_size)
    starts = (i * in_size) // out_size
    ends = ((i + 1) * in_size + out_size - 1) // out_size  # ceil
    idx = jnp.arange(in_size)[None, :]
    mask = (idx >= starts[:, None]) & (idx < ends[:, None])
    return mask.astype(jnp.float32) / (ends - starts)[:, None].astype(jnp.float32)


def _interp_matrix(out_size, in_size):
    """(out, in) bilinear (align_corners=True) 1-D interpolation weights."""
    if in_size == 1:
        return jnp.ones((out_size, 1), jnp.float32)
    if out_size == 1:
        pos = jnp.zeros((1,), jnp.float32)
    else:
        pos = jnp.arange(out_size, dtype=jnp.float32) * (in_size - 1) / (out_size - 1)
    i0 = jnp.clip(jnp.floor(pos), 0, in_size - 2).astype(jnp.int32)
    frac = pos - i0.astype(jnp.float32)
    rows = jnp.arange(out_size)
    m = jnp.zeros((out_size, in_size), jnp.float32)
    m = m.at[rows, i0].add(1.0 - frac)
    m = m.at[rows, i0 + 1].add(frac)
    return m


# ---------------------------------------------------------------------------
# Pallas kernels
# ---------------------------------------------------------------------------
def _make_conv3x3_kernel(H, W, post):
    """3x3 'same' conv on one padded image: 9 in-kernel tap matmuls (no HBM im2col)."""

    def kernel(xpad_ref, w_ref, b_ref, o_ref):
        cin = xpad_ref.shape[-1]
        cout = o_ref.shape[-1]
        acc = jnp.zeros((H * W, cout), jnp.float32)
        for t in range(9):
            kh, kw = t // 3, t % 3
            win = xpad_ref[kh:kh + H, kw:kw + W, :].reshape(H * W, cin)
            acc = acc + jnp.dot(
                win.astype(w_ref.dtype), w_ref[t],
                preferred_element_type=jnp.float32)
        acc = acc + b_ref[...]
        if post == "sigmoid":
            acc = _sigmoid(acc)
        o_ref[...] = acc

    return kernel


def _se_kernel(ca_ref, w1_ref, w2_ref, wg_ref, bg_ref, cw_ref, g_ref):
    # channel_weights = sigmoid(relu(ca @ W1) @ W2);  guidance = sigmoid(ca @ wg + bg)
    ca = ca_ref[...]
    h = jnp.maximum(
        jnp.dot(ca, w1_ref[...], preferred_element_type=jnp.float32), 0.0)
    cw_ref[...] = _sigmoid(
        jnp.dot(h, w2_ref[...], preferred_element_type=jnp.float32))
    g_ref[...] = _sigmoid(
        jnp.dot(ca, wg_ref[...], preferred_element_type=jnp.float32) + bg_ref[...])


def _fuse_kernel(x_ref, a_ref, p_ref, wx_ref, bias_ref, ea_ref, g_ref, cw_ref, o_ref):
    # multi_scale = relu( x @ Wx_s + A @ P_s + bias )      (SPP conv + folded BN + ReLU)
    # edge_refined     = ea * (1 + g)
    # semantic_refined = cw * (2 - g)
    # fused            = x * (edge_refined + semantic_refined) + multi_scale
    x = x_ref[...]                                               # (tm, C) f32
    ms = jnp.dot(x.astype(wx_ref.dtype), wx_ref[...],
                 preferred_element_type=jnp.float32)
    ms = ms + jnp.dot(a_ref[...], p_ref[...],
                      preferred_element_type=jnp.float32)
    ms = jnp.maximum(ms + bias_ref[...], 0.0)
    g = g_ref[...]                                               # (1, 1)
    er = ea_ref[...] * (1.0 + g)                                 # (tm, 1)
    sr = cw_ref[...] * (2.0 - g)                                 # (1, C)
    o_ref[...] = x * (er + sr) + ms


# ---------------------------------------------------------------------------
# pallas_call wrappers
# ---------------------------------------------------------------------------
def conv3x3_same(xpad, w_taps, bias_row, H, W, *, post=None,
                 compute_dtype=jnp.float32):
    B, Hp, Wp, cin = xpad.shape
    cout = w_taps.shape[-1]
    w_taps = w_taps.astype(compute_dtype)
    return pl.pallas_call(
        _make_conv3x3_kernel(H, W, post),
        out_shape=jax.ShapeDtypeStruct((B, H * W, cout), jnp.float32),
        grid=(B,),
        in_specs=[
            pl.BlockSpec((None, Hp, Wp, cin), lambda b: (b, 0, 0, 0)),
            pl.BlockSpec((9, cin, cout), lambda b: (0, 0, 0)),
            pl.BlockSpec((1, cout), lambda b: (0, 0)),
        ],
        out_specs=pl.BlockSpec((None, H * W, cout), lambda b: (b, 0, 0)),
        compiler_params=pltpu.CompilerParams(dimension_semantics=("parallel",)),
    )(xpad, w_taps, bias_row)


def se_guidance(channel_avg, w1, w2, wg, bg):
    B, C = channel_avg.shape
    return pl.pallas_call(
        _se_kernel,
        out_shape=(jax.ShapeDtypeStruct((B, C), jnp.float32),
                   jax.ShapeDtypeStruct((B, 1), jnp.float32)),
    )(channel_avg, w1, w2, wg, bg)


def fuse_features(x2d, a_mat, p_s, wx_s, bias_row, edge_att, guid, cw, tm=512):
    B, HW, C = x2d.shape
    R = a_mat.shape[1]
    tm = min(tm, HW)
    tm = max(8, (tm // 8) * 8)               # keep sublane dim a multiple of 8
    a_mat = a_mat.astype(jnp.bfloat16)       # bf16 operands, f32 accumulation
    p_s = p_s.astype(jnp.bfloat16)
    wx_s = wx_s.astype(jnp.bfloat16)
    return pl.pallas_call(
        _fuse_kernel,
        out_shape=jax.ShapeDtypeStruct((B, HW, C), jnp.float32),
        grid=(B, pl.cdiv(HW, tm)),
        in_specs=[
            pl.BlockSpec((None, tm, C), lambda b, i: (b, i, 0)),   # x rows
            pl.BlockSpec((tm, R), lambda b, i: (i, 0)),            # interp weights A
            pl.BlockSpec((None, R, C), lambda b, i: (b, 0, 0)),    # low-rank P_s[b]
            pl.BlockSpec((C, C), lambda b, i: (0, 0)),             # Wx (scale folded)
            pl.BlockSpec((1, C), lambda b, i: (0, 0)),             # folded BN bias
            pl.BlockSpec((None, tm, 1), lambda b, i: (b, i, 0)),   # edge attention
            pl.BlockSpec((None, 1, 1), lambda b, i: (b, 0, 0)),    # guidance scalar
            pl.BlockSpec((None, 1, C), lambda b, i: (b, 0, 0)),    # channel weights
        ],
        out_specs=pl.BlockSpec((None, tm, C), lambda b, i: (b, i, 0)),
        compiler_params=pltpu.CompilerParams(
            dimension_semantics=("parallel", "parallel")),
    )(x2d, a_mat, p_s, wx_s, bias_row, edge_att, guid, cw)


# ---------------------------------------------------------------------------
# Parameter init (deterministic, synthetic, PyTorch layouts) and forward pass
# ---------------------------------------------------------------------------
def init_params(key, c, reduction=16):
    cr = max(1, c // reduction)
    ks = jax.random.split(key, 12)
    lap = jnp.array([[0.0, 1.0, 0.0], [1.0, -4.0, 1.0], [0.0, 1.0, 0.0]], jnp.float32)
    gamma = 1.0 + 0.1 * jax.random.normal(ks[8], (c,), jnp.float32)
    beta = 0.1 * jax.random.normal(ks[9], (c,), jnp.float32)
    mean = 0.1 * jax.random.normal(ks[10], (c,), jnp.float32)
    var = jax.random.uniform(ks[11], (c,), jnp.float32, minval=0.5, maxval=1.5)
    return {
        "w_lap": jnp.tile(lap[None, None], (1, c, 1, 1)),          # fixed buffer
        "w_edge": 0.1 * jax.random.normal(ks[0], (1, c + 1, 3, 3), jnp.float32),
        "b_edge": 0.1 * jax.random.normal(ks[1], (1,), jnp.float32),
        "w_fc1": 0.1 * jax.random.normal(ks[2], (cr, c), jnp.float32),   # (out, in)
        "w_fc2": 0.1 * jax.random.normal(ks[3], (c, cr), jnp.float32),
        "w_spp": 0.1 * jax.random.normal(ks[4], (c, 5 * c, 1, 1), jnp.float32),
        "bn_spp": (gamma, beta, mean, var),
        "w_guid": 0.1 * jax.random.normal(ks[5], (1, c, 1, 1), jnp.float32),
        "b_guid": 0.1 * jax.random.normal(ks[6], (1,), jnp.float32),
        "w_fusion": 0.1 * jax.random.normal(ks[7], (c, c, 3, 3), jnp.float32),
    }


def esf_forward(params, x_nchw):
    B, C, H, W = x_nchw.shape
    HW = H * W
    x = jnp.transpose(x_nchw, (0, 2, 3, 1)).astype(jnp.float32)      # NHWC
    x2d = x.reshape(B, HW, C)

    # ---------------- edge path (laplacian -> concat -> edge conv + sigmoid) ---
    xpad = jnp.pad(x, ((0, 0), (1, 1), (1, 1), (0, 0)))
    ehf = conv3x3_same(xpad, _conv3x3_taps(params["w_lap"]),
                       jnp.zeros((1, 1), jnp.float32), H, W)          # (B, HW, 1)
    edge_in = jnp.concatenate([x, ehf.reshape(B, H, W, 1)], axis=-1)
    epad = jnp.pad(edge_in, ((0, 0), (1, 1), (1, 1), (0, 0)))
    edge_att = conv3x3_same(epad, _conv3x3_taps(params["w_edge"]),
                            params["b_edge"].reshape(1, 1), H, W,
                            post="sigmoid")                           # (B, HW, 1)

    # ---------------- adaptive pools (plain JAX glue: irregular regions) -------
    pooled = {}
    for k in (1, 2, 3, 6):
        ph = _adaptive_pool_matrix(H, k)
        pw = _adaptive_pool_matrix(W, k)
        pooled[k] = jnp.einsum("ih,bhwc,jw->bijc", ph, x, pw)         # (B, k, k, C)
    channel_avg = pooled[1].reshape(B, C)

    # ---------------- semantic_fc + guidance_weight (tiny Pallas kernel) ------
    cw, guid = se_guidance(channel_avg,
                           params["w_fc1"].T, params["w_fc2"].T,
                           params["w_guid"][:, :, 0, 0].T,
                           params["b_guid"].reshape(1, 1))            # (B,C), (B,1)

    # ---------------- SPP: low-rank form, BN scale folded into weights --------
    gamma, beta, mean, var = params["bn_spp"]
    scale = gamma / jnp.sqrt(var + BN_EPS)
    bias_row = (beta - mean * scale)[None, :]                         # (1, C)
    wm = params["w_spp"][:, :, 0, 0].T                                # (5C, C)
    wx_s = wm[:C] * scale[None, :]                                    # x-block, scaled
    p_parts = [pooled[1].reshape(B, 1, C) @ wm[C:2 * C]]
    a_parts = [jnp.ones((HW, 1), jnp.float32)]
    blocks = {2: wm[2 * C:3 * C], 3: wm[3 * C:4 * C], 6: wm[4 * C:5 * C]}
    for k in (2, 3, 6):
        p_parts.append(pooled[k].reshape(B, k * k, C) @ blocks[k])
        wh, ww = _interp_matrix(H, k), _interp_matrix(W, k)
        a_parts.append(jnp.einsum("hi,wj->hwij", wh, ww).reshape(HW, k * k))
    p_s = jnp.concatenate(p_parts, axis=1) * scale[None, None, :]     # (B, 50, C)
    a_mat = jnp.concatenate(a_parts, axis=1)                          # (HW, 50)

    # ---------------- fused feature (SPP conv + BN + ReLU + all elementwise) ---
    fused2d = fuse_features(x2d, a_mat, p_s, wx_s, bias_row, edge_att,
                            guid.reshape(B, 1, 1), cw.reshape(B, 1, C))

    # ---------------- fusion_conv (3x3, bf16 matmul, f32 accumulate) ----------
    fpad = jnp.pad(fused2d.reshape(B, H, W, C), ((0, 0), (1, 1), (1, 1), (0, 0)))
    out2d = conv3x3_same(fpad, _conv3x3_taps(params["w_fusion"]),
                         jnp.zeros((1, C), jnp.float32), H, W,
                         compute_dtype=jnp.bfloat16)                  # (B, HW, C)
    # TODO(synk): per-batch whole-image blocks in conv3x3_same assume the padded
    # image fits VMEM; very large feature maps would need H-tiling with halos.
    return jnp.transpose(out2d.reshape(B, H, W, C), (0, 3, 1, 2))


if __name__ == "__main__":
    key = jax.random.PRNGKey(0)
    kx, kp = jax.random.split(key)

    B, in_channels, H, W = 2, 32, 16, 16       # reduction=16 -> hidden width 2
    x = jax.random.normal(kx, (B, in_channels, H, W), jnp.float32)
    params = init_params(kp, in_channels, reduction=16)

    fwd = jax.jit(esf_forward)
    out = fwd(params, x)
    jax.block_until_ready(out)

    assert out.shape == (B, in_channels, H, W)
    assert bool(jnp.all(jnp.isfinite(out)))
    print("KERNEL_OK")
</pallas_src>

<mosaic_0001>
module attributes {stable_mosaic.version = 11 : i64} {
  func.func @kernel(%arg0: i32, %arg1: memref<1x18x18x32xf32, #tpu.memory_space<vmem>>, %arg2: memref<9x32x1xf32, #tpu.memory_space<vmem>>, %arg3: memref<1x1xf32, #tpu.memory_space<vmem>>, %arg4: memref<1x256x1xf32, #tpu.memory_space<vmem>>) attributes {dimension_semantics = [#tpu.dimension_semantics<parallel>], iteration_bounds = array<i64: 2>, scalar_prefetch = 0 : i64, scratch_operands = 0 : i64, tpu.core_type = #tpu.core_type<tc>, window_params = [{transform_indices = @transform_0, window_bounds = array<i64: 1, 18, 18, 32>}, {pipeline_mode = #tpu.pipeline_mode<synchronous>, transform_indices = @transform_1, window_bounds = array<i64: 9, 32, 1>}, {pipeline_mode = #tpu.pipeline_mode<synchronous>, transform_indices = @transform_2, window_bounds = array<i64: 1, 1>}, {transform_indices = @transform_3, window_bounds = array<i64: 1, 256, 1>}]} {
    %cst = arith.constant 0.000000e+00 : f32
    %0 = vector.broadcast %cst : f32 to vector<256x1xf32>
    %c0 = arith.constant 0 : index
    %c0_0 = arith.constant 0 : index
    %c0_1 = arith.constant 0 : index
    %c0_2 = arith.constant 0 : index
    %1 = vector.load %arg1[%c0, %c0_0, %c0_1, %c0_2] : memref<1x18x18x32xf32, #tpu.memory_space<vmem>>, vector<1x16x16x32xf32>
    %2 = vector.shape_cast %1 : vector<1x16x16x32xf32> to vector<16x16x32xf32>
    %3 = vector.shape_cast %2 : vector<16x16x32xf32> to vector<256x32xf32>
    %c0_3 = arith.constant 0 : index
    %c0_4 = arith.constant 0 : index
    %c0_5 = arith.constant 0 : index
    %4 = vector.load %arg2[%c0_3, %c0_4, %c0_5] : memref<9x32x1xf32, #tpu.memory_space<vmem>>, vector<1x32x1xf32>
    %5 = vector.shape_cast %4 : vector<1x32x1xf32> to vector<32x1xf32>
    %cst_6 = arith.constant dense<0.000000e+00> : vector<256x1xf32>
    %6 = tpu.matmul %3, %5, %cst_6 {dimension_numbers = #tpu.dot_dimension_numbers<[1], [0], [0], [1], [0, 0, 1, 1], [], []>} : vector<256x32xf32>, vector<32x1xf32>, vector<256x1xf32> -> vector<256x1xf32>
    %7 = arith.addf %0, %6 : vector<256x1xf32>
    %c0_7 = arith.constant 0 : index
    %c0_8 = arith.constant 0 : index
    %c1 = arith.constant 1 : index
    %c0_9 = arith.constant 0 : index
    %8 = vector.load %arg1[%c0_7, %c0_8, %c1, %c0_9] : memref<1x18x18x32xf32, #tpu.memory_space<vmem>>, vector<1x16x16x32xf32>
    %9 = vector.shape_cast %8 : vector<1x16x16x32xf32> to vector<16x16x32xf32>
    %10 = vector.shape_cast %9 : vector<16x16x32xf32> to vector<256x32xf32>
    %c1_10 = arith.constant 1 : index
    %c0_11 = arith.constant 0 : index
    %c0_12 = arith.constant 0 : index
    %11 = vector.load %arg2[%c1_10, %c0_11, %c0_12] : memref<9x32x1xf32, #tpu.memory_space<vmem>>, vector<1x32x1xf32>
    %12 = vector.shape_cast %11 : vector<1x32x1xf32> to vector<32x1xf32>
    %cst_13 = arith.constant dense<0.000000e+00> : vector<256x1xf32>
    %13 = tpu.matmul %10, %12, %cst_13 {dimension_numbers = #tpu.dot_dimension_numbers<[1], [0], [0], [1], [0, 0, 1, 1], [], []>} : vector<256x32xf32>, vector<32x1xf32>, vector<256x1xf32> -> vector<256x1xf32>
    %14 = arith.addf %7, %13 : vector<256x1xf32>
    %c0_14 = arith.constant 0 : index
    %c0_15 = arith.constant 0 : index
    %c2 = arith.constant 2 : index
    %c0_16 = arith.constant 0 : index
    %15 = vector.load %arg1[%c0_14, %c0_15, %c2, %c0_16] : memref<1x18x18x32xf32, #tpu.memory_space<vmem>>, vector<1x16x16x32xf32>
    %16 = vector.shape_cast %15 : vector<1x16x16x32xf32> to vector<16x16x32xf32>
    %17 = vector.shape_cast %16 : vector<16x16x32xf32> to vector<256x32xf32>
    %c2_17 = arith.constant 2 : index
    %c0_18 = arith.constant 0 : index
    %c0_19 = arith.constant 0 : index
    %18 = vector.load %arg2[%c2_17, %c0_18, %c0_19] : memref<9x32x1xf32, #tpu.memory_space<vmem>>, vector<1x32x1xf32>
    %19 = vector.shape_cast %18 : vector<1x32x1xf32> to vector<32x1xf32>
    %cst_20 = arith.constant dense<0.000000e+00> : vector<256x1xf32>
    %20 = tpu.matmul %17, %19, %cst_20 {dimension_numbers = #tpu.dot_dimension_numbers<[1], [0], [0], [1], [0, 0, 1, 1], [], []>} : vector<256x32xf32>, vector<32x1xf32>, vector<256x1xf32> -> vector<256x1xf32>
    %21 = arith.addf %14, %20 : vector<256x1xf32>
    %c0_21 = arith.constant 0 : index
    %c1_22 = arith.constant 1 : index
    %c0_23 = arith.constant 0 : index
    %c0_24 = arith.constant 0 : index
    %22 = vector.load %arg1[%c0_21, %c1_22, %c0_23, %c0_24] : memref<1x18x18x32xf32, #tpu.memory_space<vmem>>, vector<1x16x16x32xf32>
    %23 = vector.shape_cast %22 : vector<1x16x16x32xf32> to vector<16x16x32xf32>
    %24 = vector.shape_cast %23 : vector<16x16x32xf32> to vector<256x32xf32>
    %c3 = arith.constant 3 : index
    %c0_25 = arith.constant 0 : index
    %c0_26 = arith.constant 0 : index
    %25 = vector.load %arg2[%c3, %c0_25, %c0_26] : memref<9x32x1xf32, #tpu.memory_space<vmem>>, vector<1x32x1xf32>
    %26 = vector.shape_cast %25 : vector<1x32x1xf32> to vector<32x1xf32>
    %cst_27 = arith.constant dense<0.000000e+00> : vector<256x1xf32>
    %27 = tpu.matmul %24, %26, %cst_27 {dimension_numbers = #tpu.dot_dimension_numbers<[1], [0], [0], [1], [0, 0, 1, 1], [], []>} : vector<256x32xf32>, vector<32x1xf32>, vector<256x1xf32> -> vector<256x1xf32>
    %28 = arith.addf %21, %27 : vector<256x1xf32>
    %c0_28 = arith.constant 0 : index
    %c1_29 = arith.constant 1 : index
    %c1_30 = arith.constant 1 : index
    %c0_31 = arith.constant 0 : index
    %29 = vector.load %arg1[%c0_28, %c1_29, %c1_30, %c0_31] : memref<1x18x18x32xf32, #tpu.memory_space<vmem>>, vector<1x16x16x32xf32>
    %30 = vector.shape_cast %29 : vector<1x16x16x32xf32> to vector<16x16x32xf32>
    %31 = vector.shape_cast %30 : vector<16x16x32xf32> to vector<256x32xf32>
    %c4 = arith.constant 4 : index
    %c0_32 = arith.constant 0 : index
    %c0_33 = arith.constant 0 : index
    %32 = vector.load %arg2[%c4, %c0_32, %c0_33] : memref<9x32x1xf32, #tpu.memory_space<vmem>>, vector<1x32x1xf32>
    %33 = vector.shape_cast %32 : vector<1x32x1xf32> to vector<32x1xf32>
    %cst_34 = arith.constant dense<0.000000e+00> : vector<256x1xf32>
    %34 = tpu.matmul %31, %33, %cst_34 {dimension_numbers = #tpu.dot_dimension_numbers<[1], [0], [0], [1], [0, 0, 1, 1], [], []>} : vector<256x32xf32>, vector<32x1xf32>, vector<256x1xf32> -> vector<256x1xf32>
    %35 = arith.addf %28, %34 : vector<256x1xf32>
    %c0_35 = arith.constant 0 : index
    %c1_36 = arith.constant 1 : index
    %c2_37 = arith.constant 2 : index
    %c0_38 = arith.constant 0 : index
    %36 = vector.load %arg1[%c0_35, %c1_36, %c2_37, %c0_38] : memref<1x18x18x32xf32, #tpu.memory_space<vmem>>, vector<1x16x16x32xf32>
    %37 = vector.shape_cast %36 : vector<1x16x16x32xf32> to vector<16x16x32xf32>
    %38 = vector.shape_cast %37 : vector<16x16x32xf32> to vector<256x32xf32>
    %c5 = arith.constant 5 : index
    %c0_39 = arith.constant 0 : index
    %c0_40 = arith.constant 0 : index
    %39 = vector.load %arg2[%c5, %c0_39, %c0_40] : memref<9x32x1xf32, #tpu.memory_space<vmem>>, vector<1x32x1xf32>
    %40 = vector.shape_cast %39 : vector<1x32x1xf32> to vector<32x1xf32>
    %cst_41 = arith.constant dense<0.000000e+00> : vector<256x1xf32>
    %41 = tpu.matmul %38, %40, %cst_41 {dimension_numbers = #tpu.dot_dimension_numbers<[1], [0], [0], [1], [0, 0, 1, 1], [], []>} : vector<256x32xf32>, vector<32x1xf32>, vector<256x1xf32> -> vector<256x1xf32>
    %42 = arith.addf %35, %41 : vector<256x1xf32>
    %c0_42 = arith.constant 0 : index
    %c2_43 = arith.constant 2 : index
    %c0_44 = arith.constant 0 : index
    %c0_45 = arith.constant 0 : index
    %43 = vector.load %arg1[%c0_42, %c2_43, %c0_44, %c0_45] : memref<1x18x18x32xf32, #tpu.memory_space<vmem>>, vector<1x16x16x32xf32>
    %44 = vector.shape_cast %43 : vector<1x16x16x32xf32> to vector<16x16x32xf32>
    %45 = vector.shape_cast %44 : vector<16x16x32xf32> to vector<256x32xf32>
    %c6 = arith.constant 6 : index
    %c0_46 = arith.constant 0 : index
    %c0_47 = arith.constant 0 : index
    %46 = vector.load %arg2[%c6, %c0_46, %c0_47] : memref<9x32x1xf32, #tpu.memory_space<vmem>>, vector<1x32x1xf32>
    %47 = vector.shape_cast %46 : vector<1x32x1xf32> to vector<32x1xf32>
    %cst_48 = arith.constant dense<0.000000e+00> : vector<256x1xf32>
    %48 = tpu.matmul %45, %47, %cst_48 {dimension_numbers = #tpu.dot_dimension_numbers<[1], [0], [0], [1], [0, 0, 1, 1], [], []>} : vector<256x32xf32>, vector<32x1xf32>, vector<256x1xf32> -> vector<256x1xf32>
    %49 = arith.addf %42, %48 : vector<256x1xf32>
    %c0_49 = arith.constant 0 : index
    %c2_50 = arith.constant 2 : index
    %c1_51 = arith.constant 1 : index
    %c0_52 = arith.constant 0 : index
    %50 = vector.load %arg1[%c0_49, %c2_50, %c1_51, %c0_52] : memref<1x18x18x32xf32, #tpu.memory_space<vmem>>, vector<1x16x16x32xf32>
    %51 = vector.shape_cast %50 : vector<1x16x16x32xf32> to vector<16x16x32xf32>
    %52 = vector.shape_cast %51 : vector<16x16x32xf32> to vector<256x32xf32>
    %c7 = arith.constant 7 : index
    %c0_53 = arith.constant 0 : index
    %c0_54 = arith.constant 0 : index
    %53 = vector.load %arg2[%c7, %c0_53, %c0_54] : memref<9x32x1xf32, #tpu.memory_space<vmem>>, vector<1x32x1xf32>
    %54 = vector.shape_cast %53 : vector<1x32x1xf32> to vector<32x1xf32>
    %cst_55 = arith.constant dense<0.000000e+00> : vector<256x1xf32>
    %55 = tpu.matmul %52, %54, %cst_55 {dimension_numbers = #tpu.dot_dimension_numbers<[1], [0], [0], [1], [0, 0, 1, 1], [], []>} : vector<256x32xf32>, vector<32x1xf32>, vector<256x1xf32> -> vector<256x1xf32>
    %56 = arith.addf %49, %55 : vector<256x1xf32>
    %c0_56 = arith.constant 0 : index
    %c2_57 = arith.constant 2 : index
    %c2_58 = arith.constant 2 : index
    %c0_59 = arith.constant 0 : index
    %57 = vector.load %arg1[%c0_56, %c2_57, %c2_58, %c0_59] : memref<1x18x18x32xf32, #tpu.memory_space<vmem>>, vector<1x16x16x32xf32>
    %58 = vector.shape_cast %57 : vector<1x16x16x32xf32> to vector<16x16x32xf32>
    %59 = vector.shape_cast %58 : vector<16x16x32xf32> to vector<256x32xf32>
    %c8 = arith.constant 8 : index
    %c0_60 = arith.constant 0 : index
    %c0_61 = arith.constant 0 : index
    %60 = vector.load %arg2[%c8, %c0_60, %c0_61] : memref<9x32x1xf32, #tpu.memory_space<vmem>>, vector<1x32x1xf32>
    %61 = vector.shape_cast %60 : vector<1x32x1xf32> to vector<32x1xf32>
    %cst_62 = arith.constant dense<0.000000e+00> : vector<256x1xf32>
    %62 = tpu.matmul %59, %61, %cst_62 {dimension_numbers = #tpu.dot_dimension_numbers<[1], [0], [0], [1], [0, 0, 1, 1], [], []>} : vector<256x32xf32>, vector<32x1xf32>, vector<256x1xf32> -> vector<256x1xf32>
    %63 = arith.addf %56, %62 : vector<256x1xf32>
    %c0_63 = arith.constant 0 : index
    %c0_64 = arith.constant 0 : index
    %64 = vector.load %arg3[%c0_63, %c0_64] : memref<1x1xf32, #tpu.memory_space<vmem>>, vector<1x1xf32>
    %65 = vector.broadcast %64 : vector<1x1xf32> to vector<256x1xf32>
    %66 = arith.addf %63, %65 : vector<256x1xf32>
    %c0_65 = arith.constant 0 : index
    %c0_66 = arith.constant 0 : index
    %c0_67 = arith.constant 0 : index
    %67 = vector.load %arg4[%c0_65, %c0_66, %c0_67] : memref<1x256x1xf32, #tpu.memory_space<vmem>>, vector<1x256x1xf32>
    %68 = vector.shape_cast %67 : vector<1x256x1xf32> to vector<256x1xf32>
    %69 = vector.shape_cast %66 : vector<256x1xf32> to vector<1x256x1xf32>
    tpu.vector_store %arg4[%c0_65, %c0_66, %c0_67], %69 {strides = array<i32>} : memref<1x256x1xf32, #tpu.memory_space<vmem>>, vector<1x256x1xf32>,
    return
  }
  func.func @transform_0(%arg0: i32) -> (i32, i32, i32, i32) {
    %c0_i32 = arith.constant 0 : i32
    %c0_i32_0 = arith.constant 0 : i32
    %c0_i32_1 = arith.constant 0 : i32
    %c0_i32_2 = arith.constant 0 : i32
    return %arg0, %c0_i32, %c0_i32_0, %c0_i32_1 : i32, i32, i32, i32
  }
  func.func @transform_1(%arg0: i32) -> (i32, i32, i32) {
    %c0_i32 = arith.constant 0 : i32
    %c0_i32_0 = arith.constant 0 : i32
    %c0_i32_1 = arith.constant 0 : i32
    %c0_i32_2 = arith.constant 0 : i32
    return %c0_i32, %c0_i32_0, %c0_i32_1 : i32, i32, i32
  }
  func.func @transform_2(%arg0: i32) -> (i32, i32) {
    %c0_i32 = arith.constant 0 : i32
    %c0_i32_0 = arith.constant 0 : i32
    %c0_i32_1 = arith.constant 0 : i32
    return %c0_i32, %c0_i32_0 : i32, i32
  }
  func.func @transform_3(%arg0: i32) -> (i32, i32, i32) {
    %c0_i32 = arith.constant 0 : i32
    %c0_i32_0 = arith.constant 0 : i32
    %c0_i32_1 = arith.constant 0 : i32
    return %arg0, %c0_i32, %c0_i32_0 : i32, i32, i32
  }
}

module attributes {stable_mosaic.version = 11 : i64} {
  func.func @kernel(%arg0: i32, %arg1: memref<1x18x18x33xf32, #tpu.memory_space<vmem>>, %arg2: memref<9x33x1xf32, #tpu.memory_space<vmem>>, %arg3: memref<1x1xf32, #tpu.memory_space<vmem>>, %arg4: memref<1x256x1xf32, #tpu.memory_space<vmem>>) attributes {dimension_semantics = [#tpu.dimension_semantics<parallel>], iteration_bounds = array<i64: 2>, scalar_prefetch = 0 : i64, scratch_operands = 0 : i64, tpu.core_type = #tpu.core_type<tc>, window_params = [{transform_indices = @transform_0, window_bounds = array<i64: 1, 18, 18, 33>}, {pipeline_mode = #tpu.pipeline_mode<synchronous>, transform_indices = @transform_1, window_bounds = array<i64: 9, 33, 1>}, {pipeline_mode = #tpu.pipeline_mode<synchronous>, transform_indices = @transform_2, window_bounds = array<i64: 1, 1>}, {transform_indices = @transform_3, window_bounds = array<i64: 1, 256, 1>}]} {
    %cst = arith.constant 0.000000e+00 : f32
    %0 = vector.broadcast %cst : f32 to vector<256x1xf32>
    %c0 = arith.constant 0 : index
    %c0_0 = arith.constant 0 : index
    %c0_1 = arith.constant 0 : index
    %c0_2 = arith.constant 0 : index
    %1 = vector.load %arg1[%c0, %c0_0, %c0_1, %c0_2] : memref<1x18x18x33xf32, #tpu.memory_space<vmem>>, vector<1x16x16x33xf32>
    %2 = vector.shape_cast %1 : vector<1x16x16x33xf32> to vector<16x16x33xf32>
    %3 = vector.shape_cast %2 : vector<16x16x33xf32> to vector<256x33xf32>
    %c0_3 = arith.constant 0 : index
    %c0_4 = arith.constant 0 : index
    %c0_5 = arith.constant 0 : index
    %4 = vector.load %arg2[%c0_3, %c0_4, %c0_5] : memref<9x33x1xf32, #tpu.memory_space<vmem>>, vector<1x33x1xf32>
    %5 = vector.shape_cast %4 : vector<1x33x1xf32> to vector<33x1xf32>
    %cst_6 = arith.constant dense<0.000000e+00> : vector<256x1xf32>
    %6 = tpu.matmul %3, %5, %cst_6 {dimension_numbers = #tpu.dot_dimension_numbers<[1], [0], [0], [1], [0, 0, 1, 1], [], []>} : vector<256x33xf32>, vector<33x1xf32>, vector<256x1xf32> -> vector<256x1xf32>
    %7 = arith.addf %0, %6 : vector<256x1xf32>
    %c0_7 = arith.constant 0 : index
    %c0_8 = arith.constant 0 : index
    %c1 = arith.constant 1 : index
    %c0_9 = arith.constant 0 : index
    %8 = vector.load %arg1[%c0_7, %c0_8, %c1, %c0_9] : memref<1x18x18x33xf32, #tpu.memory_space<vmem>>, vector<1x16x16x33xf32>
    %9 = vector.shape_cast %8 : vector<1x16x16x33xf32> to vector<16x16x33xf32>
    %10 = vector.shape_cast %9 : vector<16x16x33xf32> to vector<256x33xf32>
    %c1_10 = arith.constant 1 : index
    %c0_11 = arith.constant 0 : index
    %c0_12 = arith.constant 0 : index
    %11 = vector.load %arg2[%c1_10, %c0_11, %c0_12] : memref<9x33x1xf32, #tpu.memory_space<vmem>>, vector<1x33x1xf32>
    %12 = vector.shape_cast %11 : vector<1x33x1xf32> to vector<33x1xf32>
    %cst_13 = arith.constant dense<0.000000e+00> : vector<256x1xf32>
    %13 = tpu.matmul %10, %12, %cst_13 {dimension_numbers = #tpu.dot_dimension_numbers<[1], [0], [0], [1], [0, 0, 1, 1], [], []>} : vector<256x33xf32>, vector<33x1xf32>, vector<256x1xf32> -> vector<256x1xf32>
    %14 = arith.addf %7, %13 : vector<256x1xf32>
    %c0_14 = arith.constant 0 : index
    %c0_15 = arith.constant 0 : index
    %c2 = arith.constant 2 : index
    %c0_16 = arith.constant 0 : index
    %15 = vector.load %arg1[%c0_14, %c0_15, %c2, %c0_16] : memref<1x18x18x33xf32, #tpu.memory_space<vmem>>, vector<1x16x16x33xf32>
    %16 = vector.shape_cast %15 : vector<1x16x16x33xf32> to vector<16x16x33xf32>
    %17 = vector.shape_cast %16 : vector<16x16x33xf32> to vector<256x33xf32>
    %c2_17 = arith.constant 2 : index
    %c0_18 = arith.constant 0 : index
    %c0_19 = arith.constant 0 : index
    %18 = vector.load %arg2[%c2_17, %c0_18, %c0_19] : memref<9x33x1xf32, #tpu.memory_space<vmem>>, vector<1x33x1xf32>
    %19 = vector.shape_cast %18 : vector<1x33x1xf32> to vector<33x1xf32>
    %cst_20 = arith.constant dense<0.000000e+00> : vector<256x1xf32>
    %20 = tpu.matmul %17, %19, %cst_20 {dimension_numbers = #tpu.dot_dimension_numbers<[1], [0], [0], [1], [0, 0, 1, 1], [], []>} : vector<256x33xf32>, vector<33x1xf32>, vector<256x1xf32> -> vector<256x1xf32>
    %21 = arith.addf %14, %20 : vector<256x1xf32>
    %c0_21 = arith.constant 0 : index
    %c1_22 = arith.constant 1 : index
    %c0_23 = arith.constant 0 : index
    %c0_24 = arith.constant 0 : index
    %22 = vector.load %arg1[%c0_21, %c1_22, %c0_23, %c0_24] : memref<1x18x18x33xf32, #tpu.memory_space<vmem>>, vector<1x16x16x33xf32>
    %23 = vector.shape_cast %22 : vector<1x16x16x33xf32> to vector<16x16x33xf32>
    %24 = vector.shape_cast %23 : vector<16x16x33xf32> to vector<256x33xf32>
    %c3 = arith.constant 3 : index
    %c0_25 = arith.constant 0 : index
    %c0_26 = arith.constant 0 : index
    %25 = vector.load %arg2[%c3, %c0_25, %c0_26] : memref<9x33x1xf32, #tpu.memory_space<vmem>>, vector<1x33x1xf32>
    %26 = vector.shape_cast %25 : vector<1x33x1xf32> to vector<33x1xf32>
    %cst_27 = arith.constant dense<0.000000e+00> : vector<256x1xf32>
    %27 = tpu.matmul %24, %26, %cst_27 {dimension_numbers = #tpu.dot_dimension_numbers<[1], [0], [0], [1], [0, 0, 1, 1], [], []>} : vector<256x33xf32>, vector<33x1xf32>, vector<256x1xf32> -> vector<256x1xf32>
    %28 = arith.addf %21, %27 : vector<256x1xf32>
    %c0_28 = arith.constant 0 : index
    %c1_29 = arith.constant 1 : index
    %c1_30 = arith.constant 1 : index
    %c0_31 = arith.constant 0 : index
    %29 = vector.load %arg1[%c0_28, %c1_29, %c1_30, %c0_31] : memref<1x18x18x33xf32, #tpu.memory_space<vmem>>, vector<1x16x16x33xf32>
    %30 = vector.shape_cast %29 : vector<1x16x16x33xf32> to vector<16x16x33xf32>
    %31 = vector.shape_cast %30 : vector<16x16x33xf32> to vector<256x33xf32>
    %c4 = arith.constant 4 : index
    %c0_32 = arith.constant 0 : index
    %c0_33 = arith.constant 0 : index
    %32 = vector.load %arg2[%c4, %c0_32, %c0_33] : memref<9x33x1xf32, #tpu.memory_space<vmem>>, vector<1x33x1xf32>
    %33 = vector.shape_cast %32 : vector<1x33x1xf32> to vector<33x1xf32>
    %cst_34 = arith.constant dense<0.000000e+00> : vector<256x1xf32>
    %34 = tpu.matmul %31, %33, %cst_34 {dimension_numbers = #tpu.dot_dimension_numbers<[1], [0], [0], [1], [0, 0, 1, 1], [], []>} : vector<256x33xf32>, vector<33x1xf32>, vector<256x1xf32> -> vector<256x1xf32>
    %35 = arith.addf %28, %34 : vector<256x1xf32>
    %c0_35 = arith.constant 0 : index
    %c1_36 = arith.constant 1 : index
    %c2_37 = arith.constant 2 : index
    %c0_38 = arith.constant 0 : index
    %36 = vector.load %arg1[%c0_35, %c1_36, %c2_37, %c0_38] : memref<1x18x18x33xf32, #tpu.memory_space<vmem>>, vector<1x16x16x33xf32>
    %37 = vector.shape_cast %36 : vector<1x16x16x33xf32> to vector<16x16x33xf32>
    %38 = vector.shape_cast %37 : vector<16x16x33xf32> to vector<256x33xf32>
    %c5 = arith.constant 5 : index
    %c0_39 = arith.constant 0 : index
    %c0_40 = arith.constant 0 : index
    %39 = vector.load %arg2[%c5, %c0_39, %c0_40] : memref<9x33x1xf32, #tpu.memory_space<vmem>>, vector<1x33x1xf32>
    %40 = vector.shape_cast %39 : vector<1x33x1xf32> to vector<33x1xf32>
    %cst_41 = arith.constant dense<0.000000e+00> : vector<256x1xf32>
    %41 = tpu.matmul %38, %40, %cst_41 {dimension_numbers = #tpu.dot_dimension_numbers<[1], [0], [0], [1], [0, 0, 1, 1], [], []>} : vector<256x33xf32>, vector<33x1xf32>, vector<256x1xf32> -> vector<256x1xf32>
    %42 = arith.addf %35, %41 : vector<256x1xf32>
    %c0_42 = arith.constant 0 : index
    %c2_43 = arith.constant 2 : index
    %c0_44 = arith.constant 0 : index
    %c0_45 = arith.constant 0 : index
    %43 = vector.load %arg1[%c0_42, %c2_43, %c0_44, %c0_45] : memref<1x18x18x33xf32, #tpu.memory_space<vmem>>, vector<1x16x16x33xf32>
    %44 = vector.shape_cast %43 : vector<1x16x16x33xf32> to vector<16x16x33xf32>
    %45 = vector.shape_cast %44 : vector<16x16x33xf32> to vector<256x33xf32>
    %c6 = arith.constant 6 : index
    %c0_46 = arith.constant 0 : index
    %c0_47 = arith.constant 0 : index
    %46 = vector.load %arg2[%c6, %c0_46, %c0_47] : memref<9x33x1xf32, #tpu.memory_space<vmem>>, vector<1x33x1xf32>
    %47 = vector.shape_cast %46 : vector<1x33x1xf32> to vector<33x1xf32>
    %cst_48 = arith.constant dense<0.000000e+00> : vector<256x1xf32>
    %48 = tpu.matmul %45, %47, %cst_48 {dimension_numbers = #tpu.dot_dimension_numbers<[1], [0], [0], [1], [0, 0, 1, 1], [], []>} : vector<256x33xf32>, vector<33x1xf32>, vector<256x1xf32> -> vector<256x1xf32>
    %49 = arith.addf %42, %48 : vector<256x1xf32>
    %c0_49 = arith.constant 0 : index
    %c2_50 = arith.constant 2 : index
    %c1_51 = arith.constant 1 : index
    %c0_52 = arith.constant 0 : index
    %50 = vector.load %arg1[%c0_49, %c2_50, %c1_51, %c0_52] : memref<1x18x18x33xf32, #tpu.memory_space<vmem>>, vector<1x16x16x33xf32>
    %51 = vector.shape_cast %50 : vector<1x16x16x33xf32> to vector<16x16x33xf32>
    %52 = vector.shape_cast %51 : vector<16x16x33xf32> to vector<256x33xf32>
    %c7 = arith.constant 7 : index
    %c0_53 = arith.constant 0 : index
    %c0_54 = arith.constant 0 : index
    %53 = vector.load %arg2[%c7, %c0_53, %c0_54] : memref<9x33x1xf32, #tpu.memory_space<vmem>>, vector<1x33x1xf32>
    %54 = vector.shape_cast %53 : vector<1x33x1xf32> to vector<33x1xf32>
    %cst_55 = arith.constant dense<0.000000e+00> : vector<256x1xf32>
    %55 = tpu.matmul %52, %54, %cst_55 {dimension_numbers = #tpu.dot_dimension_numbers<[1], [0], [0], [1], [0, 0, 1, 1], [], []>} : vector<256x33xf32>, vector<33x1xf32>, vector<256x1xf32> -> vector<256x1xf32>
    %56 = arith.addf %49, %55 : vector<256x1xf32>
    %c0_56 = arith.constant 0 : index
    %c2_57 = arith.constant 2 : index
    %c2_58 = arith.constant 2 : index
    %c0_59 = arith.constant 0 : index
    %57 = vector.load %arg1[%c0_56, %c2_57, %c2_58, %c0_59] : memref<1x18x18x33xf32, #tpu.memory_space<vmem>>, vector<1x16x16x33xf32>
    %58 = vector.shape_cast %57 : vector<1x16x16x33xf32> to vector<16x16x33xf32>
    %59 = vector.shape_cast %58 : vector<16x16x33xf32> to vector<256x33xf32>
    %c8 = arith.constant 8 : index
    %c0_60 = arith.constant 0 : index
    %c0_61 = arith.constant 0 : index
    %60 = vector.load %arg2[%c8, %c0_60, %c0_61] : memref<9x33x1xf32, #tpu.memory_space<vmem>>, vector<1x33x1xf32>
    %61 = vector.shape_cast %60 : vector<1x33x1xf32> to vector<33x1xf32>
    %cst_62 = arith.constant dense<0.000000e+00> : vector<256x1xf32>
    %62 = tpu.matmul %59, %61, %cst_62 {dimension_numbers = #tpu.dot_dimension_numbers<[1], [0], [0], [1], [0, 0, 1, 1], [], []>} : vector<256x33xf32>, vector<33x1xf32>, vector<256x1xf32> -> vector<256x1xf32>
    %63 = arith.addf %56, %62 : vector<256x1xf32>
    %c0_63 = arith.constant 0 : index
    %c0_64 = arith.constant 0 : index
    %64 = vector.load %arg3[%c0_63, %c0_64] : memref<1x1xf32, #tpu.memory_space<vmem>>, vector<1x1xf32>
    %65 = vector.broadcast %64 : vector<1x1xf32> to vector<256x1xf32>
    %66 = arith.addf %63, %65 : vector<256x1xf32>
    %cst_65 = arith.constant 0.000000e+00 : f32
    %67 = vector.broadcast %cst_65 : f32 to vector<256x1xf32>
    %68 = arith.subf %67, %66 : vector<256x1xf32>
    %69 = math.exp %68 : vector<256x1xf32>
    %cst_66 = arith.constant 1.000000e+00 : f32
    %70 = vector.broadcast %cst_66 : f32 to vector<256x1xf32>
    %71 = arith.addf %70, %69 : vector<256x1xf32>
    %cst_67 = arith.constant 1.000000e+00 : f32
    %72 = vector.broadcast %cst_67 : f32 to vector<256x1xf32>
    %73 = arith.divf %72, %71 : vector<256x1xf32>
    %c0_68 = arith.constant 0 : index
    %c0_69 = arith.constant 0 : index
    %c0_70 = arith.constant 0 : index
    %74 = vector.load %arg4[%c0_68, %c0_69, %c0_70] : memref<1x256x1xf32, #tpu.memory_space<vmem>>, vector<1x256x1xf32>
    %75 = vector.shape_cast %74 : vector<1x256x1xf32> to vector<256x1xf32>
    %76 = vector.shape_cast %73 : vector<256x1xf32> to vector<1x256x1xf32>
    tpu.vector_store %arg4[%c0_68, %c0_69, %c0_70], %76 {strides = array<i32>} : memref<1x256x1xf32, #tpu.memory_space<vmem>>, vector<1x256x1xf32>,
    return
  }
  func.func @transform_0(%arg0: i32) -> (i32, i32, i32, i32) {
    %c0_i32 = arith.constant 0 : i32
    %c0_i32_0 = arith.constant 0 : i32
    %c0_i32_1 = arith.constant 0 : i32
    %c0_i32_2 = arith.constant 0 : i32
    return %arg0, %c0_i32, %c0_i32_0, %c0_i32_1 : i32, i32, i32, i32
  }
  func.func @transform_1(%arg0: i32) -> (i32, i32, i32) {
    %c0_i32 = arith.constant 0 : i32
    %c0_i32_0 = arith.constant 0 : i32
    %c0_i32_1 = arith.constant 0 : i32
    %c0_i32_2 = arith.constant 0 : i32
    return %c0_i32, %c0_i32_0, %c0_i32_1 : i32, i32, i32
  }
  func.func @transform_2(%arg0: i32) -> (i32, i32) {
    %c0_i32 = arith.constant 0 : i32
    %c0_i32_0 = arith.constant 0 : i32
    %c0_i32_1 = arith.constant 0 : i32
    return %c0_i32, %c0_i32_0 : i32, i32
  }
  func.func @transform_3(%arg0: i32) -> (i32, i32, i32) {
    %c0_i32 = arith.constant 0 : i32
    %c0_i32_0 = arith.constant 0 : i32
    %c0_i32_1 = arith.constant 0 : i32
    return %arg0, %c0_i32, %c0_i32_0 : i32, i32, i32
  }
}

module attributes {stable_mosaic.version = 11 : i64} {
  func.func @_se_kernel(%arg0: memref<2x32xf32, #tpu.memory_space<vmem>>, %arg1: memref<32x2xf32, #tpu.memory_space<vmem>>, %arg2: memref<2x32xf32, #tpu.memory_space<vmem>>, %arg3: memref<32x1xf32, #tpu.memory_space<vmem>>, %arg4: memref<1x1xf32, #tpu.memory_space<vmem>>, %arg5: memref<2x32xf32, #tpu.memory_space<vmem>>, %arg6: memref<2x1xf32, #tpu.memory_space<vmem>>) attributes {dimension_semantics = [], scalar_prefetch = 0 : i64, scratch_operands = 0 : i64, tpu.core_type = #tpu.core_type<tc>} {
    %c0 = arith.constant 0 : index
    %c0_0 = arith.constant 0 : index
    %0 = vector.load %arg0[%c0, %c0_0] : memref<2x32xf32, #tpu.memory_space<vmem>>, vector<2x32xf32>
    %c0_1 = arith.constant 0 : index
    %c0_2 = arith.constant 0 : index
    %1 = vector.load %arg1[%c0_1, %c0_2] : memref<32x2xf32, #tpu.memory_space<vmem>>, vector<32x2xf32>
    %cst = arith.constant dense<0.000000e+00> : vector<2x2xf32>
    %2 = tpu.matmul %0, %1, %cst {dimension_numbers = #tpu.dot_dimension_numbers<[1], [0], [0], [1], [0, 0, 1, 1], [], []>} : vector<2x32xf32>, vector<32x2xf32>, vector<2x2xf32> -> vector<2x2xf32>
    %cst_3 = arith.constant 0.000000e+00 : f32
    %3 = vector.broadcast %cst_3 : f32 to vector<2x2xf32>
    %4 = arith.maximumf %2, %3 : vector<2x2xf32>
    %c0_4 = arith.constant 0 : index
    %c0_5 = arith.constant 0 : index
    %5 = vector.load %arg2[%c0_4, %c0_5] : memref<2x32xf32, #tpu.memory_space<vmem>>, vector<2x32xf32>
    %cst_6 = arith.constant dense<0.000000e+00> : vector<2x32xf32>
    %6 = tpu.matmul %4, %5, %cst_6 {dimension_numbers = #tpu.dot_dimension_numbers<[1], [0], [0], [1], [0, 0, 1, 1], [], []>} : vector<2x2xf32>, vector<2x32xf32>, vector<2x32xf32> -> vector<2x32xf32>
    %cst_7 = arith.constant 0.000000e+00 : f32
    %7 = vector.broadcast %cst_7 : f32 to vector<2x32xf32>
    %8 = arith.subf %7, %6 : vector<2x32xf32>
    %9 = math.exp %8 : vector<2x32xf32>
    %cst_8 = arith.constant 1.000000e+00 : f32
    %10 = vector.broadcast %cst_8 : f32 to vector<2x32xf32>
    %11 = arith.addf %10, %9 : vector<2x32xf32>
    %cst_9 = arith.constant 1.000000e+00 : f32
    %12 = vector.broadcast %cst_9 : f32 to vector<2x32xf32>
    %13 = arith.divf %12, %11 : vector<2x32xf32>
    %c0_10 = arith.constant 0 : index
    %c0_11 = arith.constant 0 : index
    %14 = vector.load %arg5[%c0_10, %c0_11] : memref<2x32xf32, #tpu.memory_space<vmem>>, vector<2x32xf32>
    tpu.vector_store %arg5[%c0_10, %c0_11], %13 {strides = array<i32>} : memref<2x32xf32, #tpu.memory_space<vmem>>, vector<2x32xf32>,
    %c0_12 = arith.constant 0 : index
    %c0_13 = arith.constant 0 : index
    %15 = vector.load %arg3[%c0_12, %c0_13] : memref<32x1xf32, #tpu.memory_space<vmem>>, vector<32x1xf32>
    %cst_14 = arith.constant dense<0.000000e+00> : vector<2x1xf32>
    %16 = tpu.matmul %0, %15, %cst_14 {dimension_numbers = #tpu.dot_dimension_numbers<[1], [0], [0], [1], [0, 0, 1, 1], [], []>} : vector<2x32xf32>, vector<32x1xf32>, vector<2x1xf32> -> vector<2x1xf32>
    %c0_15 = arith.constant 0 : index
    %c0_16 = arith.constant 0 : index
    %17 = vector.load %arg4[%c0_15, %c0_16] : memref<1x1xf32, #tpu.memory_space<vmem>>, vector<1x1xf32>
    %18 = vector.broadcast %17 : vector<1x1xf32> to vector<2x1xf32>
    %19 = arith.addf %16, %18 : vector<2x1xf32>
    %cst_17 = arith.constant 0.000000e+00 : f32
    %20 = vector.broadcast %cst_17 : f32 to vector<2x1xf32>
    %21 = arith.subf %20, %19 : vector<2x1xf32>
    %22 = math.exp %21 : vector<2x1xf32>
    %cst_18 = arith.constant 1.000000e+00 : f32
    %23 = vector.broadcast %cst_18 : f32 to vector<2x1xf32>
    %24 = arith.addf %23, %22 : vector<2x1xf32>
    %cst_19 = arith.constant 1.000000e+00 : f32
    %25 = vector.broadcast %cst_19 : f32 to vector<2x1xf32>
    %26 = arith.divf %25, %24 : vector<2x1xf32>
    %c0_20 = arith.constant 0 : index
    %c0_21 = arith.constant 0 : index
    %27 = vector.load %arg6[%c0_20, %c0_21] : memref<2x1xf32, #tpu.memory_space<vmem>>, vector<2x1xf32>
    tpu.vector_store %arg6[%c0_20, %c0_21], %26 {strides = array<i32>} : memref<2x1xf32, #tpu.memory_space<vmem>>, vector<2x1xf32>,
    return
  }
}

module attributes {stable_mosaic.version = 11 : i64} {
  func.func @_fuse_kernel(%arg0: i32, %arg1: i32, %arg2: memref<1x256x32xf32, #tpu.memory_space<vmem>>, %arg3: memref<256x50xbf16, #tpu.memory_space<vmem>>, %arg4: memref<1x50x32xbf16, #tpu.memory_space<vmem>>, %arg5: memref<32x32xbf16, #tpu.memory_space<vmem>>, %arg6: memref<1x32xf32, #tpu.memory_space<vmem>>, %arg7: memref<1x256x1xf32, #tpu.memory_space<vmem>>, %arg8: memref<1x1x1xf32, #tpu.memory_space<vmem>>, %arg9: memref<1x1x32xf32, #tpu.memory_space<vmem>>, %arg10: memref<1x256x32xf32, #tpu.memory_space<vmem>>) attributes {dimension_semantics = [#tpu.dimension_semantics<parallel>, #tpu.dimension_semantics<parallel>], iteration_bounds = array<i64: 2, 1>, scalar_prefetch = 0 : i64, scratch_operands = 0 : i64, tpu.core_type = #tpu.core_type<tc>, window_params = [{transform_indices = @transform_0, window_bounds = array<i64: 1, 256, 32>}, {transform_indices = @transform_1, window_bounds = array<i64: 256, 50>}, {transform_indices = @transform_2, window_bounds = array<i64: 1, 50, 32>}, {pipeline_mode = #tpu.pipeline_mode<synchronous>, transform_indices = @transform_3, window_bounds = array<i64: 32, 32>}, {pipeline_mode = #tpu.pipeline_mode<synchronous>, transform_indices = @transform_4, window_bounds = array<i64: 1, 32>}, {transform_indices = @transform_5, window_bounds = array<i64: 1, 256, 1>}, {transform_indices = @transform_6, window_bounds = array<i64: 1, 1, 1>}, {transform_indices = @transform_7, window_bounds = array<i64: 1, 1, 32>}, {transform_indices = @transform_8, window_bounds = array<i64: 1, 256, 32>}]} {
    %c0 = arith.constant 0 : index
    %c0_0 = arith.constant 0 : index
    %c0_1 = arith.constant 0 : index
    %0 = vector.load %arg2[%c0, %c0_0, %c0_1] : memref<1x256x32xf32, #tpu.memory_space<vmem>>, vector<1x256x32xf32>
    %1 = vector.shape_cast %0 : vector<1x256x32xf32> to vector<256x32xf32>
    %2 = arith.truncf %1 : vector<256x32xf32> to vector<256x32xbf16>
    %c0_2 = arith.constant 0 : index
    %c0_3 = arith.constant 0 : index
    %3 = vector.load %arg5[%c0_2, %c0_3] : memref<32x32xbf16, #tpu.memory_space<vmem>>, vector<32x32xbf16>
    %cst = arith.constant dense<0.000000e+00> : vector<256x32xf32>
    %4 = tpu.matmul %2, %3, %cst {dimension_numbers = #tpu.dot_dimension_numbers<[1], [0], [0], [1], [0, 0, 1, 1], [], []>} : vector<256x32xbf16>, vector<32x32xbf16>, vector<256x32xf32> -> vector<256x32xf32>
    %c0_4 = arith.constant 0 : index
    %c0_5 = arith.constant 0 : index
    %5 = vector.load %arg3[%c0_4, %c0_5] : memref<256x50xbf16, #tpu.memory_space<vmem>>, vector<256x50xbf16>
    %c0_6 = arith.constant 0 : index
    %c0_7 = arith.constant 0 : index
    %c0_8 = arith.constant 0 : index
    %6 = vector.load %arg4[%c0_6, %c0_7, %c0_8] : memref<1x50x32xbf16, #tpu.memory_space<vmem>>, vector<1x50x32xbf16>
    %7 = vector.shape_cast %6 : vector<1x50x32xbf16> to vector<50x32xbf16>
    %cst_9 = arith.constant dense<0.000000e+00> : vector<256x32xf32>
    %8 = tpu.matmul %5, %7, %cst_9 {dimension_numbers = #tpu.dot_dimension_numbers<[1], [0], [0], [1], [0, 0, 1, 1], [], []>} : vector<256x50xbf16>, vector<50x32xbf16>, vector<256x32xf32> -> vector<256x32xf32>
    %9 = arith.addf %4, %8 : vector<256x32xf32>
    %c0_10 = arith.constant 0 : index
    %c0_11 = arith.constant 0 : index
    %10 = vector.load %arg6[%c0_10, %c0_11] : memref<1x32xf32, #tpu.memory_space<vmem>>, vector<1x32xf32>
    %11 = vector.broadcast %10 : vector<1x32xf32> to vector<256x32xf32>
    %12 = arith.addf %9, %11 : vector<256x32xf32>
    %cst_12 = arith.constant 0.000000e+00 : f32
    %13 = vector.broadcast %cst_12 : f32 to vector<256x32xf32>
    %14 = arith.maximumf %12, %13 : vector<256x32xf32>
    %c0_13 = arith.constant 0 : index
    %c0_14 = arith.constant 0 : index
    %c0_15 = arith.constant 0 : index
    %15 = vector.load %arg8[%c0_13, %c0_14, %c0_15] : memref<1x1x1xf32, #tpu.memory_space<vmem>>, vector<1x1x1xf32>
    %16 = vector.shape_cast %15 : vector<1x1x1xf32> to vector<1x1xf32>
    %c0_16 = arith.constant 0 : index
    %c0_17 = arith.constant 0 : index
    %c0_18 = arith.constant 0 : index
    %17 = vector.load %arg7[%c0_16, %c0_17, %c0_18] : memref<1x256x1xf32, #tpu.memory_space<vmem>>, vector<1x256x1xf32>
    %18 = vector.shape_cast %17 : vector<1x256x1xf32> to vector<256x1xf32>
    %cst_19 = arith.constant 1.000000e+00 : f32
    %19 = vector.broadcast %cst_19 : f32 to vector<1x1xf32>
    %20 = arith.addf %19, %16 : vector<1x1xf32>
    %21 = vector.broadcast %20 : vector<1x1xf32> to vector<256x1xf32>
    %22 = arith.mulf %18, %21 : vector<256x1xf32>
    %c0_20 = arith.constant 0 : index
    %c0_21 = arith.constant 0 : index
    %c0_22 = arith.constant 0 : index
    %23 = vector.load %arg9[%c0_20, %c0_21, %c0_22] : memref<1x1x32xf32, #tpu.memory_space<vmem>>, vector<1x1x32xf32>
    %24 = vector.shape_cast %23 : vector<1x1x32xf32> to vector<1x32xf32>
    %cst_23 = arith.constant 2.000000e+00 : f32
    %25 = vector.broadcast %cst_23 : f32 to vector<1x1xf32>
    %26 = arith.subf %25, %16 : vector<1x1xf32>
    %27 = vector.broadcast %26 : vector<1x1xf32> to vector<1x32xf32>
    %28 = arith.mulf %24, %27 : vector<1x32xf32>
    %29 = vector.broadcast %22 : vector<256x1xf32> to vector<256x32xf32>
    %30 = vector.broadcast %28 : vector<1x32xf32> to vector<256x32xf32>
    %31 = arith.addf %29, %30 : vector<256x32xf32>
    %32 = arith.mulf %1, %31 : vector<256x32xf32>
    %33 = arith.addf %32, %14 : vector<256x32xf32>
    %c0_24 = arith.constant 0 : index
    %c0_25 = arith.constant 0 : index
    %c0_26 = arith.constant 0 : index
    %34 = vector.load %arg10[%c0_24, %c0_25, %c0_26] : memref<1x256x32xf32, #tpu.memory_space<vmem>>, vector<1x256x32xf32>
    %35 = vector.shape_cast %34 : vector<1x256x32xf32> to vector<256x32xf32>
    %36 = vector.shape_cast %33 : vector<256x32xf32> to vector<1x256x32xf32>
    tpu.vector_store %arg10[%c0_24, %c0_25, %c0_26], %36 {strides = array<i32>} : memref<1x256x32xf32, #tpu.memory_space<vmem>>, vector<1x256x32xf32>,
    return
  }
  func.func @transform_0(%arg0: i32, %arg1: i32) -> (i32, i32, i32) {
    %c0_i32 = arith.constant 0 : i32
    %c0_i32_0 = arith.constant 0 : i32
    return %arg0, %arg1, %c0_i32 : i32, i32, i32
  }
  func.func @transform_1(%arg0: i32, %arg1: i32) -> (i32, i32) {
    %c0_i32 = arith.constant 0 : i32
    %c0_i32_0 = arith.constant 0 : i32
    return %arg1, %c0_i32 : i32, i32
  }
  func.func @transform_2(%arg0: i32, %arg1: i32) -> (i32, i32, i32) {
    %c0_i32 = arith.constant 0 : i32
    %c0_i32_0 = arith.constant 0 : i32
    %c0_i32_1 = arith.constant 0 : i32
    return %arg0, %c0_i32, %c0_i32_0 : i32, i32, i32
  }
  func.func @transform_3(%arg0: i32, %arg1: i32) -> (i32, i32) {
    %c0_i32 = arith.constant 0 : i32
    %c0_i32_0 = arith.constant 0 : i32
    %c0_i32_1 = arith.constant 0 : i32
    return %c0_i32, %c0_i32_0 : i32, i32
  }
  func.func @transform_4(%arg0: i32, %arg1: i32) -> (i32, i32) {
    %c0_i32 = arith.constant 0 : i32
    %c0_i32_0 = arith.constant 0 : i32
    %c0_i32_1 = arith.constant 0 : i32
    return %c0_i32, %c0_i32_0 : i32, i32
  }
  func.func @transform_5(%arg0: i32, %arg1: i32) -> (i32, i32, i32) {
    %c0_i32 = arith.constant 0 : i32
    %c0_i32_0 = arith.constant 0 : i32
    return %arg0, %arg1, %c0_i32 : i32, i32, i32
  }
  func.func @transform_6(%arg0: i32, %arg1: i32) -> (i32, i32, i32) {
    %c0_i32 = arith.constant 0 : i32
    %c0_i32_0 = arith.constant 0 : i32
    %c0_i32_1 = arith.constant 0 : i32
    return %arg0, %c0_i32, %c0_i32_0 : i32, i32, i32
  }
  func.func @transform_7(%arg0: i32, %arg1: i32) -> (i32, i32, i32) {
    %c0_i32 = arith.constant 0 : i32
    %c0_i32_0 = arith.constant 0 : i32
    %c0_i32_1 = arith.constant 0 : i32
    return %arg0, %c0_i32, %c0_i32_0 : i32, i32, i32
  }
  func.func @transform_8(%arg0: i32, %arg1: i32) -> (i32, i32, i32) {
    %c0_i32 = arith.constant 0 : i32
    %c0_i32_0 = arith.constant 0 : i32
    return %arg0, %arg1, %c0_i32 : i32, i32, i32
  }
}

module attributes {stable_mosaic.version = 11 : i64} {
  func.func @kernel(%arg0: i32, %arg1: memref<1x18x18x32xf32, #tpu.memory_space<vmem>>, %arg2: memref<9x32x32xbf16, #tpu.memory_space<vmem>>, %arg3: memref<1x32xf32, #tpu.memory_space<vmem>>, %arg4: memref<1x256x32xf32, #tpu.memory_space<vmem>>) attributes {dimension_semantics = [#tpu.dimension_semantics<parallel>], iteration_bounds = array<i64: 2>, scalar_prefetch = 0 : i64, scratch_operands = 0 : i64, tpu.core_type = #tpu.core_type<tc>, window_params = [{transform_indices = @transform_0, window_bounds = array<i64: 1, 18, 18, 32>}, {pipeline_mode = #tpu.pipeline_mode<synchronous>, transform_indices = @transform_1, window_bounds = array<i64: 9, 32, 32>}, {pipeline_mode = #tpu.pipeline_mode<synchronous>, transform_indices = @transform_2, window_bounds = array<i64: 1, 32>}, {transform_indices = @transform_3, window_bounds = array<i64: 1, 256, 32>}]} {
    %cst = arith.constant 0.000000e+00 : f32
    %0 = vector.broadcast %cst : f32 to vector<256x32xf32>
    %c0 = arith.constant 0 : index
    %c0_0 = arith.constant 0 : index
    %c0_1 = arith.constant 0 : index
    %c0_2 = arith.constant 0 : index
    %1 = vector.load %arg1[%c0, %c0_0, %c0_1, %c0_2] : memref<1x18x18x32xf32, #tpu.memory_space<vmem>>, vector<1x16x16x32xf32>
    %2 = vector.shape_cast %1 : vector<1x16x16x32xf32> to vector<16x16x32xf32>
    %3 = vector.shape_cast %2 : vector<16x16x32xf32> to vector<256x32xf32>
    %4 = arith.truncf %3 : vector<256x32xf32> to vector<256x32xbf16>
    %c0_3 = arith.constant 0 : index
    %c0_4 = arith.constant 0 : index
    %c0_5 = arith.constant 0 : index
    %5 = vector.load %arg2[%c0_3, %c0_4, %c0_5] : memref<9x32x32xbf16, #tpu.memory_space<vmem>>, vector<1x32x32xbf16>
    %6 = vector.shape_cast %5 : vector<1x32x32xbf16> to vector<32x32xbf16>
    %cst_6 = arith.constant dense<0.000000e+00> : vector<256x32xf32>
    %7 = tpu.matmul %4, %6, %cst_6 {dimension_numbers = #tpu.dot_dimension_numbers<[1], [0], [0], [1], [0, 0, 1, 1], [], []>} : vector<256x32xbf16>, vector<32x32xbf16>, vector<256x32xf32> -> vector<256x32xf32>
    %8 = arith.addf %0, %7 : vector<256x32xf32>
    %c0_7 = arith.constant 0 : index
    %c0_8 = arith.constant 0 : index
    %c1 = arith.constant 1 : index
    %c0_9 = arith.constant 0 : index
    %9 = vector.load %arg1[%c0_7, %c0_8, %c1, %c0_9] : memref<1x18x18x32xf32, #tpu.memory_space<vmem>>, vector<1x16x16x32xf32>
    %10 = vector.shape_cast %9 : vector<1x16x16x32xf32> to vector<16x16x32xf32>
    %11 = vector.shape_cast %10 : vector<16x16x32xf32> to vector<256x32xf32>
    %12 = arith.truncf %11 : vector<256x32xf32> to vector<256x32xbf16>
    %c1_10 = arith.constant 1 : index
    %c0_11 = arith.constant 0 : index
    %c0_12 = arith.constant 0 : index
    %13 = vector.load %arg2[%c1_10, %c0_11, %c0_12] : memref<9x32x32xbf16, #tpu.memory_space<vmem>>, vector<1x32x32xbf16>
    %14 = vector.shape_cast %13 : vector<1x32x32xbf16> to vector<32x32xbf16>
    %cst_13 = arith.constant dense<0.000000e+00> : vector<256x32xf32>
    %15 = tpu.matmul %12, %14, %cst_13 {dimension_numbers = #tpu.dot_dimension_numbers<[1], [0], [0], [1], [0, 0, 1, 1], [], []>} : vector<256x32xbf16>, vector<32x32xbf16>, vector<256x32xf32> -> vector<256x32xf32>
    %16 = arith.addf %8, %15 : vector<256x32xf32>
    %c0_14 = arith.constant 0 : index
    %c0_15 = arith.constant 0 : index
    %c2 = arith.constant 2 : index
    %c0_16 = arith.constant 0 : index
    %17 = vector.load %arg1[%c0_14, %c0_15, %c2, %c0_16] : memref<1x18x18x32xf32, #tpu.memory_space<vmem>>, vector<1x16x16x32xf32>
    %18 = vector.shape_cast %17 : vector<1x16x16x32xf32> to vector<16x16x32xf32>
    %19 = vector.shape_cast %18 : vector<16x16x32xf32> to vector<256x32xf32>
    %20 = arith.truncf %19 : vector<256x32xf32> to vector<256x32xbf16>
    %c2_17 = arith.constant 2 : index
    %c0_18 = arith.constant 0 : index
    %c0_19 = arith.constant 0 : index
    %21 = vector.load %arg2[%c2_17, %c0_18, %c0_19] : memref<9x32x32xbf16, #tpu.memory_space<vmem>>, vector<1x32x32xbf16>
    %22 = vector.shape_cast %21 : vector<1x32x32xbf16> to vector<32x32xbf16>
    %cst_20 = arith.constant dense<0.000000e+00> : vector<256x32xf32>
    %23 = tpu.matmul %20, %22, %cst_20 {dimension_numbers = #tpu.dot_dimension_numbers<[1], [0], [0], [1], [0, 0, 1, 1], [], []>} : vector<256x32xbf16>, vector<32x32xbf16>, vector<256x32xf32> -> vector<256x32xf32>
    %24 = arith.addf %16, %23 : vector<256x32xf32>
    %c0_21 = arith.constant 0 : index
    %c1_22 = arith.constant 1 : index
    %c0_23 = arith.constant 0 : index
    %c0_24 = arith.constant 0 : index
    %25 = vector.load %arg1[%c0_21, %c1_22, %c0_23, %c0_24] : memref<1x18x18x32xf32, #tpu.memory_space<vmem>>, vector<1x16x16x32xf32>
    %26 = vector.shape_cast %25 : vector<1x16x16x32xf32> to vector<16x16x32xf32>
    %27 = vector.shape_cast %26 : vector<16x16x32xf32> to vector<256x32xf32>
    %28 = arith.truncf %27 : vector<256x32xf32> to vector<256x32xbf16>
    %c3 = arith.constant 3 : index
    %c0_25 = arith.constant 0 : index
    %c0_26 = arith.constant 0 : index
    %29 = vector.load %arg2[%c3, %c0_25, %c0_26] : memref<9x32x32xbf16, #tpu.memory_space<vmem>>, vector<1x32x32xbf16>
    %30 = vector.shape_cast %29 : vector<1x32x32xbf16> to vector<32x32xbf16>
    %cst_27 = arith.constant dense<0.000000e+00> : vector<256x32xf32>
    %31 = tpu.matmul %28, %30, %cst_27 {dimension_numbers = #tpu.dot_dimension_numbers<[1], [0], [0], [1], [0, 0, 1, 1], [], []>} : vector<256x32xbf16>, vector<32x32xbf16>, vector<256x32xf32> -> vector<256x32xf32>
    %32 = arith.addf %24, %31 : vector<256x32xf32>
    %c0_28 = arith.constant 0 : index
    %c1_29 = arith.constant 1 : index
    %c1_30 = arith.constant 1 : index
    %c0_31 = arith.constant 0 : index
    %33 = vector.load %arg1[%c0_28, %c1_29, %c1_30, %c0_31] : memref<1x18x18x32xf32, #tpu.memory_space<vmem>>, vector<1x16x16x32xf32>
    %34 = vector.shape_cast %33 : vector<1x16x16x32xf32> to vector<16x16x32xf32>
    %35 = vector.shape_cast %34 : vector<16x16x32xf32> to vector<256x32xf32>
    %36 = arith.truncf %35 : vector<256x32xf32> to vector<256x32xbf16>
    %c4 = arith.constant 4 : index
    %c0_32 = arith.constant 0 : index
    %c0_33 = arith.constant 0 : index
    %37 = vector.load %arg2[%c4, %c0_32, %c0_33] : memref<9x32x32xbf16, #tpu.memory_space<vmem>>, vector<1x32x32xbf16>
    %38 = vector.shape_cast %37 : vector<1x32x32xbf16> to vector<32x32xbf16>
    %cst_34 = arith.constant dense<0.000000e+00> : vector<256x32xf32>
    %39 = tpu.matmul %36, %38, %cst_34 {dimension_numbers = #tpu.dot_dimension_numbers<[1], [0], [0], [1], [0, 0, 1, 1], [], []>} : vector<256x32xbf16>, vector<32x32xbf16>, vector<256x32xf32> -> vector<256x32xf32>
    %40 = arith.addf %32, %39 : vector<256x32xf32>
    %c0_35 = arith.constant 0 : index
    %c1_36 = arith.constant 1 : index
    %c2_37 = arith.constant 2 : index
    %c0_38 = arith.constant 0 : index
    %41 = vector.load %arg1[%c0_35, %c1_36, %c2_37, %c0_38] : memref<1x18x18x32xf32, #tpu.memory_space<vmem>>, vector<1x16x16x32xf32>
    %42 = vector.shape_cast %41 : vector<1x16x16x32xf32> to vector<16x16x32xf32>
    %43 = vector.shape_cast %42 : vector<16x16x32xf32> to vector<256x32xf32>
    %44 = arith.truncf %43 : vector<256x32xf32> to vector<256x32xbf16>
    %c5 = arith.constant 5 : index
    %c0_39 = arith.constant 0 : index
    %c0_40 = arith.constant 0 : index
    %45 = vector.load %arg2[%c5, %c0_39, %c0_40] : memref<9x32x32xbf16, #tpu.memory_space<vmem>>, vector<1x32x32xbf16>
    %46 = vector.shape_cast %45 : vector<1x32x32xbf16> to vector<32x32xbf16>
    %cst_41 = arith.constant dense<0.000000e+00> : vector<256x32xf32>
    %47 = tpu.matmul %44, %46, %cst_41 {dimension_numbers = #tpu.dot_dimension_numbers<[1], [0], [0], [1], [0, 0, 1, 1], [], []>} : vector<256x32xbf16>, vector<32x32xbf16>, vector<256x32xf32> -> vector<256x32xf32>
    %48 = arith.addf %40, %47 : vector<256x32xf32>
    %c0_42 = arith.constant 0 : index
    %c2_43 = arith.constant 2 : index
    %c0_44 = arith.constant 0 : index
    %c0_45 = arith.constant 0 : index
    %49 = vector.load %arg1[%c0_42, %c2_43, %c0_44, %c0_45] : memref<1x18x18x32xf32, #tpu.memory_space<vmem>>, vector<1x16x16x32xf32>
    %50 = vector.shape_cast %49 : vector<1x16x16x32xf32> to vector<16x16x32xf32>
    %51 = vector.shape_cast %50 : vector<16x16x32xf32> to vector<256x32xf32>
    %52 = arith.truncf %51 : vector<256x32xf32> to vector<256x32xbf16>
    %c6 = arith.constant 6 : index
    %c0_46 = arith.constant 0 : index
    %c0_47 = arith.constant 0 : index
    %53 = vector.load %arg2[%c6, %c0_46, %c0_47] : memref<9x32x32xbf16, #tpu.memory_space<vmem>>, vector<1x32x32xbf16>
    %54 = vector.shape_cast %53 : vector<1x32x32xbf16> to vector<32x32xbf16>
    %cst_48 = arith.constant dense<0.000000e+00> : vector<256x32xf32>
    %55 = tpu.matmul %52, %54, %cst_48 {dimension_numbers = #tpu.dot_dimension_numbers<[1], [0], [0], [1], [0, 0, 1, 1], [], []>} : vector<256x32xbf16>, vector<32x32xbf16>, vector<256x32xf32> -> vector<256x32xf32>
    %56 = arith.addf %48, %55 : vector<256x32xf32>
    %c0_49 = arith.constant 0 : index
    %c2_50 = arith.constant 2 : index
    %c1_51 = arith.constant 1 : index
    %c0_52 = arith.constant 0 : index
    %57 = vector.load %arg1[%c0_49, %c2_50, %c1_51, %c0_52] : memref<1x18x18x32xf32, #tpu.memory_space<vmem>>, vector<1x16x16x32xf32>
    %58 = vector.shape_cast %57 : vector<1x16x16x32xf32> to vector<16x16x32xf32>
    %59 = vector.shape_cast %58 : vector<16x16x32xf32> to vector<256x32xf32>
    %60 = arith.truncf %59 : vector<256x32xf32> to vector<256x32xbf16>
    %c7 = arith.constant 7 : index
    %c0_53 = arith.constant 0 : index
    %c0_54 = arith.constant 0 : index
    %61 = vector.load %arg2[%c7, %c0_53, %c0_54] : memref<9x32x32xbf16, #tpu.memory_space<vmem>>, vector<1x32x32xbf16>
    %62 = vector.shape_cast %61 : vector<1x32x32xbf16> to vector<32x32xbf16>
    %cst_55 = arith.constant dense<0.000000e+00> : vector<256x32xf32>
    %63 = tpu.matmul %60, %62, %cst_55 {dimension_numbers = #tpu.dot_dimension_numbers<[1], [0], [0], [1], [0, 0, 1, 1], [], []>} : vector<256x32xbf16>, vector<32x32xbf16>, vector<256x32xf32> -> vector<256x32xf32>
    %64 = arith.addf %56, %63 : vector<256x32xf32>
    %c0_56 = arith.constant 0 : index
    %c2_57 = arith.constant 2 : index
    %c2_58 = arith.constant 2 : index
    %c0_59 = arith.constant 0 : index
    %65 = vector.load %arg1[%c0_56, %c2_57, %c2_58, %c0_59] : memref<1x18x18x32xf32, #tpu.memory_space<vmem>>, vector<1x16x16x32xf32>
    %66 = vector.shape_cast %65 : vector<1x16x16x32xf32> to vector<16x16x32xf32>
    %67 = vector.shape_cast %66 : vector<16x16x32xf32> to vector<256x32xf32>
    %68 = arith.truncf %67 : vector<256x32xf32> to vector<256x32xbf16>
    %c8 = arith.constant 8 : index
    %c0_60 = arith.constant 0 : index
    %c0_61 = arith.constant 0 : index
    %69 = vector.load %arg2[%c8, %c0_60, %c0_61] : memref<9x32x32xbf16, #tpu.memory_space<vmem>>, vector<1x32x32xbf16>
    %70 = vector.shape_cast %69 : vector<1x32x32xbf16> to vector<32x32xbf16>
    %cst_62 = arith.constant dense<0.000000e+00> : vector<256x32xf32>
    %71 = tpu.matmul %68, %70, %cst_62 {dimension_numbers = #tpu.dot_dimension_numbers<[1], [0], [0], [1], [0, 0, 1, 1], [], []>} : vector<256x32xbf16>, vector<32x32xbf16>, vector<256x32xf32> -> vector<256x32xf32>
    %72 = arith.addf %64, %71 : vector<256x32xf32>
    %c0_63 = arith.constant 0 : index
    %c0_64 = arith.constant 0 : index
    %73 = vector.load %arg3[%c0_63, %c0_64] : memref<1x32xf32, #tpu.memory_space<vmem>>, vector<1x32xf32>
    %74 = vector.broadcast %73 : vector<1x32xf32> to vector<256x32xf32>
    %75 = arith.addf %72, %74 : vector<256x32xf32>
    %c0_65 = arith.constant 0 : index
    %c0_66 = arith.constant 0 : index
    %c0_67 = arith.constant 0 : index
    %76 = vector.load %arg4[%c0_65, %c0_66, %c0_67] : memref<1x256x32xf32, #tpu.memory_space<vmem>>, vector<1x256x32xf32>
    %77 = vector.shape_cast %76 : vector<1x256x32xf32> to vector<256x32xf32>
    %78 = vector.shape_cast %75 : vector<256x32xf32> to vector<1x256x32xf32>
    tpu.vector_store %arg4[%c0_65, %c0_66, %c0_67], %78 {strides = array<i32>} : memref<1x256x32xf32, #tpu.memory_space<vmem>>, vector<1x256x32xf32>,
    return
  }
  func.func @transform_0(%arg0: i32) -> (i32, i32, i32, i32) {
    %c0_i32 = arith.constant 0 : i32
    %c0_i32_0 = arith.constant 0 : i32
    %c0_i32_1 = arith.constant 0 : i32
    %c0_i32_2 = arith.constant 0 : i32
    return %arg0, %c0_i32, %c0_i32_0, %c0_i32_1 : i32, i32, i32, i32
  }
  func.func @transform_1(%arg0: i32) -> (i32, i32, i32) {
    %c0_i32 = arith.constant 0 : i32
    %c0_i32_0 = arith.constant 0 : i32
    %c0_i32_1 = arith.constant 0 : i32
    %c0_i32_2 = arith.constant 0 : i32
    return %c0_i32, %c0_i32_0, %c0_i32_1 : i32, i32, i32
  }
  func.func @transform_2(%arg0: i32) -> (i32, i32) {
    %c0_i32 = arith.constant 0 : i32
    %c0_i32_0 = arith.constant 0 : i32
    %c0_i32_1 = arith.constant 0 : i32
    return %c0_i32, %c0_i32_0 : i32, i32
  }
  func.func @transform_3(%arg0: i32) -> (i32, i32, i32) {
    %c0_i32 = arith.constant 0 : i32
    %c0_i32_0 = arith.constant 0 : i32
    %c0_i32_1 = arith.constant 0 : i32
    return %arg0, %c0_i32, %c0_i32_0 : i32, i32, i32
  }
}

</mosaic_0001>

<llo_original>
// kernel: esf_forward.7
$region0: #{esf_forward.7}
  #allocation0 [shape = 'u32[]', space=smem, size = 0x4, offset = 0x4, fixed_abs, tag = 'smem constant byte address 0x4 - core index']
  #allocation1 [shape = 'u32[72,128]{1,0:T(1,128)}', space=vmem, size = 0x9000, scoped, tag = 'internal scratch']
  #allocation2 [shape = 'f32[1,1]{1,0:T(1,128)S(1)}', space=vmem, size = 0x200, scoped, tag = 'scoped memory for esf_forward.7']
  %s0 = inlined_call_operand.vmem [shape: f32[2,32], index: 0, kind: input, shape index: {}]
  %s1 = inlined_call_operand.vmem [shape: f32[32,2], index: 1, kind: input, shape index: {}]
  %s2 = inlined_call_operand.vmem [shape: f32[2,32], index: 2, kind: input, shape index: {}]
  %s3 = inlined_call_operand.vmem [shape: f32[32,1], index: 3, kind: input, shape index: {}]
  %s4 = inlined_call_operand.<no memory space> [shape: f32[1,1], index: 4, kind: input, shape index: {}]
  %s5 = inlined_call_operand.vmem [shape: f32[2,32], index: 5, kind: output, shape index: {0}]
  %s6 = inlined_call_operand.vmem [shape: f32[2,1], index: 6, kind: output, shape index: {1}]
  %7 = xla_tuple %s5, %s6
  %s8 = sld [smem:[#allocation0]]
  $region38: #{esf_forward.7} parent=0
    _
  %s10 = ssub.s32 1, %s8
  %s11 = scalar_select 0, %s10, %s8
  %v12 = vstv %s4
  %13 = vst [vmem:[#allocation2] sm:$0x1] %v12
  // Predicated region
  $region2: #{esf_forward.7} parent=0 // pred_check
    _
  $region3: #{esf_forward.7} parent=0 // pred_check_branch
    %15 = sbr.rel (0) target = $region5
  $region4: #{esf_forward.7} parent=0 // pred_region
    _
  $region5: #{esf_forward.7} parent=0 // pred_fallthru
    _
  // Predicated region
  $region6: #{esf_forward.7} parent=0 // pred_check
    _
  $region7: #{esf_forward.7} parent=0 // pred_check_branch
    %17 = sbr.rel (0) target = $region9
  $region8: #{esf_forward.7} parent=0 // pred_region
    _
  $region9: #{esf_forward.7} parent=0 // pred_fallthru
    _
  // Predicated region
  $region10: #{esf_forward.7} parent=0 // pred_check
    _
  $region11: #{esf_forward.7} parent=0 // pred_check_branch
    %19 = sbr.rel (0) target = $region13
  $region12: #{esf_forward.7} parent=0 // pred_region
    _
  $region13: #{esf_forward.7} parent=0 // pred_fallthru
    _
  // Predicated region
  $region14: #{esf_forward.7} parent=0 // pred_check
    _
  $region15: #{esf_forward.7} parent=0 // pred_check_branch
    %21 = sbr.rel (0) target = $region17
  $region16: #{esf_forward.7} parent=0 // pred_region
    _
  $region17: #{esf_forward.7} parent=0 // pred_fallthru
    _
  // Predicated region
  $region18: #{esf_forward.7} parent=0 // pred_check
    _
  $region19: #{esf_forward.7} parent=0 // pred_check_branch
    %23 = sbr.rel (0) target = $region21
  $region20: #{esf_forward.7} parent=0 // pred_region
    _
  $region21: #{esf_forward.7} parent=0 // pred_fallthru
    _
  %v24 = vld [vmem:[%s0] sm:$0x3]
  %v25 = vld [vmem:[%s1] sm:$0xff]
  %v26 = vld [vmem:[%s1 + $0x8] sm:$0xff]
  %v27 = vld [vmem:[%s1 + $0x10] sm:$0xff]
  %v28 = vld [vmem:[%s1 + $0x18] sm:$0xff]
  %vm29 = vcmask 261120
  %v31 = vsel %vm29, %v24, 0
  %33 = vmatpush.msra.mxu0 0.0
  %34 = vmatpush.msra.mxu0 0.0
  %35 = vmatpush.msra.mxu0 0.0
  %36 = vmatpush.msra.mxu0 0.0
  %37 = vmatpush.msra.mxu0 0.0
  %38 = vmatpush.msra.mxu0 0.0
  %39 = vmatpush.msra.mxu0 0.0
  %40 = vmatpush.msra.mxu0 0.0
  %41 = vmatpush.msra.mxu0 0.0
  %42 = vmatpush.msra.mxu0 0.0
  %43 = vmatpush.msra.mxu0 0.0
  %44 = vmatpush.msra.mxu0 0.0
  %45 = vmatpush.msra.mxu0 %v28
  %46 = vmatpush.msra.mxu0 %v27
  %47 = vmatpush.msra.mxu0 %v26
  %48 = vmatpush.msra.mxu0 %v25
  %49 = vmatmul.f32.gmra.mxu0 %v31
  %v50 = vpop.f32.mrf.mxu0
  %v51 = vadd.f32 0.0, %v50
  %52 = vdwg.mxu0
  %v53 = vmax.f32 %v51, 0.0
  %v54 = vld [vmem:[%s2] sm:$0x3]
  %vm55 = vcmask 15360
  %v57 = vsel %vm55, %v53, 0
  %vm59 = vcmask 1041408
  %v61 = vsel %vm59, %v54, 0
  %63 = vmatpush.msra.mxu0 0.0
  %64 = vmatpush.msra.mxu0 0.0
  %65 = vmatpush.msra.mxu0 0.0
  %66 = vmatpush.msra.mxu0 0.0
  %67 = vmatpush.msra.mxu0 0.0
  %68 = vmatpush.msra.mxu0 0.0
  %69 = vmatpush.msra.mxu0 0.0
  %70 = vmatpush.msra.mxu0 0.0
  %71 = vmatpush.msra.mxu0 0.0
  %72 = vmatpush.msra.mxu0 0.0
  %73 = vmatpush.msra.mxu0 0.0
  %74 = vmatpush.msra.mxu0 0.0
  %75 = vmatpush.msra.mxu0 0.0
  %76 = vmatpush.msra.mxu0 0.0
  %77 = vmatpush.msra.mxu0 0.0
  %78 = vmatpush.msra.mxu0 %v61
  %79 = vmatmul.f32.gmra.mxu0 %v57
  %v80 = vpop.f32.mrf.mxu0
  %v81 = vadd.f32 0.0, %v80
  %82 = vdwg.mxu0
  %v83 = vsub.f32 0.0, %v81
  %v84 = vmul.f32 %v83, 1.442695
  %v85 = vpow.pop %v84
  %v86 = vadd.f32 %v85, 1.0
  %v87 = vrcp.pop %v86
  %v88 = vmul.f32 %v86, %v87
  %v89 = vsub.f32 1.0, %v88
  %v90 = vmul.f32 %v87, %v89
  %v91 = vadd.f32 %v87, %v90
  %vm92 = vweird.f32 %v86
  %vm93 = vweird.f32 %v87
  %vm94 = vmor %vm92, %vm93
  %v95 = vsel %vm94, %v87, %v91
  %v96 = vand.u32 2147483647, %v86
  %vm97 = vcmp.eq.f32.partialorder %v96, 8.507059e+37
  %v98 = vand.u32 %v86, 2147483648
  %v99 = vor.u32 1.1754944e-38, %v98
  %v100 = vsel %vm97, %v99, %v95
  %v101 = vmul.f32 1.0, %v100
  %vm102 = vcmask 254976
  %103 = vst.msk [vmem:[%s5] sm:$0x3] %vm102, %v101
  %v104 = vld [vmem:[%s3] sm:$0xff]
  %v105 = vld [vmem:[%s3 + $0x8] sm:$0xff]
  %v106 = vld [vmem:[%s3 + $0x10] sm:$0xff]
  %v107 = vld [vmem:[%s3 + $0x18] sm:$0xff]
  %v108 = vld [vmem:[#allocation2] sm:$0x1]
  %v110 = vperm.slane %v108, 0
  %112 = vmatpush.msra.mxu0 0.0
  %113 = vmatpush.msra.mxu0 0.0
  %114 = vmatpush.msra.mxu0 0.0
  %115 = vmatpush.msra.mxu0 0.0
  %116 = vmatpush.msra.mxu0 0.0
  %117 = vmatpush.msra.mxu0 0.0
  %118 = vmatpush.msra.mxu0 0.0
  %119 = vmatpush.msra.mxu0 0.0
  %120 = vmatpush.msra.mxu0 0.0
  %121 = vmatpush.msra.mxu0 0.0
  %122 = vmatpush.msra.mxu0 0.0
  %123 = vmatpush.msra.mxu0 0.0
  %124 = vmatpush.msra.mxu0 %v107
  %125 = vmatpush.msra.mxu0 %v106
  %126 = vmatpush.msra.mxu0 %v105
  %127 = vmatpush.msra.mxu0 %v104
  %128 = vmatmul.f32.gmra.mxu0 %v31
  %v129 = vpop.f32.mrf.mxu0
  %v130 = vadd.f32 %v110, %v129
  %131 = vdwg.mxu0
  %v132 = vsub.f32 0.0, %v130
  %v133 = vmul.f32 %v132, 1.442695
  %v134 = vpow.pop %v133
  %v135 = vadd.f32 %v134, 1.0
  %v136 = vrcp.pop %v135
  %v137 = vmul.f32 %v135, %v136
  %v138 = vsub.f32 1.0, %v137
  %v139 = vmul.f32 %v136, %v138
  %v140 = vadd.f32 %v136, %v139
  %vm141 = vweird.f32 %v135
  %vm142 = vweird.f32 %v136
  %vm143 = vmor %vm141, %vm142
  %v144 = vsel %vm143, %v136, %v140
  %v145 = vand.u32 2147483647, %v135
  %vm146 = vcmp.eq.f32.partialorder %v145, 8.507059e+37
  %v147 = vand.u32 %v135, 2147483648
  %v148 = vor.u32 1.1754944e-38, %v147
  %v149 = vsel %vm146, %v148, %v144
  %v150 = vmul.f32 1.0, %v149
  %vm151 = vcmask 1024
  %152 = vst.msk [vmem:[%s6] sm:$0x3] %vm151, %v150
  // Predicated region
  $region22: #{esf_forward.7} parent=0 // pred_check
    _
  $region23: #{esf_forward.7} parent=0 // pred_check_branch
    %154 = sbr.rel (0) target = $region25
  $region24: #{esf_forward.7} parent=0 // pred_region
    _
  $region25: #{esf_forward.7} parent=0 // pred_fallthru
    _
  // Predicated region
  $region26: #{esf_forward.7} parent=0 // pred_check
    _
  $region27: #{esf_forward.7} parent=0 // pred_check_branch
    %156 = sbr.rel (0) target = $region29
  $region28: #{esf_forward.7} parent=0 // pred_region
    _
  $region29: #{esf_forward.7} parent=0 // pred_fallthru
    _
  // Predicated region
  $region30: #{esf_forward.7} parent=0 // pred_check
    _
  $region31: #{esf_forward.7} parent=0 // pred_check_branch
    %158 = sbr.rel (0) target = $region33
  $region32: #{esf_forward.7} parent=0 // pred_region
    _
  $region33: #{esf_forward.7} parent=0 // pred_fallthru
    _
  // Predicated region
  $region34: #{esf_forward.7} parent=0 // pred_check
    _
  $region35: #{esf_forward.7} parent=0 // pred_check_branch
    %160 = sbr.rel (0) target = $region37
  $region36: #{esf_forward.7} parent=0 // pred_region
    _
  $region37: #{esf_forward.7} parent=0 // pred_fallthru
    _

// kernel: esf_forward.5
$region0: #{esf_forward.5}
  #allocation0 [shape = 'u32[]', space=smem, size = 0x4, offset = 0x4, fixed_abs, tag = 'smem constant byte address 0x4 - core index']
  #allocation1 [shape = 'u32[72,128]{1,0:T(1,128)}', space=vmem, size = 0x9000, scoped, tag = 'internal scratch']
  #allocation2 [shape = 'f32[1,1]{1,0:T(1,128)S(1)}', space=vmem, size = 0x200, scoped, tag = 'scoped memory for esf_forward.5']
  %s0 = inlined_call_operand.vmem [shape: f32[2,18,18,32], index: 0, kind: input, shape index: {}]
  %s1 = inlined_call_operand.vmem [shape: f32[9,32,1], index: 1, kind: input, shape index: {}]
  %s2 = inlined_call_operand.<no memory space> [shape: f32[1,1], index: 2, kind: input, shape index: {}]
  %s3 = inlined_call_operand.vmem [shape: f32[2,256,1], index: 3, kind: output, shape index: {}]
  %s4 = sld [smem:[#allocation0]]
  $region45: #{esf_forward.5} parent=0
    _
  %s6 = ssub.s32 1, %s4
  %s7 = scalar_select 0, %s6, %s4
  %v8 = vstv %s2
  %9 = vst [vmem:[#allocation2] sm:$0x1] %v8
  loop: start=0, step=1, limit=4
  $region2: #{esf_forward.5} parent=0 // loop_pre_header
    _
  $region3: #{esf_forward.5} parent=0 // loop_header
    %s11 = sphi 0, %s15
    %p12 = scmp.ge.s32.totalorder %s11, 4
    %s21 = sphi 0, %s23
    %s24 = sphi 0, %s21
    %s25 = sphi 0, %s24
    %s41 = sphi 0, %s25
    %s45 = sphi 0, %s45
    %s47 = sphi 0, %s45
    %s48 = sphi 0, %s47
    %s62 = sphi 0, %s48
    %s66 = sphi 0, %s66
    %s68 = sphi 0, %s66
    %s69 = sphi 0, %s68
    %s83 = sphi 0, %s69
    %s89 = sphi 0, %s91
    %s92 = sphi 0, %s89
    %s93 = sphi 0, %s92
    %s109 = sphi 0, %s93
  $region4: #{esf_forward.5} parent=0 // loop_header_branch
    %14 = sbr.rel (%p12) target = $region8
  $region5: #{esf_forward.5} parent=0 // loop_body
    %s16 = ssub.s32 %s11, 1
    %s17 = ssub.s32 %s11, 2
    %s18 = sadd.s32 %s11, 1
    %s19 = ssub.s32 %s11, %s18
    %p20 = scmp.eq.s32.totalorder %s19, 0
    %s22 = sadd.s32 %s21, 1
    %s23 = scalar_select %p20, %s21, %s22
    %p26 = pneg %p20
    %p27 = scmp.eq.s32.totalorder %s11, 1
    %p28 = por %p26, %p27
    %p29 = scmp.ne.s32.totalorder %s21, %s24
    %p30 = scmp.eq.s32.totalorder %s11, 0
    %p31 = por %p29, %p30
    %p32 = scmp.ne.s32.totalorder %s21, %s24
    %p33 = scmp.eq.s32.totalorder %s16, 1
    %p34 = por %p32, %p33
    %p35 = scmp.ne.s32.totalorder %s24, %s25
    %p36 = scmp.eq.s32.totalorder %s16, 0
    %p37 = por %p35, %p36
    %p38 = scmp.ne.s32.totalorder %s24, %s25
    %p39 = scmp.eq.s32.totalorder %s17, 1
    %p40 = por %p38, %p39
    %p42 = scmp.ne.s32.totalorder %s25, %s41
    %p43 = scmp.eq.s32.totalorder %s17, 0
    %p44 = por %p42, %p43
    %s46 = sadd.s32 %s45, 1
    %p49 = scmp.eq.s32.totalorder %s11, 1
    %p50 = scmp.ne.s32.totalorder %s45, %s47
    %p51 = scmp.eq.s32.totalorder %s11, 0
    %p52 = por %p50, %p51
    %p53 = scmp.ne.s32.totalorder %s45, %s47
    %p54 = scmp.eq.s32.totalorder %s16, 1
    %p55 = por %p53, %p54
    %p56 = scmp.ne.s32.totalorder %s47, %s48
    %p57 = scmp.eq.s32.totalorder %s16, 0
    %p58 = por %p56, %p57
    %p59 = scmp.ne.s32.totalorder %s47, %s48
    %p60 = scmp.eq.s32.totalorder %s17, 1
    %p61 = por %p59, %p60
    %p63 = scmp.ne.s32.totalorder %s48, %s62
    %p64 = scmp.eq.s32.totalorder %s17, 0
    %p65 = por %p63, %p64
    %s67 = sadd.s32 %s66, 1
    %p70 = scmp.eq.s32.totalorder %s11, 1
    %p71 = scmp.ne.s32.totalorder %s66, %s68
    %p72 = scmp.eq.s32.totalorder %s11, 0
    %p73 = por %p71, %p72
    %p74 = scmp.ne.s32.totalorder %s66, %s68
    %p75 = scmp.eq.s32.totalorder %s16, 1
    %p76 = por %p74, %p75
    %p77 = scmp.ne.s32.totalorder %s68, %s69
    %p78 = scmp.eq.s32.totalorder %s16, 0
    %p79 = por %p77, %p78
    %p80 = scmp.ne.s32.totalorder %s68, %s69
    %p81 = scmp.eq.s32.totalorder %s17, 1
    %p82 = por %p80, %p81
    %p84 = scmp.ne.s32.totalorder %s69, %s83
    %p85 = scmp.eq.s32.totalorder %s17, 0
    %p86 = por %p84, %p85
    %s87 = ssub.s32 %s11, %s18
    %p88 = scmp.eq.s32.totalorder %s87, 0
    %s90 = sadd.s32 %s89, 1
    %s91 = scalar_select %p88, %s89, %s90
    %p94 = pneg %p88
    %p95 = scmp.eq.s32.totalorder %s11, 1
    %p96 = por %p94, %p95
    %p97 = scmp.ne.s32.totalorder %s89, %s92
    %p98 = scmp.eq.s32.totalorder %s11, 0
    %p99 = por %p97, %p98
    %p100 = scmp.ne.s32.totalorder %s89, %s92
    %p101 = scmp.eq.s32.totalorder %s16, 1
    %p102 = por %p100, %p101
    %p103 = scmp.ne.s32.totalorder %s92, %s93
    %p104 = scmp.eq.s32.totalorder %s16, 0
    %p105 = por %p103, %p104
    %p106 = scmp.ne.s32.totalorder %s92, %s93
    %p107 = scmp.eq.s32.totalorder %s17, 1
    %p108 = por %p106, %p107
    %p110 = scmp.ne.s32.totalorder %s93, %s109
    %p111 = scmp.eq.s32.totalorder %s17, 0
    %p112 = por %p110, %p111
    %p113 = scmp.le.s32.totalorder 1, %s11
    %p114 = scmp.lt.s32.totalorder %s11, 3
    %p115 = pnand %p113, %p114
    %p116 = pneg %p115
    // Predicated region
    $region9: #{esf_forward.5} parent=5 // pred_check
      _
    $region10: #{esf_forward.5} parent=5 // pred_check_branch
      %118 = sbr.rel (%p115) target = $region12
    $region11: #{esf_forward.5} parent=5 // pred_region
      %s119 = ssub.s32 %s11, 1
      // Predicated region
      $region13: #{esf_forward.5} parent=11 // pred_check
        %p120 = pneg %p58
      $region14: #{esf_forward.5} parent=11 // pred_check_branch
        %122 = sbr.rel (%p120) target = $region16
      $region15: #{esf_forward.5} parent=11 // pred_region
        _
      $region16: #{esf_forward.5} parent=11 // pred_fallthru
        _
      // Predicated region
      $region17: #{esf_forward.5} parent=11 // pred_check
        %p123 = pneg %p79
      $region18: #{esf_forward.5} parent=11 // pred_check_branch
        %125 = sbr.rel (%p123) target = $region20
      $region19: #{esf_forward.5} parent=11 // pred_region
        _
      $region20: #{esf_forward.5} parent=11 // pred_fallthru
        _
    $region12: #{esf_forward.5} parent=5 // pred_fallthru
      _
    %p126 = scmp.lt.s32.totalorder %s11, 2
    // Predicated region
    $region21: #{esf_forward.5} parent=5 // pred_check
      %p127 = pneg %p126
    $region22: #{esf_forward.5} parent=5 // pred_check_branch
      %129 = sbr.rel (%p127) target = $region24
    $region23: #{esf_forward.5} parent=5 // pred_region
      // Predicated region
      $region25: #{esf_forward.5} parent=23 // pred_check
        %p130 = pneg %p31
      $region26: #{esf_forward.5} parent=23 // pred_check_branch
        %132 = sbr.rel (%p130) target = $region28
      $region27: #{esf_forward.5} parent=23 // pred_region
        %p133 = scmp.lt.s32.totalorder %s11, 1
        %s134 = scalar_select %p133, %s11, 1
        %s135 = smul.addr %s134, 54
        %s136 = smul.addr %s135, 8
        %s137 = scalar_lea.vmem %s0, %s136
      $region28: #{esf_forward.5} parent=23 // pred_fallthru
        _
    $region24: #{esf_forward.5} parent=5 // pred_fallthru
      _
    %p138 = scmp.le.s32.totalorder 1, %s11
    %p139 = scmp.lt.s32.totalorder %s11, 3
    %p140 = pnand %p138, %p139
    %p141 = pneg %p140
    // Predicated region
    $region29: #{esf_forward.5} parent=5 // pred_check
      _
    $region30: #{esf_forward.5} parent=5 // pred_check_branch
      %143 = sbr.rel (%p140) target = $region32
    $region31: #{esf_forward.5} parent=5 // pred_region
      %s144 = ssub.s32 %s11, 1
      %p145 = scmp.lt.s32.totalorder %s16, 1
      %s146 = scalar_select %p145, %s16, 1
      %s147 = smul.addr %s146, 54
      %s148 = smul.addr %s147, 8
      %s149 = scalar_lea.vmem %s0, %s148
      %p150 = pneg %p37
      %p151 = pneg %p34
      %p152 = pneg %p58
      %p153 = pneg %p55
      %p154 = pneg %p79
      %p155 = pneg %p76
      %p156 = pneg %p105
      %p157 = pneg %p102
      %p158 = scmp.lt.s32.totalorder %s16, 1
      %s159 = scalar_select %p158, %s16, 1
      %s160 = smul.addr %s159, 32
      %s161 = smul.addr %s160, 8
      %s162 = scalar_lea.vmem %s3, %s161
      %p163 = scmp.lt.s32.totalorder %s16, 1
      %s164 = scalar_select %p163, %s16, 1
      %s165 = smul.addr %s164, 54
      %s166 = smul.addr %s165, 8
      %s167 = scalar_lea.vmem %s0, %s166
      %p168 = scmp.lt.s32.totalorder %s16, 1
      %s169 = scalar_select %p168, %s16, 1
      %s170 = smul.addr %s169, 32
      %s171 = smul.addr %s170, 8
      %s172 = scalar_lea.vmem %s3, %s171
      %v173 = vld [vmem:[%s167] sm:$0xff]
      %v174 = vld [vmem:[%s167 + $0x8] sm:$0xff]
      %v175 = vld [vmem:[%s167 + $0x18] sm:$0xff]
      %v176 = vld [vmem:[%s167 + $0x20] sm:$0xff]
      %v177 = vld [vmem:[%s167 + $0x30] sm:$0xff]
      %v178 = vld [vmem:[%s167 + $0x38] sm:$0xff]
      %v179 = vld [vmem:[%s167 + $0x48] sm:$0xff]
      %v180 = vld [vmem:[%s167 + $0x50] sm:$0xff]
      %v181 = vld [vmem:[%s167 + $0x60] sm:$0xff]
      %v182 = vld [vmem:[%s167 + $0x68] sm:$0xff]
      %v183 = vld [vmem:[%s167 + $0x78] sm:$0xff]
      %v184 = vld [vmem:[%s167 + $0x80] sm:$0xff]
      %v185 = vld [vmem:[%s167 + $0x90] sm:$0xff]
      %v186 = vld [vmem:[%s167 + $0x98] sm:$0xff]
      %v187 = vld [vmem:[%s167 + $0xa8] sm:$0xff]
      %v188 = vld [vmem:[%s167 + $0xb0] sm:$0xff]
      %v189 = vld [vmem:[%s167 + $0xc0] sm:$0xff]
      %v190 = vld [vmem:[%s167 + $0xc8] sm:$0xff]
      %v191 = vld [vmem:[%s167 + $0xd8] sm:$0xff]
      %v192 = vld [vmem:[%s167 + $0xe0] sm:$0xff]
      %v193 = vld [vmem:[%s167 + $0xf0] sm:$0xff]
      %v194 = vld [vmem:[%s167 + $0xf8] sm:$0xff]
      %v195 = vld [vmem:[%s167 + $0x108] sm:$0xff]
      %v196 = vld [vmem:[%s167 + $0x110] sm:$0xff]
      %v197 = vld [vmem:[%s167 + $0x120] sm:$0xff]
      %v198 = vld [vmem:[%s167 + $0x128] sm:$0xff]
      %v199 = vld [vmem:[%s167 + $0x138] sm:$0xff]
      %v200 = vld [vmem:[%s167 + $0x140] sm:$0xff]
      %v201 = vld [vmem:[%s167 + $0x150] sm:$0xff]
      %v202 = vld [vmem:[%s167 + $0x158] sm:$0xff]
      %v203 = vld [vmem:[%s167 + $0x168] sm:$0xff]
      %v204 = vld [vmem:[%s167 + $0x170] sm:$0xff]
      %v205 = vld [vmem:[%s1] sm:$0xff]
      %v206 = vld [vmem:[%s1 + $0x8] sm:$0xff]
      %v207 = vld [vmem:[%s1 + $0x10] sm:$0xff]
      %v208 = vld [vmem:[%s1 + $0x18] sm:$0xff]
      %v209 = vld [vmem:[%s167 + $0x1] sm:$0xff]
      %v210 = vld [vmem:[%s167 + $0x9] sm:$0xff]
      %v211 = vld [vmem:[%s167 + $0x19] sm:$0xff]
      %v212 = vld [vmem:[%s167 + $0x21] sm:$0xff]
      %v213 = vld [vmem:[%s167 + $0x31] sm:$0xff]
      %v214 = vld [vmem:[%s167 + $0x39] sm:$0xff]
      %v215 = vld [vmem:[%s167 + $0x49] sm:$0xff]
      %v216 = vld [vmem:[%s167 + $0x51] sm:$0xff]
      %v217 = vld [vmem:[%s167 + $0x61] sm:$0xff]
      %v218 = vld [vmem:[%s167 + $0x69] sm:$0xff]
      %v219 = vld [vmem:[%s167 + $0x79] sm:$0xff]
      %v220 = vld [vmem:[%s167 + $0x81] sm:$0xff]
      %v221 = vld [vmem:[%s167 + $0x91] sm:$0xff]
      %v222 = vld [vmem:[%s167 + $0x99] sm:$0xff]
      %v223 = vld [vmem:[%s167 + $0xa9] sm:$0xff]
      %v224 = vld [vmem:[%s167 + $0xb1] sm:$0xff]
      %v225 = vld [vmem:[%s167 + $0xc1] sm:$0xff]
      %v226 = vld [vmem:[%s167 + $0xc9] sm:$0xff]
      %v227 = vld [vmem:[%s167 + $0xd9] sm:$0xff]
      %v228 = vld [vmem:[%s167 + $0xe1] sm:$0xff]
      %v229 = vld [vmem:[%s167 + $0xf1] sm:$0xff]
      %v230 = vld [vmem:[%s167 + $0xf9] sm:$0xff]
      %v231 = vld [vmem:[%s167 + $0x109] sm:$0xff]
      %v232 = vld [vmem:[%s167 + $0x111] sm:$0xff]
      %v233 = vld [vmem:[%s167 + $0x121] sm:$0xff]
      %v234 = vld [vmem:[%s167 + $0x129] sm:$0xff]
      %v235 = vld [vmem:[%s167 + $0x139] sm:$0xff]
      %v236 = vld [vmem:[%s167 + $0x141] sm:$0xff]
      %v237 = vld [vmem:[%s167 + $0x151] sm:$0xff]
      %v238 = vld [vmem:[%s167 + $0x159] sm:$0xff]
      %v239 = vld [vmem:[%s167 + $0x169] sm:$0xff]
      %v240 = vld [vmem:[%s167 + $0x171] sm:$0xff]
      %s241 = scalar_lea.vmem %s1, 32
      %v242 = vld [vmem:[%s241] sm:$0xff]
      %v243 = vld [vmem:[%s241 + $0x8] sm:$0xff]
      %v244 = vld [vmem:[%s241 + $0x10] sm:$0xff]
      %v245 = vld [vmem:[%s241 + $0x18] sm:$0xff]
      %vm246 = vcmask 261120
      %v248 = vsel %vm246, %v209, 0
      %v251 = vsel %vm246, %v210, 0
      %v254 = vsel %vm246, %v211, 0
      %v257 = vsel %vm246, %v212, 0
      %v260 = vsel %vm246, %v213, 0
      %v263 = vsel %vm246, %v214, 0
      %v266 = vsel %vm246, %v215, 0
      %v269 = vsel %vm246, %v216, 0
      %v272 = vsel %vm246, %v217, 0
      %v275 = vsel %vm246, %v218, 0
      %v278 = vsel %vm246, %v219, 0
      %v281 = vsel %vm246, %v220, 0
      %v284 = vsel %vm246, %v221, 0
      %v287 = vsel %vm246, %v222, 0
      %v290 = vsel %vm246, %v223, 0
      %v293 = vsel %vm246, %v224, 0
      %v296 = vsel %vm246, %v225, 0
      %v299 = vsel %vm246, %v226, 0
      %v302 = vsel %vm246, %v227, 0
      %v305 = vsel %vm246, %v228, 0
      %v308 = vsel %vm246, %v229, 0
      %v311 = vsel %vm246, %v230, 0
      %v314 = vsel %vm246, %v231, 0
      %v317 = vsel %vm246, %v232, 0
      %v320 = vsel %vm246, %v233, 0
      %v323 = vsel %vm246, %v234, 0
      %v326 = vsel %vm246, %v235, 0
      %v329 = vsel %vm246, %v236, 0
      %v332 = vsel %vm246, %v237, 0
      %v335 = vsel %vm246, %v238, 0
      %v338 = vsel %vm246, %v239, 0
      %v341 = vsel %vm246, %v240, 0
      %343 = vmatpush.msra.mxu0 0.0
      %344 = vmatpush.msra.mxu0 0.0
      %345 = vmatpush.msra.mxu0 0.0
      %346 = vmatpush.msra.mxu0 0.0
      %347 = vmatpush.msra.mxu0 0.0
      %348 = vmatpush.msra.mxu0 0.0
      %349 = vmatpush.msra.mxu0 0.0
      %350 = vmatpush.msra.mxu0 0.0
      %351 = vmatpush.msra.mxu0 0.0
      %352 = vmatpush.msra.mxu0 0.0
      %353 = vmatpush.msra.mxu0 0.0
      %354 = vmatpush.msra.mxu0 0.0
      %355 = vmatpush.msra.mxu0 %v245
      %356 = vmatpush.msra.mxu0 %v244
      %357 = vmatpush.msra.mxu0 %v243
      %358 = vmatpush.msra.mxu0 %v242
      %359 = vmatmul.f32.gmra.mxu0 %v248
      %v360 = vpop.f32.mrf.mxu0
      %v361 = vadd.f32 0.0, %v360
      %362 = vmatmul.f32.gmra.mxu0 %v251
      %v363 = vpop.f32.mrf.mxu0
      %v364 = vadd.f32 0.0, %v363
      %365 = vmatmul.f32.gmra.mxu0 %v254
      %v366 = vpop.f32.mrf.mxu0
      %v367 = vadd.f32 0.0, %v366
      %368 = vmatmul.f32.gmra.mxu0 %v257
      %v369 = vpop.f32.mrf.mxu0
      %v370 = vadd.f32 0.0, %v369
      %371 = vmatmul.f32.gmra.mxu0 %v260
      %v372 = vpop.f32.mrf.mxu0
      %v373 = vadd.f32 0.0, %v372
      %374 = vmatmul.f32.gmra.mxu0 %v263
      %v375 = vpop.f32.mrf.mxu0
      %v376 = vadd.f32 0.0, %v375
      %377 = vmatmul.f32.gmra.mxu0 %v266
      %v378 = vpop.f32.mrf.mxu0
      %v379 = vadd.f32 0.0, %v378
      %380 = vmatmul.f32.gmra.mxu0 %v269
      %v381 = vpop.f32.mrf.mxu0
      %v382 = vadd.f32 0.0, %v381
      %383 = vmatmul.f32.gmra.mxu0 %v272
      %v384 = vpop.f32.mrf.mxu0
      %v385 = vadd.f32 0.0, %v384
      %386 = vmatmul.f32.gmra.mxu0 %v275
      %v387 = vpop.f32.mrf.mxu0
      %v388 = vadd.f32 0.0, %v387
      %389 = vmatmul.f32.gmra.mxu0 %v278
      %v390 = vpop.f32.mrf.mxu0
      %v391 = vadd.f32 0.0, %v390
      %392 = vmatmul.f32.gmra.mxu0 %v281
      %v393 = vpop.f32.mrf.mxu0
      %v394 = vadd.f32 0.0, %v393
      %395 = vmatmul.f32.gmra.mxu0 %v284
      %v396 = vpop.f32.mrf.mxu0
      %v397 = vadd.f32 0.0, %v396
      %398 = vmatmul.f32.gmra.mxu0 %v287
      %v399 = vpop.f32.mrf.mxu0
      %v400 = vadd.f32 0.0, %v399
      %401 = vmatmul.f32.gmra.mxu0 %v290
      %v402 = vpop.f32.mrf.mxu0
      %v403 = vadd.f32 0.0, %v402
      %404 = vmatmul.f32.gmra.mxu0 %v293
      %v405 = vpop.f32.mrf.mxu0
      %v406 = vadd.f32 0.0, %v405
      %407 = vmatmul.f32.gmra.mxu0 %v296
      %v408 = vpop.f32.mrf.mxu0
      %v409 = vadd.f32 0.0, %v408
      %410 = vmatmul.f32.gmra.mxu0 %v299
      %v411 = vpop.f32.mrf.mxu0
      %v412 = vadd.f32 0.0, %v411
      %413 = vmatmul.f32.gmra.mxu0 %v302
      %v414 = vpop.f32.mrf.mxu0
      %v415 = vadd.f32 0.0, %v414
      %416 = vmatmul.f32.gmra.mxu0 %v305
      %v417 = vpop.f32.mrf.mxu0
      %v418 = vadd.f32 0.0, %v417
      %419 = vmatmul.f32.gmra.mxu0 %v308
      %v420 = vpop.f32.mrf.mxu0
      %v421 = vadd.f32 0.0, %v420
      %422 = vmatmul.f32.gmra.mxu0 %v311
      %v423 = vpop.f32.mrf.mxu0
      %v424 = vadd.f32 0.0, %v423
      %425 = vmatmul.f32.gmra.mxu0 %v314
      %v426 = vpop.f32.mrf.mxu0
      %v427 = vadd.f32 0.0, %v426
      %428 = vmatmul.f32.gmra.mxu0 %v317
      %v429 = vpop.f32.mrf.mxu0
      %v430 = vadd.f32 0.0, %v429
      %431 = vmatmul.f32.gmra.mxu0 %v320
      %v432 = vpop.f32.mrf.mxu0
      %v433 = vadd.f32 0.0, %v432
      %434 = vmatmul.f32.gmra.mxu0 %v323
      %v435 = vpop.f32.mrf.mxu0
      %v436 = vadd.f32 0.0, %v435
      %437 = vmatmul.f32.gmra.mxu0 %v326
      %v438 = vpop.f32.mrf.mxu0
      %v439 = vadd.f32 0.0, %v438
      %440 = vmatmul.f32.gmra.mxu0 %v329
      %v441 = vpop.f32.mrf.mxu0
      %v442 = vadd.f32 0.0, %v441
      %443 = vmatmul.f32.gmra.mxu0 %v332
      %v444 = vpop.f32.mrf.mxu0
      %v445 = vadd.f32 0.0, %v444
      %446 = vmatmul.f32.gmra.mxu0 %v335
      %v447 = vpop.f32.mrf.mxu0
      %v448 = vadd.f32 0.0, %v447
      %449 = vmatmul.f32.gmra.mxu0 %v338
      %v450 = vpop.f32.mrf.mxu0
      %v451 = vadd.f32 0.0, %v450
      %452 = vmatmul.f32.gmra.mxu0 %v341
      %v453 = vpop.f32.mrf.mxu0
      %v454 = vadd.f32 0.0, %v453
      %455 = vdwg.mxu0
      %v457 = vsel %vm246, %v173, 0
      %v460 = vsel %vm246, %v174, 0
      %v463 = vsel %vm246, %v175, 0
      %v466 = vsel %vm246, %v176, 0
      %v469 = vsel %vm246, %v177, 0
      %v472 = vsel %vm246, %v178, 0
      %v475 = vsel %vm246, %v179, 0
      %v478 = vsel %vm246, %v180, 0
      %v481 = vsel %vm246, %v181, 0
      %v484 = vsel %vm246, %v182, 0
      %v487 = vsel %vm246, %v183, 0
      %v490 = vsel %vm246, %v184, 0
      %v493 = vsel %vm246, %v185, 0
      %v496 = vsel %vm246, %v186, 0
      %v499 = vsel %vm246, %v187, 0
      %v502 = vsel %vm246, %v188, 0
      %v505 = vsel %vm246, %v189, 0
      %v508 = vsel %vm246, %v190, 0
      %v511 = vsel %vm246, %v191, 0
      %v514 = vsel %vm246, %v192, 0
      %v517 = vsel %vm246, %v193, 0
      %v520 = vsel %vm246, %v194, 0
      %v523 = vsel %vm246, %v195, 0
      %v526 = vsel %vm246, %v196, 0
      %v529 = vsel %vm246, %v197, 0
      %v532 = vsel %vm246, %v198, 0
      %v535 = vsel %vm246, %v199, 0
      %v538 = vsel %vm246, %v200, 0
      %v541 = vsel %vm246, %v201, 0
      %v544 = vsel %vm246, %v202, 0
      %v547 = vsel %vm246, %v203, 0
      %v550 = vsel %vm246, %v204, 0
      %552 = vmatpush.msra.mxu0 0.0
      %553 = vmatpush.msra.mxu0 0.0
      %554 = vmatpush.msra.mxu0 0.0
      %555 = vmatpush.msra.mxu0 0.0
      %556 = vmatpush.msra.mxu0 0.0
      %557 = vmatpush.msra.mxu0 0.0
      %558 = vmatpush.msra.mxu0 0.0
      %559 = vmatpush.msra.mxu0 0.0
      %560 = vmatpush.msra.mxu0 0.0
      %561 = vmatpush.msra.mxu0 0.0
      %562 = vmatpush.msra.mxu0 0.0
      %563 = vmatpush.msra.mxu0 0.0
      %564 = vmatpush.msra.mxu0 %v208
      %565 = vmatpush.msra.mxu0 %v207
      %566 = vmatpush.msra.mxu0 %v206
      %567 = vmatpush.msra.mxu0 %v205
      %568 = vmatmul.f32.gmra.mxu0 %v457
      %v569 = vpop.f32.mrf.mxu0
      %v570 = vadd.f32 %v361, %v569
      %571 = vmatmul.f32.gmra.mxu0 %v460
      %v572 = vpop.f32.mrf.mxu0
      %v573 = vadd.f32 %v364, %v572
      %574 = vmatmul.f32.gmra.mxu0 %v463
      %v575 = vpop.f32.mrf.mxu0
      %v576 = vadd.f32 %v367, %v575
      %577 = vmatmul.f32.gmra.mxu0 %v466
      %v578 = vpop.f32.mrf.mxu0
      %v579 = vadd.f32 %v370, %v578
      %580 = vmatmul.f32.gmra.mxu0 %v469
      %v581 = vpop.f32.mrf.mxu0
      %v582 = vadd.f32 %v373, %v581
      %583 = vmatmul.f32.gmra.mxu0 %v472
      %v584 = vpop.f32.mrf.mxu0
      %v585 = vadd.f32 %v376, %v584
      %586 = vmatmul.f32.gmra.mxu0 %v475
      %v587 = vpop.f32.mrf.mxu0
      %v588 = vadd.f32 %v379, %v587
      %589 = vmatmul.f32.gmra.mxu0 %v478
      %v590 = vpop.f32.mrf.mxu0
      %v591 = vadd.f32 %v382, %v590
      %592 = vmatmul.f32.gmra.mxu0 %v481
      %v593 = vpop.f32.mrf.mxu0
      %v594 = vadd.f32 %v385, %v593
      %595 = vmatmul.f32.gmra.mxu0 %v484
      %v596 = vpop.f32.mrf.mxu0
      %v597 = vadd.f32 %v388, %v596
      %598 = vmatmul.f32.gmra.mxu0 %v487
      %v599 = vpop.f32.mrf.mxu0
      %v600 = vadd.f32 %v391, %v599
      %601 = vmatmul.f32.gmra.mxu0 %v490
      %v602 = vpop.f32.mrf.mxu0
      %v603 = vadd.f32 %v394, %v602
      %604 = vmatmul.f32.gmra.mxu0 %v493
      %v605 = vpop.f32.mrf.mxu0
      %v606 = vadd.f32 %v397, %v605
      %607 = vmatmul.f32.gmra.mxu0 %v496
      %v608 = vpop.f32.mrf.mxu0
      %v609 = vadd.f32 %v400, %v608
      %610 = vmatmul.f32.gmra.mxu0 %v499
      %v611 = vpop.f32.mrf.mxu0
      %v612 = vadd.f32 %v403, %v611
      %613 = vmatmul.f32.gmra.mxu0 %v502
      %v614 = vpop.f32.mrf.mxu0
      %v615 = vadd.f32 %v406, %v614
      %616 = vmatmul.f32.gmra.mxu0 %v505
      %v617 = vpop.f32.mrf.mxu0
      %v618 = vadd.f32 %v409, %v617
      %619 = vmatmul.f32.gmra.mxu0 %v508
      %v620 = vpop.f32.mrf.mxu0
      %v621 = vadd.f32 %v412, %v620
      %622 = vmatmul.f32.gmra.mxu0 %v511
      %v623 = vpop.f32.mrf.mxu0
      %v624 = vadd.f32 %v415, %v623
      %625 = vmatmul.f32.gmra.mxu0 %v514
      %v626 = vpop.f32.mrf.mxu0
      %v627 = vadd.f32 %v418, %v626
      %628 = vmatmul.f32.gmra.mxu0 %v517
      %v629 = vpop.f32.mrf.mxu0
      %v630 = vadd.f32 %v421, %v629
      %631 = vmatmul.f32.gmra.mxu0 %v520
      %v632 = vpop.f32.mrf.mxu0
      %v633 = vadd.f32 %v424, %v632
      %634 = vmatmul.f32.gmra.mxu0 %v523
      %v635 = vpop.f32.mrf.mxu0
      %v636 = vadd.f32 %v427, %v635
      %637 = vmatmul.f32.gmra.mxu0 %v526
      %v638 = vpop.f32.mrf.mxu0
      %v639 = vadd.f32 %v430, %v638
      %640 = vmatmul.f32.gmra.mxu0 %v529
      %v641 = vpop.f32.mrf.mxu0
      %v642 = vadd.f32 %v433, %v641
      %643 = vmatmul.f32.gmra.mxu0 %v532
      %v644 = vpop.f32.mrf.mxu0
      %v645 = vadd.f32 %v436, %v644
      %646 = vmatmul.f32.gmra.mxu0 %v535
      %v647 = vpop.f32.mrf.mxu0
      %v648 = vadd.f32 %v439, %v647
      %649 = vmatmul.f32.gmra.mxu0 %v538
      %v650 = vpop.f32.mrf.mxu0
      %v651 = vadd.f32 %v442, %v650
      %652 = vmatmul.f32.gmra.mxu0 %v541
      %v653 = vpop.f32.mrf.mxu0
      %v654 = vadd.f32 %v445, %v653
      %655 = vmatmul.f32.gmra.mxu0 %v544
      %v656 = vpop.f32.mrf.mxu0
      %v657 = vadd.f32 %v448, %v656
      %658 = vmatmul.f32.gmra.mxu0 %v547
      %v659 = vpop.f32.mrf.mxu0
      %v660 = vadd.f32 %v451, %v659
      %661 = vmatmul.f32.gmra.mxu0 %v550
      %v662 = vpop.f32.mrf.mxu0
      %v663 = vadd.f32 %v454, %v662
      %664 = vdwg.mxu0
      %v665 = vld [vmem:[%s167 + $0x2] sm:$0xff]
      %v666 = vld [vmem:[%s167 + $0xa] sm:$0xff]
      %v667 = vld [vmem:[%s167 + $0x1a] sm:$0xff]
      %v668 = vld [vmem:[%s167 + $0x22] sm:$0xff]
      %v669 = vld [vmem:[%s167 + $0x32] sm:$0xff]
      %v670 = vld [vmem:[%s167 + $0x3a] sm:$0xff]
      %v671 = vld [vmem:[%s167 + $0x4a] sm:$0xff]
      %v672 = vld [vmem:[%s167 + $0x52] sm:$0xff]
      %v673 = vld [vmem:[%s167 + $0x62] sm:$0xff]
      %v674 = vld [vmem:[%s167 + $0x6a] sm:$0xff]
      %v675 = vld [vmem:[%s167 + $0x7a] sm:$0xff]
      %v676 = vld [vmem:[%s167 + $0x82] sm:$0xff]
      %v677 = vld [vmem:[%s167 + $0x92] sm:$0xff]
      %v678 = vld [vmem:[%s167 + $0x9a] sm:$0xff]
      %v679 = vld [vmem:[%s167 + $0xaa] sm:$0xff]
      %v680 = vld [vmem:[%s167 + $0xb2] sm:$0xff]
      %v681 = vld [vmem:[%s167 + $0xc2] sm:$0xff]
      %v682 = vld [vmem:[%s167 + $0xca] sm:$0xff]
      %v683 = vld [vmem:[%s167 + $0xda] sm:$0xff]
      %v684 = vld [vmem:[%s167 + $0xe2] sm:$0xff]
      %v685 = vld [vmem:[%s167 + $0xf2] sm:$0xff]
      %v686 = vld [vmem:[%s167 + $0xfa] sm:$0xff]
      %v687 = vld [vmem:[%s167 + $0x10a] sm:$0xff]
      %v688 = vld [vmem:[%s167 + $0x112] sm:$0xff]
      %v689 = vld [vmem:[%s167 + $0x122] sm:$0xff]
      %v690 = vld [vmem:[%s167 + $0x12a] sm:$0xff]
      %v691 = vld [vmem:[%s167 + $0x13a] sm:$0xff]
      %v692 = vld [vmem:[%s167 + $0x142] sm:$0xff]
      %v693 = vld [vmem:[%s167 + $0x152] sm:$0xff]
      %v694 = vld [vmem:[%s167 + $0x15a] sm:$0xff]
      %v695 = vld [vmem:[%s167 + $0x16a] sm:$0xff]
      %v696 = vld [vmem:[%s167 + $0x172] sm:$0xff]
      %s697 = scalar_lea.vmem %s1, 64
      %v698 = vld [vmem:[%s697] sm:$0xff]
      %v699 = vld [vmem:[%s697 + $0x8] sm:$0xff]
      %v700 = vld [vmem:[%s697 + $0x10] sm:$0xff]
      %v701 = vld [vmem:[%s697 + $0x18] sm:$0xff]
      %v703 = vsel %vm246, %v665, 0
      %v706 = vsel %vm246, %v666, 0
      %v709 = vsel %vm246, %v667, 0
      %v712 = vsel %vm246, %v668, 0
      %v715 = vsel %vm246, %v669, 0
      %v718 = vsel %vm246, %v670, 0
      %v721 = vsel %vm246, %v671, 0
      %v724 = vsel %vm246, %v672, 0
      %v727 = vsel %vm246, %v673, 0
      %v730 = vsel %vm246, %v674, 0
      %v733 = vsel %vm246, %v675, 0
      %v736 = vsel %vm246, %v676, 0
      %v739 = vsel %vm246, %v677, 0
      %v742 = vsel %vm246, %v678, 0
      %v745 = vsel %vm246, %v679, 0
      %v748 = vsel %vm246, %v680, 0
      %v751 = vsel %vm246, %v681, 0
      %v754 = vsel %vm246, %v682, 0
      %v757 = vsel %vm246, %v683, 0
      %v760 = vsel %vm246, %v684, 0
      %v763 = vsel %vm246, %v685, 0
      %v766 = vsel %vm246, %v686, 0
      %v769 = vsel %vm246, %v687, 0
      %v772 = vsel %vm246, %v688, 0
      %v775 = vsel %vm246, %v689, 0
      %v778 = vsel %vm246, %v690, 0
      %v781 = vsel %vm246, %v691, 0
      %v784 = vsel %vm246, %v692, 0
      %v787 = vsel %vm246, %v693, 0
      %v790 = vsel %vm246, %v694, 0
      %v793 = vsel %vm246, %v695, 0
      %v796 = vsel %vm246, %v696, 0
      %798 = vmatpush.msra.mxu0 0.0
      %799 = vmatpush.msra.mxu0 0.0
      %800 = vmatpush.msra.mxu0 0.0
      %801 = vmatpush.msra.mxu0 0.0
      %802 = vmatpush.msra.mxu0 0.0
      %803 = vmatpush.msra.mxu0 0.0
      %804 = vmatpush.msra.mxu0 0.0
      %805 = vmatpush.msra.mxu0 0.0
      %806 = vmatpush.msra.mxu0 0.0
      %807 = vmatpush.msra.mxu0 0.0
      %808 = vmatpush.msra.mxu0 0.0
      %809 = vmatpush.msra.mxu0 0.0
      %810 = vmatpush.msra.mxu0 %v701
      %811 = vmatpush.msra.mxu0 %v700
      %812 = vmatpush.msra.mxu0 %v699
      %813 = vmatpush.msra.mxu0 %v698
      %814 = vmatmul.f32.gmra.mxu0 %v703
      %v815 = vpop.f32.mrf.mxu0
      %v816 = vadd.f32 0.0, %v815
      %817 = vmatmul.f32.gmra.mxu0 %v706
      %v818 = vpop.f32.mrf.mxu0
      %v819 = vadd.f32 0.0, %v818
      %820 = vmatmul.f32.gmra.mxu0 %v709
      %v821 = vpop.f32.mrf.mxu0
      %v822 = vadd.f32 0.0, %v821
      %823 = vmatmul.f32.gmra.mxu0 %v712
      %v824 = vpop.f32.mrf.mxu0
      %v825 = vadd.f32 0.0, %v824
      %826 = vmatmul.f32.gmra.mxu0 %v715
      %v827 = vpop.f32.mrf.mxu0
      %v828 = vadd.f32 0.0, %v827
      %829 = vmatmul.f32.gmra.mxu0 %v718
      %v830 = vpop.f32.mrf.mxu0
      %v831 = vadd.f32 0.0, %v830
      %832 = vmatmul.f32.gmra.mxu0 %v721
      %v833 = vpop.f32.mrf.mxu0
      %v834 = vadd.f32 0.0, %v833
      %835 = vmatmul.f32.gmra.mxu0 %v724
      %v836 = vpop.f32.mrf.mxu0
      %v837 = vadd.f32 0.0, %v836
      %838 = vmatmul.f32.gmra.mxu0 %v727
      %v839 = vpop.f32.mrf.mxu0
      %v840 = vadd.f32 0.0, %v839
      %841 = vmatmul.f32.gmra.mxu0 %v730
      %v842 = vpop.f32.mrf.mxu0
      %v843 = vadd.f32 0.0, %v842
      %844 = vmatmul.f32.gmra.mxu0 %v733
      %v845 = vpop.f32.mrf.mxu0
      %v846 = vadd.f32 0.0, %v845
      %847 = vmatmul.f32.gmra.mxu0 %v736
      %v848 = vpop.f32.mrf.mxu0
      %v849 = vadd.f32 0.0, %v848
      %850 = vmatmul.f32.gmra.mxu0 %v739
      %v851 = vpop.f32.mrf.mxu0
      %v852 = vadd.f32 0.0, %v851
      %853 = vmatmul.f32.gmra.mxu0 %v742
      %v854 = vpop.f32.mrf.mxu0
      %v855 = vadd.f32 0.0, %v854
      %856 = vmatmul.f32.gmra.mxu0 %v745
      %v857 = vpop.f32.mrf.mxu0
      %v858 = vadd.f32 0.0, %v857
      %859 = vmatmul.f32.gmra.mxu0 %v748
      %v860 = vpop.f32.mrf.mxu0
      %v861 = vadd.f32 0.0, %v860
      %862 = vmatmul.f32.gmra.mxu0 %v751
      %v863 = vpop.f32.mrf.mxu0
      %v864 = vadd.f32 0.0, %v863
      %865 = vmatmul.f32.gmra.mxu0 %v754
      %v866 = vpop.f32.mrf.mxu0
      %v867 = vadd.f32 0.0, %v866
      %868 = vmatmul.f32.gmra.mxu0 %v757
      %v869 = vpop.f32.mrf.mxu0
      %v870 = vadd.f32 0.0, %v869
      %871 = vmatmul.f32.gmra.mxu0 %v760
      %v872 = vpop.f32.mrf.mxu0
      %v873 = vadd.f32 0.0, %v872
      %874 = vmatmul.f32.gmra.mxu0 %v763
      %v875 = vpop.f32.mrf.mxu0
      %v876 = vadd.f32 0.0, %v875
      %877 = vmatmul.f32.gmra.mxu0 %v766
      %v878 = vpop.f32.mrf.mxu0
      %v879 = vadd.f32 0.0, %v878
      %880 = vmatmul.f32.gmra.mxu0 %v769
      %v881 = vpop.f32.mrf.mxu0
      %v882 = vadd.f32 0.0, %v881
      %883 = vmatmul.f32.gmra.mxu0 %v772
      %v884 = vpop.f32.mrf.mxu0
      %v885 = vadd.f32 0.0, %v884
      %886 = vmatmul.f32.gmra.mxu0 %v775
      %v887 = vpop.f32.mrf.mxu0
      %v888 = vadd.f32 0.0, %v887
      %889 = vmatmul.f32.gmra.mxu0 %v778
      %v890 = vpop.f32.mrf.mxu0
      %v891 = vadd.f32 0.0, %v890
      %892 = vmatmul.f32.gmra.mxu0 %v781
      %v893 = vpop.f32.mrf.mxu0
      %v894 = vadd.f32 0.0, %v893
      %895 = vmatmul.f32.gmra.mxu0 %v784
      %v896 = vpop.f32.mrf.mxu0
      %v897 = vadd.f32 0.0, %v896
      %898 = vmatmul.f32.gmra.mxu0 %v787
      %v899 = vpop.f32.mrf.mxu0
      %v900 = vadd.f32 0.0, %v899
      %901 = vmatmul.f32.gmra.mxu0 %v790
      %v902 = vpop.f32.mrf.mxu0
      %v903 = vadd.f32 0.0, %v902
      %904 = vmatmul.f32.gmra.mxu0 %v793
      %v905 = vpop.f32.mrf.mxu0
      %v906 = vadd.f32 0.0, %v905
      %907 = vmatmul.f32.gmra.mxu0 %v796
      %v908 = vpop.f32.mrf.mxu0
      %v909 = vadd.f32 0.0, %v908
      %910 = vdwg.mxu0
      %v911 = vadd.f32 %v570, %v816
      %v912 = vadd.f32 %v573, %v819
      %v913 = vadd.f32 %v576, %v822
      %v914 = vadd.f32 %v579, %v825
      %v915 = vadd.f32 %v582, %v828
      %v916 = vadd.f32 %v585, %v831
      %v917 = vadd.f32 %v588, %v834
      %v918 = vadd.f32 %v591, %v837
      %v919 = vadd.f32 %v594, %v840
      %v920 = vadd.f32 %v597, %v843
      %v921 = vadd.f32 %v600, %v846
      %v922 = vadd.f32 %v603, %v849
      %v923 = vadd.f32 %v606, %v852
      %v924 = vadd.f32 %v609, %v855
      %v925 = vadd.f32 %v612, %v858
      %v926 = vadd.f32 %v615, %v861
      %v927 = vadd.f32 %v618, %v864
      %v928 = vadd.f32 %v621, %v867
      %v929 = vadd.f32 %v624, %v870
      %v930 = vadd.f32 %v627, %v873
      %v931 = vadd.f32 %v630, %v876
      %v932 = vadd.f32 %v633, %v879
      %v933 = vadd.f32 %v636, %v882
      %v934 = vadd.f32 %v639, %v885
      %v935 = vadd.f32 %v642, %v888
      %v936 = vadd.f32 %v645, %v891
      %v937 = vadd.f32 %v648, %v894
      %v938 = vadd.f32 %v651, %v897
      %v939 = vadd.f32 %v654, %v900
      %v940 = vadd.f32 %v657, %v903
      %v941 = vadd.f32 %v660, %v906
      %v942 = vadd.f32 %v663, %v909
      %s943 = scalar_lea.vmem %s167, 24
      %v944 = vld [vmem:[%s943] sm:$0xff]
      %v945 = vld [vmem:[%s943 + $0x8] sm:$0xff]
      %v946 = vld [vmem:[%s943 + $0x18] sm:$0xff]
      %v947 = vld [vmem:[%s943 + $0x20] sm:$0xff]
      %v948 = vld [vmem:[%s943 + $0x30] sm:$0xff]
      %v949 = vld [vmem:[%s943 + $0x38] sm:$0xff]
      %v950 = vld [vmem:[%s943 + $0x48] sm:$0xff]
      %v951 = vld [vmem:[%s943 + $0x50] sm:$0xff]
      %v952 = vld [vmem:[%s943 + $0x60] sm:$0xff]
      %v953 = vld [vmem:[%s943 + $0x68] sm:$0xff]
      %v954 = vld [vmem:[%s943 + $0x78] sm:$0xff]
      %v955 = vld [vmem:[%s943 + $0x80] sm:$0xff]
      %v956 = vld [vmem:[%s943 + $0x90] sm:$0xff]
      %v957 = vld [vmem:[%s943 + $0x98] sm:$0xff]
      %v958 = vld [vmem:[%s943 + $0xa8] sm:$0xff]
      %v959 = vld [vmem:[%s943 + $0xb0] sm:$0xff]
      %v960 = vld [vmem:[%s943 + $0xc0] sm:$0xff]
      %v961 = vld [vmem:[%s943 + $0xc8] sm:$0xff]
      %v962 = vld [vmem:[%s943 + $0xd8] sm:$0xff]
      %v963 = vld [vmem:[%s943 + $0xe0] sm:$0xff]
      %v964 = vld [vmem:[%s943 + $0xf0] sm:$0xff]
      %v965 = vld [vmem:[%s943 + $0xf8] sm:$0xff]
      %v966 = vld [vmem:[%s943 + $0x108] sm:$0xff]
      %v967 = vld [vmem:[%s943 + $0x110] sm:$0xff]
      %v968 = vld [vmem:[%s943 + $0x120] sm:$0xff]
      %v969 = vld [vmem:[%s943 + $0x128] sm:$0xff]
      %v970 = vld [vmem:[%s943 + $0x138] sm:$0xff]
      %v971 = vld [vmem:[%s943 + $0x140] sm:$0xff]
      %v972 = vld [vmem:[%s943 + $0x150] sm:$0xff]
      %v973 = vld [vmem:[%s943 + $0x158] sm:$0xff]
      %v974 = vld [vmem:[%s943 + $0x168] sm:$0xff]
      %v975 = vld [vmem:[%s943 + $0x170] sm:$0xff]
      %s976 = scalar_lea.vmem %s1, 96
      %v977 = vld [vmem:[%s976] sm:$0xff]
      %v978 = vld [vmem:[%s976 + $0x8] sm:$0xff]
      %v979 = vld [vmem:[%s976 + $0x10] sm:$0xff]
      %v980 = vld [vmem:[%s976 + $0x18] sm:$0xff]
      %v982 = vsel %vm246, %v944, 0
      %v985 = vsel %vm246, %v945, 0
      %v988 = vsel %vm246, %v946, 0
      %v991 = vsel %vm246, %v947, 0
      %v994 = vsel %vm246, %v948, 0
      %v997 = vsel %vm246, %v949, 0
      %v1000 = vsel %vm246, %v950, 0
      %v1003 = vsel %vm246, %v951, 0
      %v1006 = vsel %vm246, %v952, 0
      %v1009 = vsel %vm246, %v953, 0
      %v1012 = vsel %vm246, %v954, 0
      %v1015 = vsel %vm246, %v955, 0
      %v1018 = vsel %vm246, %v956, 0
      %v1021 = vsel %vm246, %v957, 0
      %v1024 = vsel %vm246, %v958, 0
      %v1027 = vsel %vm246, %v959, 0
      %v1030 = vsel %vm246, %v960, 0
      %v1033 = vsel %vm246, %v961, 0
      %v1036 = vsel %vm246, %v962, 0
      %v1039 = vsel %vm246, %v963, 0
      %v1042 = vsel %vm246, %v964, 0
      %v1045 = vsel %vm246, %v965, 0
      %v1048 = vsel %vm246, %v966, 0
      %v1051 = vsel %vm246, %v967, 0
      %v1054 = vsel %vm246, %v968, 0
      %v1057 = vsel %vm246, %v969, 0
      %v1060 = vsel %vm246, %v970, 0
      %v1063 = vsel %vm246, %v971, 0
      %v1066 = vsel %vm246, %v972, 0
      %v1069 = vsel %vm246, %v973, 0
      %v1072 = vsel %vm246, %v974, 0
      %v1075 = vsel %vm246, %v975, 0
      %1077 = vmatpush.msra.mxu0 0.0
      %1078 = vmatpush.msra.mxu0 0.0
      %1079 = vmatpush.msra.mxu0 0.0
      %1080 = vmatpush.msra.mxu0 0.0
      %1081 = vmatpush.msra.mxu0 0.0
      %1082 = vmatpush.msra.mxu0 0.0
      %1083 = vmatpush.msra.mxu0 0.0
      %1084 = vmatpush.msra.mxu0 0.0
      %1085 = vmatpush.msra.mxu0 0.0
      %1086 = vmatpush.msra.mxu0 0.0
      %1087 = vmatpush.msra.mxu0 0.0
      %1088 = vmatpush.msra.mxu0 0.0
      %1089 = vmatpush.msra.mxu0 %v980
      %1090 = vmatpush.msra.mxu0 %v979
      %1091 = vmatpush.msra.mxu0 %v978
      %1092 = vmatpush.msra.mxu0 %v977
      %1093 = vmatmul.f32.gmra.mxu0 %v982
      %v1094 = vpop.f32.mrf.mxu0
      %v1095 = vadd.f32 0.0, %v1094
      %1096 = vmatmul.f32.gmra.mxu0 %v985
      %v1097 = vpop.f32.mrf.mxu0
      %v1098 = vadd.f32 0.0, %v1097
      %1099 = vmatmul.f32.gmra.mxu0 %v988
      %v1100 = vpop.f32.mrf.mxu0
      %v1101 = vadd.f32 0.0, %v1100
      %1102 = vmatmul.f32.gmra.mxu0 %v991
      %v1103 = vpop.f32.mrf.mxu0
      %v1104 = vadd.f32 0.0, %v1103
      %1105 = vmatmul.f32.gmra.mxu0 %v994
      %v1106 = vpop.f32.mrf.mxu0
      %v1107 = vadd.f32 0.0, %v1106
      %1108 = vmatmul.f32.gmra.mxu0 %v997
      %v1109 = vpop.f32.mrf.mxu0
      %v1110 = vadd.f32 0.0, %v1109
      %1111 = vmatmul.f32.gmra.mxu0 %v1000
      %v1112 = vpop.f32.mrf.mxu0
      %v1113 = vadd.f32 0.0, %v1112
      %1114 = vmatmul.f32.gmra.mxu0 %v1003
      %v1115 = vpop.f32.mrf.mxu0
      %v1116 = vadd.f32 0.0, %v1115
      %1117 = vmatmul.f32.gmra.mxu0 %v1006
      %v1118 = vpop.f32.mrf.mxu0
      %v1119 = vadd.f32 0.0, %v1118
      %1120 = vmatmul.f32.gmra.mxu0 %v1009
      %v1121 = vpop.f32.mrf.mxu0
      %v1122 = vadd.f32 0.0, %v1121
      %1123 = vmatmul.f32.gmra.mxu0 %v1012
      %v1124 = vpop.f32.mrf.mxu0
      %v1125 = vadd.f32 0.0, %v1124
      %1126 = vmatmul.f32.gmra.mxu0 %v1015
      %v1127 = vpop.f32.mrf.mxu0
      %v1128 = vadd.f32 0.0, %v1127
      %1129 = vmatmul.f32.gmra.mxu0 %v1018
      %v1130 = vpop.f32.mrf.mxu0
      %v1131 = vadd.f32 0.0, %v1130
      %1132 = vmatmul.f32.gmra.mxu0 %v1021
      %v1133 = vpop.f32.mrf.mxu0
      %v1134 = vadd.f32 0.0, %v1133
      %1135 = vmatmul.f32.gmra.mxu0 %v1024
      %v1136 = vpop.f32.mrf.mxu0
      %v1137 = vadd.f32 0.0, %v1136
      %1138 = vmatmul.f32.gmra.mxu0 %v1027
      %v1139 = vpop.f32.mrf.mxu0
      %v1140 = vadd.f32 0.0, %v1139
      %1141 = vmatmul.f32.gmra.mxu0 %v1030
      %v1142 = vpop.f32.mrf.mxu0
      %v1143 = vadd.f32 0.0, %v1142
      %1144 = vmatmul.f32.gmra.mxu0 %v1033
      %v1145 = vpop.f32.mrf.mxu0
      %v1146 = vadd.f32 0.0, %v1145
      %1147 = vmatmul.f32.gmra.mxu0 %v1036
      %v1148 = vpop.f32.mrf.mxu0
      %v1149 = vadd.f32 0.0, %v1148
      %1150 = vmatmul.f32.gmra.mxu0 %v1039
      %v1151 = vpop.f32.mrf.mxu0
      %v1152 = vadd.f32 0.0, %v1151
      %1153 = vmatmul.f32.gmra.mxu0 %v1042
      %v1154 = vpop.f32.mrf.mxu0
      %v1155 = vadd.f32 0.0, %v1154
      %1156 = vmatmul.f32.gmra.mxu0 %v1045
      %v1157 = vpop.f32.mrf.mxu0
      %v1158 = vadd.f32 0.0, %v1157
      %1159 = vmatmul.f32.gmra.mxu0 %v1048
      %v1160 = vpop.f32.mrf.mxu0
      %v1161 = vadd.f32 0.0, %v1160
      %1162 = vmatmul.f32.gmra.mxu0 %v1051
      %v1163 = vpop.f32.mrf.mxu0
      %v1164 = vadd.f32 0.0, %v1163
      %1165 = vmatmul.f32.gmra.mxu0 %v1054
      %v1166 = vpop.f32.mrf.mxu0
      %v1167 = vadd.f32 0.0, %v1166
      %1168 = vmatmul.f32.gmra.mxu0 %v1057
      %v1169 = vpop.f32.mrf.mxu0
      %v1170 = vadd.f32 0.0, %v1169
      %1171 = vmatmul.f32.gmra.mxu0 %v1060
      %v1172 = vpop.f32.mrf.mxu0
      %v1173 = vadd.f32 0.0, %v1172
      %1174 = vmatmul.f32.gmra.mxu0 %v1063
      %v1175 = vpop.f32.mrf.mxu0
      %v1176 = vadd.f32 0.0, %v1175
      %1177 = vmatmul.f32.gmra.mxu0 %v1066
      %v1178 = vpop.f32.mrf.mxu0
      %v1179 = vadd.f32 0.0, %v1178
      %1180 = vmatmul.f32.gmra.mxu0 %v1069
      %v1181 = vpop.f32.mrf.mxu0
      %v1182 = vadd.f32 0.0, %v1181
      %1183 = vmatmul.f32.gmra.mxu0 %v1072
      %v1184 = vpop.f32.mrf.mxu0
      %v1185 = vadd.f32 0.0, %v1184
      %1186 = vmatmul.f32.gmra.mxu0 %v1075
      %v1187 = vpop.f32.mrf.mxu0
      %v1188 = vadd.f32 0.0, %v1187
      %1189 = vdwg.mxu0
      %v1190 = vadd.f32 %v911, %v1095
      %v1191 = vadd.f32 %v912, %v1098
      %v1192 = vadd.f32 %v913, %v1101
      %v1193 = vadd.f32 %v914, %v1104
      %v1194 = vadd.f32 %v915, %v1107
      %v1195 = vadd.f32 %v916, %v1110
      %v1196 = vadd.f32 %v917, %v1113
      %v1197 = vadd.f32 %v918, %v1116
      %v1198 = vadd.f32 %v919, %v1119
      %v1199 = vadd.f32 %v920, %v1122
      %v1200 = vadd.f32 %v921, %v1125
      %v1201 = vadd.f32 %v922, %v1128
      %v1202 = vadd.f32 %v923, %v1131
      %v1203 = vadd.f32 %v924, %v1134
      %v1204 = vadd.f32 %v925, %v1137
      %v1205 = vadd.f32 %v926, %v1140
      %v1206 = vadd.f32 %v927, %v1143
      %v1207 = vadd.f32 %v928, %v1146
      %v1208 = vadd.f32 %v929, %v1149
      %v1209 = vadd.f32 %v930, %v1152
      %v1210 = vadd.f32 %v931, %v1155
      %v1211 = vadd.f32 %v932, %v1158
      %v1212 = vadd.f32 %v933, %v1161
      %v1213 = vadd.f32 %v934, %v1164
      %v1214 = vadd.f32 %v935, %v1167
      %v1215 = vadd.f32 %v936, %v1170
      %v1216 = vadd.f32 %v937, %v1173
      %v1217 = vadd.f32 %v938, %v1176
      %v1218 = vadd.f32 %v939, %v1179
      %v1219 = vadd.f32 %v940, %v1182
      %v1220 = vadd.f32 %v941, %v1185
      %v1221 = vadd.f32 %v942, %v1188
      %v1222 = vld [vmem:[%s943 + $0x1] sm:$0xff]
      %v1223 = vld [vmem:[%s943 + $0x9] sm:$0xff]
      %v1224 = vld [vmem:[%s943 + $0x19] sm:$0xff]
      %v1225 = vld [vmem:[%s943 + $0x21] sm:$0xff]
      %v1226 = vld [vmem:[%s943 + $0x31] sm:$0xff]
      %v1227 = vld [vmem:[%s943 + $0x39] sm:$0xff]
      %v1228 = vld [vmem:[%s943 + $0x49] sm:$0xff]
      %v1229 = vld [vmem:[%s943 + $0x51] sm:$0xff]
      %v1230 = vld [vmem:[%s943 + $0x61] sm:$0xff]
      %v1231 = vld [vmem:[%s943 + $0x69] sm:$0xff]
      %v1232 = vld [vmem:[%s943 + $0x79] sm:$0xff]
      %v1233 = vld [vmem:[%s943 + $0x81] sm:$0xff]
      %v1234 = vld [vmem:[%s943 + $0x91] sm:$0xff]
      %v1235 = vld [vmem:[%s943 + $0x99] sm:$0xff]
      %v1236 = vld [vmem:[%s943 + $0xa9] sm:$0xff]
      %v1237 = vld [vmem:[%s943 + $0xb1] sm:$0xff]
      %v1238 = vld [vmem:[%s943 + $0xc1] sm:$0xff]
      %v1239 = vld [vmem:[%s943 + $0xc9] sm:$0xff]
      %v1240 = vld [vmem:[%s943 + $0xd9] sm:$0xff]
      %v1241 = vld [vmem:[%s943 + $0xe1] sm:$0xff]
      %v1242 = vld [vmem:[%s943 + $0xf1] sm:$0xff]
      %v1243 = vld [vmem:[%s943 + $0xf9] sm:$0xff]
      %v1244 = vld [vmem:[%s943 + $0x109] sm:$0xff]
      %v1245 = vld [vmem:[%s943 + $0x111] sm:$0xff]
      %v1246 = vld [vmem:[%s943 + $0x121] sm:$0xff]
      %v1247 = vld [vmem:[%s943 + $0x129] sm:$0xff]
      %v1248 = vld [vmem:[%s943 + $0x139] sm:$0xff]
      %v1249 = vld [vmem:[%s943 + $0x141] sm:$0xff]
      %v1250 = vld [vmem:[%s943 + $0x151] sm:$0xff]
      %v1251 = vld [vmem:[%s943 + $0x159] sm:$0xff]
      %v1252 = vld [vmem:[%s943 + $0x169] sm:$0xff]
      %v1253 = vld [vmem:[%s943 + $0x171] sm:$0xff]
      %s1254 = scalar_lea.vmem %s1, 128
      %v1255 = vld [vmem:[%s1254] sm:$0xff]
      %v1256 = vld [vmem:[%s1254 + $0x8] sm:$0xff]
      %v1257 = vld [vmem:[%s1254 + $0x10] sm:$0xff]
      %v1258 = vld [vmem:[%s1254 + $0x18] sm:$0xff]
      %v1260 = vsel %vm246, %v1222, 0
      %v1263 = vsel %vm246, %v1223, 0
      %v1266 = vsel %vm246, %v1224, 0
      %v1269 = vsel %vm246, %v1225, 0
      %v1272 = vsel %vm246, %v1226, 0
      %v1275 = vsel %vm246, %v1227, 0
      %v1278 = vsel %vm246, %v1228, 0
      %v1281 = vsel %vm246, %v1229, 0
      %v1284 = vsel %vm246, %v1230, 0
      %v1287 = vsel %vm246, %v1231, 0
      %v1290 = vsel %vm246, %v1232, 0
      %v1293 = vsel %vm246, %v1233, 0
      %v1296 = vsel %vm246, %v1234, 0
      %v1299 = vsel %vm246, %v1235, 0
      %v1302 = vsel %vm246, %v1236, 0
      %v1305 = vsel %vm246, %v1237, 0
      %v1308 = vsel %vm246, %v1238, 0
      %v1311 = vsel %vm246, %v1239, 0
      %v1314 = vsel %vm246, %v1240, 0
      %v1317 = vsel %vm246, %v1241, 0
      %v1320 = vsel %vm246, %v1242, 0
      %v1323 = vsel %vm246, %v1243, 0
      %v1326 = vsel %vm246, %v1244, 0
      %v1329 = vsel %vm246, %v1245, 0
      %v1332 = vsel %vm246, %v1246, 0
      %v1335 = vsel %vm246, %v1247, 0
      %v1338 = vsel %vm246, %v1248, 0
      %v1341 = vsel %vm246, %v1249, 0
      %v1344 = vsel %vm246, %v1250, 0
      %v1347 = vsel %vm246, %v1251, 0
      %v1350 = vsel %vm246, %v1252, 0
      %v1353 = vsel %vm246, %v1253, 0
      %1355 = vmatpush.msra.mxu0 0.0
      %1356 = vmatpush.msra.mxu0 0.0
      %1357 = vmatpush.msra.mxu0 0.0
      %1358 = vmatpush.msra.mxu0 0.0
      %1359 = vmatpush.msra.mxu0 0.0
      %1360 = vmatpush.msra.mxu0 0.0
      %1361 = vmatpush.msra.mxu0 0.0
      %1362 = vmatpush.msra.mxu0 0.0
      %1363 = vmatpush.msra.mxu0 0.0
      %1364 = vmatpush.msra.mxu0 0.0
      %1365 = vmatpush.msra.mxu0 0.0
      %1366 = vmatpush.msra.mxu0 0.0
      %1367 = vmatpush.msra.mxu0 %v1258
      %1368 = vmatpush.msra.mxu0 %v1257
      %1369 = vmatpush.msra.mxu0 %v1256
      %1370 = vmatpush.msra.mxu0 %v1255
      %1371 = vmatmul.f32.gmra.mxu0 %v1260
      %v1372 = vpop.f32.mrf.mxu0
      %v1373 = vadd.f32 0.0, %v1372
      %1374 = vmatmul.f32.gmra.mxu0 %v1263
      %v1375 = vpop.f32.mrf.mxu0
      %v1376 = vadd.f32 0.0, %v1375
      %1377 = vmatmul.f32.gmra.mxu0 %v1266
      %v1378 = vpop.f32.mrf.mxu0
      %v1379 = vadd.f32 0.0, %v1378
      %1380 = vmatmul.f32.gmra.mxu0 %v1269
      %v1381 = vpop.f32.mrf.mxu0
      %v1382 = vadd.f32 0.0, %v1381
      %1383 = vmatmul.f32.gmra.mxu0 %v1272
      %v1384 = vpop.f32.mrf.mxu0
      %v1385 = vadd.f32 0.0, %v1384
      %1386 = vmatmul.f32.gmra.mxu0 %v1275
      %v1387 = vpop.f32.mrf.mxu0
      %v1388 = vadd.f32 0.0, %v1387
      %1389 = vmatmul.f32.gmra.mxu0 %v1278
      %v1390 = vpop.f32.mrf.mxu0
      %v1391 = vadd.f32 0.0, %v1390
      %1392 = vmatmul.f32.gmra.mxu0 %v1281
      %v1393 = vpop.f32.mrf.mxu0
      %v1394 = vadd.f32 0.0, %v1393
      %1395 = vmatmul.f32.gmra.mxu0 %v1284
      %v1396 = vpop.f32.mrf.mxu0
      %v1397 = vadd.f32 0.0, %v1396
      %1398 = vmatmul.f32.gmra.mxu0 %v1287
      %v1399 = vpop.f32.mrf.mxu0
      %v1400 = vadd.f32 0.0, %v1399
      %1401 = vmatmul.f32.gmra.mxu0 %v1290
      %v1402 = vpop.f32.mrf.mxu0
      %v1403 = vadd.f32 0.0, %v1402
      %1404 = vmatmul.f32.gmra.mxu0 %v1293
      %v1405 = vpop.f32.mrf.mxu0
      %v1406 = vadd.f32 0.0, %v1405
      %1407 = vmatmul.f32.gmra.mxu0 %v1296
      %v1408 = vpop.f32.mrf.mxu0
      %v1409 = vadd.f32 0.0, %v1408
      %1410 = vmatmul.f32.gmra.mxu0 %v1299
      %v1411 = vpop.f32.mrf.mxu0
      %v1412 = vadd.f32 0.0, %v1411
      %1413 = vmatmul.f32.gmra.mxu0 %v1302
      %v1414 = vpop.f32.mrf.mxu0
      %v1415 = vadd.f32 0.0, %v1414
      %1416 = vmatmul.f32.gmra.mxu0 %v1305
      %v1417 = vpop.f32.mrf.mxu0
      %v1418 = vadd.f32 0.0, %v1417
      %1419 = vmatmul.f32.gmra.mxu0 %v1308
      %v1420 = vpop.f32.mrf.mxu0
      %v1421 = vadd.f32 0.0, %v1420
      %1422 = vmatmul.f32.gmra.mxu0 %v1311
      %v1423 = vpop.f32.mrf.mxu0
      %v1424 = vadd.f32 0.0, %v1423
      %1425 = vmatmul.f32.gmra.mxu0 %v1314
      %v1426 = vpop.f32.mrf.mxu0
      %v1427 = vadd.f32 0.0, %v1426
      %1428 = vmatmul.f32.gmra.mxu0 %v1317
      %v1429 = vpop.f32.mrf.mxu0
      %v1430 = vadd.f32 0.0, %v1429
      %1431 = vmatmul.f32.gmra.mxu0 %v1320
      %v1432 = vpop.f32.mrf.mxu0
      %v1433 = vadd.f32 0.0, %v1432
      %1434 = vmatmul.f32.gmra.mxu0 %v1323
      %v1435 = vpop.f32.mrf.mxu0
      %v1436 = vadd.f32 0.0, %v1435
      %1437 = vmatmul.f32.gmra.mxu0 %v1326
      %v1438 = vpop.f32.mrf.mxu0
      %v1439 = vadd.f32 0.0, %v1438
      %1440 = vmatmul.f32.gmra.mxu0 %v1329
      %v1441 = vpop.f32.mrf.mxu0
      %v1442 = vadd.f32 0.0, %v1441
      %1443 = vmatmul.f32.gmra.mxu0 %v1332
      %v1444 = vpop.f32.mrf.mxu0
      %v1445 = vadd.f32 0.0, %v1444
      %1446 = vmatmul.f32.gmra.mxu0 %v1335
      %v1447 = vpop.f32.mrf.mxu0
      %v1448 = vadd.f32 0.0, %v1447
      %1449 = vmatmul.f32.gmra.mxu0 %v1338
      %v1450 = vpop.f32.mrf.mxu0
      %v1451 = vadd.f32 0.0, %v1450
      %1452 = vmatmul.f32.gmra.mxu0 %v1341
      %v1453 = vpop.f32.mrf.mxu0
      %v1454 = vadd.f32 0.0, %v1453
      %1455 = vmatmul.f32.gmra.mxu0 %v1344
      %v1456 = vpop.f32.mrf.mxu0
      %v1457 = vadd.f32 0.0, %v1456
      %1458 = vmatmul.f32.gmra.mxu0 %v1347
      %v1459 = vpop.f32.mrf.mxu0
      %v1460 = vadd.f32 0.0, %v1459
      %1461 = vmatmul.f32.gmra.mxu0 %v1350
      %v1462 = vpop.f32.mrf.mxu0
      %v1463 = vadd.f32 0.0, %v1462
      %1464 = vmatmul.f32.gmra.mxu0 %v1353
      %v1465 = vpop.f32.mrf.mxu0
      %v1466 = vadd.f32 0.0, %v1465
      %1467 = vdwg.mxu0
      %v1468 = vadd.f32 %v1190, %v1373
      %v1469 = vadd.f32 %v1191, %v1376
      %v1470 = vadd.f32 %v1192, %v1379
      %v1471 = vadd.f32 %v1193, %v1382
      %v1472 = vadd.f32 %v1194, %v1385
      %v1473 = vadd.f32 %v1195, %v1388
      %v1474 = vadd.f32 %v1196, %v1391
      %v1475 = vadd.f32 %v1197, %v1394
      %v1476 = vadd.f32 %v1198, %v1397
      %v1477 = vadd.f32 %v1199, %v1400
      %v1478 = vadd.f32 %v1200, %v1403
      %v1479 = vadd.f32 %v1201, %v1406
      %v1480 = vadd.f32 %v1202, %v1409
      %v1481 = vadd.f32 %v1203, %v1412
      %v1482 = vadd.f32 %v1204, %v1415
      %v1483 = vadd.f32 %v1205, %v1418
      %v1484 = vadd.f32 %v1206, %v1421
      %v1485 = vadd.f32 %v1207, %v1424
      %v1486 = vadd.f32 %v1208, %v1427
      %v1487 = vadd.f32 %v1209, %v1430
      %v1488 = vadd.f32 %v1210, %v1433
      %v1489 = vadd.f32 %v1211, %v1436
      %v1490 = vadd.f32 %v1212, %v1439
      %v1491 = vadd.f32 %v1213, %v1442
      %v1492 = vadd.f32 %v1214, %v1445
      %v1493 = vadd.f32 %v1215, %v1448
      %v1494 = vadd.f32 %v1216, %v1451
      %v1495 = vadd.f32 %v1217, %v1454
      %v1496 = vadd.f32 %v1218, %v1457
      %v1497 = vadd.f32 %v1219, %v1460
      %v1498 = vadd.f32 %v1220, %v1463
      %v1499 = vadd.f32 %v1221, %v1466
      %v1500 = vld [vmem:[%s943 + $0x2] sm:$0xff]
      %v1501 = vld [vmem:[%s943 + $0xa] sm:$0xff]
      %v1502 = vld [vmem:[%s943 + $0x1a] sm:$0xff]
      %v1503 = vld [vmem:[%s943 + $0x22] sm:$0xff]
      %v1504 = vld [vmem:[%s943 + $0x32] sm:$0xff]
      %v1505 = vld [vmem:[%s943 + $0x3a] sm:$0xff]
      %v1506 = vld [vmem:[%s943 + $0x4a] sm:$0xff]
      %v1507 = vld [vmem:[%s943 + $0x52] sm:$0xff]
      %v1508 = vld [vmem:[%s943 + $0x62] sm:$0xff]
      %v1509 = vld [vmem:[%s943 + $0x6a] sm:$0xff]
      %v1510 = vld [vmem:[%s943 + $0x7a] sm:$0xff]
      %v1511 = vld [vmem:[%s943 + $0x82] sm:$0xff]
      %v1512 = vld [vmem:[%s943 + $0x92] sm:$0xff]
      %v1513 = vld [vmem:[%s943 + $0x9a] sm:$0xff]
      %v1514 = vld [vmem:[%s943 + $0xaa] sm:$0xff]
      %v1515 = vld [vmem:[%s943 + $0xb2] sm:$0xff]
      %v1516 = vld [vmem:[%s943 + $0xc2] sm:$0xff]
      %v1517 = vld [vmem:[%s943 + $0xca] sm:$0xff]
      %v1518 = vld [vmem:[%s943 + $0xda] sm:$0xff]
      %v1519 = vld [vmem:[%s943 + $0xe2] sm:$0xff]
      %v1520 = vld [vmem:[%s943 + $0xf2] sm:$0xff]
      %v1521 = vld [vmem:[%s943 + $0xfa] sm:$0xff]
      %v1522 = vld [vmem:[%s943 + $0x10a] sm:$0xff]
      %v1523 = vld [vmem:[%s943 + $0x112] sm:$0xff]
      %v1524 = vld [vmem:[%s943 + $0x122] sm:$0xff]
      %v1525 = vld [vmem:[%s943 + $0x12a] sm:$0xff]
      %v1526 = vld [vmem:[%s943 + $0x13a] sm:$0xff]
      %v1527 = vld [vmem:[%s943 + $0x142] sm:$0xff]
      %v1528 = vld [vmem:[%s943 + $0x152] sm:$0xff]
      %v1529 = vld [vmem:[%s943 + $0x15a] sm:$0xff]
      %v1530 = vld [vmem:[%s943 + $0x16a] sm:$0xff]
      %v1531 = vld [vmem:[%s943 + $0x172] sm:$0xff]
      %s1532 = scalar_lea.vmem %s1, 160
      %v1533 = vld [vmem:[%s1532] sm:$0xff]
      %v1534 = vld [vmem:[%s1532 + $0x8] sm:$0xff]
      %v1535 = vld [vmem:[%s1532 + $0x10] sm:$0xff]
      %v1536 = vld [vmem:[%s1532 + $0x18] sm:$0xff]
      %v1538 = vsel %vm246, %v1500, 0
      %v1541 = vsel %vm246, %v1501, 0
      %v1544 = vsel %vm246, %v1502, 0
      %v1547 = vsel %vm246, %v1503, 0
      %v1550 = vsel %vm246, %v1504, 0
      %v1553 = vsel %vm246, %v1505, 0
      %v1556 = vsel %vm246, %v1506, 0
      %v1559 = vsel %vm246, %v1507, 0
      %v1562 = vsel %vm246, %v1508, 0
      %v1565 = vsel %vm246, %v1509, 0
      %v1568 = vsel %vm246, %v1510, 0
      %v1571 = vsel %vm246, %v1511, 0
      %v1574 = vsel %vm246, %v1512, 0
      %v1577 = vsel %vm246, %v1513, 0
      %v1580 = vsel %vm246, %v1514, 0
      %v1583 = vsel %vm246, %v1515, 0
      %v1586 = vsel %vm246, %v1516, 0
      %v1589 = vsel %vm246, %v1517, 0
      %v1592 = vsel %vm246, %v1518, 0
      %v1595 = vsel %vm246, %v1519, 0
      %v1598 = vsel %vm246, %v1520, 0
      %v1601 = vsel %vm246, %v1521, 0
      %v1604 = vsel %vm246, %v1522, 0
      %v1607 = vsel %vm246, %v1523, 0
      %v1610 = vsel %vm246, %v1524, 0
      %v1613 = vsel %vm246, %v1525, 0
      %v1616 = vsel %vm246, %v1526, 0
      %v1619 = vsel %vm246, %v1527, 0
      %v1622 = vsel %vm246, %v1528, 0
      %v1625 = vsel %vm246, %v1529, 0
      %v1628 = vsel %vm246, %v1530, 0
      %v1631 = vsel %vm246, %v1531, 0
      %1633 = vmatpush.msra.mxu0 0.0
      %1634 = vmatpush.msra.mxu0 0.0
      %1635 = vmatpush.msra.mxu0 0.0
      %1636 = vmatpush.msra.mxu0 0.0
      %1637 = vmatpush.msra.mxu0 0.0
      %1638 = vmatpush.msra.mxu0 0.0
      %1639 = vmatpush.msra.mxu0 0.0
      %1640 = vmatpush.msra.mxu0 0.0
      %1641 = vmatpush.msra.mxu0 0.0
      %1642 = vmatpush.msra.mxu0 0.0
      %1643 = vmatpush.msra.mxu0 0.0
      %1644 = vmatpush.msra.mxu0 0.0
      %1645 = vmatpush.msra.mxu0 %v1536
      %1646 = vmatpush.msra.mxu0 %v1535
      %1647 = vmatpush.msra.mxu0 %v1534
      %1648 = vmatpush.msra.mxu0 %v1533
      %1649 = vmatmul.f32.gmra.mxu0 %v1538
      %v1650 = vpop.f32.mrf.mxu0
      %v1651 = vadd.f32 0.0, %v1650
      %1652 = vmatmul.f32.gmra.mxu0 %v1541
      %v1653 = vpop.f32.mrf.mxu0
      %v1654 = vadd.f32 0.0, %v1653
      %1655 = vmatmul.f32.gmra.mxu0 %v1544
      %v1656 = vpop.f32.mrf.mxu0
      %v1657 = vadd.f32 0.0, %v1656
      %1658 = vmatmul.f32.gmra.mxu0 %v1547
      %v1659 = vpop.f32.mrf.mxu0
      %v1660 = vadd.f32 0.0, %v1659
      %1661 = vmatmul.f32.gmra.mxu0 %v1550
      %v1662 = vpop.f32.mrf.mxu0
      %v1663 = vadd.f32 0.0, %v1662
      %1664 = vmatmul.f32.gmra.mxu0 %v1553
      %v1665 = vpop.f32.mrf.mxu0
      %v1666 = vadd.f32 0.0, %v1665
      %1667 = vmatmul.f32.gmra.mxu0 %v1556
      %v1668 = vpop.f32.mrf.mxu0
      %v1669 = vadd.f32 0.0, %v1668
      %1670 = vmatmul.f32.gmra.mxu0 %v1559
      %v1671 = vpop.f32.mrf.mxu0
      %v1672 = vadd.f32 0.0, %v1671
      %1673 = vmatmul.f32.gmra.mxu0 %v1562
      %v1674 = vpop.f32.mrf.mxu0
      %v1675 = vadd.f32 0.0, %v1674
      %1676 = vmatmul.f32.gmra.mxu0 %v1565
      %v1677 = vpop.f32.mrf.mxu0
      %v1678 = vadd.f32 0.0, %v1677
      %1679 = vmatmul.f32.gmra.mxu0 %v1568
      %v1680 = vpop.f32.mrf.mxu0
      %v1681 = vadd.f32 0.0, %v1680
      %1682 = vmatmul.f32.gmra.mxu0 %v1571
      %v1683 = vpop.f32.mrf.mxu0
      %v1684 = vadd.f32 0.0, %v1683
      %1685 = vmatmul.f32.gmra.mxu0 %v1574
      %v1686 = vpop.f32.mrf.mxu0
      %v1687 = vadd.f32 0.0, %v1686
      %1688 = vmatmul.f32.gmra.mxu0 %v1577
      %v1689 = vpop.f32.mrf.mxu0
      %v1690 = vadd.f32 0.0, %v1689
      %1691 = vmatmul.f32.gmra.mxu0 %v1580
      %v1692 = vpop.f32.mrf.mxu0
      %v1693 = vadd.f32 0.0, %v1692
      %1694 = vmatmul.f32.gmra.mxu0 %v1583
      %v1695 = vpop.f32.mrf.mxu0
      %v1696 = vadd.f32 0.0, %v1695
      %1697 = vmatmul.f32.gmra.mxu0 %v1586
      %v1698 = vpop.f32.mrf.mxu0
      %v1699 = vadd.f32 0.0, %v1698
      %1700 = vmatmul.f32.gmra.mxu0 %v1589
      %v1701 = vpop.f32.mrf.mxu0
      %v1702 = vadd.f32 0.0, %v1701
      %1703 = vmatmul.f32.gmra.mxu0 %v1592
      %v1704 = vpop.f32.mrf.mxu0
      %v1705 = vadd.f32 0.0, %v1704
      %1706 = vmatmul.f32.gmra.mxu0 %v1595
      %v1707 = vpop.f32.mrf.mxu0
      %v1708 = vadd.f32 0.0, %v1707
      %1709 = vmatmul.f32.gmra.mxu0 %v1598
      %v1710 = vpop.f32.mrf.mxu0
      %v1711 = vadd.f32 0.0, %v1710
      %1712 = vmatmul.f32.gmra.mxu0 %v1601
      %v1713 = vpop.f32.mrf.mxu0
      %v1714 = vadd.f32 0.0, %v1713
      %1715 = vmatmul.f32.gmra.mxu0 %v1604
      %v1716 = vpop.f32.mrf.mxu0
      %v1717 = vadd.f32 0.0, %v1716
      %1718 = vmatmul.f32.gmra.mxu0 %v1607
      %v1719 = vpop.f32.mrf.mxu0
      %v1720 = vadd.f32 0.0, %v1719
      %1721 = vmatmul.f32.gmra.mxu0 %v1610
      %v1722 = vpop.f32.mrf.mxu0
      %v1723 = vadd.f32 0.0, %v1722
      %1724 = vmatmul.f32.gmra.mxu0 %v1613
      %v1725 = vpop.f32.mrf.mxu0
      %v1726 = vadd.f32 0.0, %v1725
      %1727 = vmatmul.f32.gmra.mxu0 %v1616
      %v1728 = vpop.f32.mrf.mxu0
      %v1729 = vadd.f32 0.0, %v1728
      %1730 = vmatmul.f32.gmra.mxu0 %v1619
      %v1731 = vpop.f32.mrf.mxu0
      %v1732 = vadd.f32 0.0, %v1731
      %1733 = vmatmul.f32.gmra.mxu0 %v1622
      %v1734 = vpop.f32.mrf.mxu0
      %v1735 = vadd.f32 0.0, %v1734
      %1736 = vmatmul.f32.gmra.mxu0 %v1625
      %v1737 = vpop.f32.mrf.mxu0
      %v1738 = vadd.f32 0.0, %v1737
      %1739 = vmatmul.f32.gmra.mxu0 %v1628
      %v1740 = vpop.f32.mrf.mxu0
      %v1741 = vadd.f32 0.0, %v1740
      %1742 = vmatmul.f32.gmra.mxu0 %v1631
      %v1743 = vpop.f32.mrf.mxu0
      %v1744 = vadd.f32 0.0, %v1743
      %1745 = vdwg.mxu0
      %v1746 = vadd.f32 %v1468, %v1651
      %v1747 = vadd.f32 %v1469, %v1654
      %v1748 = vadd.f32 %v1470, %v1657
      %v1749 = vadd.f32 %v1471, %v1660
      %v1750 = vadd.f32 %v1472, %v1663
      %v1751 = vadd.f32 %v1473, %v1666
      %v1752 = vadd.f32 %v1474, %v1669
      %v1753 = vadd.f32 %v1475, %v1672
      %v1754 = vadd.f32 %v1476, %v1675
      %v1755 = vadd.f32 %v1477, %v1678
      %v1756 = vadd.f32 %v1478, %v1681
      %v1757 = vadd.f32 %v1479, %v1684
      %v1758 = vadd.f32 %v1480, %v1687
      %v1759 = vadd.f32 %v1481, %v1690
      %v1760 = vadd.f32 %v1482, %v1693
      %v1761 = vadd.f32 %v1483, %v1696
      %v1762 = vadd.f32 %v1484, %v1699
      %v1763 = vadd.f32 %v1485, %v1702
      %v1764 = vadd.f32 %v1486, %v1705
      %v1765 = vadd.f32 %v1487, %v1708
      %v1766 = vadd.f32 %v1488, %v1711
      %v1767 = vadd.f32 %v1489, %v1714
      %v1768 = vadd.f32 %v1490, %v1717
      %v1769 = vadd.f32 %v1491, %v1720
      %v1770 = vadd.f32 %v1492, %v1723
      %v1771 = vadd.f32 %v1493, %v1726
      %v1772 = vadd.f32 %v1494, %v1729
      %v1773 = vadd.f32 %v1495, %v1732
      %v1774 = vadd.f32 %v1496, %v1735
      %v1775 = vadd.f32 %v1497, %v1738
      %v1776 = vadd.f32 %v1498, %v1741
      %v1777 = vadd.f32 %v1499, %v1744
      %s1778 = scalar_lea.vmem %s167, 48
      %v1779 = vld [vmem:[%s1778] sm:$0xff]
      %v1780 = vld [vmem:[%s1778 + $0x8] sm:$0xff]
      %v1781 = vld [vmem:[%s1778 + $0x18] sm:$0xff]
      %v1782 = vld [vmem:[%s1778 + $0x20] sm:$0xff]
      %v1783 = vld [vmem:[%s1778 + $0x30] sm:$0xff]
      %v1784 = vld [vmem:[%s1778 + $0x38] sm:$0xff]
      %v1785 = vld [vmem:[%s1778 + $0x48] sm:$0xff]
      %v1786 = vld [vmem:[%s1778 + $0x50] sm:$0xff]
      %v1787 = vld [vmem:[%s1778 + $0x60] sm:$0xff]
      %v1788 = vld [vmem:[%s1778 + $0x68] sm:$0xff]
      %v1789 = vld [vmem:[%s1778 + $0x78] sm:$0xff]
      %v1790 = vld [vmem:[%s1778 + $0x80] sm:$0xff]
      %v1791 = vld [vmem:[%s1778 + $0x90] sm:$0xff]
      %v1792 = vld [vmem:[%s1778 + $0x98] sm:$0xff]
      %v1793 = vld [vmem:[%s1778 + $0xa8] sm:$0xff]
      %v1794 = vld [vmem:[%s1778 + $0xb0] sm:$0xff]
      %v1795 = vld [vmem:[%s1778 + $0xc0] sm:$0xff]
      %v1796 = vld [vmem:[%s1778 + $0xc8] sm:$0xff]
      %v1797 = vld [vmem:[%s1778 + $0xd8] sm:$0xff]
      %v1798 = vld [vmem:[%s1778 + $0xe0] sm:$0xff]
      %v1799 = vld [vmem:[%s1778 + $0xf0] sm:$0xff]
      %v1800 = vld [vmem:[%s1778 + $0xf8] sm:$0xff]
      %v1801 = vld [vmem:[%s1778 + $0x108] sm:$0xff]
      %v1802 = vld [vmem:[%s1778 + $0x110] sm:$0xff]
      %v1803 = vld [vmem:[%s1778 + $0x120] sm:$0xff]
      %v1804 = vld [vmem:[%s1778 + $0x128] sm:$0xff]
      %v1805 = vld [vmem:[%s1778 + $0x138] sm:$0xff]
      %v1806 = vld [vmem:[%s1778 + $0x140] sm:$0xff]
      %v1807 = vld [vmem:[%s1778 + $0x150] sm:$0xff]
      %v1808 = vld [vmem:[%s1778 + $0x158] sm:$0xff]
      %v1809 = vld [vmem:[%s1778 + $0x168] sm:$0xff]
      %v1810 = vld [vmem:[%s1778 + $0x170] sm:$0xff]
      %s1811 = scalar_lea.vmem %s1, 192
      %v1812 = vld [vmem:[%s1811] sm:$0xff]
      %v1813 = vld [vmem:[%s1811 + $0x8] sm:$0xff]
      %v1814 = vld [vmem:[%s1811 + $0x10] sm:$0xff]
      %v1815 = vld [vmem:[%s1811 + $0x18] sm:$0xff]
      %v1817 = vsel %vm246, %v1779, 0
      %v1820 = vsel %vm246, %v1780, 0
      %v1823 = vsel %vm246, %v1781, 0
      %v1826 = vsel %vm246, %v1782, 0
      %v1829 = vsel %vm246, %v1783, 0
      %v1832 = vsel %vm246, %v1784, 0
      %v1835 = vsel %vm246, %v1785, 0
      %v1838 = vsel %vm246, %v1786, 0
      %v1841 = vsel %vm246, %v1787, 0
      %v1844 = vsel %vm246, %v1788, 0
      %v1847 = vsel %vm246, %v1789, 0
      %v1850 = vsel %vm246, %v1790, 0
      %v1853 = vsel %vm246, %v1791, 0
      %v1856 = vsel %vm246, %v1792, 0
      %v1859 = vsel %vm246, %v1793, 0
      %v1862 = vsel %vm246, %v1794, 0
      %v1865 = vsel %vm246, %v1795, 0
      %v1868 = vsel %vm246, %v1796, 0
      %v1871 = vsel %vm246, %v1797, 0
      %v1874 = vsel %vm246, %v1798, 0
      %v1877 = vsel %vm246, %v1799, 0
      %v1880 = vsel %vm246, %v1800, 0
      %v1883 = vsel %vm246, %v1801, 0
      %v1886 = vsel %vm246, %v1802, 0
      %v1889 = vsel %vm246, %v1803, 0
      %v1892 = vsel %vm246, %v1804, 0
      %v1895 = vsel %vm246, %v1805, 0
      %v1898 = vsel %vm246, %v1806, 0
      %v1901 = vsel %vm246, %v1807, 0
      %v1904 = vsel %vm246, %v1808, 0
      %v1907 = vsel %vm246, %v1809, 0
      %v1910 = vsel %vm246, %v1810, 0
      %1912 = vmatpush.msra.mxu0 0.0
      %1913 = vmatpush.msra.mxu0 0.0
      %1914 = vmatpush.msra.mxu0 0.0
      %1915 = vmatpush.msra.mxu0 0.0
      %1916 = vmatpush.msra.mxu0 0.0
      %1917 = vmatpush.msra.mxu0 0.0
      %1918 = vmatpush.msra.mxu0 0.0
      %1919 = vmatpush.msra.mxu0 0.0
      %1920 = vmatpush.msra.mxu0 0.0
      %1921 = vmatpush.msra.mxu0 0.0
      %1922 = vmatpush.msra.mxu0 0.0
      %1923 = vmatpush.msra.mxu0 0.0
      %1924 = vmatpush.msra.mxu0 %v1815
      %1925 = vmatpush.msra.mxu0 %v1814
      %1926 = vmatpush.msra.mxu0 %v1813
      %1927 = vmatpush.msra.mxu0 %v1812
      %1928 = vmatmul.f32.gmra.mxu0 %v1817
      %v1929 = vpop.f32.mrf.mxu0
      %v1930 = vadd.f32 0.0, %v1929
      %1931 = vmatmul.f32.gmra.mxu0 %v1820
      %v1932 = vpop.f32.mrf.mxu0
      %v1933 = vadd.f32 0.0, %v1932
      %1934 = vmatmul.f32.gmra.mxu0 %v1823
      %v1935 = vpop.f32.mrf.mxu0
      %v1936 = vadd.f32 0.0, %v1935
      %1937 = vmatmul.f32.gmra.mxu0 %v1826
      %v1938 = vpop.f32.mrf.mxu0
      %v1939 = vadd.f32 0.0, %v1938
      %1940 = vmatmul.f32.gmra.mxu0 %v1829
      %v1941 = vpop.f32.mrf.mxu0
      %v1942 = vadd.f32 0.0, %v1941
      %1943 = vmatmul.f32.gmra.mxu0 %v1832
      %v1944 = vpop.f32.mrf.mxu0
      %v1945 = vadd.f32 0.0, %v1944
      %1946 = vmatmul.f32.gmra.mxu0 %v1835
      %v1947 = vpop.f32.mrf.mxu0
      %v1948 = vadd.f32 0.0, %v1947
      %1949 = vmatmul.f32.gmra.mxu0 %v1838
      %v1950 = vpop.f32.mrf.mxu0
      %v1951 = vadd.f32 0.0, %v1950
      %1952 = vmatmul.f32.gmra.mxu0 %v1841
      %v1953 = vpop.f32.mrf.mxu0
      %v1954 = vadd.f32 0.0, %v1953
      %1955 = vmatmul.f32.gmra.mxu0 %v1844
      %v1956 = vpop.f32.mrf.mxu0
      %v1957 = vadd.f32 0.0, %v1956
      %1958 = vmatmul.f32.gmra.mxu0 %v1847
      %v1959 = vpop.f32.mrf.mxu0
      %v1960 = vadd.f32 0.0, %v1959
      %1961 = vmatmul.f32.gmra.mxu0 %v1850
      %v1962 = vpop.f32.mrf.mxu0
      %v1963 = vadd.f32 0.0, %v1962
      %1964 = vmatmul.f32.gmra.mxu0 %v1853
      %v1965 = vpop.f32.mrf.mxu0
      %v1966 = vadd.f32 0.0, %v1965
      %1967 = vmatmul.f32.gmra.mxu0 %v1856
      %v1968 = vpop.f32.mrf.mxu0
      %v1969 = vadd.f32 0.0, %v1968
      %1970 = vmatmul.f32.gmra.mxu0 %v1859
      %v1971 = vpop.f32.mrf.mxu0
      %v1972 = vadd.f32 0.0, %v1971
      %1973 = vmatmul.f32.gmra.mxu0 %v1862
      %v1974 = vpop.f32.mrf.mxu0
      %v1975 = vadd.f32 0.0, %v1974
      %1976 = vmatmul.f32.gmra.mxu0 %v1865
      %v1977 = vpop.f32.mrf.mxu0
      %v1978 = vadd.f32 0.0, %v1977
      %1979 = vmatmul.f32.gmra.mxu0 %v1868
      %v1980 = vpop.f32.mrf.mxu0
      %v1981 = vadd.f32 0.0, %v1980
      %1982 = vmatmul.f32.gmra.mxu0 %v1871
      %v1983 = vpop.f32.mrf.mxu0
      %v1984 = vadd.f32 0.0, %v1983
      %1985 = vmatmul.f32.gmra.mxu0 %v1874
      %v1986 = vpop.f32.mrf.mxu0
      %v1987 = vadd.f32 0.0, %v1986
      %1988 = vmatmul.f32.gmra.mxu0 %v1877
      %v1989 = vpop.f32.mrf.mxu0
      %v1990 = vadd.f32 0.0, %v1989
      %1991 = vmatmul.f32.gmra.mxu0 %v1880
      %v1992 = vpop.f32.mrf.mxu0
      %v1993 = vadd.f32 0.0, %v1992
      %1994 = vmatmul.f32.gmra.mxu0 %v1883
      %v1995 = vpop.f32.mrf.mxu0
      %v1996 = vadd.f32 0.0, %v1995
      %1997 = vmatmul.f32.gmra.mxu0 %v1886
      %v1998 = vpop.f32.mrf.mxu0
      %v1999 = vadd.f32 0.0, %v1998
      %2000 = vmatmul.f32.gmra.mxu0 %v1889
      %v2001 = vpop.f32.mrf.mxu0
      %v2002 = vadd.f32 0.0, %v2001
      %2003 = vmatmul.f32.gmra.mxu0 %v1892
      %v2004 = vpop.f32.mrf.mxu0
      %v2005 = vadd.f32 0.0, %v2004
      %2006 = vmatmul.f32.gmra.mxu0 %v1895
      %v2007 = vpop.f32.mrf.mxu0
      %v2008 = vadd.f32 0.0, %v2007
      %2009 = vmatmul.f32.gmra.mxu0 %v1898
      %v2010 = vpop.f32.mrf.mxu0
      %v2011 = vadd.f32 0.0, %v2010
      %2012 = vmatmul.f32.gmra.mxu0 %v1901
      %v2013 = vpop.f32.mrf.mxu0
      %v2014 = vadd.f32 0.0, %v2013
      %2015 = vmatmul.f32.gmra.mxu0 %v1904
      %v2016 = vpop.f32.mrf.mxu0
      %v2017 = vadd.f32 0.0, %v2016
      %2018 = vmatmul.f32.gmra.mxu0 %v1907
      %v2019 = vpop.f32.mrf.mxu0
      %v2020 = vadd.f32 0.0, %v2019
      %2021 = vmatmul.f32.gmra.mxu0 %v1910
      %v2022 = vpop.f32.mrf.mxu0
      %v2023 = vadd.f32 0.0, %v2022
      %2024 = vdwg.mxu0
      %v2025 = vadd.f32 %v1746, %v1930
      %v2026 = vadd.f32 %v1747, %v1933
      %v2027 = vadd.f32 %v1748, %v1936
      %v2028 = vadd.f32 %v1749, %v1939
      %v2029 = vadd.f32 %v1750, %v1942
      %v2030 = vadd.f32 %v1751, %v1945
      %v2031 = vadd.f32 %v1752, %v1948
      %v2032 = vadd.f32 %v1753, %v1951
      %v2033 = vadd.f32 %v1754, %v1954
      %v2034 = vadd.f32 %v1755, %v1957
      %v2035 = vadd.f32 %v1756, %v1960
      %v2036 = vadd.f32 %v1757, %v1963
      %v2037 = vadd.f32 %v1758, %v1966
      %v2038 = vadd.f32 %v1759, %v1969
      %v2039 = vadd.f32 %v1760, %v1972
      %v2040 = vadd.f32 %v1761, %v1975
      %v2041 = vadd.f32 %v1762, %v1978
      %v2042 = vadd.f32 %v1763, %v1981
      %v2043 = vadd.f32 %v1764, %v1984
      %v2044 = vadd.f32 %v1765, %v1987
      %v2045 = vadd.f32 %v1766, %v1990
      %v2046 = vadd.f32 %v1767, %v1993
      %v2047 = vadd.f32 %v1768, %v1996
      %v2048 = vadd.f32 %v1769, %v1999
      %v2049 = vadd.f32 %v1770, %v2002
      %v2050 = vadd.f32 %v1771, %v2005
      %v2051 = vadd.f32 %v1772, %v2008
      %v2052 = vadd.f32 %v1773, %v2011
      %v2053 = vadd.f32 %v1774, %v2014
      %v2054 = vadd.f32 %v1775, %v2017
      %v2055 = vadd.f32 %v1776, %v2020
      %v2056 = vadd.f32 %v1777, %v2023
      %v2057 = vld [vmem:[%s1778 + $0x1] sm:$0xff]
      %v2058 = vld [vmem:[%s1778 + $0x9] sm:$0xff]
      %v2059 = vld [vmem:[%s1778 + $0x19] sm:$0xff]
      %v2060 = vld [vmem:[%s1778 + $0x21] sm:$0xff]
      %v2061 = vld [vmem:[%s1778 + $0x31] sm:$0xff]
      %v2062 = vld [vmem:[%s1778 + $0x39] sm:$0xff]
      %v2063 = vld [vmem:[%s1778 + $0x49] sm:$0xff]
      %v2064 = vld [vmem:[%s1778 + $0x51] sm:$0xff]
      %v2065 = vld [vmem:[%s1778 + $0x61] sm:$0xff]
      %v2066 = vld [vmem:[%s1778 + $0x69] sm:$0xff]
      %v2067 = vld [vmem:[%s1778 + $0x79] sm:$0xff]
      %v2068 = vld [vmem:[%s1778 + $0x81] sm:$0xff]
      %v2069 = vld [vmem:[%s1778 + $0x91] sm:$0xff]
      %v2070 = vld [vmem:[%s1778 + $0x99] sm:$0xff]
      %v2071 = vld [vmem:[%s1778 + $0xa9] sm:$0xff]
      %v2072 = vld [vmem:[%s1778 + $0xb1] sm:$0xff]
      %v2073 = vld [vmem:[%s1778 + $0xc1] sm:$0xff]
      %v2074 = vld [vmem:[%s1778 + $0xc9] sm:$0xff]
      %v2075 = vld [vmem:[%s1778 + $0xd9] sm:$0xff]
      %v2076 = vld [vmem:[%s1778 + $0xe1] sm:$0xff]
      %v2077 = vld [vmem:[%s1778 + $0xf1] sm:$0xff]
      %v2078 = vld [vmem:[%s1778 + $0xf9] sm:$0xff]
      %v2079 = vld [vmem:[%s1778 + $0x109] sm:$0xff]
      %v2080 = vld [vmem:[%s1778 + $0x111] sm:$0xff]
      %v2081 = vld [vmem:[%s1778 + $0x121] sm:$0xff]
      %v2082 = vld [vmem:[%s1778 + $0x129] sm:$0xff]
      %v2083 = vld [vmem:[%s1778 + $0x139] sm:$0xff]
      %v2084 = vld [vmem:[%s1778 + $0x141] sm:$0xff]
      %v2085 = vld [vmem:[%s1778 + $0x151] sm:$0xff]
      %v2086 = vld [vmem:[%s1778 + $0x159] sm:$0xff]
      %v2087 = vld [vmem:[%s1778 + $0x169] sm:$0xff]
      %v2088 = vld [vmem:[%s1778 + $0x171] sm:$0xff]
      %s2089 = scalar_lea.vmem %s1, 224
      %v2090 = vld [vmem:[%s2089] sm:$0xff]
      %v2091 = vld [vmem:[%s2089 + $0x8] sm:$0xff]
      %v2092 = vld [vmem:[%s2089 + $0x10] sm:$0xff]
      %v2093 = vld [vmem:[%s2089 + $0x18] sm:$0xff]
      %v2095 = vsel %vm246, %v2057, 0
      %v2098 = vsel %vm246, %v2058, 0
      %v2101 = vsel %vm246, %v2059, 0
      %v2104 = vsel %vm246, %v2060, 0
      %v2107 = vsel %vm246, %v2061, 0
      %v2110 = vsel %vm246, %v2062, 0
      %v2113 = vsel %vm246, %v2063, 0
      %v2116 = vsel %vm246, %v2064, 0
      %v2119 = vsel %vm246, %v2065, 0
      %v2122 = vsel %vm246, %v2066, 0
      %v2125 = vsel %vm246, %v2067, 0
      %v2128 = vsel %vm246, %v2068, 0
      %v2131 = vsel %vm246, %v2069, 0
      %v2134 = vsel %vm246, %v2070, 0
      %v2137 = vsel %vm246, %v2071, 0
      %v2140 = vsel %vm246, %v2072, 0
      %v2143 = vsel %vm246, %v2073, 0
      %v2146 = vsel %vm246, %v2074, 0
      %v2149 = vsel %vm246, %v2075, 0
      %v2152 = vsel %vm246, %v2076, 0
      %v2155 = vsel %vm246, %v2077, 0
      %v2158 = vsel %vm246, %v2078, 0
      %v2161 = vsel %vm246, %v2079, 0
      %v2164 = vsel %vm246, %v2080, 0
      %v2167 = vsel %vm246, %v2081, 0
      %v2170 = vsel %vm246, %v2082, 0
      %v2173 = vsel %vm246, %v2083, 0
      %v2176 = vsel %vm246, %v2084, 0
      %v2179 = vsel %vm246, %v2085, 0
      %v2182 = vsel %vm246, %v2086, 0
      %v2185 = vsel %vm246, %v2087, 0
      %v2188 = vsel %vm246, %v2088, 0
      %2190 = vmatpush.msra.mxu0 0.0
      %2191 = vmatpush.msra.mxu0 0.0
      %2192 = vmatpush.msra.mxu0 0.0
      %2193 = vmatpush.msra.mxu0 0.0
      %2194 = vmatpush.msra.mxu0 0.0
      %2195 = vmatpush.msra.mxu0 0.0
      %2196 = vmatpush.msra.mxu0 0.0
      %2197 = vmatpush.msra.mxu0 0.0
      %2198 = vmatpush.msra.mxu0 0.0
      %2199 = vmatpush.msra.mxu0 0.0
      %2200 = vmatpush.msra.mxu0 0.0
      %2201 = vmatpush.msra.mxu0 0.0
      %2202 = vmatpush.msra.mxu0 %v2093
      %2203 = vmatpush.msra.mxu0 %v2092
      %2204 = vmatpush.msra.mxu0 %v2091
      %2205 = vmatpush.msra.mxu0 %v2090
      %2206 = vmatmul.f32.gmra.mxu0 %v2095
      %v2207 = vpop.f32.mrf.mxu0
      %v2208 = vadd.f32 0.0, %v2207
      %2209 = vmatmul.f32.gmra.mxu0 %v2098
      %v2210 = vpop.f32.mrf.mxu0
      %v2211 = vadd.f32 0.0, %v2210
      %2212 = vmatmul.f32.gmra.mxu0 %v2101
      %v2213 = vpop.f32.mrf.mxu0
      %v2214 = vadd.f32 0.0, %v2213
      %2215 = vmatmul.f32.gmra.mxu0 %v2104
      %v2216 = vpop.f32.mrf.mxu0
      %v2217 = vadd.f32 0.0, %v2216
      %2218 = vmatmul.f32.gmra.mxu0 %v2107
      %v2219 = vpop.f32.mrf.mxu0
      %v2220 = vadd.f32 0.0, %v2219
      %2221 = vmatmul.f32.gmra.mxu0 %v2110
      %v2222 = vpop.f32.mrf.mxu0
      %v2223 = vadd.f32 0.0, %v2222
      %2224 = vmatmul.f32.gmra.mxu0 %v2113
      %v2225 = vpop.f32.mrf.mxu0
      %v2226 = vadd.f32 0.0, %v2225
      %2227 = vmatmul.f32.gmra.mxu0 %v2116
      %v2228 = vpop.f32.mrf.mxu0
      %v2229 = vadd.f32 0.0, %v2228
      %2230 = vmatmul.f32.gmra.mxu0 %v2119
      %v2231 = vpop.f32.mrf.mxu0
      %v2232 = vadd.f32 0.0, %v2231
      %2233 = vmatmul.f32.gmra.mxu0 %v2122
      %v2234 = vpop.f32.mrf.mxu0
      %v2235 = vadd.f32 0.0, %v2234
      %2236 = vmatmul.f32.gmra.mxu0 %v2125
      %v2237 = vpop.f32.mrf.mxu0
      %v2238 = vadd.f32 0.0, %v2237
      %2239 = vmatmul.f32.gmra.mxu0 %v2128
      %v2240 = vpop.f32.mrf.mxu0
      %v2241 = vadd.f32 0.0, %v2240
      %2242 = vmatmul.f32.gmra.mxu0 %v2131
      %v2243 = vpop.f32.mrf.mxu0
      %v2244 = vadd.f32 0.0, %v2243
      %2245 = vmatmul.f32.gmra.mxu0 %v2134
      %v2246 = vpop.f32.mrf.mxu0
      %v2247 = vadd.f32 0.0, %v2246
      %2248 = vmatmul.f32.gmra.mxu0 %v2137
      %v2249 = vpop.f32.mrf.mxu0
      %v2250 = vadd.f32 0.0, %v2249
      %2251 = vmatmul.f32.gmra.mxu0 %v2140
      %v2252 = vpop.f32.mrf.mxu0
      %v2253 = vadd.f32 0.0, %v2252
      %2254 = vmatmul.f32.gmra.mxu0 %v2143
      %v2255 = vpop.f32.mrf.mxu0
      %v2256 = vadd.f32 0.0, %v2255
      %2257 = vmatmul.f32.gmra.mxu0 %v2146
      %v2258 = vpop.f32.mrf.mxu0
      %v2259 = vadd.f32 0.0, %v2258
      %2260 = vmatmul.f32.gmra.mxu0 %v2149
      %v2261 = vpop.f32.mrf.mxu0
      %v2262 = vadd.f32 0.0, %v2261
      %2263 = vmatmul.f32.gmra.mxu0 %v2152
      %v2264 = vpop.f32.mrf.mxu0
      %v2265 = vadd.f32 0.0, %v2264
      %2266 = vmatmul.f32.gmra.mxu0 %v2155
      %v2267 = vpop.f32.mrf.mxu0
      %v2268 = vadd.f32 0.0, %v2267
      %2269 = vmatmul.f32.gmra.mxu0 %v2158
      %v2270 = vpop.f32.mrf.mxu0
      %v2271 = vadd.f32 0.0, %v2270
      %2272 = vmatmul.f32.gmra.mxu0 %v2161
      %v2273 = vpop.f32.mrf.mxu0
      %v2274 = vadd.f32 0.0, %v2273
      %2275 = vmatmul.f32.gmra.mxu0 %v2164
      %v2276 = vpop.f32.mrf.mxu0
      %v2277 = vadd.f32 0.0, %v2276
      %2278 = vmatmul.f32.gmra.mxu0 %v2167
      %v2279 = vpop.f32.mrf.mxu0
      %v2280 = vadd.f32 0.0, %v2279
      %2281 = vmatmul.f32.gmra.mxu0 %v2170
      %v2282 = vpop.f32.mrf.mxu0
      %v2283 = vadd.f32 0.0, %v2282
      %2284 = vmatmul.f32.gmra.mxu0 %v2173
      %v2285 = vpop.f32.mrf.mxu0
      %v2286 = vadd.f32 0.0, %v2285
      %2287 = vmatmul.f32.gmra.mxu0 %v2176
      %v2288 = vpop.f32.mrf.mxu0
      %v2289 = vadd.f32 0.0, %v2288
      %2290 = vmatmul.f32.gmra.mxu0 %v2179
      %v2291 = vpop.f32.mrf.mxu0
      %v2292 = vadd.f32 0.0, %v2291
      %2293 = vmatmul.f32.gmra.mxu0 %v2182
      %v2294 = vpop.f32.mrf.mxu0
      %v2295 = vadd.f32 0.0, %v2294
      %2296 = vmatmul.f32.gmra.mxu0 %v2185
      %v2297 = vpop.f32.mrf.mxu0
      %v2298 = vadd.f32 0.0, %v2297
      %2299 = vmatmul.f32.gmra.mxu0 %v2188
      %v2300 = vpop.f32.mrf.mxu0
      %v2301 = vadd.f32 0.0, %v2300
      %2302 = vdwg.mxu0
      %v2303 = vadd.f32 %v2025, %v2208
      %v2304 = vadd.f32 %v2026, %v2211
      %v2305 = vadd.f32 %v2027, %v2214
      %v2306 = vadd.f32 %v2028, %v2217
      %v2307 = vadd.f32 %v2029, %v2220
      %v2308 = vadd.f32 %v2030, %v2223
      %v2309 = vadd.f32 %v2031, %v2226
      %v2310 = vadd.f32 %v2032, %v2229
      %v2311 = vadd.f32 %v2033, %v2232
      %v2312 = vadd.f32 %v2034, %v2235
      %v2313 = vadd.f32 %v2035, %v2238
      %v2314 = vadd.f32 %v2036, %v2241
      %v2315 = vadd.f32 %v2037, %v2244
      %v2316 = vadd.f32 %v2038, %v2247
      %v2317 = vadd.f32 %v2039, %v2250
      %v2318 = vadd.f32 %v2040, %v2253
      %v2319 = vadd.f32 %v2041, %v2256
      %v2320 = vadd.f32 %v2042, %v2259
      %v2321 = vadd.f32 %v2043, %v2262
      %v2322 = vadd.f32 %v2044, %v2265
      %v2323 = vadd.f32 %v2045, %v2268
      %v2324 = vadd.f32 %v2046, %v2271
      %v2325 = vadd.f32 %v2047, %v2274
      %v2326 = vadd.f32 %v2048, %v2277
      %v2327 = vadd.f32 %v2049, %v2280
      %v2328 = vadd.f32 %v2050, %v2283
      %v2329 = vadd.f32 %v2051, %v2286
      %v2330 = vadd.f32 %v2052, %v2289
      %v2331 = vadd.f32 %v2053, %v2292
      %v2332 = vadd.f32 %v2054, %v2295
      %v2333 = vadd.f32 %v2055, %v2298
      %v2334 = vadd.f32 %v2056, %v2301
      %v2335 = vld [vmem:[%s1778 + $0x2] sm:$0xff]
      %v2336 = vld [vmem:[%s1778 + $0xa] sm:$0xff]
      %v2337 = vld [vmem:[%s1778 + $0x1a] sm:$0xff]
      %v2338 = vld [vmem:[%s1778 + $0x22] sm:$0xff]
      %v2339 = vld [vmem:[%s1778 + $0x32] sm:$0xff]
      %v2340 = vld [vmem:[%s1778 + $0x3a] sm:$0xff]
      %v2341 = vld [vmem:[%s1778 + $0x4a] sm:$0xff]
      %v2342 = vld [vmem:[%s1778 + $0x52] sm:$0xff]
      %v2343 = vld [vmem:[%s1778 + $0x62] sm:$0xff]
      %v2344 = vld [vmem:[%s1778 + $0x6a] sm:$0xff]
      %v2345 = vld [vmem:[%s1778 + $0x7a] sm:$0xff]
      %v2346 = vld [vmem:[%s1778 + $0x82] sm:$0xff]
      %v2347 = vld [vmem:[%s1778 + $0x92] sm:$0xff]
      %v2348 = vld [vmem:[%s1778 + $0x9a] sm:$0xff]
      %v2349 = vld [vmem:[%s1778 + $0xaa] sm:$0xff]
      %v2350 = vld [vmem:[%s1778 + $0xb2] sm:$0xff]
      %v2351 = vld [vmem:[%s1778 + $0xc2] sm:$0xff]
      %v2352 = vld [vmem:[%s1778 + $0xca] sm:$0xff]
      %v2353 = vld [vmem:[%s1778 + $0xda] sm:$0xff]
      %v2354 = vld [vmem:[%s1778 + $0xe2] sm:$0xff]
      %v2355 = vld [vmem:[%s1778 + $0xf2] sm:$0xff]
      %v2356 = vld [vmem:[%s1778 + $0xfa] sm:$0xff]
      %v2357 = vld [vmem:[%s1778 + $0x10a] sm:$0xff]
      %v2358 = vld [vmem:[%s1778 + $0x112] sm:$0xff]
      %v2359 = vld [vmem:[%s1778 + $0x122] sm:$0xff]
      %v2360 = vld [vmem:[%s1778 + $0x12a] sm:$0xff]
      %v2361 = vld [vmem:[%s1778 + $0x13a] sm:$0xff]
      %v2362 = vld [vmem:[%s1778 + $0x142] sm:$0xff]
      %v2363 = vld [vmem:[%s1778 + $0x152] sm:$0xff]
      %v2364 = vld [vmem:[%s1778 + $0x15a] sm:$0xff]
      %v2365 = vld [vmem:[%s1778 + $0x16a] sm:$0xff]
      %v2366 = vld [vmem:[%s1778 + $0x172] sm:$0xff]
      %s2367 = scalar_lea.vmem %s1, 256
      %v2368 = vld [vmem:[%s2367] sm:$0xff]
      %v2369 = vld [vmem:[%s2367 + $0x8] sm:$0xff]
      %v2370 = vld [vmem:[%s2367 + $0x10] sm:$0xff]
      %v2371 = vld [vmem:[%s2367 + $0x18] sm:$0xff]
      %v2373 = vsel %vm246, %v2335, 0
      %v2376 = vsel %vm246, %v2336, 0
      %v2379 = vsel %vm246, %v2337, 0
      %v2382 = vsel %vm246, %v2338, 0
      %v2385 = vsel %vm246, %v2339, 0
      %v2388 = vsel %vm246, %v2340, 0
      %v2391 = vsel %vm246, %v2341, 0
      %v2394 = vsel %vm246, %v2342, 0
      %v2397 = vsel %vm246, %v2343, 0
      %v2400 = vsel %vm246, %v2344, 0
      %v2403 = vsel %vm246, %v2345, 0
      %v2406 = vsel %vm246, %v2346, 0
      %v2409 = vsel %vm246, %v2347, 0
      %v2412 = vsel %vm246, %v2348, 0
      %v2415 = vsel %vm246, %v2349, 0
      %v2418 = vsel %vm246, %v2350, 0
      %v2421 = vsel %vm246, %v2351, 0
      %v2424 = vsel %vm246, %v2352, 0
      %v2427 = vsel %vm246, %v2353, 0
      %v2430 = vsel %vm246, %v2354, 0
      %v2433 = vsel %vm246, %v2355, 0
      %v2436 = vsel %vm246, %v2356, 0
      %v2439 = vsel %vm246, %v2357, 0
      %v2442 = vsel %vm246, %v2358, 0
      %v2445 = vsel %vm246, %v2359, 0
      %v2448 = vsel %vm246, %v2360, 0
      %v2451 = vsel %vm246, %v2361, 0
      %v2454 = vsel %vm246, %v2362, 0
      %v2457 = vsel %vm246, %v2363, 0
      %v2460 = vsel %vm246, %v2364, 0
      %v2463 = vsel %vm246, %v2365, 0
      %v2466 = vsel %vm246, %v2366, 0
      %2468 = vmatpush.msra.mxu0 0.0
      %2469 = vmatpush.msra.mxu0 0.0
      %2470 = vmatpush.msra.mxu0 0.0
      %2471 = vmatpush.msra.mxu0 0.0
      %2472 = vmatpush.msra.mxu0 0.0
      %2473 = vmatpush.msra.mxu0 0.0
      %2474 = vmatpush.msra.mxu0 0.0
      %2475 = vmatpush.msra.mxu0 0.0
      %2476 = vmatpush.msra.mxu0 0.0
      %2477 = vmatpush.msra.mxu0 0.0
      %2478 = vmatpush.msra.mxu0 0.0
      %2479 = vmatpush.msra.mxu0 0.0
      %2480 = vmatpush.msra.mxu0 %v2371
      %2481 = vmatpush.msra.mxu0 %v2370
      %2482 = vmatpush.msra.mxu0 %v2369
      %2483 = vmatpush.msra.mxu0 %v2368
      %2484 = vmatmul.f32.gmra.mxu0 %v2373
      %v2485 = vpop.f32.mrf.mxu0
      %v2486 = vadd.f32 0.0, %v2485
      %2487 = vmatmul.f32.gmra.mxu0 %v2376
      %v2488 = vpop.f32.mrf.mxu0
      %v2489 = vadd.f32 0.0, %v2488
      %2490 = vmatmul.f32.gmra.mxu0 %v2379
      %v2491 = vpop.f32.mrf.mxu0
      %v2492 = vadd.f32 0.0, %v2491
      %2493 = vmatmul.f32.gmra.mxu0 %v2382
      %v2494 = vpop.f32.mrf.mxu0
      %v2495 = vadd.f32 0.0, %v2494
      %2496 = vmatmul.f32.gmra.mxu0 %v2385
      %v2497 = vpop.f32.mrf.mxu0
      %v2498 = vadd.f32 0.0, %v2497
      %2499 = vmatmul.f32.gmra.mxu0 %v2388
      %v2500 = vpop.f32.mrf.mxu0
      %v2501 = vadd.f32 0.0, %v2500
      %2502 = vmatmul.f32.gmra.mxu0 %v2391
      %v2503 = vpop.f32.mrf.mxu0
      %v2504 = vadd.f32 0.0, %v2503
      %2505 = vmatmul.f32.gmra.mxu0 %v2394
      %v2506 = vpop.f32.mrf.mxu0
      %v2507 = vadd.f32 0.0, %v2506
      %2508 = vmatmul.f32.gmra.mxu0 %v2397
      %v2509 = vpop.f32.mrf.mxu0
      %v2510 = vadd.f32 0.0, %v2509
      %2511 = vmatmul.f32.gmra.mxu0 %v2400
      %v2512 = vpop.f32.mrf.mxu0
      %v2513 = vadd.f32 0.0, %v2512
      %2514 = vmatmul.f32.gmra.mxu0 %v2403
      %v2515 = vpop.f32.mrf.mxu0
      %v2516 = vadd.f32 0.0, %v2515
      %2517 = vmatmul.f32.gmra.mxu0 %v2406
      %v2518 = vpop.f32.mrf.mxu0
      %v2519 = vadd.f32 0.0, %v2518
      %2520 = vmatmul.f32.gmra.mxu0 %v2409
      %v2521 = vpop.f32.mrf.mxu0
      %v2522 = vadd.f32 0.0, %v2521
      %2523 = vmatmul.f32.gmra.mxu0 %v2412
      %v2524 = vpop.f32.mrf.mxu0
      %v2525 = vadd.f32 0.0, %v2524
      %2526 = vmatmul.f32.gmra.mxu0 %v2415
      %v2527 = vpop.f32.mrf.mxu0
      %v2528 = vadd.f32 0.0, %v2527
      %2529 = vmatmul.f32.gmra.mxu0 %v2418
      %v2530 = vpop.f32.mrf.mxu0
      %v2531 = vadd.f32 0.0, %v2530
      %2532 = vmatmul.f32.gmra.mxu0 %v2421
      %v2533 = vpop.f32.mrf.mxu0
      %v2534 = vadd.f32 0.0, %v2533
      %2535 = vmatmul.f32.gmra.mxu0 %v2424
      %v2536 = vpop.f32.mrf.mxu0
      %v2537 = vadd.f32 0.0, %v2536
      %2538 = vmatmul.f32.gmra.mxu0 %v2427
      %v2539 = vpop.f32.mrf.mxu0
      %v2540 = vadd.f32 0.0, %v2539
      %2541 = vmatmul.f32.gmra.mxu0 %v2430
      %v2542 = vpop.f32.mrf.mxu0
      %v2543 = vadd.f32 0.0, %v2542
      %2544 = vmatmul.f32.gmra.mxu0 %v2433
      %v2545 = vpop.f32.mrf.mxu0
      %v2546 = vadd.f32 0.0, %v2545
      %2547 = vmatmul.f32.gmra.mxu0 %v2436
      %v2548 = vpop.f32.mrf.mxu0
      %v2549 = vadd.f32 0.0, %v2548
      %2550 = vmatmul.f32.gmra.mxu0 %v2439
      %v2551 = vpop.f32.mrf.mxu0
      %v2552 = vadd.f32 0.0, %v2551
      %2553 = vmatmul.f32.gmra.mxu0 %v2442
      %v2554 = vpop.f32.mrf.mxu0
      %v2555 = vadd.f32 0.0, %v2554
      %2556 = vmatmul.f32.gmra.mxu0 %v2445
      %v2557 = vpop.f32.mrf.mxu0
      %v2558 = vadd.f32 0.0, %v2557
      %2559 = vmatmul.f32.gmra.mxu0 %v2448
      %v2560 = vpop.f32.mrf.mxu0
      %v2561 = vadd.f32 0.0, %v2560
      %2562 = vmatmul.f32.gmra.mxu0 %v2451
      %v2563 = vpop.f32.mrf.mxu0
      %v2564 = vadd.f32 0.0, %v2563
      %2565 = vmatmul.f32.gmra.mxu0 %v2454
      %v2566 = vpop.f32.mrf.mxu0
      %v2567 = vadd.f32 0.0, %v2566
      %2568 = vmatmul.f32.gmra.mxu0 %v2457
      %v2569 = vpop.f32.mrf.mxu0
      %v2570 = vadd.f32 0.0, %v2569
      %2571 = vmatmul.f32.gmra.mxu0 %v2460
      %v2572 = vpop.f32.mrf.mxu0
      %v2573 = vadd.f32 0.0, %v2572
      %2574 = vmatmul.f32.gmra.mxu0 %v2463
      %v2575 = vpop.f32.mrf.mxu0
      %v2576 = vadd.f32 0.0, %v2575
      %2577 = vmatmul.f32.gmra.mxu0 %v2466
      %v2578 = vpop.f32.mrf.mxu0
      %v2579 = vadd.f32 0.0, %v2578
      %2580 = vdwg.mxu0
      %v2581 = vadd.f32 %v2303, %v2486
      %v2582 = vadd.f32 %v2304, %v2489
      %v2583 = vadd.f32 %v2305, %v2492
      %v2584 = vadd.f32 %v2306, %v2495
      %v2585 = vadd.f32 %v2307, %v2498
      %v2586 = vadd.f32 %v2308, %v2501
      %v2587 = vadd.f32 %v2309, %v2504
      %v2588 = vadd.f32 %v2310, %v2507
      %v2589 = vadd.f32 %v2311, %v2510
      %v2590 = vadd.f32 %v2312, %v2513
      %v2591 = vadd.f32 %v2313, %v2516
      %v2592 = vadd.f32 %v2314, %v2519
      %v2593 = vadd.f32 %v2315, %v2522
      %v2594 = vadd.f32 %v2316, %v2525
      %v2595 = vadd.f32 %v2317, %v2528
      %v2596 = vadd.f32 %v2318, %v2531
      %v2597 = vadd.f32 %v2319, %v2534
      %v2598 = vadd.f32 %v2320, %v2537
      %v2599 = vadd.f32 %v2321, %v2540
      %v2600 = vadd.f32 %v2322, %v2543
      %v2601 = vadd.f32 %v2323, %v2546
      %v2602 = vadd.f32 %v2324, %v2549
      %v2603 = vadd.f32 %v2325, %v2552
      %v2604 = vadd.f32 %v2326, %v2555
      %v2605 = vadd.f32 %v2327, %v2558
      %v2606 = vadd.f32 %v2328, %v2561
      %v2607 = vadd.f32 %v2329, %v2564
      %v2608 = vadd.f32 %v2330, %v2567
      %v2609 = vadd.f32 %v2331, %v2570
      %v2610 = vadd.f32 %v2332, %v2573
      %v2611 = vadd.f32 %v2333, %v2576
      %v2612 = vadd.f32 %v2334, %v2579
      %v2613 = vld [vmem:[#allocation2] sm:$0x1]
      %v2615 = vperm.slane %v2613, 0
      %v2617 = vadd.f32 %v2581, %v2615
      %v2618 = vadd.f32 %v2582, %v2615
      %v2619 = vadd.f32 %v2583, %v2615
      %v2620 = vadd.f32 %v2584, %v2615
      %v2621 = vadd.f32 %v2585, %v2615
      %v2622 = vadd.f32 %v2586, %v2615
      %v2623 = vadd.f32 %v2587, %v2615
      %v2624 = vadd.f32 %v2588, %v2615
      %v2625 = vadd.f32 %v2589, %v2615
      %v2626 = vadd.f32 %v2590, %v2615
      %v2627 = vadd.f32 %v2591, %v2615
      %v2628 = vadd.f32 %v2592, %v2615
      %v2629 = vadd.f32 %v2593, %v2615
      %v2630 = vadd.f32 %v2594, %v2615
      %v2631 = vadd.f32 %v2595, %v2615
      %v2632 = vadd.f32 %v2596, %v2615
      %v2633 = vadd.f32 %v2597, %v2615
      %v2634 = vadd.f32 %v2598, %v2615
      %v2635 = vadd.f32 %v2599, %v2615
      %v2636 = vadd.f32 %v2600, %v2615
      %v2637 = vadd.f32 %v2601, %v2615
      %v2638 = vadd.f32 %v2602, %v2615
      %v2639 = vadd.f32 %v2603, %v2615
      %v2640 = vadd.f32 %v2604, %v2615
      %v2641 = vadd.f32 %v2605, %v2615
      %v2642 = vadd.f32 %v2606, %v2615
      %v2643 = vadd.f32 %v2607, %v2615
      %v2644 = vadd.f32 %v2608, %v2615
      %v2645 = vadd.f32 %v2609, %v2615
      %v2646 = vadd.f32 %v2610, %v2615
      %v2647 = vadd.f32 %v2611, %v2615
      %v2648 = vadd.f32 %v2612, %v2615
      %vm2649 = vcmask 7168
      %2650 = vst.msk [vmem:[%s172] sm:$0xff] %vm2649, %v2617
      %2651 = vst.msk [vmem:[%s172 + $0x8] sm:$0xff] %vm2649, %v2618
      %2652 = vst.msk [vmem:[%s172 + $0x10] sm:$0xff] %vm2649, %v2619
      %2653 = vst.msk [vmem:[%s172 + $0x18] sm:$0xff] %vm2649, %v2620
      %2654 = vst.msk [vmem:[%s172 + $0x20] sm:$0xff] %vm2649, %v2621
      %2655 = vst.msk [vmem:[%s172 + $0x28] sm:$0xff] %vm2649, %v2622
      %2656 = vst.msk [vmem:[%s172 + $0x30] sm:$0xff] %vm2649, %v2623
      %2657 = vst.msk [vmem:[%s172 + $0x38] sm:$0xff] %vm2649, %v2624
      %2658 = vst.msk [vmem:[%s172 + $0x40] sm:$0xff] %vm2649, %v2625
      %2659 = vst.msk [vmem:[%s172 + $0x48] sm:$0xff] %vm2649, %v2626
      %2660 = vst.msk [vmem:[%s172 + $0x50] sm:$0xff] %vm2649, %v2627
      %2661 = vst.msk [vmem:[%s172 + $0x58] sm:$0xff] %vm2649, %v2628
      %2662 = vst.msk [vmem:[%s172 + $0x60] sm:$0xff] %vm2649, %v2629
      %2663 = vst.msk [vmem:[%s172 + $0x68] sm:$0xff] %vm2649, %v2630
      %2664 = vst.msk [vmem:[%s172 + $0x70] sm:$0xff] %vm2649, %v2631
      %2665 = vst.msk [vmem:[%s172 + $0x78] sm:$0xff] %vm2649, %v2632
      %2666 = vst.msk [vmem:[%s172 + $0x80] sm:$0xff] %vm2649, %v2633
      %2667 = vst.msk [vmem:[%s172 + $0x88] sm:$0xff] %vm2649, %v2634
      %2668 = vst.msk [vmem:[%s172 + $0x90] sm:$0xff] %vm2649, %v2635
      %2669 = vst.msk [vmem:[%s172 + $0x98] sm:$0xff] %vm2649, %v2636
      %2670 = vst.msk [vmem:[%s172 + $0xa0] sm:$0xff] %vm2649, %v2637
      %2671 = vst.msk [vmem:[%s172 + $0xa8] sm:$0xff] %vm2649, %v2638
      %2672 = vst.msk [vmem:[%s172 + $0xb0] sm:$0xff] %vm2649, %v2639
      %2673 = vst.msk [vmem:[%s172 + $0xb8] sm:$0xff] %vm2649, %v2640
      %2674 = vst.msk [vmem:[%s172 + $0xc0] sm:$0xff] %vm2649, %v2641
      %2675 = vst.msk [vmem:[%s172 + $0xc8] sm:$0xff] %vm2649, %v2642
      %2676 = vst.msk [vmem:[%s172 + $0xd0] sm:$0xff] %vm2649, %v2643
      %2677 = vst.msk [vmem:[%s172 + $0xd8] sm:$0xff] %vm2649, %v2644
      %2678 = vst.msk [vmem:[%s172 + $0xe0] sm:$0xff] %vm2649, %v2645
      %2679 = vst.msk [vmem:[%s172 + $0xe8] sm:$0xff] %vm2649, %v2646
      %2680 = vst.msk [vmem:[%s172 + $0xf0] sm:$0xff] %vm2649, %v2647
      %2681 = vst.msk [vmem:[%s172 + $0xf8] sm:$0xff] %vm2649, %v2648
      %p2682 = scmp.lt.s32.totalorder %s16, 1
      %s2683 = scalar_select %p2682, %s16, 1
      %s2684 = smul.addr %s2683, 32
      %s2685 = smul.addr %s2684, 8
      %s2686 = scalar_lea.vmem %s3, %s2685
      // Predicated region
      $region33: #{esf_forward.5} parent=31 // pred_check
        %p2687 = pneg %p102
      $region34: #{esf_forward.5} parent=31 // pred_check_branch
        %2689 = sbr.rel (%p2687) target = $region36
      $region35: #{esf_forward.5} parent=31 // pred_region
        _
      $region36: #{esf_forward.5} parent=31 // pred_fallthru
        _
    $region32: #{esf_forward.5} parent=5 // pred_fallthru
      _
    %p2690 = scmp.le.s32.totalorder 2, %s11
    // Predicated region
    $region37: #{esf_forward.5} parent=5 // pred_check
      %p2691 = pneg %p2690
    $region38: #{esf_forward.5} parent=5 // pred_check_branch
      %2693 = sbr.rel (%p2691) target = $region40
    $region39: #{esf_forward.5} parent=5 // pred_region
      %s2694 = ssub.s32 %s11, 2
      // Predicated region
      $region41: #{esf_forward.5} parent=39 // pred_check
        %p2695 = pneg %p108
      $region42: #{esf_forward.5} parent=39 // pred_check_branch
        %2697 = sbr.rel (%p2695) target = $region44
      $region43: #{esf_forward.5} parent=39 // pred_region
        %p2698 = scmp.lt.s32.totalorder %s17, 1
        %s2699 = scalar_select %p2698, %s17, 1
        %s2700 = smul.addr %s2699, 32
        %s2701 = smul.addr %s2700, 8
        %s2702 = scalar_lea.vmem %s3, %s2701
      $region44: #{esf_forward.5} parent=39 // pred_fallthru
        _
    $region40: #{esf_forward.5} parent=5 // pred_fallthru
      _
  $region6: #{esf_forward.5} parent=0 // loop_footer
    %s15 = sadd.s32 1, %s11
  $region7: #{esf_forward.5} parent=0 // loop_footer_branch
    %10 = sbr.rel target = $region3
  $region8: #{esf_forward.5} parent=0 // loop_exit
    _

// kernel: esf_forward.8
$region0: #{esf_forward.8}
  #allocation0 [shape = 'u32[]', space=smem, size = 0x4, offset = 0x4, fixed_abs, tag = 'smem constant byte address 0x4 - core index']
  #allocation1 [shape = 'u32[72,128]{1,0:T(1,128)}', space=vmem, size = 0x9000, scoped, tag = 'internal scratch']
  %s0 = inlined_call_operand.vmem [shape: f32[2,256,32], index: 0, kind: input, shape index: {}]
  %s1 = inlined_call_operand.vmem [shape: bf16[256,50], index: 1, kind: input, shape index: {}]
  %s2 = inlined_call_operand.vmem [shape: bf16[2,50,32], index: 2, kind: input, shape index: {}]
  %s3 = inlined_call_operand.vmem [shape: bf16[32,32], index: 3, kind: input, shape index: {}]
  %s4 = inlined_call_operand.vmem [shape: f32[1,32], index: 4, kind: input, shape index: {}]
  %s5 = inlined_call_operand.vmem [shape: f32[2,256,1], index: 5, kind: input, shape index: {}]
  %s6 = inlined_call_operand.vmem [shape: f32[2,1,1], index: 6, kind: input, shape index: {}]
  %s7 = inlined_call_operand.vmem [shape: f32[2,1,32], index: 7, kind: input, shape index: {}]
  %s8 = inlined_call_operand.vmem [shape: f32[2,256,32], index: 8, kind: output, shape index: {}]
  %s9 = sld [smem:[#allocation0]]
  $region65: #{esf_forward.8} parent=0
    _
  %s11 = ssub.s32 1, %s9
  %s12 = scalar_select 0, %s11, %s9
  loop: start=0, step=1, limit=4
  $region2: #{esf_forward.8} parent=0 // loop_pre_header
    _
  $region3: #{esf_forward.8} parent=0 // loop_header
    %s14 = sphi 0, %s18
    %p15 = scmp.ge.s32.totalorder %s14, 4
    %s21 = sphi 0, %s33
    %s22 = sphi 0, %s29
    %s23 = sphi 0, %s21
    %s24 = sphi 0, %s22
    %s25 = sphi 0, %s23
    %s26 = sphi 0, %s24
    %s38 = sphi 0, %s40
    %s41 = sphi 0, %s38
    %s42 = sphi 0, %s41
    %s58 = sphi 0, %s42
    %s64 = sphi 0, %s66
    %s67 = sphi 0, %s64
    %s68 = sphi 0, %s67
    %s84 = sphi 0, %s68
    %s90 = sphi 0, %s92
    %s93 = sphi 0, %s90
    %s94 = sphi 0, %s93
    %s110 = sphi 0, %s94
    %s114 = sphi 0, %s114
    %s116 = sphi 0, %s114
    %s117 = sphi 0, %s116
    %s131 = sphi 0, %s117
    %s135 = sphi 0, %s135
    %s137 = sphi 0, %s135
    %s138 = sphi 0, %s137
    %s152 = sphi 0, %s138
    %s160 = sphi 0, %s162
    %s163 = sphi 0, %s160
    %s164 = sphi 0, %s163
    %s180 = sphi 0, %s164
    %s186 = sphi 0, %s188
    %s189 = sphi 0, %s186
    %s190 = sphi 0, %s189
    %s206 = sphi 0, %s190
    %s212 = sphi 0, %s214
    %s215 = sphi 0, %s212
    %s216 = sphi 0, %s215
    %s232 = sphi 0, %s216
    %s240 = sphi 0, %s242
    %s243 = sphi 0, %s240
    %s244 = sphi 0, %s243
    %s260 = sphi 0, %s244
  $region4: #{esf_forward.8} parent=0 // loop_header_branch
    %17 = sbr.rel (%p15) target = $region8
  $region5: #{esf_forward.8} parent=0 // loop_body
    %s19 = ssub.s32 %s14, 1
    %s20 = ssub.s32 %s14, 2
    %s27 = sadd.s32 1, %s22
    %p28 = scmp.ge.s32.totalorder %s27, 1
    %s29 = scalar_select %p28, 0, %s27
    %s30 = sadd.s32 1, %s21
    %s31 = scalar_select %p28, %s30, %s21
    %p32 = scmp.ge.s32.totalorder %s31, 2
    %s33 = scalar_select %p32, 0, %s31
    %s34 = ssub.s32 %s21, %s33
    %s35 = ssub.s32 %s22, %s29
    %s36 = sor.u32 %s34, %s35
    %p37 = scmp.eq.s32.totalorder %s36, 0
    %s39 = sadd.s32 %s38, 1
    %s40 = scalar_select %p37, %s38, %s39
    %p43 = pneg %p37
    %p44 = scmp.eq.s32.totalorder %s14, 1
    %p45 = por %p43, %p44
    %p46 = scmp.ne.s32.totalorder %s38, %s41
    %p47 = scmp.eq.s32.totalorder %s14, 0
    %p48 = por %p46, %p47
    %p49 = scmp.ne.s32.totalorder %s38, %s41
    %p50 = scmp.eq.s32.totalorder %s19, 1
    %p51 = por %p49, %p50
    %p52 = scmp.ne.s32.totalorder %s41, %s42
    %p53 = scmp.eq.s32.totalorder %s19, 0
    %p54 = por %p52, %p53
    %p55 = scmp.ne.s32.totalorder %s41, %s42
    %p56 = scmp.eq.s32.totalorder %s20, 1
    %p57 = por %p55, %p56
    %p59 = scmp.ne.s32.totalorder %s42, %s58
    %p60 = scmp.eq.s32.totalorder %s20, 0
    %p61 = por %p59, %p60
    %s62 = ssub.s32 %s22, %s29
    %p63 = scmp.eq.s32.totalorder %s62, 0
    %s65 = sadd.s32 %s64, 1
    %s66 = scalar_select %p63, %s64, %s65
    %p69 = pneg %p63
    %p70 = scmp.eq.s32.totalorder %s14, 1
    %p71 = por %p69, %p70
    %p72 = scmp.ne.s32.totalorder %s64, %s67
    %p73 = scmp.eq.s32.totalorder %s14, 0
    %p74 = por %p72, %p73
    %p75 = scmp.ne.s32.totalorder %s64, %s67
    %p76 = scmp.eq.s32.totalorder %s19, 1
    %p77 = por %p75, %p76
    %p78 = scmp.ne.s32.totalorder %s67, %s68
    %p79 = scmp.eq.s32.totalorder %s19, 0
    %p80 = por %p78, %p79
    %p81 = scmp.ne.s32.totalorder %s67, %s68
    %p82 = scmp.eq.s32.totalorder %s20, 1
    %p83 = por %p81, %p82
    %p85 = scmp.ne.s32.totalorder %s68, %s84
    %p86 = scmp.eq.s32.totalorder %s20, 0
    %p87 = por %p85, %p86
    %s88 = ssub.s32 %s21, %s33
    %p89 = scmp.eq.s32.totalorder %s88, 0
    %s91 = sadd.s32 %s90, 1
    %s92 = scalar_select %p89, %s90, %s91
    %p95 = pneg %p89
    %p96 = scmp.eq.s32.totalorder %s14, 1
    %p97 = por %p95, %p96
    %p98 = scmp.ne.s32.totalorder %s90, %s93
    %p99 = scmp.eq.s32.totalorder %s14, 0
    %p100 = por %p98, %p99
    %p101 = scmp.ne.s32.totalorder %s90, %s93
    %p102 = scmp.eq.s32.totalorder %s19, 1
    %p103 = por %p101, %p102
    %p104 = scmp.ne.s32.totalorder %s93, %s94
    %p105 = scmp.eq.s32.totalorder %s19, 0
    %p106 = por %p104, %p105
    %p107 = scmp.ne.s32.totalorder %s93, %s94
    %p108 = scmp.eq.s32.totalorder %s20, 1
    %p109 = por %p107, %p108
    %p111 = scmp.ne.s32.totalorder %s94, %s110
    %p112 = scmp.eq.s32.totalorder %s20, 0
    %p113 = por %p111, %p112
    %s115 = sadd.s32 %s114, 1
    %p118 = scmp.eq.s32.totalorder %s14, 1
    %p119 = scmp.ne.s32.totalorder %s114, %s116
    %p120 = scmp.eq.s32.totalorder %s14, 0
    %p121 = por %p119, %p120
    %p122 = scmp.ne.s32.totalorder %s114, %s116
    %p123 = scmp.eq.s32.totalorder %s19, 1
    %p124 = por %p122, %p123
    %p125 = scmp.ne.s32.totalorder %s116, %s117
    %p126 = scmp.eq.s32.totalorder %s19, 0
    %p127 = por %p125, %p126
    %p128 = scmp.ne.s32.totalorder %s116, %s117
    %p129 = scmp.eq.s32.totalorder %s20, 1
    %p130 = por %p128, %p129
    %p132 = scmp.ne.s32.totalorder %s117, %s131
    %p133 = scmp.eq.s32.totalorder %s20, 0
    %p134 = por %p132, %p133
    %s136 = sadd.s32 %s135, 1
    %p139 = scmp.eq.s32.totalorder %s14, 1
    %p140 = scmp.ne.s32.totalorder %s135, %s137
    %p141 = scmp.eq.s32.totalorder %s14, 0
    %p142 = por %p140, %p141
    %p143 = scmp.ne.s32.totalorder %s135, %s137
    %p144 = scmp.eq.s32.totalorder %s19, 1
    %p145 = por %p143, %p144
    %p146 = scmp.ne.s32.totalorder %s137, %s138
    %p147 = scmp.eq.s32.totalorder %s19, 0
    %p148 = por %p146, %p147
    %p149 = scmp.ne.s32.totalorder %s137, %s138
    %p150 = scmp.eq.s32.totalorder %s20, 1
    %p151 = por %p149, %p150
    %p153 = scmp.ne.s32.totalorder %s138, %s152
    %p154 = scmp.eq.s32.totalorder %s20, 0
    %p155 = por %p153, %p154
    %s156 = ssub.s32 %s21, %s33
    %s157 = ssub.s32 %s22, %s29
    %s158 = sor.u32 %s156, %s157
    %p159 = scmp.eq.s32.totalorder %s158, 0
    %s161 = sadd.s32 %s160, 1
    %s162 = scalar_select %p159, %s160, %s161
    %p165 = pneg %p159
    %p166 = scmp.eq.s32.totalorder %s14, 1
    %p167 = por %p165, %p166
    %p168 = scmp.ne.s32.totalorder %s160, %s163
    %p169 = scmp.eq.s32.totalorder %s14, 0
    %p170 = por %p168, %p169
    %p171 = scmp.ne.s32.totalorder %s160, %s163
    %p172 = scmp.eq.s32.totalorder %s19, 1
    %p173 = por %p171, %p172
    %p174 = scmp.ne.s32.totalorder %s163, %s164
    %p175 = scmp.eq.s32.totalorder %s19, 0
    %p176 = por %p174, %p175
    %p177 = scmp.ne.s32.totalorder %s163, %s164
    %p178 = scmp.eq.s32.totalorder %s20, 1
    %p179 = por %p177, %p178
    %p181 = scmp.ne.s32.totalorder %s164, %s180
    %p182 = scmp.eq.s32.totalorder %s20, 0
    %p183 = por %p181, %p182
    %s184 = ssub.s32 %s21, %s33
    %p185 = scmp.eq.s32.totalorder %s184, 0
    %s187 = sadd.s32 %s186, 1
    %s188 = scalar_select %p185, %s186, %s187
    %p191 = pneg %p185
    %p192 = scmp.eq.s32.totalorder %s14, 1
    %p193 = por %p191, %p192
    %p194 = scmp.ne.s32.totalorder %s186, %s189
    %p195 = scmp.eq.s32.totalorder %s14, 0
    %p196 = por %p194, %p195
    %p197 = scmp.ne.s32.totalorder %s186, %s189
    %p198 = scmp.eq.s32.totalorder %s19, 1
    %p199 = por %p197, %p198
    %p200 = scmp.ne.s32.totalorder %s189, %s190
    %p201 = scmp.eq.s32.totalorder %s19, 0
    %p202 = por %p200, %p201
    %p203 = scmp.ne.s32.totalorder %s189, %s190
    %p204 = scmp.eq.s32.totalorder %s20, 1
    %p205 = por %p203, %p204
    %p207 = scmp.ne.s32.totalorder %s190, %s206
    %p208 = scmp.eq.s32.totalorder %s20, 0
    %p209 = por %p207, %p208
    %s210 = ssub.s32 %s21, %s33
    %p211 = scmp.eq.s32.totalorder %s210, 0
    %s213 = sadd.s32 %s212, 1
    %s214 = scalar_select %p211, %s212, %s213
    %p217 = pneg %p211
    %p218 = scmp.eq.s32.totalorder %s14, 1
    %p219 = por %p217, %p218
    %p220 = scmp.ne.s32.totalorder %s212, %s215
    %p221 = scmp.eq.s32.totalorder %s14, 0
    %p222 = por %p220, %p221
    %p223 = scmp.ne.s32.totalorder %s212, %s215
    %p224 = scmp.eq.s32.totalorder %s19, 1
    %p225 = por %p223, %p224
    %p226 = scmp.ne.s32.totalorder %s215, %s216
    %p227 = scmp.eq.s32.totalorder %s19, 0
    %p228 = por %p226, %p227
    %p229 = scmp.ne.s32.totalorder %s215, %s216
    %p230 = scmp.eq.s32.totalorder %s20, 1
    %p231 = por %p229, %p230
    %p233 = scmp.ne.s32.totalorder %s216, %s232
    %p234 = scmp.eq.s32.totalorder %s20, 0
    %p235 = por %p233, %p234
    %s236 = ssub.s32 %s21, %s33
    %s237 = ssub.s32 %s22, %s29
    %s238 = sor.u32 %s236, %s237
    %p239 = scmp.eq.s32.totalorder %s238, 0
    %s241 = sadd.s32 %s240, 1
    %s242 = scalar_select %p239, %s240, %s241
    %p245 = pneg %p239
    %p246 = scmp.eq.s32.totalorder %s14, 1
    %p247 = por %p245, %p246
    %p248 = scmp.ne.s32.totalorder %s240, %s243
    %p249 = scmp.eq.s32.totalorder %s14, 0
    %p250 = por %p248, %p249
    %p251 = scmp.ne.s32.totalorder %s240, %s243
    %p252 = scmp.eq.s32.totalorder %s19, 1
    %p253 = por %p251, %p252
    %p254 = scmp.ne.s32.totalorder %s243, %s244
    %p255 = scmp.eq.s32.totalorder %s19, 0
    %p256 = por %p254, %p255
    %p257 = scmp.ne.s32.totalorder %s243, %s244
    %p258 = scmp.eq.s32.totalorder %s20, 1
    %p259 = por %p257, %p258
    %p261 = scmp.ne.s32.totalorder %s244, %s260
    %p262 = scmp.eq.s32.totalorder %s20, 0
    %p263 = por %p261, %p262
    %p264 = scmp.le.s32.totalorder 1, %s14
    %p265 = scmp.lt.s32.totalorder %s14, 3
    %p266 = pnand %p264, %p265
    %p267 = pneg %p266
    // Predicated region
    $region9: #{esf_forward.8} parent=5 // pred_check
      _
    $region10: #{esf_forward.8} parent=5 // pred_check_branch
      %269 = sbr.rel (%p266) target = $region12
    $region11: #{esf_forward.8} parent=5 // pred_region
      %s270 = ssub.s32 %s14, 1
      // Predicated region
      $region13: #{esf_forward.8} parent=11 // pred_check
        %p271 = pneg %p80
      $region14: #{esf_forward.8} parent=11 // pred_check_branch
        %273 = sbr.rel (%p271) target = $region16
      $region15: #{esf_forward.8} parent=11 // pred_region
        %s274 = smul.u32 32, %s24
        %p275 = scmp.lt.s32.totalorder %s274, 31
        %s276 = scalar_select %p275, %s274, 31
        %s277 = smul.addr %s276, 4
        %s278 = scalar_lea.vmem %s1, %s277
        %s279 = smul.u32 32, %s24
      $region16: #{esf_forward.8} parent=11 // pred_fallthru
        _
      // Predicated region
      $region17: #{esf_forward.8} parent=11 // pred_check
        %p280 = pneg %p127
      $region18: #{esf_forward.8} parent=11 // pred_check_branch
        %282 = sbr.rel (%p280) target = $region20
      $region19: #{esf_forward.8} parent=11 // pred_region
        _
      $region20: #{esf_forward.8} parent=11 // pred_fallthru
        _
      // Predicated region
      $region21: #{esf_forward.8} parent=11 // pred_check
        %p283 = pneg %p148
      $region22: #{esf_forward.8} parent=11 // pred_check_branch
        %285 = sbr.rel (%p283) target = $region24
      $region23: #{esf_forward.8} parent=11 // pred_region
        _
      $region24: #{esf_forward.8} parent=11 // pred_fallthru
        _
    $region12: #{esf_forward.8} parent=5 // pred_fallthru
      _
    %p286 = scmp.lt.s32.totalorder %s14, 2
    // Predicated region
    $region25: #{esf_forward.8} parent=5 // pred_check
      %p287 = pneg %p286
    $region26: #{esf_forward.8} parent=5 // pred_check_branch
      %289 = sbr.rel (%p287) target = $region28
    $region27: #{esf_forward.8} parent=5 // pred_region
      // Predicated region
      $region29: #{esf_forward.8} parent=27 // pred_check
        %p290 = pneg %p48
      $region30: #{esf_forward.8} parent=27 // pred_check_branch
        %292 = sbr.rel (%p290) target = $region32
      $region31: #{esf_forward.8} parent=27 // pred_region
        %s293 = smul.u32 32, %s22
        %p294 = scmp.lt.s32.totalorder %s21, 1
        %s295 = scalar_select %p294, %s21, 1
        %p296 = scmp.lt.s32.totalorder %s293, 31
        %s297 = scalar_select %p296, %s293, 31
        %s298 = smul.addr %s295, 32
        %s299 = sadd.s32 %s297, %s298
        %s300 = smul.addr %s299, 8
        %s301 = scalar_lea.vmem %s0, %s300
        %s302 = smul.u32 32, %s22
      $region32: #{esf_forward.8} parent=27 // pred_fallthru
        _
      // Predicated region
      $region33: #{esf_forward.8} parent=27 // pred_check
        %p303 = pneg %p100
      $region34: #{esf_forward.8} parent=27 // pred_check_branch
        %305 = sbr.rel (%p303) target = $region36
      $region35: #{esf_forward.8} parent=27 // pred_region
        %p306 = scmp.lt.s32.totalorder %s21, 1
        %s307 = scalar_select %p306, %s21, 1
        %s308 = smul.addr %s307, 7
        %s309 = smul.addr %s308, 4
        %s310 = scalar_lea.vmem %s2, %s309
      $region36: #{esf_forward.8} parent=27 // pred_fallthru
        _
      // Predicated region
      $region37: #{esf_forward.8} parent=27 // pred_check
        %p311 = pneg %p170
      $region38: #{esf_forward.8} parent=27 // pred_check_branch
        %313 = sbr.rel (%p311) target = $region40
      $region39: #{esf_forward.8} parent=27 // pred_region
        %s314 = smul.u32 32, %s22
        %p315 = scmp.lt.s32.totalorder %s21, 1
        %s316 = scalar_select %p315, %s21, 1
        %p317 = scmp.lt.s32.totalorder %s314, 31
        %s318 = scalar_select %p317, %s314, 31
        %s319 = smul.addr %s316, 32
        %s320 = sadd.s32 %s318, %s319
        %s321 = smul.addr %s320, 8
        %s322 = scalar_lea.vmem %s5, %s321
        %s323 = smul.u32 32, %s22
      $region40: #{esf_forward.8} parent=27 // pred_fallthru
        _
      // Predicated region
      $region41: #{esf_forward.8} parent=27 // pred_check
        %p324 = pneg %p196
      $region42: #{esf_forward.8} parent=27 // pred_check_branch
        %326 = sbr.rel (%p324) target = $region44
      $region43: #{esf_forward.8} parent=27 // pred_region
        %p327 = scmp.lt.s32.totalorder %s21, 1
        %s328 = scalar_select %p327, %s21, 1
        %s329 = scalar_lea.vmem %s6, %s328
      $region44: #{esf_forward.8} parent=27 // pred_fallthru
        _
      // Predicated region
      $region45: #{esf_forward.8} parent=27 // pred_check
        %p330 = pneg %p222
      $region46: #{esf_forward.8} parent=27 // pred_check_branch
        %332 = sbr.rel (%p330) target = $region48
      $region47: #{esf_forward.8} parent=27 // pred_region
        %p333 = scmp.lt.s32.totalorder %s21, 1
        %s334 = scalar_select %p333, %s21, 1
        %s335 = scalar_lea.vmem %s7, %s334
      $region48: #{esf_forward.8} parent=27 // pred_fallthru
        _
    $region28: #{esf_forward.8} parent=5 // pred_fallthru
      _
    %p336 = scmp.le.s32.totalorder 1, %s14
    %p337 = scmp.lt.s32.totalorder %s14, 3
    %p338 = pnand %p336, %p337
    %p339 = pneg %p338
    // Predicated region
    $region49: #{esf_forward.8} parent=5 // pred_check
      _
    $region50: #{esf_forward.8} parent=5 // pred_check_branch
      %341 = sbr.rel (%p338) target = $region52
    $region51: #{esf_forward.8} parent=5 // pred_region
      %s342 = ssub.s32 %s14, 1
      %s343 = smul.u32 32, %s24
      %p344 = scmp.lt.s32.totalorder %s23, 1
      %s345 = scalar_select %p344, %s23, 1
      %p346 = scmp.lt.s32.totalorder %s343, 31
      %s347 = scalar_select %p346, %s343, 31
      %s348 = smul.addr %s345, 32
      %s349 = sadd.s32 %s347, %s348
      %s350 = smul.addr %s349, 8
      %s351 = scalar_lea.vmem %s0, %s350
      %p352 = pneg %p54
      %p353 = pneg %p51
      %s354 = smul.u32 32, %s24
      %p355 = scmp.lt.s32.totalorder %s354, 31
      %s356 = scalar_select %p355, %s354, 31
      %s357 = smul.addr %s356, 4
      %s358 = scalar_lea.vmem %s1, %s357
      %p359 = pneg %p80
      %p360 = pneg %p77
      %p361 = scmp.lt.s32.totalorder %s23, 1
      %s362 = scalar_select %p361, %s23, 1
      %s363 = smul.addr %s362, 7
      %s364 = smul.addr %s363, 4
      %s365 = scalar_lea.vmem %s2, %s364
      %p366 = pneg %p106
      %p367 = pneg %p103
      %p368 = pneg %p127
      %p369 = pneg %p124
      %p370 = pneg %p148
      %p371 = pneg %p145
      %s372 = smul.u32 32, %s24
      %p373 = scmp.lt.s32.totalorder %s23, 1
      %s374 = scalar_select %p373, %s23, 1
      %p375 = scmp.lt.s32.totalorder %s372, 31
      %s376 = scalar_select %p375, %s372, 31
      %s377 = smul.addr %s374, 32
      %s378 = sadd.s32 %s376, %s377
      %s379 = smul.addr %s378, 8
      %s380 = scalar_lea.vmem %s5, %s379
      %p381 = pneg %p176
      %p382 = pneg %p173
      %p383 = scmp.lt.s32.totalorder %s23, 1
      %s384 = scalar_select %p383, %s23, 1
      %s385 = scalar_lea.vmem %s6, %s384
      %p386 = pneg %p202
      %p387 = pneg %p199
      %p388 = scmp.lt.s32.totalorder %s23, 1
      %s389 = scalar_select %p388, %s23, 1
      %s390 = scalar_lea.vmem %s7, %s389
      %p391 = pneg %p228
      %p392 = pneg %p225
      %p393 = pneg %p256
      %p394 = pneg %p253
      %s395 = smul.u32 32, %s24
      %p396 = scmp.lt.s32.totalorder %s23, 1
      %s397 = scalar_select %p396, %s23, 1
      %p398 = scmp.lt.s32.totalorder %s395, 31
      %s399 = scalar_select %p398, %s395, 31
      %s400 = smul.addr %s397, 32
      %s401 = sadd.s32 %s399, %s400
      %s402 = smul.addr %s401, 8
      %s403 = scalar_lea.vmem %s8, %s402
      %s404 = smul.u32 32, %s24
      %p405 = scmp.lt.s32.totalorder %s23, 1
      %s406 = scalar_select %p405, %s23, 1
      %p407 = scmp.lt.s32.totalorder %s404, 31
      %s408 = scalar_select %p407, %s404, 31
      %s409 = smul.addr %s406, 32
      %s410 = sadd.s32 %s408, %s409
      %s411 = smul.addr %s410, 8
      %s412 = scalar_lea.vmem %s0, %s411
      %s413 = smul.u32 32, %s24
      %s414 = smul.u32 32, %s24
      %p415 = scmp.lt.s32.totalorder %s414, 31
      %s416 = scalar_select %p415, %s414, 31
      %s417 = smul.addr %s416, 4
      %s418 = scalar_lea.vmem %s1, %s417
      %s419 = smul.u32 32, %s24
      %p420 = scmp.lt.s32.totalorder %s23, 1
      %s421 = scalar_select %p420, %s23, 1
      %s422 = smul.addr %s421, 7
      %s423 = smul.addr %s422, 4
      %s424 = scalar_lea.vmem %s2, %s423
      %s425 = smul.u32 32, %s24
      %p426 = scmp.lt.s32.totalorder %s23, 1
      %s427 = scalar_select %p426, %s23, 1
      %p428 = scmp.lt.s32.totalorder %s425, 31
      %s429 = scalar_select %p428, %s425, 31
      %s430 = smul.addr %s427, 32
      %s431 = sadd.s32 %s429, %s430
      %s432 = smul.addr %s431, 8
      %s433 = scalar_lea.vmem %s5, %s432
      %s434 = smul.u32 32, %s24
      %p435 = scmp.lt.s32.totalorder %s23, 1
      %s436 = scalar_select %p435, %s23, 1
      %s437 = scalar_lea.vmem %s6, %s436
      %p438 = scmp.lt.s32.totalorder %s23, 1
      %s439 = scalar_select %p438, %s23, 1
      %s440 = scalar_lea.vmem %s7, %s439
      %s441 = smul.u32 32, %s24
      %p442 = scmp.lt.s32.totalorder %s23, 1
      %s443 = scalar_select %p442, %s23, 1
      %p444 = scmp.lt.s32.totalorder %s441, 31
      %s445 = scalar_select %p444, %s441, 31
      %s446 = smul.addr %s443, 32
      %s447 = sadd.s32 %s445, %s446
      %s448 = smul.addr %s447, 8
      %s449 = scalar_lea.vmem %s8, %s448
      %s450 = smul.u32 32, %s24
      %v452 = vld [vmem:[%s412] sm:$0xff]
      %v453 = vld [vmem:[%s412 + $0x8] sm:$0xff]
      %v454 = vld [vmem:[%s412 + $0x10] sm:$0xff]
      %v455 = vld [vmem:[%s412 + $0x18] sm:$0xff]
      %v456 = vld [vmem:[%s412 + $0x20] sm:$0xff]
      %v457 = vld [vmem:[%s412 + $0x28] sm:$0xff]
      %v458 = vld [vmem:[%s412 + $0x30] sm:$0xff]
      %v459 = vld [vmem:[%s412 + $0x38] sm:$0xff]
      %v460 = vld [vmem:[%s412 + $0x40] sm:$0xff]
      %v461 = vld [vmem:[%s412 + $0x48] sm:$0xff]
      %v462 = vld [vmem:[%s412 + $0x50] sm:$0xff]
      %v463 = vld [vmem:[%s412 + $0x58] sm:$0xff]
      %v464 = vld [vmem:[%s412 + $0x60] sm:$0xff]
      %v465 = vld [vmem:[%s412 + $0x68] sm:$0xff]
      %v466 = vld [vmem:[%s412 + $0x70] sm:$0xff]
      %v467 = vld [vmem:[%s412 + $0x78] sm:$0xff]
      %v468 = vld [vmem:[%s412 + $0x80] sm:$0xff]
      %v469 = vld [vmem:[%s412 + $0x88] sm:$0xff]
      %v470 = vld [vmem:[%s412 + $0x90] sm:$0xff]
      %v471 = vld [vmem:[%s412 + $0x98] sm:$0xff]
      %v472 = vld [vmem:[%s412 + $0xa0] sm:$0xff]
      %v473 = vld [vmem:[%s412 + $0xa8] sm:$0xff]
      %v474 = vld [vmem:[%s412 + $0xb0] sm:$0xff]
      %v475 = vld [vmem:[%s412 + $0xb8] sm:$0xff]
      %v476 = vld [vmem:[%s412 + $0xc0] sm:$0xff]
      %v477 = vld [vmem:[%s412 + $0xc8] sm:$0xff]
      %v478 = vld [vmem:[%s412 + $0xd0] sm:$0xff]
      %v479 = vld [vmem:[%s412 + $0xd8] sm:$0xff]
      %v480 = vld [vmem:[%s412 + $0xe0] sm:$0xff]
      %v481 = vld [vmem:[%s412 + $0xe8] sm:$0xff]
      %v482 = vld [vmem:[%s412 + $0xf0] sm:$0xff]
      %v483 = vld [vmem:[%s412 + $0xf8] sm:$0xff]
      %v484 = vpack.c.bf16 %v453, %v452
      %v485 = vpack.c.bf16 %v455, %v454
      %v486 = vpack.c.bf16 %v457, %v456
      %v487 = vpack.c.bf16 %v459, %v458
      %v488 = vpack.c.bf16 %v461, %v460
      %v489 = vpack.c.bf16 %v463, %v462
      %v490 = vpack.c.bf16 %v465, %v464
      %v491 = vpack.c.bf16 %v467, %v466
      %v492 = vpack.c.bf16 %v469, %v468
      %v493 = vpack.c.bf16 %v471, %v470
      %v494 = vpack.c.bf16 %v473, %v472
      %v495 = vpack.c.bf16 %v475, %v474
      %v496 = vpack.c.bf16 %v477, %v476
      %v497 = vpack.c.bf16 %v479, %v478
      %v498 = vpack.c.bf16 %v481, %v480
      %v499 = vpack.c.bf16 %v483, %v482
      %v500 = vld [vmem:[%s3] sm:$0xf]
      %v501 = vld [vmem:[%s3 + $0x4] sm:$0xf]
      %v502 = vld [vmem:[%s3 + $0x8] sm:$0xf]
      %v503 = vld [vmem:[%s3 + $0xc] sm:$0xf]
      %v504 = vld [vmem:[%s418] sm:$0xf]
      %v505 = vld [vmem:[%s418 + $0x4] sm:$0xf]
      %v506 = vld [vmem:[%s418 + $0x8] sm:$0xf]
      %v507 = vld [vmem:[%s418 + $0xc] sm:$0xf]
      %v508 = vld [vmem:[%s418 + $0x10] sm:$0xf]
      %v509 = vld [vmem:[%s418 + $0x14] sm:$0xf]
      %v510 = vld [vmem:[%s418 + $0x18] sm:$0xf]
      %v511 = vld [vmem:[%s418 + $0x1c] sm:$0xf]
      %v512 = vld [vmem:[%s418 + $0x20] sm:$0xf]
      %v513 = vld [vmem:[%s418 + $0x24] sm:$0xf]
      %v514 = vld [vmem:[%s418 + $0x28] sm:$0xf]
      %v515 = vld [vmem:[%s418 + $0x2c] sm:$0xf]
      %v516 = vld [vmem:[%s418 + $0x30] sm:$0xf]
      %v517 = vld [vmem:[%s418 + $0x34] sm:$0xf]
      %v518 = vld [vmem:[%s418 + $0x38] sm:$0xf]
      %v519 = vld [vmem:[%s418 + $0x3c] sm:$0xf]
      %v520 = vld [vmem:[%s418 + $0x40] sm:$0xf]
      %v521 = vld [vmem:[%s418 + $0x44] sm:$0xf]
      %v522 = vld [vmem:[%s418 + $0x48] sm:$0xf]
      %v523 = vld [vmem:[%s418 + $0x4c] sm:$0xf]
      %v524 = vld [vmem:[%s418 + $0x50] sm:$0xf]
      %v525 = vld [vmem:[%s418 + $0x54] sm:$0xf]
      %v526 = vld [vmem:[%s418 + $0x58] sm:$0xf]
      %v527 = vld [vmem:[%s418 + $0x5c] sm:$0xf]
      %v528 = vld [vmem:[%s418 + $0x60] sm:$0xf]
      %v529 = vld [vmem:[%s418 + $0x64] sm:$0xf]
      %v530 = vld [vmem:[%s418 + $0x68] sm:$0xf]
      %v531 = vld [vmem:[%s418 + $0x6c] sm:$0xf]
      %v532 = vld [vmem:[%s418 + $0x70] sm:$0xf]
      %v533 = vld [vmem:[%s418 + $0x74] sm:$0xf]
      %v534 = vld [vmem:[%s418 + $0x78] sm:$0xf]
      %v535 = vld [vmem:[%s418 + $0x7c] sm:$0xf]
      %v536 = vld [vmem:[%s424] sm:$0xf]
      %v537 = vld [vmem:[%s424 + $0x4] sm:$0xf]
      %v538 = vld [vmem:[%s424 + $0x8] sm:$0xf]
      %v539 = vld [vmem:[%s424 + $0xc] sm:$0xf]
      %v540 = vld [vmem:[%s424 + $0x10] sm:$0xf]
      %v541 = vld [vmem:[%s424 + $0x14] sm:$0xf]
      %v542 = vld [vmem:[%s424 + $0x18] sm:$0x1]
      %v575 = vunpack.c.l.b16 %v504
      %v576 = vunpack.c.l.b16 %v505
      %v577 = vunpack.c.l.b16 %v506
      %v578 = vunpack.c.l.b16 %v507
      %v579 = vunpack.c.l.b16 %v508
      %v580 = vunpack.c.l.b16 %v509
      %v581 = vunpack.c.l.b16 %v510
      %v582 = vunpack.c.l.b16 %v511
      %v583 = vunpack.c.l.b16 %v512
      %v584 = vunpack.c.l.b16 %v513
      %v585 = vunpack.c.l.b16 %v514
      %v586 = vunpack.c.l.b16 %v515
      %v587 = vunpack.c.l.b16 %v516
      %v588 = vunpack.c.l.b16 %v517
      %v589 = vunpack.c.l.b16 %v518
      %v590 = vunpack.c.l.b16 %v519
      %v591 = vunpack.c.l.b16 %v520
      %v592 = vunpack.c.l.b16 %v521
      %v593 = vunpack.c.l.b16 %v522
      %v594 = vunpack.c.l.b16 %v523
      %v595 = vunpack.c.l.b16 %v524
      %v596 = vunpack.c.l.b16 %v525
      %v597 = vunpack.c.l.b16 %v526
      %v598 = vunpack.c.l.b16 %v527
      %v599 = vunpack.c.l.b16 %v528
      %v600 = vunpack.c.l.b16 %v529
      %v601 = vunpack.c.l.b16 %v530
      %v602 = vunpack.c.l.b16 %v531
      %v603 = vunpack.c.l.b16 %v532
      %v604 = vunpack.c.l.b16 %v533
      %v605 = vunpack.c.l.b16 %v534
      %v606 = vunpack.c.l.b16 %v535
      %v607 = vpack.c.b16 %v576, %v575
      %v608 = vpack.c.b16 %v578, %v577
      %v609 = vpack.c.b16 %v580, %v579
      %v610 = vpack.c.b16 %v582, %v581
      %v611 = vpack.c.b16 %v584, %v583
      %v612 = vpack.c.b16 %v586, %v585
      %v613 = vpack.c.b16 %v588, %v587
      %v614 = vpack.c.b16 %v590, %v589
      %v615 = vpack.c.b16 %v592, %v591
      %v616 = vpack.c.b16 %v594, %v593
      %v617 = vpack.c.b16 %v596, %v595
      %v618 = vpack.c.b16 %v598, %v597
      %v619 = vpack.c.b16 %v600, %v599
      %v620 = vpack.c.b16 %v602, %v601
      %v621 = vpack.c.b16 %v604, %v603
      %v622 = vpack.c.b16 %v606, %v605
      %v630 = vunpack.c.l.b16 %v536
      %v631 = vunpack.c.l.b16 %v537
      %v632 = vunpack.c.l.b16 %v538
      %v633 = vunpack.c.l.b16 %v539
      %v634 = vunpack.c.l.b16 %v540
      %v635 = vunpack.c.l.b16 %v541
      %v636 = vunpack.c.l.b16 %v542
      %v637 = vpack.c.b16 %v631, %v630
      %v638 = vpack.c.b16 %v633, %v632
      %v639 = vpack.c.b16 %v635, %v634
      %v640 = vpack.c.b16 %v636, %v636
      %vm644 = vcmask 408576
      %v646 = vsel %vm644, %v607, 0
      %v649 = vsel %vm644, %v608, 0
      %v652 = vsel %vm644, %v609, 0
      %v655 = vsel %vm644, %v610, 0
      %v658 = vsel %vm644, %v611, 0
      %v661 = vsel %vm644, %v612, 0
      %v664 = vsel %vm644, %v613, 0
      %v667 = vsel %vm644, %v614, 0
      %v670 = vsel %vm644, %v615, 0
      %v673 = vsel %vm644, %v616, 0
      %v676 = vsel %vm644, %v617, 0
      %v679 = vsel %vm644, %v618, 0
      %v682 = vsel %vm644, %v619, 0
      %v685 = vsel %vm644, %v620, 0
      %v688 = vsel %vm644, %v621, 0
      %v691 = vsel %vm644, %v622, 0
      %vm693 = vcmask 1040384
      %v695 = vsel %vm693, %v640, 0
      %697 = vmatpush.bf16.msra.mxu0 0
      %698 = vmatpush.bf16.msra.mxu0 0
      %699 = vmatpush.bf16.msra.mxu0 0
      %700 = vmatpush.bf16.msra.mxu0 0
      %701 = vmatpush.bf16.msra.mxu0 %v695
      %702 = vmatpush.bf16.msra.mxu0 %v639
      %703 = vmatpush.bf16.msra.mxu0 %v638
      %704 = vmatpush.bf16.msra.mxu0 %v637
      %705 = vmatmul.bf16.gmra.mxu0 %v646
      %v706 = vpop.f32.mrf.mxu0
      %v707 = vadd.f32 0.0, %v706
      %v708 = vpop.f32.mrf.mxu0
      %v709 = vadd.f32 0.0, %v708
      %710 = vmatmul.bf16.gmra.mxu0 %v649
      %v711 = vpop.f32.mrf.mxu0
      %v712 = vadd.f32 0.0, %v711
      %v713 = vpop.f32.mrf.mxu0
      %v714 = vadd.f32 0.0, %v713
      %715 = vmatmul.bf16.gmra.mxu0 %v652
      %v716 = vpop.f32.mrf.mxu0
      %v717 = vadd.f32 0.0, %v716
      %v718 = vpop.f32.mrf.mxu0
      %v719 = vadd.f32 0.0, %v718
      %720 = vmatmul.bf16.gmra.mxu0 %v655
      %v721 = vpop.f32.mrf.mxu0
      %v722 = vadd.f32 0.0, %v721
      %v723 = vpop.f32.mrf.mxu0
      %v724 = vadd.f32 0.0, %v723
      %725 = vmatmul.bf16.gmra.mxu0 %v658
      %v726 = vpop.f32.mrf.mxu0
      %v727 = vadd.f32 0.0, %v726
      %v728 = vpop.f32.mrf.mxu0
      %v729 = vadd.f32 0.0, %v728
      %730 = vmatmul.bf16.gmra.mxu0 %v661
      %v731 = vpop.f32.mrf.mxu0
      %v732 = vadd.f32 0.0, %v731
      %v733 = vpop.f32.mrf.mxu0
      %v734 = vadd.f32 0.0, %v733
      %735 = vmatmul.bf16.gmra.mxu0 %v664
      %v736 = vpop.f32.mrf.mxu0
      %v737 = vadd.f32 0.0, %v736
      %v738 = vpop.f32.mrf.mxu0
      %v739 = vadd.f32 0.0, %v738
      %740 = vmatmul.bf16.gmra.mxu0 %v667
      %v741 = vpop.f32.mrf.mxu0
      %v742 = vadd.f32 0.0, %v741
      %v743 = vpop.f32.mrf.mxu0
      %v744 = vadd.f32 0.0, %v743
      %745 = vmatmul.bf16.gmra.mxu0 %v670
      %v746 = vpop.f32.mrf.mxu0
      %v747 = vadd.f32 0.0, %v746
      %v748 = vpop.f32.mrf.mxu0
      %v749 = vadd.f32 0.0, %v748
      %750 = vmatmul.bf16.gmra.mxu0 %v673
      %v751 = vpop.f32.mrf.mxu0
      %v752 = vadd.f32 0.0, %v751
      %v753 = vpop.f32.mrf.mxu0
      %v754 = vadd.f32 0.0, %v753
      %755 = vmatmul.bf16.gmra.mxu0 %v676
      %v756 = vpop.f32.mrf.mxu0
      %v757 = vadd.f32 0.0, %v756
      %v758 = vpop.f32.mrf.mxu0
      %v759 = vadd.f32 0.0, %v758
      %760 = vmatmul.bf16.gmra.mxu0 %v679
      %v761 = vpop.f32.mrf.mxu0
      %v762 = vadd.f32 0.0, %v761
      %v763 = vpop.f32.mrf.mxu0
      %v764 = vadd.f32 0.0, %v763
      %765 = vmatmul.bf16.gmra.mxu0 %v682
      %v766 = vpop.f32.mrf.mxu0
      %v767 = vadd.f32 0.0, %v766
      %v768 = vpop.f32.mrf.mxu0
      %v769 = vadd.f32 0.0, %v768
      %770 = vmatmul.bf16.gmra.mxu0 %v685
      %v771 = vpop.f32.mrf.mxu0
      %v772 = vadd.f32 0.0, %v771
      %v773 = vpop.f32.mrf.mxu0
      %v774 = vadd.f32 0.0, %v773
      %775 = vmatmul.bf16.gmra.mxu0 %v688
      %v776 = vpop.f32.mrf.mxu0
      %v777 = vadd.f32 0.0, %v776
      %v778 = vpop.f32.mrf.mxu0
      %v779 = vadd.f32 0.0, %v778
      %780 = vmatmul.bf16.gmra.mxu0 %v691
      %v781 = vpop.f32.mrf.mxu0
      %v782 = vadd.f32 0.0, %v781
      %v783 = vpop.f32.mrf.mxu0
      %v784 = vadd.f32 0.0, %v783
      %785 = vdwg.mxu0
      %v790 = vunpack.c.l.b16 %v500
      %v791 = vunpack.c.l.b16 %v501
      %v792 = vunpack.c.l.b16 %v502
      %v793 = vunpack.c.l.b16 %v503
      %v794 = vpack.c.b16 %v791, %v790
      %v795 = vpack.c.b16 %v793, %v792
      %vm798 = vcmask 261120
      %v800 = vsel %vm798, %v484, 0
      %v803 = vsel %vm798, %v485, 0
      %v806 = vsel %vm798, %v486, 0
      %v809 = vsel %vm798, %v487, 0
      %v812 = vsel %vm798, %v488, 0
      %v815 = vsel %vm798, %v489, 0
      %v818 = vsel %vm798, %v490, 0
      %v821 = vsel %vm798, %v491, 0
      %v824 = vsel %vm798, %v492, 0
      %v827 = vsel %vm798, %v493, 0
      %v830 = vsel %vm798, %v494, 0
      %v833 = vsel %vm798, %v495, 0
      %v836 = vsel %vm798, %v496, 0
      %v839 = vsel %vm798, %v497, 0
      %v842 = vsel %vm798, %v498, 0
      %v845 = vsel %vm798, %v499, 0
      %847 = vmatpush.bf16.msra.mxu0 0
      %848 = vmatpush.bf16.msra.mxu0 0
      %849 = vmatpush.bf16.msra.mxu0 0
      %850 = vmatpush.bf16.msra.mxu0 0
      %851 = vmatpush.bf16.msra.mxu0 0
      %852 = vmatpush.bf16.msra.mxu0 0
      %853 = vmatpush.bf16.msra.mxu0 %v795
      %854 = vmatpush.bf16.msra.mxu0 %v794
      %855 = vmatmul.bf16.gmra.mxu0 %v800
      %v856 = vpop.f32.mrf.mxu0
      %v857 = vadd.f32 %v707, %v856
      %v858 = vpop.f32.mrf.mxu0
      %v859 = vadd.f32 %v709, %v858
      %860 = vmatmul.bf16.gmra.mxu0 %v803
      %v861 = vpop.f32.mrf.mxu0
      %v862 = vadd.f32 %v712, %v861
      %v863 = vpop.f32.mrf.mxu0
      %v864 = vadd.f32 %v714, %v863
      %865 = vmatmul.bf16.gmra.mxu0 %v806
      %v866 = vpop.f32.mrf.mxu0
      %v867 = vadd.f32 %v717, %v866
      %v868 = vpop.f32.mrf.mxu0
      %v869 = vadd.f32 %v719, %v868
      %870 = vmatmul.bf16.gmra.mxu0 %v809
      %v871 = vpop.f32.mrf.mxu0
      %v872 = vadd.f32 %v722, %v871
      %v873 = vpop.f32.mrf.mxu0
      %v874 = vadd.f32 %v724, %v873
      %875 = vmatmul.bf16.gmra.mxu0 %v812
      %v876 = vpop.f32.mrf.mxu0
      %v877 = vadd.f32 %v727, %v876
      %v878 = vpop.f32.mrf.mxu0
      %v879 = vadd.f32 %v729, %v878
      %880 = vmatmul.bf16.gmra.mxu0 %v815
      %v881 = vpop.f32.mrf.mxu0
      %v882 = vadd.f32 %v732, %v881
      %v883 = vpop.f32.mrf.mxu0
      %v884 = vadd.f32 %v734, %v883
      %885 = vmatmul.bf16.gmra.mxu0 %v818
      %v886 = vpop.f32.mrf.mxu0
      %v887 = vadd.f32 %v737, %v886
      %v888 = vpop.f32.mrf.mxu0
      %v889 = vadd.f32 %v739, %v888
      %890 = vmatmul.bf16.gmra.mxu0 %v821
      %v891 = vpop.f32.mrf.mxu0
      %v892 = vadd.f32 %v742, %v891
      %v893 = vpop.f32.mrf.mxu0
      %v894 = vadd.f32 %v744, %v893
      %895 = vmatmul.bf16.gmra.mxu0 %v824
      %v896 = vpop.f32.mrf.mxu0
      %v897 = vadd.f32 %v747, %v896
      %v898 = vpop.f32.mrf.mxu0
      %v899 = vadd.f32 %v749, %v898
      %900 = vmatmul.bf16.gmra.mxu0 %v827
      %v901 = vpop.f32.mrf.mxu0
      %v902 = vadd.f32 %v752, %v901
      %v903 = vpop.f32.mrf.mxu0
      %v904 = vadd.f32 %v754, %v903
      %905 = vmatmul.bf16.gmra.mxu0 %v830
      %v906 = vpop.f32.mrf.mxu0
      %v907 = vadd.f32 %v757, %v906
      %v908 = vpop.f32.mrf.mxu0
      %v909 = vadd.f32 %v759, %v908
      %910 = vmatmul.bf16.gmra.mxu0 %v833
      %v911 = vpop.f32.mrf.mxu0
      %v912 = vadd.f32 %v762, %v911
      %v913 = vpop.f32.mrf.mxu0
      %v914 = vadd.f32 %v764, %v913
      %915 = vmatmul.bf16.gmra.mxu0 %v836
      %v916 = vpop.f32.mrf.mxu0
      %v917 = vadd.f32 %v767, %v916
      %v918 = vpop.f32.mrf.mxu0
      %v919 = vadd.f32 %v769, %v918
      %920 = vmatmul.bf16.gmra.mxu0 %v839
      %v921 = vpop.f32.mrf.mxu0
      %v922 = vadd.f32 %v772, %v921
      %v923 = vpop.f32.mrf.mxu0
      %v924 = vadd.f32 %v774, %v923
      %925 = vmatmul.bf16.gmra.mxu0 %v842
      %v926 = vpop.f32.mrf.mxu0
      %v927 = vadd.f32 %v777, %v926
      %v928 = vpop.f32.mrf.mxu0
      %v929 = vadd.f32 %v779, %v928
      %930 = vmatmul.bf16.gmra.mxu0 %v845
      %v931 = vpop.f32.mrf.mxu0
      %v932 = vadd.f32 %v782, %v931
      %v933 = vpop.f32.mrf.mxu0
      %v934 = vadd.f32 %v784, %v933
      %935 = vdwg.mxu0
      %v936 = vld [vmem:[%s4] sm:$0x1]
      %v938 = vperm.slane %v936, 0
      %v940 = vadd.f32 %v857, %v938
      %v941 = vadd.f32 %v859, %v938
      %v942 = vadd.f32 %v862, %v938
      %v943 = vadd.f32 %v864, %v938
      %v944 = vadd.f32 %v867, %v938
      %v945 = vadd.f32 %v869, %v938
      %v946 = vadd.f32 %v872, %v938
      %v947 = vadd.f32 %v874, %v938
      %v948 = vadd.f32 %v877, %v938
      %v949 = vadd.f32 %v879, %v938
      %v950 = vadd.f32 %v882, %v938
      %v951 = vadd.f32 %v884, %v938
      %v952 = vadd.f32 %v887, %v938
      %v953 = vadd.f32 %v889, %v938
      %v954 = vadd.f32 %v892, %v938
      %v955 = vadd.f32 %v894, %v938
      %v956 = vadd.f32 %v897, %v938
      %v957 = vadd.f32 %v899, %v938
      %v958 = vadd.f32 %v902, %v938
      %v959 = vadd.f32 %v904, %v938
      %v960 = vadd.f32 %v907, %v938
      %v961 = vadd.f32 %v909, %v938
      %v962 = vadd.f32 %v912, %v938
      %v963 = vadd.f32 %v914, %v938
      %v964 = vadd.f32 %v917, %v938
      %v965 = vadd.f32 %v919, %v938
      %v966 = vadd.f32 %v922, %v938
      %v967 = vadd.f32 %v924, %v938
      %v968 = vadd.f32 %v927, %v938
      %v969 = vadd.f32 %v929, %v938
      %v970 = vadd.f32 %v932, %v938
      %v971 = vadd.f32 %v934, %v938
      %v972 = vmax.f32 %v940, 0.0
      %v973 = vmax.f32 %v941, 0.0
      %v974 = vmax.f32 %v942, 0.0
      %v975 = vmax.f32 %v943, 0.0
      %v976 = vmax.f32 %v944, 0.0
      %v977 = vmax.f32 %v945, 0.0
      %v978 = vmax.f32 %v946, 0.0
      %v979 = vmax.f32 %v947, 0.0
      %v980 = vmax.f32 %v948, 0.0
      %v981 = vmax.f32 %v949, 0.0
      %v982 = vmax.f32 %v950, 0.0
      %v983 = vmax.f32 %v951, 0.0
      %v984 = vmax.f32 %v952, 0.0
      %v985 = vmax.f32 %v953, 0.0
      %v986 = vmax.f32 %v954, 0.0
      %v987 = vmax.f32 %v955, 0.0
      %v988 = vmax.f32 %v956, 0.0
      %v989 = vmax.f32 %v957, 0.0
      %v990 = vmax.f32 %v958, 0.0
      %v991 = vmax.f32 %v959, 0.0
      %v992 = vmax.f32 %v960, 0.0
      %v993 = vmax.f32 %v961, 0.0
      %v994 = vmax.f32 %v962, 0.0
      %v995 = vmax.f32 %v963, 0.0
      %v996 = vmax.f32 %v964, 0.0
      %v997 = vmax.f32 %v965, 0.0
      %v998 = vmax.f32 %v966, 0.0
      %v999 = vmax.f32 %v967, 0.0
      %v1000 = vmax.f32 %v968, 0.0
      %v1001 = vmax.f32 %v969, 0.0
      %v1002 = vmax.f32 %v970, 0.0
      %v1003 = vmax.f32 %v971, 0.0
      %v1004 = vld [vmem:[%s437] sm:$0x1]
      %v1005 = vld [vmem:[%s433] sm:$0xff]
      %v1006 = vld [vmem:[%s433 + $0x8] sm:$0xff]
      %v1007 = vld [vmem:[%s433 + $0x10] sm:$0xff]
      %v1008 = vld [vmem:[%s433 + $0x18] sm:$0xff]
      %v1009 = vld [vmem:[%s433 + $0x20] sm:$0xff]
      %v1010 = vld [vmem:[%s433 + $0x28] sm:$0xff]
      %v1011 = vld [vmem:[%s433 + $0x30] sm:$0xff]
      %v1012 = vld [vmem:[%s433 + $0x38] sm:$0xff]
      %v1013 = vld [vmem:[%s433 + $0x40] sm:$0xff]
      %v1014 = vld [vmem:[%s433 + $0x48] sm:$0xff]
      %v1015 = vld [vmem:[%s433 + $0x50] sm:$0xff]
      %v1016 = vld [vmem:[%s433 + $0x58] sm:$0xff]
      %v1017 = vld [vmem:[%s433 + $0x60] sm:$0xff]
      %v1018 = vld [vmem:[%s433 + $0x68] sm:$0xff]
      %v1019 = vld [vmem:[%s433 + $0x70] sm:$0xff]
      %v1020 = vld [vmem:[%s433 + $0x78] sm:$0xff]
      %v1021 = vld [vmem:[%s433 + $0x80] sm:$0xff]
      %v1022 = vld [vmem:[%s433 + $0x88] sm:$0xff]
      %v1023 = vld [vmem:[%s433 + $0x90] sm:$0xff]
      %v1024 = vld [vmem:[%s433 + $0x98] sm:$0xff]
      %v1025 = vld [vmem:[%s433 + $0xa0] sm:$0xff]
      %v1026 = vld [vmem:[%s433 + $0xa8] sm:$0xff]
      %v1027 = vld [vmem:[%s433 + $0xb0] sm:$0xff]
      %v1028 = vld [vmem:[%s433 + $0xb8] sm:$0xff]
      %v1029 = vld [vmem:[%s433 + $0xc0] sm:$0xff]
      %v1030 = vld [vmem:[%s433 + $0xc8] sm:$0xff]
      %v1031 = vld [vmem:[%s433 + $0xd0] sm:$0xff]
      %v1032 = vld [vmem:[%s433 + $0xd8] sm:$0xff]
      %v1033 = vld [vmem:[%s433 + $0xe0] sm:$0xff]
      %v1034 = vld [vmem:[%s433 + $0xe8] sm:$0xff]
      %v1035 = vld [vmem:[%s433 + $0xf0] sm:$0xff]
      %v1036 = vld [vmem:[%s433 + $0xf8] sm:$0xff]
      %v1037 = vadd.f32 %v1004, 1.0
      %v1039 = vperm.slane %v1037, 0
      %v1041 = vmul.f32 %v1005, %v1039
      %v1042 = vmul.f32 %v1006, %v1039
      %v1043 = vmul.f32 %v1007, %v1039
      %v1044 = vmul.f32 %v1008, %v1039
      %v1045 = vmul.f32 %v1009, %v1039
      %v1046 = vmul.f32 %v1010, %v1039
      %v1047 = vmul.f32 %v1011, %v1039
      %v1048 = vmul.f32 %v1012, %v1039
      %v1049 = vmul.f32 %v1013, %v1039
      %v1050 = vmul.f32 %v1014, %v1039
      %v1051 = vmul.f32 %v1015, %v1039
      %v1052 = vmul.f32 %v1016, %v1039
      %v1053 = vmul.f32 %v1017, %v1039
      %v1054 = vmul.f32 %v1018, %v1039
      %v1055 = vmul.f32 %v1019, %v1039
      %v1056 = vmul.f32 %v1020, %v1039
      %v1057 = vmul.f32 %v1021, %v1039
      %v1058 = vmul.f32 %v1022, %v1039
      %v1059 = vmul.f32 %v1023, %v1039
      %v1060 = vmul.f32 %v1024, %v1039
      %v1061 = vmul.f32 %v1025, %v1039
      %v1062 = vmul.f32 %v1026, %v1039
      %v1063 = vmul.f32 %v1027, %v1039
      %v1064 = vmul.f32 %v1028, %v1039
      %v1065 = vmul.f32 %v1029, %v1039
      %v1066 = vmul.f32 %v1030, %v1039
      %v1067 = vmul.f32 %v1031, %v1039
      %v1068 = vmul.f32 %v1032, %v1039
      %v1069 = vmul.f32 %v1033, %v1039
      %v1070 = vmul.f32 %v1034, %v1039
      %v1071 = vmul.f32 %v1035, %v1039
      %v1072 = vmul.f32 %v1036, %v1039
      %v1073 = vld [vmem:[%s440] sm:$0x1]
      %v1074 = vsub.f32 2.0, %v1004
      %1076 = vset.pattern.permute.xlu0 0
      %1077 = vperm.xlu0 %1076, %v1074
      %v1078 = vpop.permute.xlu0 %1077
      %v1080 = vperm.slane %v1078, 0
      %v1081 = vmul.f32 %v1073, %v1080
      %1083 = vset.pattern.permute.xlu0 0
      %1084 = vperm.xlu0 %1083, %v1041
      %v1085 = vpop.permute.xlu0 %1084
      %1088 = vset.pattern.permute.xlu0 0
      %1089 = vperm.xlu0 %1088, %v1042
      %v1090 = vpop.permute.xlu0 %1089
      %1093 = vset.pattern.permute.xlu0 0
      %1094 = vperm.xlu0 %1093, %v1043
      %v1095 = vpop.permute.xlu0 %1094
      %1098 = vset.pattern.permute.xlu0 0
      %1099 = vperm.xlu0 %1098, %v1044
      %v1100 = vpop.permute.xlu0 %1099
      %1103 = vset.pattern.permute.xlu0 0
      %1104 = vperm.xlu0 %1103, %v1045
      %v1105 = vpop.permute.xlu0 %1104
      %1108 = vset.pattern.permute.xlu0 0
      %1109 = vperm.xlu0 %1108, %v1046
      %v1110 = vpop.permute.xlu0 %1109
      %1113 = vset.pattern.permute.xlu0 0
      %1114 = vperm.xlu0 %1113, %v1047
      %v1115 = vpop.permute.xlu0 %1114
      %1118 = vset.pattern.permute.xlu0 0
      %1119 = vperm.xlu0 %1118, %v1048
      %v1120 = vpop.permute.xlu0 %1119
      %1123 = vset.pattern.permute.xlu0 0
      %1124 = vperm.xlu0 %1123, %v1049
      %v1125 = vpop.permute.xlu0 %1124
      %1128 = vset.pattern.permute.xlu0 0
      %1129 = vperm.xlu0 %1128, %v1050
      %v1130 = vpop.permute.xlu0 %1129
      %1133 = vset.pattern.permute.xlu0 0
      %1134 = vperm.xlu0 %1133, %v1051
      %v1135 = vpop.permute.xlu0 %1134
      %1138 = vset.pattern.permute.xlu0 0
      %1139 = vperm.xlu0 %1138, %v1052
      %v1140 = vpop.permute.xlu0 %1139
      %1143 = vset.pattern.permute.xlu0 0
      %1144 = vperm.xlu0 %1143, %v1053
      %v1145 = vpop.permute.xlu0 %1144
      %1148 = vset.pattern.permute.xlu0 0
      %1149 = vperm.xlu0 %1148, %v1054
      %v1150 = vpop.permute.xlu0 %1149
      %1153 = vset.pattern.permute.xlu0 0
      %1154 = vperm.xlu0 %1153, %v1055
      %v1155 = vpop.permute.xlu0 %1154
      %1158 = vset.pattern.permute.xlu0 0
      %1159 = vperm.xlu0 %1158, %v1056
      %v1160 = vpop.permute.xlu0 %1159
      %1163 = vset.pattern.permute.xlu0 0
      %1164 = vperm.xlu0 %1163, %v1057
      %v1165 = vpop.permute.xlu0 %1164
      %1168 = vset.pattern.permute.xlu0 0
      %1169 = vperm.xlu0 %1168, %v1058
      %v1170 = vpop.permute.xlu0 %1169
      %1173 = vset.pattern.permute.xlu0 0
      %1174 = vperm.xlu0 %1173, %v1059
      %v1175 = vpop.permute.xlu0 %1174
      %1178 = vset.pattern.permute.xlu0 0
      %1179 = vperm.xlu0 %1178, %v1060
      %v1180 = vpop.permute.xlu0 %1179
      %1183 = vset.pattern.permute.xlu0 0
      %1184 = vperm.xlu0 %1183, %v1061
      %v1185 = vpop.permute.xlu0 %1184
      %1188 = vset.pattern.permute.xlu0 0
      %1189 = vperm.xlu0 %1188, %v1062
      %v1190 = vpop.permute.xlu0 %1189
      %1193 = vset.pattern.permute.xlu0 0
      %1194 = vperm.xlu0 %1193, %v1063
      %v1195 = vpop.permute.xlu0 %1194
      %1198 = vset.pattern.permute.xlu0 0
      %1199 = vperm.xlu0 %1198, %v1064
      %v1200 = vpop.permute.xlu0 %1199
      %1203 = vset.pattern.permute.xlu0 0
      %1204 = vperm.xlu0 %1203, %v1065
      %v1205 = vpop.permute.xlu0 %1204
      %1208 = vset.pattern.permute.xlu0 0
      %1209 = vperm.xlu0 %1208, %v1066
      %v1210 = vpop.permute.xlu0 %1209
      %1213 = vset.pattern.permute.xlu0 0
      %1214 = vperm.xlu0 %1213, %v1067
      %v1215 = vpop.permute.xlu0 %1214
      %1218 = vset.pattern.permute.xlu0 0
      %1219 = vperm.xlu0 %1218, %v1068
      %v1220 = vpop.permute.xlu0 %1219
      %1223 = vset.pattern.permute.xlu0 0
      %1224 = vperm.xlu0 %1223, %v1069
      %v1225 = vpop.permute.xlu0 %1224
      %1228 = vset.pattern.permute.xlu0 0
      %1229 = vperm.xlu0 %1228, %v1070
      %v1230 = vpop.permute.xlu0 %1229
      %1233 = vset.pattern.permute.xlu0 0
      %1234 = vperm.xlu0 %1233, %v1071
      %v1235 = vpop.permute.xlu0 %1234
      %1238 = vset.pattern.permute.xlu0 0
      %1239 = vperm.xlu0 %1238, %v1072
      %v1240 = vpop.permute.xlu0 %1239
      %v1243 = vperm.slane %v1081, 0
      %v1245 = vadd.f32 %v1085, %v1243
      %v1246 = vadd.f32 %v1090, %v1243
      %v1247 = vadd.f32 %v1095, %v1243
      %v1248 = vadd.f32 %v1100, %v1243
      %v1249 = vadd.f32 %v1105, %v1243
      %v1250 = vadd.f32 %v1110, %v1243
      %v1251 = vadd.f32 %v1115, %v1243
      %v1252 = vadd.f32 %v1120, %v1243
      %v1253 = vadd.f32 %v1125, %v1243
      %v1254 = vadd.f32 %v1130, %v1243
      %v1255 = vadd.f32 %v1135, %v1243
      %v1256 = vadd.f32 %v1140, %v1243
      %v1257 = vadd.f32 %v1145, %v1243
      %v1258 = vadd.f32 %v1150, %v1243
      %v1259 = vadd.f32 %v1155, %v1243
      %v1260 = vadd.f32 %v1160, %v1243
      %v1261 = vadd.f32 %v1165, %v1243
      %v1262 = vadd.f32 %v1170, %v1243
      %v1263 = vadd.f32 %v1175, %v1243
      %v1264 = vadd.f32 %v1180, %v1243
      %v1265 = vadd.f32 %v1185, %v1243
      %v1266 = vadd.f32 %v1190, %v1243
      %v1267 = vadd.f32 %v1195, %v1243
      %v1268 = vadd.f32 %v1200, %v1243
      %v1269 = vadd.f32 %v1205, %v1243
      %v1270 = vadd.f32 %v1210, %v1243
      %v1271 = vadd.f32 %v1215, %v1243
      %v1272 = vadd.f32 %v1220, %v1243
      %v1273 = vadd.f32 %v1225, %v1243
      %v1274 = vadd.f32 %v1230, %v1243
      %v1275 = vadd.f32 %v1235, %v1243
      %v1276 = vadd.f32 %v1240, %v1243
      %v1277 = vmul.f32 %v452, %v1245
      %v1278 = vmul.f32 %v453, %v1246
      %v1279 = vmul.f32 %v454, %v1247
      %v1280 = vmul.f32 %v455, %v1248
      %v1281 = vmul.f32 %v456, %v1249
      %v1282 = vmul.f32 %v457, %v1250
      %v1283 = vmul.f32 %v458, %v1251
      %v1284 = vmul.f32 %v459, %v1252
      %v1285 = vmul.f32 %v460, %v1253
      %v1286 = vmul.f32 %v461, %v1254
      %v1287 = vmul.f32 %v462, %v1255
      %v1288 = vmul.f32 %v463, %v1256
      %v1289 = vmul.f32 %v464, %v1257
      %v1290 = vmul.f32 %v465, %v1258
      %v1291 = vmul.f32 %v466, %v1259
      %v1292 = vmul.f32 %v467, %v1260
      %v1293 = vmul.f32 %v468, %v1261
      %v1294 = vmul.f32 %v469, %v1262
      %v1295 = vmul.f32 %v470, %v1263
      %v1296 = vmul.f32 %v471, %v1264
      %v1297 = vmul.f32 %v472, %v1265
      %v1298 = vmul.f32 %v473, %v1266
      %v1299 = vmul.f32 %v474, %v1267
      %v1300 = vmul.f32 %v475, %v1268
      %v1301 = vmul.f32 %v476, %v1269
      %v1302 = vmul.f32 %v477, %v1270
      %v1303 = vmul.f32 %v478, %v1271
      %v1304 = vmul.f32 %v479, %v1272
      %v1305 = vmul.f32 %v480, %v1273
      %v1306 = vmul.f32 %v481, %v1274
      %v1307 = vmul.f32 %v482, %v1275
      %v1308 = vmul.f32 %v483, %v1276
      %v1309 = vadd.f32 %v1277, %v972
      %v1310 = vadd.f32 %v1278, %v973
      %v1311 = vadd.f32 %v1279, %v974
      %v1312 = vadd.f32 %v1280, %v975
      %v1313 = vadd.f32 %v1281, %v976
      %v1314 = vadd.f32 %v1282, %v977
      %v1315 = vadd.f32 %v1283, %v978
      %v1316 = vadd.f32 %v1284, %v979
      %v1317 = vadd.f32 %v1285, %v980
      %v1318 = vadd.f32 %v1286, %v981
      %v1319 = vadd.f32 %v1287, %v982
      %v1320 = vadd.f32 %v1288, %v983
      %v1321 = vadd.f32 %v1289, %v984
      %v1322 = vadd.f32 %v1290, %v985
      %v1323 = vadd.f32 %v1291, %v986
      %v1324 = vadd.f32 %v1292, %v987
      %v1325 = vadd.f32 %v1293, %v988
      %v1326 = vadd.f32 %v1294, %v989
      %v1327 = vadd.f32 %v1295, %v990
      %v1328 = vadd.f32 %v1296, %v991
      %v1329 = vadd.f32 %v1297, %v992
      %v1330 = vadd.f32 %v1298, %v993
      %v1331 = vadd.f32 %v1299, %v994
      %v1332 = vadd.f32 %v1300, %v995
      %v1333 = vadd.f32 %v1301, %v996
      %v1334 = vadd.f32 %v1302, %v997
      %v1335 = vadd.f32 %v1303, %v998
      %v1336 = vadd.f32 %v1304, %v999
      %v1337 = vadd.f32 %v1305, %v1000
      %v1338 = vadd.f32 %v1306, %v1001
      %v1339 = vadd.f32 %v1307, %v1002
      %v1340 = vadd.f32 %v1308, %v1003
      %1341 = vst.msk [vmem:[%s449] sm:$0xff] %vm798, %v1309
      %1342 = vst.msk [vmem:[%s449 + $0x8] sm:$0xff] %vm798, %v1310
      %1343 = vst.msk [vmem:[%s449 + $0x10] sm:$0xff] %vm798, %v1311
      %1344 = vst.msk [vmem:[%s449 + $0x18] sm:$0xff] %vm798, %v1312
      %1345 = vst.msk [vmem:[%s449 + $0x20] sm:$0xff] %vm798, %v1313
      %1346 = vst.msk [vmem:[%s449 + $0x28] sm:$0xff] %vm798, %v1314
      %1347 = vst.msk [vmem:[%s449 + $0x30] sm:$0xff] %vm798, %v1315
      %1348 = vst.msk [vmem:[%s449 + $0x38] sm:$0xff] %vm798, %v1316
      %1349 = vst.msk [vmem:[%s449 + $0x40] sm:$0xff] %vm798, %v1317
      %1350 = vst.msk [vmem:[%s449 + $0x48] sm:$0xff] %vm798, %v1318
      %1351 = vst.msk [vmem:[%s449 + $0x50] sm:$0xff] %vm798, %v1319
      %1352 = vst.msk [vmem:[%s449 + $0x58] sm:$0xff] %vm798, %v1320
      %1353 = vst.msk [vmem:[%s449 + $0x60] sm:$0xff] %vm798, %v1321
      %1354 = vst.msk [vmem:[%s449 + $0x68] sm:$0xff] %vm798, %v1322
      %1355 = vst.msk [vmem:[%s449 + $0x70] sm:$0xff] %vm798, %v1323
      %1356 = vst.msk [vmem:[%s449 + $0x78] sm:$0xff] %vm798, %v1324
      %1357 = vst.msk [vmem:[%s449 + $0x80] sm:$0xff] %vm798, %v1325
      %1358 = vst.msk [vmem:[%s449 + $0x88] sm:$0xff] %vm798, %v1326
      %1359 = vst.msk [vmem:[%s449 + $0x90] sm:$0xff] %vm798, %v1327
      %1360 = vst.msk [vmem:[%s449 + $0x98] sm:$0xff] %vm798, %v1328
      %1361 = vst.msk [vmem:[%s449 + $0xa0] sm:$0xff] %vm798, %v1329
      %1362 = vst.msk [vmem:[%s449 + $0xa8] sm:$0xff] %vm798, %v1330
      %1363 = vst.msk [vmem:[%s449 + $0xb0] sm:$0xff] %vm798, %v1331
      %1364 = vst.msk [vmem:[%s449 + $0xb8] sm:$0xff] %vm798, %v1332
      %1365 = vst.msk [vmem:[%s449 + $0xc0] sm:$0xff] %vm798, %v1333
      %1366 = vst.msk [vmem:[%s449 + $0xc8] sm:$0xff] %vm798, %v1334
      %1367 = vst.msk [vmem:[%s449 + $0xd0] sm:$0xff] %vm798, %v1335
      %1368 = vst.msk [vmem:[%s449 + $0xd8] sm:$0xff] %vm798, %v1336
      %1369 = vst.msk [vmem:[%s449 + $0xe0] sm:$0xff] %vm798, %v1337
      %1370 = vst.msk [vmem:[%s449 + $0xe8] sm:$0xff] %vm798, %v1338
      %1371 = vst.msk [vmem:[%s449 + $0xf0] sm:$0xff] %vm798, %v1339
      %1372 = vst.msk [vmem:[%s449 + $0xf8] sm:$0xff] %vm798, %v1340
      %s1373 = smul.u32 32, %s24
      %p1374 = scmp.lt.s32.totalorder %s23, 1
      %s1375 = scalar_select %p1374, %s23, 1
      %p1376 = scmp.lt.s32.totalorder %s1373, 31
      %s1377 = scalar_select %p1376, %s1373, 31
      %s1378 = smul.addr %s1375, 32
      %s1379 = sadd.s32 %s1377, %s1378
      %s1380 = smul.addr %s1379, 8
      %s1381 = scalar_lea.vmem %s8, %s1380
      // Predicated region
      $region53: #{esf_forward.8} parent=51 // pred_check
        %p1382 = pneg %p253
      $region54: #{esf_forward.8} parent=51 // pred_check_branch
        %1384 = sbr.rel (%p1382) target = $region56
      $region55: #{esf_forward.8} parent=51 // pred_region
        %s1385 = smul.u32 32, %s24
      $region56: #{esf_forward.8} parent=51 // pred_fallthru
        _
    $region52: #{esf_forward.8} parent=5 // pred_fallthru
      _
    %p1386 = scmp.le.s32.totalorder 2, %s14
    // Predicated region
    $region57: #{esf_forward.8} parent=5 // pred_check
      %p1387 = pneg %p1386
    $region58: #{esf_forward.8} parent=5 // pred_check_branch
      %1389 = sbr.rel (%p1387) target = $region60
    $region59: #{esf_forward.8} parent=5 // pred_region
      %s1390 = ssub.s32 %s14, 2
      // Predicated region
      $region61: #{esf_forward.8} parent=59 // pred_check
        %p1391 = pneg %p259
      $region62: #{esf_forward.8} parent=59 // pred_check_branch
        %1393 = sbr.rel (%p1391) target = $region64
      $region63: #{esf_forward.8} parent=59 // pred_region
        %s1394 = smul.u32 32, %s26
        %p1395 = scmp.lt.s32.totalorder %s25, 1
        %s1396 = scalar_select %p1395, %s25, 1
        %p1397 = scmp.lt.s32.totalorder %s1394, 31
        %s1398 = scalar_select %p1397, %s1394, 31
        %s1399 = smul.addr %s1396, 32
        %s1400 = sadd.s32 %s1398, %s1399
        %s1401 = smul.addr %s1400, 8
        %s1402 = scalar_lea.vmem %s8, %s1401
      $region64: #{esf_forward.8} parent=59 // pred_fallthru
        _
    $region60: #{esf_forward.8} parent=5 // pred_fallthru
      _
  $region6: #{esf_forward.8} parent=0 // loop_footer
    %s18 = sadd.s32 1, %s14
  $region7: #{esf_forward.8} parent=0 // loop_footer_branch
    %13 = sbr.rel target = $region3
  $region8: #{esf_forward.8} parent=0 // loop_exit
    _

// kernel: esf_forward.6
$region0: #{esf_forward.6}
  #allocation0 [shape = 'u32[]', space=smem, size = 0x4, offset = 0x4, fixed_abs, tag = 'smem constant byte address 0x4 - core index']
  #allocation1 [shape = 'u32[72,128]{1,0:T(1,128)}', space=vmem, size = 0x9000, scoped, tag = 'internal scratch']
  #allocation2 [shape = 'f32[1,1]{1,0:T(1,128)S(1)}', space=vmem, size = 0x200, scoped, tag = 'scoped memory for esf_forward.6']
  %s0 = inlined_call_operand.vmem [shape: f32[2,18,18,33], index: 0, kind: input, shape index: {}]
  %s1 = inlined_call_operand.vmem [shape: f32[9,33,1], index: 1, kind: input, shape index: {}]
  %s2 = inlined_call_operand.<no memory space> [shape: f32[1,1], index: 2, kind: input, shape index: {}]
  %s3 = inlined_call_operand.vmem [shape: f32[2,256,1], index: 3, kind: output, shape index: {}]
  %s4 = sld [smem:[#allocation0]]
  $region45: #{esf_forward.6} parent=0
    _
  %s6 = ssub.s32 1, %s4
  %s7 = scalar_select 0, %s6, %s4
  %v8 = vstv %s2
  %9 = vst [vmem:[#allocation2] sm:$0x1] %v8
  loop: start=0, step=1, limit=4
  $region2: #{esf_forward.6} parent=0 // loop_pre_header
    _
  $region3: #{esf_forward.6} parent=0 // loop_header
    %s11 = sphi 0, %s15
    %p12 = scmp.ge.s32.totalorder %s11, 4
    %s21 = sphi 0, %s23
    %s24 = sphi 0, %s21
    %s25 = sphi 0, %s24
    %s41 = sphi 0, %s25
    %s45 = sphi 0, %s45
    %s47 = sphi 0, %s45
    %s48 = sphi 0, %s47
    %s62 = sphi 0, %s48
    %s66 = sphi 0, %s66
    %s68 = sphi 0, %s66
    %s69 = sphi 0, %s68
    %s83 = sphi 0, %s69
    %s89 = sphi 0, %s91
    %s92 = sphi 0, %s89
    %s93 = sphi 0, %s92
    %s109 = sphi 0, %s93
  $region4: #{esf_forward.6} parent=0 // loop_header_branch
    %14 = sbr.rel (%p12) target = $region8
  $region5: #{esf_forward.6} parent=0 // loop_body
    %s16 = ssub.s32 %s11, 1
    %s17 = ssub.s32 %s11, 2
    %s18 = sadd.s32 %s11, 1
    %s19 = ssub.s32 %s11, %s18
    %p20 = scmp.eq.s32.totalorder %s19, 0
    %s22 = sadd.s32 %s21, 1
    %s23 = scalar_select %p20, %s21, %s22
    %p26 = pneg %p20
    %p27 = scmp.eq.s32.totalorder %s11, 1
    %p28 = por %p26, %p27
    %p29 = scmp.ne.s32.totalorder %s21, %s24
    %p30 = scmp.eq.s32.totalorder %s11, 0
    %p31 = por %p29, %p30
    %p32 = scmp.ne.s32.totalorder %s21, %s24
    %p33 = scmp.eq.s32.totalorder %s16, 1
    %p34 = por %p32, %p33
    %p35 = scmp.ne.s32.totalorder %s24, %s25
    %p36 = scmp.eq.s32.totalorder %s16, 0
    %p37 = por %p35, %p36
    %p38 = scmp.ne.s32.totalorder %s24, %s25
    %p39 = scmp.eq.s32.totalorder %s17, 1
    %p40 = por %p38, %p39
    %p42 = scmp.ne.s32.totalorder %s25, %s41
    %p43 = scmp.eq.s32.totalorder %s17, 0
    %p44 = por %p42, %p43
    %s46 = sadd.s32 %s45, 1
    %p49 = scmp.eq.s32.totalorder %s11, 1
    %p50 = scmp.ne.s32.totalorder %s45, %s47
    %p51 = scmp.eq.s32.totalorder %s11, 0
    %p52 = por %p50, %p51
    %p53 = scmp.ne.s32.totalorder %s45, %s47
    %p54 = scmp.eq.s32.totalorder %s16, 1
    %p55 = por %p53, %p54
    %p56 = scmp.ne.s32.totalorder %s47, %s48
    %p57 = scmp.eq.s32.totalorder %s16, 0
    %p58 = por %p56, %p57
    %p59 = scmp.ne.s32.totalorder %s47, %s48
    %p60 = scmp.eq.s32.totalorder %s17, 1
    %p61 = por %p59, %p60
    %p63 = scmp.ne.s32.totalorder %s48, %s62
    %p64 = scmp.eq.s32.totalorder %s17, 0
    %p65 = por %p63, %p64
    %s67 = sadd.s32 %s66, 1
    %p70 = scmp.eq.s32.totalorder %s11, 1
    %p71 = scmp.ne.s32.totalorder %s66, %s68
    %p72 = scmp.eq.s32.totalorder %s11, 0
    %p73 = por %p71, %p72
    %p74 = scmp.ne.s32.totalorder %s66, %s68
    %p75 = scmp.eq.s32.totalorder %s16, 1
    %p76 = por %p74, %p75
    %p77 = scmp.ne.s32.totalorder %s68, %s69
    %p78 = scmp.eq.s32.totalorder %s16, 0
    %p79 = por %p77, %p78
    %p80 = scmp.ne.s32.totalorder %s68, %s69
    %p81 = scmp.eq.s32.totalorder %s17, 1
    %p82 = por %p80, %p81
    %p84 = scmp.ne.s32.totalorder %s69, %s83
    %p85 = scmp.eq.s32.totalorder %s17, 0
    %p86 = por %p84, %p85
    %s87 = ssub.s32 %s11, %s18
    %p88 = scmp.eq.s32.totalorder %s87, 0
    %s90 = sadd.s32 %s89, 1
    %s91 = scalar_select %p88, %s89, %s90
    %p94 = pneg %p88
    %p95 = scmp.eq.s32.totalorder %s11, 1
    %p96 = por %p94, %p95
    %p97 = scmp.ne.s32.totalorder %s89, %s92
    %p98 = scmp.eq.s32.totalorder %s11, 0
    %p99 = por %p97, %p98
    %p100 = scmp.ne.s32.totalorder %s89, %s92
    %p101 = scmp.eq.s32.totalorder %s16, 1
    %p102 = por %p100, %p101
    %p103 = scmp.ne.s32.totalorder %s92, %s93
    %p104 = scmp.eq.s32.totalorder %s16, 0
    %p105 = por %p103, %p104
    %p106 = scmp.ne.s32.totalorder %s92, %s93
    %p107 = scmp.eq.s32.totalorder %s17, 1
    %p108 = por %p106, %p107
    %p110 = scmp.ne.s32.totalorder %s93, %s109
    %p111 = scmp.eq.s32.totalorder %s17, 0
    %p112 = por %p110, %p111
    %p113 = scmp.le.s32.totalorder 1, %s11
    %p114 = scmp.lt.s32.totalorder %s11, 3
    %p115 = pnand %p113, %p114
    %p116 = pneg %p115
    // Predicated region
    $region9: #{esf_forward.6} parent=5 // pred_check
      _
    $region10: #{esf_forward.6} parent=5 // pred_check_branch
      %118 = sbr.rel (%p115) target = $region12
    $region11: #{esf_forward.6} parent=5 // pred_region
      %s119 = ssub.s32 %s11, 1
      // Predicated region
      $region13: #{esf_forward.6} parent=11 // pred_check
        %p120 = pneg %p58
      $region14: #{esf_forward.6} parent=11 // pred_check_branch
        %122 = sbr.rel (%p120) target = $region16
      $region15: #{esf_forward.6} parent=11 // pred_region
        _
      $region16: #{esf_forward.6} parent=11 // pred_fallthru
        _
      // Predicated region
      $region17: #{esf_forward.6} parent=11 // pred_check
        %p123 = pneg %p79
      $region18: #{esf_forward.6} parent=11 // pred_check_branch
        %125 = sbr.rel (%p123) target = $region20
      $region19: #{esf_forward.6} parent=11 // pred_region
        _
      $region20: #{esf_forward.6} parent=11 // pred_fallthru
        _
    $region12: #{esf_forward.6} parent=5 // pred_fallthru
      _
    %p126 = scmp.lt.s32.totalorder %s11, 2
    // Predicated region
    $region21: #{esf_forward.6} parent=5 // pred_check
      %p127 = pneg %p126
    $region22: #{esf_forward.6} parent=5 // pred_check_branch
      %129 = sbr.rel (%p127) target = $region24
    $region23: #{esf_forward.6} parent=5 // pred_region
      // Predicated region
      $region25: #{esf_forward.6} parent=23 // pred_check
        %p130 = pneg %p31
      $region26: #{esf_forward.6} parent=23 // pred_check_branch
        %132 = sbr.rel (%p130) target = $region28
      $region27: #{esf_forward.6} parent=23 // pred_region
        %p133 = scmp.lt.s32.totalorder %s11, 1
        %s134 = scalar_select %p133, %s11, 1
        %s135 = smul.addr %s134, 54
        %s136 = smul.addr %s135, 8
        %s137 = scalar_lea.vmem %s0, %s136
      $region28: #{esf_forward.6} parent=23 // pred_fallthru
        _
    $region24: #{esf_forward.6} parent=5 // pred_fallthru
      _
    %p138 = scmp.le.s32.totalorder 1, %s11
    %p139 = scmp.lt.s32.totalorder %s11, 3
    %p140 = pnand %p138, %p139
    %p141 = pneg %p140
    // Predicated region
    $region29: #{esf_forward.6} parent=5 // pred_check
      _
    $region30: #{esf_forward.6} parent=5 // pred_check_branch
      %143 = sbr.rel (%p140) target = $region32
    $region31: #{esf_forward.6} parent=5 // pred_region
      %s144 = ssub.s32 %s11, 1
      %p145 = scmp.lt.s32.totalorder %s16, 1
      %s146 = scalar_select %p145, %s16, 1
      %s147 = smul.addr %s146, 54
      %s148 = smul.addr %s147, 8
      %s149 = scalar_lea.vmem %s0, %s148
      %p150 = pneg %p37
      %p151 = pneg %p34
      %p152 = pneg %p58
      %p153 = pneg %p55
      %p154 = pneg %p79
      %p155 = pneg %p76
      %p156 = pneg %p105
      %p157 = pneg %p102
      %p158 = scmp.lt.s32.totalorder %s16, 1
      %s159 = scalar_select %p158, %s16, 1
      %s160 = smul.addr %s159, 32
      %s161 = smul.addr %s160, 8
      %s162 = scalar_lea.vmem %s3, %s161
      %p163 = scmp.lt.s32.totalorder %s16, 1
      %s164 = scalar_select %p163, %s16, 1
      %s165 = smul.addr %s164, 54
      %s166 = smul.addr %s165, 8
      %s167 = scalar_lea.vmem %s0, %s166
      %p168 = scmp.lt.s32.totalorder %s16, 1
      %s169 = scalar_select %p168, %s16, 1
      %s170 = smul.addr %s169, 32
      %s171 = smul.addr %s170, 8
      %s172 = scalar_lea.vmem %s3, %s171
      %v173 = vld [vmem:[%s167] sm:$0xff]
      %v174 = vld [vmem:[%s167 + $0x8] sm:$0xff]
      %v175 = vld [vmem:[%s167 + $0x18] sm:$0xff]
      %v176 = vld [vmem:[%s167 + $0x20] sm:$0xff]
      %v177 = vld [vmem:[%s167 + $0x30] sm:$0xff]
      %v178 = vld [vmem:[%s167 + $0x38] sm:$0xff]
      %v179 = vld [vmem:[%s167 + $0x48] sm:$0xff]
      %v180 = vld [vmem:[%s167 + $0x50] sm:$0xff]
      %v181 = vld [vmem:[%s167 + $0x60] sm:$0xff]
      %v182 = vld [vmem:[%s167 + $0x68] sm:$0xff]
      %v183 = vld [vmem:[%s167 + $0x78] sm:$0xff]
      %v184 = vld [vmem:[%s167 + $0x80] sm:$0xff]
      %v185 = vld [vmem:[%s167 + $0x90] sm:$0xff]
      %v186 = vld [vmem:[%s167 + $0x98] sm:$0xff]
      %v187 = vld [vmem:[%s167 + $0xa8] sm:$0xff]
      %v188 = vld [vmem:[%s167 + $0xb0] sm:$0xff]
      %v189 = vld [vmem:[%s167 + $0xc0] sm:$0xff]
      %v190 = vld [vmem:[%s167 + $0xc8] sm:$0xff]
      %v191 = vld [vmem:[%s167 + $0xd8] sm:$0xff]
      %v192 = vld [vmem:[%s167 + $0xe0] sm:$0xff]
      %v193 = vld [vmem:[%s167 + $0xf0] sm:$0xff]
      %v194 = vld [vmem:[%s167 + $0xf8] sm:$0xff]
      %v195 = vld [vmem:[%s167 + $0x108] sm:$0xff]
      %v196 = vld [vmem:[%s167 + $0x110] sm:$0xff]
      %v197 = vld [vmem:[%s167 + $0x120] sm:$0xff]
      %v198 = vld [vmem:[%s167 + $0x128] sm:$0xff]
      %v199 = vld [vmem:[%s167 + $0x138] sm:$0xff]
      %v200 = vld [vmem:[%s167 + $0x140] sm:$0xff]
      %v201 = vld [vmem:[%s167 + $0x150] sm:$0xff]
      %v202 = vld [vmem:[%s167 + $0x158] sm:$0xff]
      %v203 = vld [vmem:[%s167 + $0x168] sm:$0xff]
      %v204 = vld [vmem:[%s167 + $0x170] sm:$0xff]
      %v205 = vld [vmem:[%s1] sm:$0xff]
      %v206 = vld [vmem:[%s1 + $0x8] sm:$0xff]
      %v207 = vld [vmem:[%s1 + $0x10] sm:$0xff]
      %v208 = vld [vmem:[%s1 + $0x18] sm:$0xff]
      %v209 = vld [vmem:[%s1 + $0x20] sm:$0x1]
      %v210 = vld [vmem:[%s167 + $0x1] sm:$0xff]
      %v211 = vld [vmem:[%s167 + $0x9] sm:$0xff]
      %v212 = vld [vmem:[%s167 + $0x19] sm:$0xff]
      %v213 = vld [vmem:[%s167 + $0x21] sm:$0xff]
      %v214 = vld [vmem:[%s167 + $0x31] sm:$0xff]
      %v215 = vld [vmem:[%s167 + $0x39] sm:$0xff]
      %v216 = vld [vmem:[%s167 + $0x49] sm:$0xff]
      %v217 = vld [vmem:[%s167 + $0x51] sm:$0xff]
      %v218 = vld [vmem:[%s167 + $0x61] sm:$0xff]
      %v219 = vld [vmem:[%s167 + $0x69] sm:$0xff]
      %v220 = vld [vmem:[%s167 + $0x79] sm:$0xff]
      %v221 = vld [vmem:[%s167 + $0x81] sm:$0xff]
      %v222 = vld [vmem:[%s167 + $0x91] sm:$0xff]
      %v223 = vld [vmem:[%s167 + $0x99] sm:$0xff]
      %v224 = vld [vmem:[%s167 + $0xa9] sm:$0xff]
      %v225 = vld [vmem:[%s167 + $0xb1] sm:$0xff]
      %v226 = vld [vmem:[%s167 + $0xc1] sm:$0xff]
      %v227 = vld [vmem:[%s167 + $0xc9] sm:$0xff]
      %v228 = vld [vmem:[%s167 + $0xd9] sm:$0xff]
      %v229 = vld [vmem:[%s167 + $0xe1] sm:$0xff]
      %v230 = vld [vmem:[%s167 + $0xf1] sm:$0xff]
      %v231 = vld [vmem:[%s167 + $0xf9] sm:$0xff]
      %v232 = vld [vmem:[%s167 + $0x109] sm:$0xff]
      %v233 = vld [vmem:[%s167 + $0x111] sm:$0xff]
      %v234 = vld [vmem:[%s167 + $0x121] sm:$0xff]
      %v235 = vld [vmem:[%s167 + $0x129] sm:$0xff]
      %v236 = vld [vmem:[%s167 + $0x139] sm:$0xff]
      %v237 = vld [vmem:[%s167 + $0x141] sm:$0xff]
      %v238 = vld [vmem:[%s167 + $0x151] sm:$0xff]
      %v239 = vld [vmem:[%s167 + $0x159] sm:$0xff]
      %v240 = vld [vmem:[%s167 + $0x169] sm:$0xff]
      %v241 = vld [vmem:[%s167 + $0x171] sm:$0xff]
      %s242 = scalar_lea.vmem %s1, 40
      %v243 = vld [vmem:[%s242] sm:$0xff]
      %v244 = vld [vmem:[%s242 + $0x8] sm:$0xff]
      %v245 = vld [vmem:[%s242 + $0x10] sm:$0xff]
      %v246 = vld [vmem:[%s242 + $0x18] sm:$0xff]
      %v247 = vld [vmem:[%s242 + $0x20] sm:$0x1]
      %vm248 = vcmask 269312
      %v250 = vsel %vm248, %v210, 0
      %v253 = vsel %vm248, %v211, 0
      %v256 = vsel %vm248, %v212, 0
      %v259 = vsel %vm248, %v213, 0
      %v262 = vsel %vm248, %v214, 0
      %v265 = vsel %vm248, %v215, 0
      %v268 = vsel %vm248, %v216, 0
      %v271 = vsel %vm248, %v217, 0
      %v274 = vsel %vm248, %v218, 0
      %v277 = vsel %vm248, %v219, 0
      %v280 = vsel %vm248, %v220, 0
      %v283 = vsel %vm248, %v221, 0
      %v286 = vsel %vm248, %v222, 0
      %v289 = vsel %vm248, %v223, 0
      %v292 = vsel %vm248, %v224, 0
      %v295 = vsel %vm248, %v225, 0
      %v298 = vsel %vm248, %v226, 0
      %v301 = vsel %vm248, %v227, 0
      %v304 = vsel %vm248, %v228, 0
      %v307 = vsel %vm248, %v229, 0
      %v310 = vsel %vm248, %v230, 0
      %v313 = vsel %vm248, %v231, 0
      %v316 = vsel %vm248, %v232, 0
      %v319 = vsel %vm248, %v233, 0
      %v322 = vsel %vm248, %v234, 0
      %v325 = vsel %vm248, %v235, 0
      %v328 = vsel %vm248, %v236, 0
      %v331 = vsel %vm248, %v237, 0
      %v334 = vsel %vm248, %v238, 0
      %v337 = vsel %vm248, %v239, 0
      %v340 = vsel %vm248, %v240, 0
      %v343 = vsel %vm248, %v241, 0
      %vm345 = vcmask 1040384
      %v347 = vsel %vm345, %v247, 0
      %349 = vmatpush.msra.mxu0 0.0
      %350 = vmatpush.msra.mxu0 0.0
      %351 = vmatpush.msra.mxu0 0.0
      %352 = vmatpush.msra.mxu0 0.0
      %353 = vmatpush.msra.mxu0 0.0
      %354 = vmatpush.msra.mxu0 0.0
      %355 = vmatpush.msra.mxu0 0.0
      %356 = vmatpush.msra.mxu0 0.0
      %357 = vmatpush.msra.mxu0 0.0
      %358 = vmatpush.msra.mxu0 0.0
      %359 = vmatpush.msra.mxu0 0.0
      %360 = vmatpush.msra.mxu0 %v347
      %361 = vmatpush.msra.mxu0 %v246
      %362 = vmatpush.msra.mxu0 %v245
      %363 = vmatpush.msra.mxu0 %v244
      %364 = vmatpush.msra.mxu0 %v243
      %365 = vmatmul.f32.gmra.mxu0 %v250
      %v366 = vpop.f32.mrf.mxu0
      %v367 = vadd.f32 0.0, %v366
      %368 = vmatmul.f32.gmra.mxu0 %v253
      %v369 = vpop.f32.mrf.mxu0
      %v370 = vadd.f32 0.0, %v369
      %371 = vmatmul.f32.gmra.mxu0 %v256
      %v372 = vpop.f32.mrf.mxu0
      %v373 = vadd.f32 0.0, %v372
      %374 = vmatmul.f32.gmra.mxu0 %v259
      %v375 = vpop.f32.mrf.mxu0
      %v376 = vadd.f32 0.0, %v375
      %377 = vmatmul.f32.gmra.mxu0 %v262
      %v378 = vpop.f32.mrf.mxu0
      %v379 = vadd.f32 0.0, %v378
      %380 = vmatmul.f32.gmra.mxu0 %v265
      %v381 = vpop.f32.mrf.mxu0
      %v382 = vadd.f32 0.0, %v381
      %383 = vmatmul.f32.gmra.mxu0 %v268
      %v384 = vpop.f32.mrf.mxu0
      %v385 = vadd.f32 0.0, %v384
      %386 = vmatmul.f32.gmra.mxu0 %v271
      %v387 = vpop.f32.mrf.mxu0
      %v388 = vadd.f32 0.0, %v387
      %389 = vmatmul.f32.gmra.mxu0 %v274
      %v390 = vpop.f32.mrf.mxu0
      %v391 = vadd.f32 0.0, %v390
      %392 = vmatmul.f32.gmra.mxu0 %v277
      %v393 = vpop.f32.mrf.mxu0
      %v394 = vadd.f32 0.0, %v393
      %395 = vmatmul.f32.gmra.mxu0 %v280
      %v396 = vpop.f32.mrf.mxu0
      %v397 = vadd.f32 0.0, %v396
      %398 = vmatmul.f32.gmra.mxu0 %v283
      %v399 = vpop.f32.mrf.mxu0
      %v400 = vadd.f32 0.0, %v399
      %401 = vmatmul.f32.gmra.mxu0 %v286
      %v402 = vpop.f32.mrf.mxu0
      %v403 = vadd.f32 0.0, %v402
      %404 = vmatmul.f32.gmra.mxu0 %v289
      %v405 = vpop.f32.mrf.mxu0
      %v406 = vadd.f32 0.0, %v405
      %407 = vmatmul.f32.gmra.mxu0 %v292
      %v408 = vpop.f32.mrf.mxu0
      %v409 = vadd.f32 0.0, %v408
      %410 = vmatmul.f32.gmra.mxu0 %v295
      %v411 = vpop.f32.mrf.mxu0
      %v412 = vadd.f32 0.0, %v411
      %413 = vmatmul.f32.gmra.mxu0 %v298
      %v414 = vpop.f32.mrf.mxu0
      %v415 = vadd.f32 0.0, %v414
      %416 = vmatmul.f32.gmra.mxu0 %v301
      %v417 = vpop.f32.mrf.mxu0
      %v418 = vadd.f32 0.0, %v417
      %419 = vmatmul.f32.gmra.mxu0 %v304
      %v420 = vpop.f32.mrf.mxu0
      %v421 = vadd.f32 0.0, %v420
      %422 = vmatmul.f32.gmra.mxu0 %v307
      %v423 = vpop.f32.mrf.mxu0
      %v424 = vadd.f32 0.0, %v423
      %425 = vmatmul.f32.gmra.mxu0 %v310
      %v426 = vpop.f32.mrf.mxu0
      %v427 = vadd.f32 0.0, %v426
      %428 = vmatmul.f32.gmra.mxu0 %v313
      %v429 = vpop.f32.mrf.mxu0
      %v430 = vadd.f32 0.0, %v429
      %431 = vmatmul.f32.gmra.mxu0 %v316
      %v432 = vpop.f32.mrf.mxu0
      %v433 = vadd.f32 0.0, %v432
      %434 = vmatmul.f32.gmra.mxu0 %v319
      %v435 = vpop.f32.mrf.mxu0
      %v436 = vadd.f32 0.0, %v435
      %437 = vmatmul.f32.gmra.mxu0 %v322
      %v438 = vpop.f32.mrf.mxu0
      %v439 = vadd.f32 0.0, %v438
      %440 = vmatmul.f32.gmra.mxu0 %v325
      %v441 = vpop.f32.mrf.mxu0
      %v442 = vadd.f32 0.0, %v441
      %443 = vmatmul.f32.gmra.mxu0 %v328
      %v444 = vpop.f32.mrf.mxu0
      %v445 = vadd.f32 0.0, %v444
      %446 = vmatmul.f32.gmra.mxu0 %v331
      %v447 = vpop.f32.mrf.mxu0
      %v448 = vadd.f32 0.0, %v447
      %449 = vmatmul.f32.gmra.mxu0 %v334
      %v450 = vpop.f32.mrf.mxu0
      %v451 = vadd.f32 0.0, %v450
      %452 = vmatmul.f32.gmra.mxu0 %v337
      %v453 = vpop.f32.mrf.mxu0
      %v454 = vadd.f32 0.0, %v453
      %455 = vmatmul.f32.gmra.mxu0 %v340
      %v456 = vpop.f32.mrf.mxu0
      %v457 = vadd.f32 0.0, %v456
      %458 = vmatmul.f32.gmra.mxu0 %v343
      %v459 = vpop.f32.mrf.mxu0
      %v460 = vadd.f32 0.0, %v459
      %461 = vdwg.mxu0
      %v463 = vsel %vm248, %v173, 0
      %v466 = vsel %vm248, %v174, 0
      %v469 = vsel %vm248, %v175, 0
      %v472 = vsel %vm248, %v176, 0
      %v475 = vsel %vm248, %v177, 0
      %v478 = vsel %vm248, %v178, 0
      %v481 = vsel %vm248, %v179, 0
      %v484 = vsel %vm248, %v180, 0
      %v487 = vsel %vm248, %v181, 0
      %v490 = vsel %vm248, %v182, 0
      %v493 = vsel %vm248, %v183, 0
      %v496 = vsel %vm248, %v184, 0
      %v499 = vsel %vm248, %v185, 0
      %v502 = vsel %vm248, %v186, 0
      %v505 = vsel %vm248, %v187, 0
      %v508 = vsel %vm248, %v188, 0
      %v511 = vsel %vm248, %v189, 0
      %v514 = vsel %vm248, %v190, 0
      %v517 = vsel %vm248, %v191, 0
      %v520 = vsel %vm248, %v192, 0
      %v523 = vsel %vm248, %v193, 0
      %v526 = vsel %vm248, %v194, 0
      %v529 = vsel %vm248, %v195, 0
      %v532 = vsel %vm248, %v196, 0
      %v535 = vsel %vm248, %v197, 0
      %v538 = vsel %vm248, %v198, 0
      %v541 = vsel %vm248, %v199, 0
      %v544 = vsel %vm248, %v200, 0
      %v547 = vsel %vm248, %v201, 0
      %v550 = vsel %vm248, %v202, 0
      %v553 = vsel %vm248, %v203, 0
      %v556 = vsel %vm248, %v204, 0
      %v559 = vsel %vm345, %v209, 0
      %561 = vmatpush.msra.mxu0 0.0
      %562 = vmatpush.msra.mxu0 0.0
      %563 = vmatpush.msra.mxu0 0.0
      %564 = vmatpush.msra.mxu0 0.0
      %565 = vmatpush.msra.mxu0 0.0
      %566 = vmatpush.msra.mxu0 0.0
      %567 = vmatpush.msra.mxu0 0.0
      %568 = vmatpush.msra.mxu0 0.0
      %569 = vmatpush.msra.mxu0 0.0
      %570 = vmatpush.msra.mxu0 0.0
      %571 = vmatpush.msra.mxu0 0.0
      %572 = vmatpush.msra.mxu0 %v559
      %573 = vmatpush.msra.mxu0 %v208
      %574 = vmatpush.msra.mxu0 %v207
      %575 = vmatpush.msra.mxu0 %v206
      %576 = vmatpush.msra.mxu0 %v205
      %577 = vmatmul.f32.gmra.mxu0 %v463
      %v578 = vpop.f32.mrf.mxu0
      %v579 = vadd.f32 %v367, %v578
      %580 = vmatmul.f32.gmra.mxu0 %v466
      %v581 = vpop.f32.mrf.mxu0
      %v582 = vadd.f32 %v370, %v581
      %583 = vmatmul.f32.gmra.mxu0 %v469
      %v584 = vpop.f32.mrf.mxu0
      %v585 = vadd.f32 %v373, %v584
      %586 = vmatmul.f32.gmra.mxu0 %v472
      %v587 = vpop.f32.mrf.mxu0
      %v588 = vadd.f32 %v376, %v587
      %589 = vmatmul.f32.gmra.mxu0 %v475
      %v590 = vpop.f32.mrf.mxu0
      %v591 = vadd.f32 %v379, %v590
      %592 = vmatmul.f32.gmra.mxu0 %v478
      %v593 = vpop.f32.mrf.mxu0
      %v594 = vadd.f32 %v382, %v593
      %595 = vmatmul.f32.gmra.mxu0 %v481
      %v596 = vpop.f32.mrf.mxu0
      %v597 = vadd.f32 %v385, %v596
      %598 = vmatmul.f32.gmra.mxu0 %v484
      %v599 = vpop.f32.mrf.mxu0
      %v600 = vadd.f32 %v388, %v599
      %601 = vmatmul.f32.gmra.mxu0 %v487
      %v602 = vpop.f32.mrf.mxu0
      %v603 = vadd.f32 %v391, %v602
      %604 = vmatmul.f32.gmra.mxu0 %v490
      %v605 = vpop.f32.mrf.mxu0
      %v606 = vadd.f32 %v394, %v605
      %607 = vmatmul.f32.gmra.mxu0 %v493
      %v608 = vpop.f32.mrf.mxu0
      %v609 = vadd.f32 %v397, %v608
      %610 = vmatmul.f32.gmra.mxu0 %v496
      %v611 = vpop.f32.mrf.mxu0
      %v612 = vadd.f32 %v400, %v611
      %613 = vmatmul.f32.gmra.mxu0 %v499
      %v614 = vpop.f32.mrf.mxu0
      %v615 = vadd.f32 %v403, %v614
      %616 = vmatmul.f32.gmra.mxu0 %v502
      %v617 = vpop.f32.mrf.mxu0
      %v618 = vadd.f32 %v406, %v617
      %619 = vmatmul.f32.gmra.mxu0 %v505
      %v620 = vpop.f32.mrf.mxu0
      %v621 = vadd.f32 %v409, %v620
      %622 = vmatmul.f32.gmra.mxu0 %v508
      %v623 = vpop.f32.mrf.mxu0
      %v624 = vadd.f32 %v412, %v623
      %625 = vmatmul.f32.gmra.mxu0 %v511
      %v626 = vpop.f32.mrf.mxu0
      %v627 = vadd.f32 %v415, %v626
      %628 = vmatmul.f32.gmra.mxu0 %v514
      %v629 = vpop.f32.mrf.mxu0
      %v630 = vadd.f32 %v418, %v629
      %631 = vmatmul.f32.gmra.mxu0 %v517
      %v632 = vpop.f32.mrf.mxu0
      %v633 = vadd.f32 %v421, %v632
      %634 = vmatmul.f32.gmra.mxu0 %v520
      %v635 = vpop.f32.mrf.mxu0
      %v636 = vadd.f32 %v424, %v635
      %637 = vmatmul.f32.gmra.mxu0 %v523
      %v638 = vpop.f32.mrf.mxu0
      %v639 = vadd.f32 %v427, %v638
      %640 = vmatmul.f32.gmra.mxu0 %v526
      %v641 = vpop.f32.mrf.mxu0
      %v642 = vadd.f32 %v430, %v641
      %643 = vmatmul.f32.gmra.mxu0 %v529
      %v644 = vpop.f32.mrf.mxu0
      %v645 = vadd.f32 %v433, %v644
      %646 = vmatmul.f32.gmra.mxu0 %v532
      %v647 = vpop.f32.mrf.mxu0
      %v648 = vadd.f32 %v436, %v647
      %649 = vmatmul.f32.gmra.mxu0 %v535
      %v650 = vpop.f32.mrf.mxu0
      %v651 = vadd.f32 %v439, %v650
      %652 = vmatmul.f32.gmra.mxu0 %v538
      %v653 = vpop.f32.mrf.mxu0
      %v654 = vadd.f32 %v442, %v653
      %655 = vmatmul.f32.gmra.mxu0 %v541
      %v656 = vpop.f32.mrf.mxu0
      %v657 = vadd.f32 %v445, %v656
      %658 = vmatmul.f32.gmra.mxu0 %v544
      %v659 = vpop.f32.mrf.mxu0
      %v660 = vadd.f32 %v448, %v659
      %661 = vmatmul.f32.gmra.mxu0 %v547
      %v662 = vpop.f32.mrf.mxu0
      %v663 = vadd.f32 %v451, %v662
      %664 = vmatmul.f32.gmra.mxu0 %v550
      %v665 = vpop.f32.mrf.mxu0
      %v666 = vadd.f32 %v454, %v665
      %667 = vmatmul.f32.gmra.mxu0 %v553
      %v668 = vpop.f32.mrf.mxu0
      %v669 = vadd.f32 %v457, %v668
      %670 = vmatmul.f32.gmra.mxu0 %v556
      %v671 = vpop.f32.mrf.mxu0
      %v672 = vadd.f32 %v460, %v671
      %673 = vdwg.mxu0
      %v674 = vld [vmem:[%s167 + $0x2] sm:$0xff]
      %v675 = vld [vmem:[%s167 + $0xa] sm:$0xff]
      %v676 = vld [vmem:[%s167 + $0x1a] sm:$0xff]
      %v677 = vld [vmem:[%s167 + $0x22] sm:$0xff]
      %v678 = vld [vmem:[%s167 + $0x32] sm:$0xff]
      %v679 = vld [vmem:[%s167 + $0x3a] sm:$0xff]
      %v680 = vld [vmem:[%s167 + $0x4a] sm:$0xff]
      %v681 = vld [vmem:[%s167 + $0x52] sm:$0xff]
      %v682 = vld [vmem:[%s167 + $0x62] sm:$0xff]
      %v683 = vld [vmem:[%s167 + $0x6a] sm:$0xff]
      %v684 = vld [vmem:[%s167 + $0x7a] sm:$0xff]
      %v685 = vld [vmem:[%s167 + $0x82] sm:$0xff]
      %v686 = vld [vmem:[%s167 + $0x92] sm:$0xff]
      %v687 = vld [vmem:[%s167 + $0x9a] sm:$0xff]
      %v688 = vld [vmem:[%s167 + $0xaa] sm:$0xff]
      %v689 = vld [vmem:[%s167 + $0xb2] sm:$0xff]
      %v690 = vld [vmem:[%s167 + $0xc2] sm:$0xff]
      %v691 = vld [vmem:[%s167 + $0xca] sm:$0xff]
      %v692 = vld [vmem:[%s167 + $0xda] sm:$0xff]
      %v693 = vld [vmem:[%s167 + $0xe2] sm:$0xff]
      %v694 = vld [vmem:[%s167 + $0xf2] sm:$0xff]
      %v695 = vld [vmem:[%s167 + $0xfa] sm:$0xff]
      %v696 = vld [vmem:[%s167 + $0x10a] sm:$0xff]
      %v697 = vld [vmem:[%s167 + $0x112] sm:$0xff]
      %v698 = vld [vmem:[%s167 + $0x122] sm:$0xff]
      %v699 = vld [vmem:[%s167 + $0x12a] sm:$0xff]
      %v700 = vld [vmem:[%s167 + $0x13a] sm:$0xff]
      %v701 = vld [vmem:[%s167 + $0x142] sm:$0xff]
      %v702 = vld [vmem:[%s167 + $0x152] sm:$0xff]
      %v703 = vld [vmem:[%s167 + $0x15a] sm:$0xff]
      %v704 = vld [vmem:[%s167 + $0x16a] sm:$0xff]
      %v705 = vld [vmem:[%s167 + $0x172] sm:$0xff]
      %s706 = scalar_lea.vmem %s1, 80
      %v707 = vld [vmem:[%s706] sm:$0xff]
      %v708 = vld [vmem:[%s706 + $0x8] sm:$0xff]
      %v709 = vld [vmem:[%s706 + $0x10] sm:$0xff]
      %v710 = vld [vmem:[%s706 + $0x18] sm:$0xff]
      %v711 = vld [vmem:[%s706 + $0x20] sm:$0x1]
      %v713 = vsel %vm248, %v674, 0
      %v716 = vsel %vm248, %v675, 0
      %v719 = vsel %vm248, %v676, 0
      %v722 = vsel %vm248, %v677, 0
      %v725 = vsel %vm248, %v678, 0
      %v728 = vsel %vm248, %v679, 0
      %v731 = vsel %vm248, %v680, 0
      %v734 = vsel %vm248, %v681, 0
      %v737 = vsel %vm248, %v682, 0
      %v740 = vsel %vm248, %v683, 0
      %v743 = vsel %vm248, %v684, 0
      %v746 = vsel %vm248, %v685, 0
      %v749 = vsel %vm248, %v686, 0
      %v752 = vsel %vm248, %v687, 0
      %v755 = vsel %vm248, %v688, 0
      %v758 = vsel %vm248, %v689, 0
      %v761 = vsel %vm248, %v690, 0
      %v764 = vsel %vm248, %v691, 0
      %v767 = vsel %vm248, %v692, 0
      %v770 = vsel %vm248, %v693, 0
      %v773 = vsel %vm248, %v694, 0
      %v776 = vsel %vm248, %v695, 0
      %v779 = vsel %vm248, %v696, 0
      %v782 = vsel %vm248, %v697, 0
      %v785 = vsel %vm248, %v698, 0
      %v788 = vsel %vm248, %v699, 0
      %v791 = vsel %vm248, %v700, 0
      %v794 = vsel %vm248, %v701, 0
      %v797 = vsel %vm248, %v702, 0
      %v800 = vsel %vm248, %v703, 0
      %v803 = vsel %vm248, %v704, 0
      %v806 = vsel %vm248, %v705, 0
      %v809 = vsel %vm345, %v711, 0
      %811 = vmatpush.msra.mxu0 0.0
      %812 = vmatpush.msra.mxu0 0.0
      %813 = vmatpush.msra.mxu0 0.0
      %814 = vmatpush.msra.mxu0 0.0
      %815 = vmatpush.msra.mxu0 0.0
      %816 = vmatpush.msra.mxu0 0.0
      %817 = vmatpush.msra.mxu0 0.0
      %818 = vmatpush.msra.mxu0 0.0
      %819 = vmatpush.msra.mxu0 0.0
      %820 = vmatpush.msra.mxu0 0.0
      %821 = vmatpush.msra.mxu0 0.0
      %822 = vmatpush.msra.mxu0 %v809
      %823 = vmatpush.msra.mxu0 %v710
      %824 = vmatpush.msra.mxu0 %v709
      %825 = vmatpush.msra.mxu0 %v708
      %826 = vmatpush.msra.mxu0 %v707
      %827 = vmatmul.f32.gmra.mxu0 %v713
      %v828 = vpop.f32.mrf.mxu0
      %v829 = vadd.f32 0.0, %v828
      %830 = vmatmul.f32.gmra.mxu0 %v716
      %v831 = vpop.f32.mrf.mxu0
      %v832 = vadd.f32 0.0, %v831
      %833 = vmatmul.f32.gmra.mxu0 %v719
      %v834 = vpop.f32.mrf.mxu0
      %v835 = vadd.f32 0.0, %v834
      %836 = vmatmul.f32.gmra.mxu0 %v722
      %v837 = vpop.f32.mrf.mxu0
      %v838 = vadd.f32 0.0, %v837
      %839 = vmatmul.f32.gmra.mxu0 %v725
      %v840 = vpop.f32.mrf.mxu0
      %v841 = vadd.f32 0.0, %v840
      %842 = vmatmul.f32.gmra.mxu0 %v728
      %v843 = vpop.f32.mrf.mxu0
      %v844 = vadd.f32 0.0, %v843
      %845 = vmatmul.f32.gmra.mxu0 %v731
      %v846 = vpop.f32.mrf.mxu0
      %v847 = vadd.f32 0.0, %v846
      %848 = vmatmul.f32.gmra.mxu0 %v734
      %v849 = vpop.f32.mrf.mxu0
      %v850 = vadd.f32 0.0, %v849
      %851 = vmatmul.f32.gmra.mxu0 %v737
      %v852 = vpop.f32.mrf.mxu0
      %v853 = vadd.f32 0.0, %v852
      %854 = vmatmul.f32.gmra.mxu0 %v740
      %v855 = vpop.f32.mrf.mxu0
      %v856 = vadd.f32 0.0, %v855
      %857 = vmatmul.f32.gmra.mxu0 %v743
      %v858 = vpop.f32.mrf.mxu0
      %v859 = vadd.f32 0.0, %v858
      %860 = vmatmul.f32.gmra.mxu0 %v746
      %v861 = vpop.f32.mrf.mxu0
      %v862 = vadd.f32 0.0, %v861
      %863 = vmatmul.f32.gmra.mxu0 %v749
      %v864 = vpop.f32.mrf.mxu0
      %v865 = vadd.f32 0.0, %v864
      %866 = vmatmul.f32.gmra.mxu0 %v752
      %v867 = vpop.f32.mrf.mxu0
      %v868 = vadd.f32 0.0, %v867
      %869 = vmatmul.f32.gmra.mxu0 %v755
      %v870 = vpop.f32.mrf.mxu0
      %v871 = vadd.f32 0.0, %v870
      %872 = vmatmul.f32.gmra.mxu0 %v758
      %v873 = vpop.f32.mrf.mxu0
      %v874 = vadd.f32 0.0, %v873
      %875 = vmatmul.f32.gmra.mxu0 %v761
      %v876 = vpop.f32.mrf.mxu0
      %v877 = vadd.f32 0.0, %v876
      %878 = vmatmul.f32.gmra.mxu0 %v764
      %v879 = vpop.f32.mrf.mxu0
      %v880 = vadd.f32 0.0, %v879
      %881 = vmatmul.f32.gmra.mxu0 %v767
      %v882 = vpop.f32.mrf.mxu0
      %v883 = vadd.f32 0.0, %v882
      %884 = vmatmul.f32.gmra.mxu0 %v770
      %v885 = vpop.f32.mrf.mxu0
      %v886 = vadd.f32 0.0, %v885
      %887 = vmatmul.f32.gmra.mxu0 %v773
      %v888 = vpop.f32.mrf.mxu0
      %v889 = vadd.f32 0.0, %v888
      %890 = vmatmul.f32.gmra.mxu0 %v776
      %v891 = vpop.f32.mrf.mxu0
      %v892 = vadd.f32 0.0, %v891
      %893 = vmatmul.f32.gmra.mxu0 %v779
      %v894 = vpop.f32.mrf.mxu0
      %v895 = vadd.f32 0.0, %v894
      %896 = vmatmul.f32.gmra.mxu0 %v782
      %v897 = vpop.f32.mrf.mxu0
      %v898 = vadd.f32 0.0, %v897
      %899 = vmatmul.f32.gmra.mxu0 %v785
      %v900 = vpop.f32.mrf.mxu0
      %v901 = vadd.f32 0.0, %v900
      %902 = vmatmul.f32.gmra.mxu0 %v788
      %v903 = vpop.f32.mrf.mxu0
      %v904 = vadd.f32 0.0, %v903
      %905 = vmatmul.f32.gmra.mxu0 %v791
      %v906 = vpop.f32.mrf.mxu0
      %v907 = vadd.f32 0.0, %v906
      %908 = vmatmul.f32.gmra.mxu0 %v794
      %v909 = vpop.f32.mrf.mxu0
      %v910 = vadd.f32 0.0, %v909
      %911 = vmatmul.f32.gmra.mxu0 %v797
      %v912 = vpop.f32.mrf.mxu0
      %v913 = vadd.f32 0.0, %v912
      %914 = vmatmul.f32.gmra.mxu0 %v800
      %v915 = vpop.f32.mrf.mxu0
      %v916 = vadd.f32 0.0, %v915
      %917 = vmatmul.f32.gmra.mxu0 %v803
      %v918 = vpop.f32.mrf.mxu0
      %v919 = vadd.f32 0.0, %v918
      %920 = vmatmul.f32.gmra.mxu0 %v806
      %v921 = vpop.f32.mrf.mxu0
      %v922 = vadd.f32 0.0, %v921
      %923 = vdwg.mxu0
      %v924 = vadd.f32 %v579, %v829
      %v925 = vadd.f32 %v582, %v832
      %v926 = vadd.f32 %v585, %v835
      %v927 = vadd.f32 %v588, %v838
      %v928 = vadd.f32 %v591, %v841
      %v929 = vadd.f32 %v594, %v844
      %v930 = vadd.f32 %v597, %v847
      %v931 = vadd.f32 %v600, %v850
      %v932 = vadd.f32 %v603, %v853
      %v933 = vadd.f32 %v606, %v856
      %v934 = vadd.f32 %v609, %v859
      %v935 = vadd.f32 %v612, %v862
      %v936 = vadd.f32 %v615, %v865
      %v937 = vadd.f32 %v618, %v868
      %v938 = vadd.f32 %v621, %v871
      %v939 = vadd.f32 %v624, %v874
      %v940 = vadd.f32 %v627, %v877
      %v941 = vadd.f32 %v630, %v880
      %v942 = vadd.f32 %v633, %v883
      %v943 = vadd.f32 %v636, %v886
      %v944 = vadd.f32 %v639, %v889
      %v945 = vadd.f32 %v642, %v892
      %v946 = vadd.f32 %v645, %v895
      %v947 = vadd.f32 %v648, %v898
      %v948 = vadd.f32 %v651, %v901
      %v949 = vadd.f32 %v654, %v904
      %v950 = vadd.f32 %v657, %v907
      %v951 = vadd.f32 %v660, %v910
      %v952 = vadd.f32 %v663, %v913
      %v953 = vadd.f32 %v666, %v916
      %v954 = vadd.f32 %v669, %v919
      %v955 = vadd.f32 %v672, %v922
      %s956 = scalar_lea.vmem %s167, 24
      %v957 = vld [vmem:[%s956] sm:$0xff]
      %v958 = vld [vmem:[%s956 + $0x8] sm:$0xff]
      %v959 = vld [vmem:[%s956 + $0x18] sm:$0xff]
      %v960 = vld [vmem:[%s956 + $0x20] sm:$0xff]
      %v961 = vld [vmem:[%s956 + $0x30] sm:$0xff]
      %v962 = vld [vmem:[%s956 + $0x38] sm:$0xff]
      %v963 = vld [vmem:[%s956 + $0x48] sm:$0xff]
      %v964 = vld [vmem:[%s956 + $0x50] sm:$0xff]
      %v965 = vld [vmem:[%s956 + $0x60] sm:$0xff]
      %v966 = vld [vmem:[%s956 + $0x68] sm:$0xff]
      %v967 = vld [vmem:[%s956 + $0x78] sm:$0xff]
      %v968 = vld [vmem:[%s956 + $0x80] sm:$0xff]
      %v969 = vld [vmem:[%s956 + $0x90] sm:$0xff]
      %v970 = vld [vmem:[%s956 + $0x98] sm:$0xff]
      %v971 = vld [vmem:[%s956 + $0xa8] sm:$0xff]
      %v972 = vld [vmem:[%s956 + $0xb0] sm:$0xff]
      %v973 = vld [vmem:[%s956 + $0xc0] sm:$0xff]
      %v974 = vld [vmem:[%s956 + $0xc8] sm:$0xff]
      %v975 = vld [vmem:[%s956 + $0xd8] sm:$0xff]
      %v976 = vld [vmem:[%s956 + $0xe0] sm:$0xff]
      %v977 = vld [vmem:[%s956 + $0xf0] sm:$0xff]
      %v978 = vld [vmem:[%s956 + $0xf8] sm:$0xff]
      %v979 = vld [vmem:[%s956 + $0x108] sm:$0xff]
      %v980 = vld [vmem:[%s956 + $0x110] sm:$0xff]
      %v981 = vld [vmem:[%s956 + $0x120] sm:$0xff]
      %v982 = vld [vmem:[%s956 + $0x128] sm:$0xff]
      %v983 = vld [vmem:[%s956 + $0x138] sm:$0xff]
      %v984 = vld [vmem:[%s956 + $0x140] sm:$0xff]
      %v985 = vld [vmem:[%s956 + $0x150] sm:$0xff]
      %v986 = vld [vmem:[%s956 + $0x158] sm:$0xff]
      %v987 = vld [vmem:[%s956 + $0x168] sm:$0xff]
      %v988 = vld [vmem:[%s956 + $0x170] sm:$0xff]
      %s989 = scalar_lea.vmem %s1, 120
      %v990 = vld [vmem:[%s989] sm:$0xff]
      %v991 = vld [vmem:[%s989 + $0x8] sm:$0xff]
      %v992 = vld [vmem:[%s989 + $0x10] sm:$0xff]
      %v993 = vld [vmem:[%s989 + $0x18] sm:$0xff]
      %v994 = vld [vmem:[%s989 + $0x20] sm:$0x1]
      %v996 = vsel %vm248, %v957, 0
      %v999 = vsel %vm248, %v958, 0
      %v1002 = vsel %vm248, %v959, 0
      %v1005 = vsel %vm248, %v960, 0
      %v1008 = vsel %vm248, %v961, 0
      %v1011 = vsel %vm248, %v962, 0
      %v1014 = vsel %vm248, %v963, 0
      %v1017 = vsel %vm248, %v964, 0
      %v1020 = vsel %vm248, %v965, 0
      %v1023 = vsel %vm248, %v966, 0
      %v1026 = vsel %vm248, %v967, 0
      %v1029 = vsel %vm248, %v968, 0
      %v1032 = vsel %vm248, %v969, 0
      %v1035 = vsel %vm248, %v970, 0
      %v1038 = vsel %vm248, %v971, 0
      %v1041 = vsel %vm248, %v972, 0
      %v1044 = vsel %vm248, %v973, 0
      %v1047 = vsel %vm248, %v974, 0
      %v1050 = vsel %vm248, %v975, 0
      %v1053 = vsel %vm248, %v976, 0
      %v1056 = vsel %vm248, %v977, 0
      %v1059 = vsel %vm248, %v978, 0
      %v1062 = vsel %vm248, %v979, 0
      %v1065 = vsel %vm248, %v980, 0
      %v1068 = vsel %vm248, %v981, 0
      %v1071 = vsel %vm248, %v982, 0
      %v1074 = vsel %vm248, %v983, 0
      %v1077 = vsel %vm248, %v984, 0
      %v1080 = vsel %vm248, %v985, 0
      %v1083 = vsel %vm248, %v986, 0
      %v1086 = vsel %vm248, %v987, 0
      %v1089 = vsel %vm248, %v988, 0
      %v1092 = vsel %vm345, %v994, 0
      %1094 = vmatpush.msra.mxu0 0.0
      %1095 = vmatpush.msra.mxu0 0.0
      %1096 = vmatpush.msra.mxu0 0.0
      %1097 = vmatpush.msra.mxu0 0.0
      %1098 = vmatpush.msra.mxu0 0.0
      %1099 = vmatpush.msra.mxu0 0.0
      %1100 = vmatpush.msra.mxu0 0.0
      %1101 = vmatpush.msra.mxu0 0.0
      %1102 = vmatpush.msra.mxu0 0.0
      %1103 = vmatpush.msra.mxu0 0.0
      %1104 = vmatpush.msra.mxu0 0.0
      %1105 = vmatpush.msra.mxu0 %v1092
      %1106 = vmatpush.msra.mxu0 %v993
      %1107 = vmatpush.msra.mxu0 %v992
      %1108 = vmatpush.msra.mxu0 %v991
      %1109 = vmatpush.msra.mxu0 %v990
      %1110 = vmatmul.f32.gmra.mxu0 %v996
      %v1111 = vpop.f32.mrf.mxu0
      %v1112 = vadd.f32 0.0, %v1111
      %1113 = vmatmul.f32.gmra.mxu0 %v999
      %v1114 = vpop.f32.mrf.mxu0
      %v1115 = vadd.f32 0.0, %v1114
      %1116 = vmatmul.f32.gmra.mxu0 %v1002
      %v1117 = vpop.f32.mrf.mxu0
      %v1118 = vadd.f32 0.0, %v1117
      %1119 = vmatmul.f32.gmra.mxu0 %v1005
      %v1120 = vpop.f32.mrf.mxu0
      %v1121 = vadd.f32 0.0, %v1120
      %1122 = vmatmul.f32.gmra.mxu0 %v1008
      %v1123 = vpop.f32.mrf.mxu0
      %v1124 = vadd.f32 0.0, %v1123
      %1125 = vmatmul.f32.gmra.mxu0 %v1011
      %v1126 = vpop.f32.mrf.mxu0
      %v1127 = vadd.f32 0.0, %v1126
      %1128 = vmatmul.f32.gmra.mxu0 %v1014
      %v1129 = vpop.f32.mrf.mxu0
      %v1130 = vadd.f32 0.0, %v1129
      %1131 = vmatmul.f32.gmra.mxu0 %v1017
      %v1132 = vpop.f32.mrf.mxu0
      %v1133 = vadd.f32 0.0, %v1132
      %1134 = vmatmul.f32.gmra.mxu0 %v1020
      %v1135 = vpop.f32.mrf.mxu0
      %v1136 = vadd.f32 0.0, %v1135
      %1137 = vmatmul.f32.gmra.mxu0 %v1023
      %v1138 = vpop.f32.mrf.mxu0
      %v1139 = vadd.f32 0.0, %v1138
      %1140 = vmatmul.f32.gmra.mxu0 %v1026
      %v1141 = vpop.f32.mrf.mxu0
      %v1142 = vadd.f32 0.0, %v1141
      %1143 = vmatmul.f32.gmra.mxu0 %v1029
      %v1144 = vpop.f32.mrf.mxu0
      %v1145 = vadd.f32 0.0, %v1144
      %1146 = vmatmul.f32.gmra.mxu0 %v1032
      %v1147 = vpop.f32.mrf.mxu0
      %v1148 = vadd.f32 0.0, %v1147
      %1149 = vmatmul.f32.gmra.mxu0 %v1035
      %v1150 = vpop.f32.mrf.mxu0
      %v1151 = vadd.f32 0.0, %v1150
      %1152 = vmatmul.f32.gmra.mxu0 %v1038
      %v1153 = vpop.f32.mrf.mxu0
      %v1154 = vadd.f32 0.0, %v1153
      %1155 = vmatmul.f32.gmra.mxu0 %v1041
      %v1156 = vpop.f32.mrf.mxu0
      %v1157 = vadd.f32 0.0, %v1156
      %1158 = vmatmul.f32.gmra.mxu0 %v1044
      %v1159 = vpop.f32.mrf.mxu0
      %v1160 = vadd.f32 0.0, %v1159
      %1161 = vmatmul.f32.gmra.mxu0 %v1047
      %v1162 = vpop.f32.mrf.mxu0
      %v1163 = vadd.f32 0.0, %v1162
      %1164 = vmatmul.f32.gmra.mxu0 %v1050
      %v1165 = vpop.f32.mrf.mxu0
      %v1166 = vadd.f32 0.0, %v1165
      %1167 = vmatmul.f32.gmra.mxu0 %v1053
      %v1168 = vpop.f32.mrf.mxu0
      %v1169 = vadd.f32 0.0, %v1168
      %1170 = vmatmul.f32.gmra.mxu0 %v1056
      %v1171 = vpop.f32.mrf.mxu0
      %v1172 = vadd.f32 0.0, %v1171
      %1173 = vmatmul.f32.gmra.mxu0 %v1059
      %v1174 = vpop.f32.mrf.mxu0
      %v1175 = vadd.f32 0.0, %v1174
      %1176 = vmatmul.f32.gmra.mxu0 %v1062
      %v1177 = vpop.f32.mrf.mxu0
      %v1178 = vadd.f32 0.0, %v1177
      %1179 = vmatmul.f32.gmra.mxu0 %v1065
      %v1180 = vpop.f32.mrf.mxu0
      %v1181 = vadd.f32 0.0, %v1180
      %1182 = vmatmul.f32.gmra.mxu0 %v1068
      %v1183 = vpop.f32.mrf.mxu0
      %v1184 = vadd.f32 0.0, %v1183
      %1185 = vmatmul.f32.gmra.mxu0 %v1071
      %v1186 = vpop.f32.mrf.mxu0
      %v1187 = vadd.f32 0.0, %v1186
      %1188 = vmatmul.f32.gmra.mxu0 %v1074
      %v1189 = vpop.f32.mrf.mxu0
      %v1190 = vadd.f32 0.0, %v1189
      %1191 = vmatmul.f32.gmra.mxu0 %v1077
      %v1192 = vpop.f32.mrf.mxu0
      %v1193 = vadd.f32 0.0, %v1192
      %1194 = vmatmul.f32.gmra.mxu0 %v1080
      %v1195 = vpop.f32.mrf.mxu0
      %v1196 = vadd.f32 0.0, %v1195
      %1197 = vmatmul.f32.gmra.mxu0 %v1083
      %v1198 = vpop.f32.mrf.mxu0
      %v1199 = vadd.f32 0.0, %v1198
      %1200 = vmatmul.f32.gmra.mxu0 %v1086
      %v1201 = vpop.f32.mrf.mxu0
      %v1202 = vadd.f32 0.0, %v1201
      %1203 = vmatmul.f32.gmra.mxu0 %v1089
      %v1204 = vpop.f32.mrf.mxu0
      %v1205 = vadd.f32 0.0, %v1204
      %1206 = vdwg.mxu0
      %v1207 = vadd.f32 %v924, %v1112
      %v1208 = vadd.f32 %v925, %v1115
      %v1209 = vadd.f32 %v926, %v1118
      %v1210 = vadd.f32 %v927, %v1121
      %v1211 = vadd.f32 %v928, %v1124
      %v1212 = vadd.f32 %v929, %v1127
      %v1213 = vadd.f32 %v930, %v1130
      %v1214 = vadd.f32 %v931, %v1133
      %v1215 = vadd.f32 %v932, %v1136
      %v1216 = vadd.f32 %v933, %v1139
      %v1217 = vadd.f32 %v934, %v1142
      %v1218 = vadd.f32 %v935, %v1145
      %v1219 = vadd.f32 %v936, %v1148
      %v1220 = vadd.f32 %v937, %v1151
      %v1221 = vadd.f32 %v938, %v1154
      %v1222 = vadd.f32 %v939, %v1157
      %v1223 = vadd.f32 %v940, %v1160
      %v1224 = vadd.f32 %v941, %v1163
      %v1225 = vadd.f32 %v942, %v1166
      %v1226 = vadd.f32 %v943, %v1169
      %v1227 = vadd.f32 %v944, %v1172
      %v1228 = vadd.f32 %v945, %v1175
      %v1229 = vadd.f32 %v946, %v1178
      %v1230 = vadd.f32 %v947, %v1181
      %v1231 = vadd.f32 %v948, %v1184
      %v1232 = vadd.f32 %v949, %v1187
      %v1233 = vadd.f32 %v950, %v1190
      %v1234 = vadd.f32 %v951, %v1193
      %v1235 = vadd.f32 %v952, %v1196
      %v1236 = vadd.f32 %v953, %v1199
      %v1237 = vadd.f32 %v954, %v1202
      %v1238 = vadd.f32 %v955, %v1205
      %v1239 = vld [vmem:[%s956 + $0x1] sm:$0xff]
      %v1240 = vld [vmem:[%s956 + $0x9] sm:$0xff]
      %v1241 = vld [vmem:[%s956 + $0x19] sm:$0xff]
      %v1242 = vld [vmem:[%s956 + $0x21] sm:$0xff]
      %v1243 = vld [vmem:[%s956 + $0x31] sm:$0xff]
      %v1244 = vld [vmem:[%s956 + $0x39] sm:$0xff]
      %v1245 = vld [vmem:[%s956 + $0x49] sm:$0xff]
      %v1246 = vld [vmem:[%s956 + $0x51] sm:$0xff]
      %v1247 = vld [vmem:[%s956 + $0x61] sm:$0xff]
      %v1248 = vld [vmem:[%s956 + $0x69] sm:$0xff]
      %v1249 = vld [vmem:[%s956 + $0x79] sm:$0xff]
      %v1250 = vld [vmem:[%s956 + $0x81] sm:$0xff]
      %v1251 = vld [vmem:[%s956 + $0x91] sm:$0xff]
      %v1252 = vld [vmem:[%s956 + $0x99] sm:$0xff]
      %v1253 = vld [vmem:[%s956 + $0xa9] sm:$0xff]
      %v1254 = vld [vmem:[%s956 + $0xb1] sm:$0xff]
      %v1255 = vld [vmem:[%s956 + $0xc1] sm:$0xff]
      %v1256 = vld [vmem:[%s956 + $0xc9] sm:$0xff]
      %v1257 = vld [vmem:[%s956 + $0xd9] sm:$0xff]
      %v1258 = vld [vmem:[%s956 + $0xe1] sm:$0xff]
      %v1259 = vld [vmem:[%s956 + $0xf1] sm:$0xff]
      %v1260 = vld [vmem:[%s956 + $0xf9] sm:$0xff]
      %v1261 = vld [vmem:[%s956 + $0x109] sm:$0xff]
      %v1262 = vld [vmem:[%s956 + $0x111] sm:$0xff]
      %v1263 = vld [vmem:[%s956 + $0x121] sm:$0xff]
      %v1264 = vld [vmem:[%s956 + $0x129] sm:$0xff]
      %v1265 = vld [vmem:[%s956 + $0x139] sm:$0xff]
      %v1266 = vld [vmem:[%s956 + $0x141] sm:$0xff]
      %v1267 = vld [vmem:[%s956 + $0x151] sm:$0xff]
      %v1268 = vld [vmem:[%s956 + $0x159] sm:$0xff]
      %v1269 = vld [vmem:[%s956 + $0x169] sm:$0xff]
      %v1270 = vld [vmem:[%s956 + $0x171] sm:$0xff]
      %s1271 = scalar_lea.vmem %s1, 160
      %v1272 = vld [vmem:[%s1271] sm:$0xff]
      %v1273 = vld [vmem:[%s1271 + $0x8] sm:$0xff]
      %v1274 = vld [vmem:[%s1271 + $0x10] sm:$0xff]
      %v1275 = vld [vmem:[%s1271 + $0x18] sm:$0xff]
      %v1276 = vld [vmem:[%s1271 + $0x20] sm:$0x1]
      %v1278 = vsel %vm248, %v1239, 0
      %v1281 = vsel %vm248, %v1240, 0
      %v1284 = vsel %vm248, %v1241, 0
      %v1287 = vsel %vm248, %v1242, 0
      %v1290 = vsel %vm248, %v1243, 0
      %v1293 = vsel %vm248, %v1244, 0
      %v1296 = vsel %vm248, %v1245, 0
      %v1299 = vsel %vm248, %v1246, 0
      %v1302 = vsel %vm248, %v1247, 0
      %v1305 = vsel %vm248, %v1248, 0
      %v1308 = vsel %vm248, %v1249, 0
      %v1311 = vsel %vm248, %v1250, 0
      %v1314 = vsel %vm248, %v1251, 0
      %v1317 = vsel %vm248, %v1252, 0
      %v1320 = vsel %vm248, %v1253, 0
      %v1323 = vsel %vm248, %v1254, 0
      %v1326 = vsel %vm248, %v1255, 0
      %v1329 = vsel %vm248, %v1256, 0
      %v1332 = vsel %vm248, %v1257, 0
      %v1335 = vsel %vm248, %v1258, 0
      %v1338 = vsel %vm248, %v1259, 0
      %v1341 = vsel %vm248, %v1260, 0
      %v1344 = vsel %vm248, %v1261, 0
      %v1347 = vsel %vm248, %v1262, 0
      %v1350 = vsel %vm248, %v1263, 0
      %v1353 = vsel %vm248, %v1264, 0
      %v1356 = vsel %vm248, %v1265, 0
      %v1359 = vsel %vm248, %v1266, 0
      %v1362 = vsel %vm248, %v1267, 0
      %v1365 = vsel %vm248, %v1268, 0
      %v1368 = vsel %vm248, %v1269, 0
      %v1371 = vsel %vm248, %v1270, 0
      %v1374 = vsel %vm345, %v1276, 0
      %1376 = vmatpush.msra.mxu0 0.0
      %1377 = vmatpush.msra.mxu0 0.0
      %1378 = vmatpush.msra.mxu0 0.0
      %1379 = vmatpush.msra.mxu0 0.0
      %1380 = vmatpush.msra.mxu0 0.0
      %1381 = vmatpush.msra.mxu0 0.0
      %1382 = vmatpush.msra.mxu0 0.0
      %1383 = vmatpush.msra.mxu0 0.0
      %1384 = vmatpush.msra.mxu0 0.0
      %1385 = vmatpush.msra.mxu0 0.0
      %1386 = vmatpush.msra.mxu0 0.0
      %1387 = vmatpush.msra.mxu0 %v1374
      %1388 = vmatpush.msra.mxu0 %v1275
      %1389 = vmatpush.msra.mxu0 %v1274
      %1390 = vmatpush.msra.mxu0 %v1273
      %1391 = vmatpush.msra.mxu0 %v1272
      %1392 = vmatmul.f32.gmra.mxu0 %v1278
      %v1393 = vpop.f32.mrf.mxu0
      %v1394 = vadd.f32 0.0, %v1393
      %1395 = vmatmul.f32.gmra.mxu0 %v1281
      %v1396 = vpop.f32.mrf.mxu0
      %v1397 = vadd.f32 0.0, %v1396
      %1398 = vmatmul.f32.gmra.mxu0 %v1284
      %v1399 = vpop.f32.mrf.mxu0
      %v1400 = vadd.f32 0.0, %v1399
      %1401 = vmatmul.f32.gmra.mxu0 %v1287
      %v1402 = vpop.f32.mrf.mxu0
      %v1403 = vadd.f32 0.0, %v1402
      %1404 = vmatmul.f32.gmra.mxu0 %v1290
      %v1405 = vpop.f32.mrf.mxu0
      %v1406 = vadd.f32 0.0, %v1405
      %1407 = vmatmul.f32.gmra.mxu0 %v1293
      %v1408 = vpop.f32.mrf.mxu0
      %v1409 = vadd.f32 0.0, %v1408
      %1410 = vmatmul.f32.gmra.mxu0 %v1296
      %v1411 = vpop.f32.mrf.mxu0
      %v1412 = vadd.f32 0.0, %v1411
      %1413 = vmatmul.f32.gmra.mxu0 %v1299
      %v1414 = vpop.f32.mrf.mxu0
      %v1415 = vadd.f32 0.0, %v1414
      %1416 = vmatmul.f32.gmra.mxu0 %v1302
      %v1417 = vpop.f32.mrf.mxu0
      %v1418 = vadd.f32 0.0, %v1417
      %1419 = vmatmul.f32.gmra.mxu0 %v1305
      %v1420 = vpop.f32.mrf.mxu0
      %v1421 = vadd.f32 0.0, %v1420
      %1422 = vmatmul.f32.gmra.mxu0 %v1308
      %v1423 = vpop.f32.mrf.mxu0
      %v1424 = vadd.f32 0.0, %v1423
      %1425 = vmatmul.f32.gmra.mxu0 %v1311
      %v1426 = vpop.f32.mrf.mxu0
      %v1427 = vadd.f32 0.0, %v1426
      %1428 = vmatmul.f32.gmra.mxu0 %v1314
      %v1429 = vpop.f32.mrf.mxu0
      %v1430 = vadd.f32 0.0, %v1429
      %1431 = vmatmul.f32.gmra.mxu0 %v1317
      %v1432 = vpop.f32.mrf.mxu0
      %v1433 = vadd.f32 0.0, %v1432
      %1434 = vmatmul.f32.gmra.mxu0 %v1320
      %v1435 = vpop.f32.mrf.mxu0
      %v1436 = vadd.f32 0.0, %v1435
      %1437 = vmatmul.f32.gmra.mxu0 %v1323
      %v1438 = vpop.f32.mrf.mxu0
      %v1439 = vadd.f32 0.0, %v1438
      %1440 = vmatmul.f32.gmra.mxu0 %v1326
      %v1441 = vpop.f32.mrf.mxu0
      %v1442 = vadd.f32 0.0, %v1441
      %1443 = vmatmul.f32.gmra.mxu0 %v1329
      %v1444 = vpop.f32.mrf.mxu0
      %v1445 = vadd.f32 0.0, %v1444
      %1446 = vmatmul.f32.gmra.mxu0 %v1332
      %v1447 = vpop.f32.mrf.mxu0
      %v1448 = vadd.f32 0.0, %v1447
      %1449 = vmatmul.f32.gmra.mxu0 %v1335
      %v1450 = vpop.f32.mrf.mxu0
      %v1451 = vadd.f32 0.0, %v1450
      %1452 = vmatmul.f32.gmra.mxu0 %v1338
      %v1453 = vpop.f32.mrf.mxu0
      %v1454 = vadd.f32 0.0, %v1453
      %1455 = vmatmul.f32.gmra.mxu0 %v1341
      %v1456 = vpop.f32.mrf.mxu0
      %v1457 = vadd.f32 0.0, %v1456
      %1458 = vmatmul.f32.gmra.mxu0 %v1344
      %v1459 = vpop.f32.mrf.mxu0
      %v1460 = vadd.f32 0.0, %v1459
      %1461 = vmatmul.f32.gmra.mxu0 %v1347
      %v1462 = vpop.f32.mrf.mxu0
      %v1463 = vadd.f32 0.0, %v1462
      %1464 = vmatmul.f32.gmra.mxu0 %v1350
      %v1465 = vpop.f32.mrf.mxu0
      %v1466 = vadd.f32 0.0, %v1465
      %1467 = vmatmul.f32.gmra.mxu0 %v1353
      %v1468 = vpop.f32.mrf.mxu0
      %v1469 = vadd.f32 0.0, %v1468
      %1470 = vmatmul.f32.gmra.mxu0 %v1356
      %v1471 = vpop.f32.mrf.mxu0
      %v1472 = vadd.f32 0.0, %v1471
      %1473 = vmatmul.f32.gmra.mxu0 %v1359
      %v1474 = vpop.f32.mrf.mxu0
      %v1475 = vadd.f32 0.0, %v1474
      %1476 = vmatmul.f32.gmra.mxu0 %v1362
      %v1477 = vpop.f32.mrf.mxu0
      %v1478 = vadd.f32 0.0, %v1477
      %1479 = vmatmul.f32.gmra.mxu0 %v1365
      %v1480 = vpop.f32.mrf.mxu0
      %v1481 = vadd.f32 0.0, %v1480
      %1482 = vmatmul.f32.gmra.mxu0 %v1368
      %v1483 = vpop.f32.mrf.mxu0
      %v1484 = vadd.f32 0.0, %v1483
      %1485 = vmatmul.f32.gmra.mxu0 %v1371
      %v1486 = vpop.f32.mrf.mxu0
      %v1487 = vadd.f32 0.0, %v1486
      %1488 = vdwg.mxu0
      %v1489 = vadd.f32 %v1207, %v1394
      %v1490 = vadd.f32 %v1208, %v1397
      %v1491 = vadd.f32 %v1209, %v1400
      %v1492 = vadd.f32 %v1210, %v1403
      %v1493 = vadd.f32 %v1211, %v1406
      %v1494 = vadd.f32 %v1212, %v1409
      %v1495 = vadd.f32 %v1213, %v1412
      %v1496 = vadd.f32 %v1214, %v1415
      %v1497 = vadd.f32 %v1215, %v1418
      %v1498 = vadd.f32 %v1216, %v1421
      %v1499 = vadd.f32 %v1217, %v1424
      %v1500 = vadd.f32 %v1218, %v1427
      %v1501 = vadd.f32 %v1219, %v1430
      %v1502 = vadd.f32 %v1220, %v1433
      %v1503 = vadd.f32 %v1221, %v1436
      %v1504 = vadd.f32 %v1222, %v1439
      %v1505 = vadd.f32 %v1223, %v1442
      %v1506 = vadd.f32 %v1224, %v1445
      %v1507 = vadd.f32 %v1225, %v1448
      %v1508 = vadd.f32 %v1226, %v1451
      %v1509 = vadd.f32 %v1227, %v1454
      %v1510 = vadd.f32 %v1228, %v1457
      %v1511 = vadd.f32 %v1229, %v1460
      %v1512 = vadd.f32 %v1230, %v1463
      %v1513 = vadd.f32 %v1231, %v1466
      %v1514 = vadd.f32 %v1232, %v1469
      %v1515 = vadd.f32 %v1233, %v1472
      %v1516 = vadd.f32 %v1234, %v1475
      %v1517 = vadd.f32 %v1235, %v1478
      %v1518 = vadd.f32 %v1236, %v1481
      %v1519 = vadd.f32 %v1237, %v1484
      %v1520 = vadd.f32 %v1238, %v1487
      %v1521 = vld [vmem:[%s956 + $0x2] sm:$0xff]
      %v1522 = vld [vmem:[%s956 + $0xa] sm:$0xff]
      %v1523 = vld [vmem:[%s956 + $0x1a] sm:$0xff]
      %v1524 = vld [vmem:[%s956 + $0x22] sm:$0xff]
      %v1525 = vld [vmem:[%s956 + $0x32] sm:$0xff]
      %v1526 = vld [vmem:[%s956 + $0x3a] sm:$0xff]
      %v1527 = vld [vmem:[%s956 + $0x4a] sm:$0xff]
      %v1528 = vld [vmem:[%s956 + $0x52] sm:$0xff]
      %v1529 = vld [vmem:[%s956 + $0x62] sm:$0xff]
      %v1530 = vld [vmem:[%s956 + $0x6a] sm:$0xff]
      %v1531 = vld [vmem:[%s956 + $0x7a] sm:$0xff]
      %v1532 = vld [vmem:[%s956 + $0x82] sm:$0xff]
      %v1533 = vld [vmem:[%s956 + $0x92] sm:$0xff]
      %v1534 = vld [vmem:[%s956 + $0x9a] sm:$0xff]
      %v1535 = vld [vmem:[%s956 + $0xaa] sm:$0xff]
      %v1536 = vld [vmem:[%s956 + $0xb2] sm:$0xff]
      %v1537 = vld [vmem:[%s956 + $0xc2] sm:$0xff]
      %v1538 = vld [vmem:[%s956 + $0xca] sm:$0xff]
      %v1539 = vld [vmem:[%s956 + $0xda] sm:$0xff]
      %v1540 = vld [vmem:[%s956 + $0xe2] sm:$0xff]
      %v1541 = vld [vmem:[%s956 + $0xf2] sm:$0xff]
      %v1542 = vld [vmem:[%s956 + $0xfa] sm:$0xff]
      %v1543 = vld [vmem:[%s956 + $0x10a] sm:$0xff]
      %v1544 = vld [vmem:[%s956 + $0x112] sm:$0xff]
      %v1545 = vld [vmem:[%s956 + $0x122] sm:$0xff]
      %v1546 = vld [vmem:[%s956 + $0x12a] sm:$0xff]
      %v1547 = vld [vmem:[%s956 + $0x13a] sm:$0xff]
      %v1548 = vld [vmem:[%s956 + $0x142] sm:$0xff]
      %v1549 = vld [vmem:[%s956 + $0x152] sm:$0xff]
      %v1550 = vld [vmem:[%s956 + $0x15a] sm:$0xff]
      %v1551 = vld [vmem:[%s956 + $0x16a] sm:$0xff]
      %v1552 = vld [vmem:[%s956 + $0x172] sm:$0xff]
      %s1553 = scalar_lea.vmem %s1, 200
      %v1554 = vld [vmem:[%s1553] sm:$0xff]
      %v1555 = vld [vmem:[%s1553 + $0x8] sm:$0xff]
      %v1556 = vld [vmem:[%s1553 + $0x10] sm:$0xff]
      %v1557 = vld [vmem:[%s1553 + $0x18] sm:$0xff]
      %v1558 = vld [vmem:[%s1553 + $0x20] sm:$0x1]
      %v1560 = vsel %vm248, %v1521, 0
      %v1563 = vsel %vm248, %v1522, 0
      %v1566 = vsel %vm248, %v1523, 0
      %v1569 = vsel %vm248, %v1524, 0
      %v1572 = vsel %vm248, %v1525, 0
      %v1575 = vsel %vm248, %v1526, 0
      %v1578 = vsel %vm248, %v1527, 0
      %v1581 = vsel %vm248, %v1528, 0
      %v1584 = vsel %vm248, %v1529, 0
      %v1587 = vsel %vm248, %v1530, 0
      %v1590 = vsel %vm248, %v1531, 0
      %v1593 = vsel %vm248, %v1532, 0
      %v1596 = vsel %vm248, %v1533, 0
      %v1599 = vsel %vm248, %v1534, 0
      %v1602 = vsel %vm248, %v1535, 0
      %v1605 = vsel %vm248, %v1536, 0
      %v1608 = vsel %vm248, %v1537, 0
      %v1611 = vsel %vm248, %v1538, 0
      %v1614 = vsel %vm248, %v1539, 0
      %v1617 = vsel %vm248, %v1540, 0
      %v1620 = vsel %vm248, %v1541, 0
      %v1623 = vsel %vm248, %v1542, 0
      %v1626 = vsel %vm248, %v1543, 0
      %v1629 = vsel %vm248, %v1544, 0
      %v1632 = vsel %vm248, %v1545, 0
      %v1635 = vsel %vm248, %v1546, 0
      %v1638 = vsel %vm248, %v1547, 0
      %v1641 = vsel %vm248, %v1548, 0
      %v1644 = vsel %vm248, %v1549, 0
      %v1647 = vsel %vm248, %v1550, 0
      %v1650 = vsel %vm248, %v1551, 0
      %v1653 = vsel %vm248, %v1552, 0
      %v1656 = vsel %vm345, %v1558, 0
      %1658 = vmatpush.msra.mxu0 0.0
      %1659 = vmatpush.msra.mxu0 0.0
      %1660 = vmatpush.msra.mxu0 0.0
      %1661 = vmatpush.msra.mxu0 0.0
      %1662 = vmatpush.msra.mxu0 0.0
      %1663 = vmatpush.msra.mxu0 0.0
      %1664 = vmatpush.msra.mxu0 0.0
      %1665 = vmatpush.msra.mxu0 0.0
      %1666 = vmatpush.msra.mxu0 0.0
      %1667 = vmatpush.msra.mxu0 0.0
      %1668 = vmatpush.msra.mxu0 0.0
      %1669 = vmatpush.msra.mxu0 %v1656
      %1670 = vmatpush.msra.mxu0 %v1557
      %1671 = vmatpush.msra.mxu0 %v1556
      %1672 = vmatpush.msra.mxu0 %v1555
      %1673 = vmatpush.msra.mxu0 %v1554
      %1674 = vmatmul.f32.gmra.mxu0 %v1560
      %v1675 = vpop.f32.mrf.mxu0
      %v1676 = vadd.f32 0.0, %v1675
      %1677 = vmatmul.f32.gmra.mxu0 %v1563
      %v1678 = vpop.f32.mrf.mxu0
      %v1679 = vadd.f32 0.0, %v1678
      %1680 = vmatmul.f32.gmra.mxu0 %v1566
      %v1681 = vpop.f32.mrf.mxu0
      %v1682 = vadd.f32 0.0, %v1681
      %1683 = vmatmul.f32.gmra.mxu0 %v1569
      %v1684 = vpop.f32.mrf.mxu0
      %v1685 = vadd.f32 0.0, %v1684
      %1686 = vmatmul.f32.gmra.mxu0 %v1572
      %v1687 = vpop.f32.mrf.mxu0
      %v1688 = vadd.f32 0.0, %v1687
      %1689 = vmatmul.f32.gmra.mxu0 %v1575
      %v1690 = vpop.f32.mrf.mxu0
      %v1691 = vadd.f32 0.0, %v1690
      %1692 = vmatmul.f32.gmra.mxu0 %v1578
      %v1693 = vpop.f32.mrf.mxu0
      %v1694 = vadd.f32 0.0, %v1693
      %1695 = vmatmul.f32.gmra.mxu0 %v1581
      %v1696 = vpop.f32.mrf.mxu0
      %v1697 = vadd.f32 0.0, %v1696
      %1698 = vmatmul.f32.gmra.mxu0 %v1584
      %v1699 = vpop.f32.mrf.mxu0
      %v1700 = vadd.f32 0.0, %v1699
      %1701 = vmatmul.f32.gmra.mxu0 %v1587
      %v1702 = vpop.f32.mrf.mxu0
      %v1703 = vadd.f32 0.0, %v1702
      %1704 = vmatmul.f32.gmra.mxu0 %v1590
      %v1705 = vpop.f32.mrf.mxu0
      %v1706 = vadd.f32 0.0, %v1705
      %1707 = vmatmul.f32.gmra.mxu0 %v1593
      %v1708 = vpop.f32.mrf.mxu0
      %v1709 = vadd.f32 0.0, %v1708
      %1710 = vmatmul.f32.gmra.mxu0 %v1596
      %v1711 = vpop.f32.mrf.mxu0
      %v1712 = vadd.f32 0.0, %v1711
      %1713 = vmatmul.f32.gmra.mxu0 %v1599
      %v1714 = vpop.f32.mrf.mxu0
      %v1715 = vadd.f32 0.0, %v1714
      %1716 = vmatmul.f32.gmra.mxu0 %v1602
      %v1717 = vpop.f32.mrf.mxu0
      %v1718 = vadd.f32 0.0, %v1717
      %1719 = vmatmul.f32.gmra.mxu0 %v1605
      %v1720 = vpop.f32.mrf.mxu0
      %v1721 = vadd.f32 0.0, %v1720
      %1722 = vmatmul.f32.gmra.mxu0 %v1608
      %v1723 = vpop.f32.mrf.mxu0
      %v1724 = vadd.f32 0.0, %v1723
      %1725 = vmatmul.f32.gmra.mxu0 %v1611
      %v1726 = vpop.f32.mrf.mxu0
      %v1727 = vadd.f32 0.0, %v1726
      %1728 = vmatmul.f32.gmra.mxu0 %v1614
      %v1729 = vpop.f32.mrf.mxu0
      %v1730 = vadd.f32 0.0, %v1729
      %1731 = vmatmul.f32.gmra.mxu0 %v1617
      %v1732 = vpop.f32.mrf.mxu0
      %v1733 = vadd.f32 0.0, %v1732
      %1734 = vmatmul.f32.gmra.mxu0 %v1620
      %v1735 = vpop.f32.mrf.mxu0
      %v1736 = vadd.f32 0.0, %v1735
      %1737 = vmatmul.f32.gmra.mxu0 %v1623
      %v1738 = vpop.f32.mrf.mxu0
      %v1739 = vadd.f32 0.0, %v1738
      %1740 = vmatmul.f32.gmra.mxu0 %v1626
      %v1741 = vpop.f32.mrf.mxu0
      %v1742 = vadd.f32 0.0, %v1741
      %1743 = vmatmul.f32.gmra.mxu0 %v1629
      %v1744 = vpop.f32.mrf.mxu0
      %v1745 = vadd.f32 0.0, %v1744
      %1746 = vmatmul.f32.gmra.mxu0 %v1632
      %v1747 = vpop.f32.mrf.mxu0
      %v1748 = vadd.f32 0.0, %v1747
      %1749 = vmatmul.f32.gmra.mxu0 %v1635
      %v1750 = vpop.f32.mrf.mxu0
      %v1751 = vadd.f32 0.0, %v1750
      %1752 = vmatmul.f32.gmra.mxu0 %v1638
      %v1753 = vpop.f32.mrf.mxu0
      %v1754 = vadd.f32 0.0, %v1753
      %1755 = vmatmul.f32.gmra.mxu0 %v1641
      %v1756 = vpop.f32.mrf.mxu0
      %v1757 = vadd.f32 0.0, %v1756
      %1758 = vmatmul.f32.gmra.mxu0 %v1644
      %v1759 = vpop.f32.mrf.mxu0
      %v1760 = vadd.f32 0.0, %v1759
      %1761 = vmatmul.f32.gmra.mxu0 %v1647
      %v1762 = vpop.f32.mrf.mxu0
      %v1763 = vadd.f32 0.0, %v1762
      %1764 = vmatmul.f32.gmra.mxu0 %v1650
      %v1765 = vpop.f32.mrf.mxu0
      %v1766 = vadd.f32 0.0, %v1765
      %1767 = vmatmul.f32.gmra.mxu0 %v1653
      %v1768 = vpop.f32.mrf.mxu0
      %v1769 = vadd.f32 0.0, %v1768
      %1770 = vdwg.mxu0
      %v1771 = vadd.f32 %v1489, %v1676
      %v1772 = vadd.f32 %v1490, %v1679
      %v1773 = vadd.f32 %v1491, %v1682
      %v1774 = vadd.f32 %v1492, %v1685
      %v1775 = vadd.f32 %v1493, %v1688
      %v1776 = vadd.f32 %v1494, %v1691
      %v1777 = vadd.f32 %v1495, %v1694
      %v1778 = vadd.f32 %v1496, %v1697
      %v1779 = vadd.f32 %v1497, %v1700
      %v1780 = vadd.f32 %v1498, %v1703
      %v1781 = vadd.f32 %v1499, %v1706
      %v1782 = vadd.f32 %v1500, %v1709
      %v1783 = vadd.f32 %v1501, %v1712
      %v1784 = vadd.f32 %v1502, %v1715
      %v1785 = vadd.f32 %v1503, %v1718
      %v1786 = vadd.f32 %v1504, %v1721
      %v1787 = vadd.f32 %v1505, %v1724
      %v1788 = vadd.f32 %v1506, %v1727
      %v1789 = vadd.f32 %v1507, %v1730
      %v1790 = vadd.f32 %v1508, %v1733
      %v1791 = vadd.f32 %v1509, %v1736
      %v1792 = vadd.f32 %v1510, %v1739
      %v1793 = vadd.f32 %v1511, %v1742
      %v1794 = vadd.f32 %v1512, %v1745
      %v1795 = vadd.f32 %v1513, %v1748
      %v1796 = vadd.f32 %v1514, %v1751
      %v1797 = vadd.f32 %v1515, %v1754
      %v1798 = vadd.f32 %v1516, %v1757
      %v1799 = vadd.f32 %v1517, %v1760
      %v1800 = vadd.f32 %v1518, %v1763
      %v1801 = vadd.f32 %v1519, %v1766
      %v1802 = vadd.f32 %v1520, %v1769
      %s1803 = scalar_lea.vmem %s167, 48
      %v1804 = vld [vmem:[%s1803] sm:$0xff]
      %v1805 = vld [vmem:[%s1803 + $0x8] sm:$0xff]
      %v1806 = vld [vmem:[%s1803 + $0x18] sm:$0xff]
      %v1807 = vld [vmem:[%s1803 + $0x20] sm:$0xff]
      %v1808 = vld [vmem:[%s1803 + $0x30] sm:$0xff]
      %v1809 = vld [vmem:[%s1803 + $0x38] sm:$0xff]
      %v1810 = vld [vmem:[%s1803 + $0x48] sm:$0xff]
      %v1811 = vld [vmem:[%s1803 + $0x50] sm:$0xff]
      %v1812 = vld [vmem:[%s1803 + $0x60] sm:$0xff]
      %v1813 = vld [vmem:[%s1803 + $0x68] sm:$0xff]
      %v1814 = vld [vmem:[%s1803 + $0x78] sm:$0xff]
      %v1815 = vld [vmem:[%s1803 + $0x80] sm:$0xff]
      %v1816 = vld [vmem:[%s1803 + $0x90] sm:$0xff]
      %v1817 = vld [vmem:[%s1803 + $0x98] sm:$0xff]
      %v1818 = vld [vmem:[%s1803 + $0xa8] sm:$0xff]
      %v1819 = vld [vmem:[%s1803 + $0xb0] sm:$0xff]
      %v1820 = vld [vmem:[%s1803 + $0xc0] sm:$0xff]
      %v1821 = vld [vmem:[%s1803 + $0xc8] sm:$0xff]
      %v1822 = vld [vmem:[%s1803 + $0xd8] sm:$0xff]
      %v1823 = vld [vmem:[%s1803 + $0xe0] sm:$0xff]
      %v1824 = vld [vmem:[%s1803 + $0xf0] sm:$0xff]
      %v1825 = vld [vmem:[%s1803 + $0xf8] sm:$0xff]
      %v1826 = vld [vmem:[%s1803 + $0x108] sm:$0xff]
      %v1827 = vld [vmem:[%s1803 + $0x110] sm:$0xff]
      %v1828 = vld [vmem:[%s1803 + $0x120] sm:$0xff]
      %v1829 = vld [vmem:[%s1803 + $0x128] sm:$0xff]
      %v1830 = vld [vmem:[%s1803 + $0x138] sm:$0xff]
      %v1831 = vld [vmem:[%s1803 + $0x140] sm:$0xff]
      %v1832 = vld [vmem:[%s1803 + $0x150] sm:$0xff]
      %v1833 = vld [vmem:[%s1803 + $0x158] sm:$0xff]
      %v1834 = vld [vmem:[%s1803 + $0x168] sm:$0xff]
      %v1835 = vld [vmem:[%s1803 + $0x170] sm:$0xff]
      %s1836 = scalar_lea.vmem %s1, 240
      %v1837 = vld [vmem:[%s1836] sm:$0xff]
      %v1838 = vld [vmem:[%s1836 + $0x8] sm:$0xff]
      %v1839 = vld [vmem:[%s1836 + $0x10] sm:$0xff]
      %v1840 = vld [vmem:[%s1836 + $0x18] sm:$0xff]
      %v1841 = vld [vmem:[%s1836 + $0x20] sm:$0x1]
      %v1843 = vsel %vm248, %v1804, 0
      %v1846 = vsel %vm248, %v1805, 0
      %v1849 = vsel %vm248, %v1806, 0
      %v1852 = vsel %vm248, %v1807, 0
      %v1855 = vsel %vm248, %v1808, 0
      %v1858 = vsel %vm248, %v1809, 0
      %v1861 = vsel %vm248, %v1810, 0
      %v1864 = vsel %vm248, %v1811, 0
      %v1867 = vsel %vm248, %v1812, 0
      %v1870 = vsel %vm248, %v1813, 0
      %v1873 = vsel %vm248, %v1814, 0
      %v1876 = vsel %vm248, %v1815, 0
      %v1879 = vsel %vm248, %v1816, 0
      %v1882 = vsel %vm248, %v1817, 0
      %v1885 = vsel %vm248, %v1818, 0
      %v1888 = vsel %vm248, %v1819, 0
      %v1891 = vsel %vm248, %v1820, 0
      %v1894 = vsel %vm248, %v1821, 0
      %v1897 = vsel %vm248, %v1822, 0
      %v1900 = vsel %vm248, %v1823, 0
      %v1903 = vsel %vm248, %v1824, 0
      %v1906 = vsel %vm248, %v1825, 0
      %v1909 = vsel %vm248, %v1826, 0
      %v1912 = vsel %vm248, %v1827, 0
      %v1915 = vsel %vm248, %v1828, 0
      %v1918 = vsel %vm248, %v1829, 0
      %v1921 = vsel %vm248, %v1830, 0
      %v1924 = vsel %vm248, %v1831, 0
      %v1927 = vsel %vm248, %v1832, 0
      %v1930 = vsel %vm248, %v1833, 0
      %v1933 = vsel %vm248, %v1834, 0
      %v1936 = vsel %vm248, %v1835, 0
      %v1939 = vsel %vm345, %v1841, 0
      %1941 = vmatpush.msra.mxu0 0.0
      %1942 = vmatpush.msra.mxu0 0.0
      %1943 = vmatpush.msra.mxu0 0.0
      %1944 = vmatpush.msra.mxu0 0.0
      %1945 = vmatpush.msra.mxu0 0.0
      %1946 = vmatpush.msra.mxu0 0.0
      %1947 = vmatpush.msra.mxu0 0.0
      %1948 = vmatpush.msra.mxu0 0.0
      %1949 = vmatpush.msra.mxu0 0.0
      %1950 = vmatpush.msra.mxu0 0.0
      %1951 = vmatpush.msra.mxu0 0.0
      %1952 = vmatpush.msra.mxu0 %v1939
      %1953 = vmatpush.msra.mxu0 %v1840
      %1954 = vmatpush.msra.mxu0 %v1839
      %1955 = vmatpush.msra.mxu0 %v1838
      %1956 = vmatpush.msra.mxu0 %v1837
      %1957 = vmatmul.f32.gmra.mxu0 %v1843
      %v1958 = vpop.f32.mrf.mxu0
      %v1959 = vadd.f32 0.0, %v1958
      %1960 = vmatmul.f32.gmra.mxu0 %v1846
      %v1961 = vpop.f32.mrf.mxu0
      %v1962 = vadd.f32 0.0, %v1961
      %1963 = vmatmul.f32.gmra.mxu0 %v1849
      %v1964 = vpop.f32.mrf.mxu0
      %v1965 = vadd.f32 0.0, %v1964
      %1966 = vmatmul.f32.gmra.mxu0 %v1852
      %v1967 = vpop.f32.mrf.mxu0
      %v1968 = vadd.f32 0.0, %v1967
      %1969 = vmatmul.f32.gmra.mxu0 %v1855
      %v1970 = vpop.f32.mrf.mxu0
      %v1971 = vadd.f32 0.0, %v1970
      %1972 = vmatmul.f32.gmra.mxu0 %v1858
      %v1973 = vpop.f32.mrf.mxu0
      %v1974 = vadd.f32 0.0, %v1973
      %1975 = vmatmul.f32.gmra.mxu0 %v1861
      %v1976 = vpop.f32.mrf.mxu0
      %v1977 = vadd.f32 0.0, %v1976
      %1978 = vmatmul.f32.gmra.mxu0 %v1864
      %v1979 = vpop.f32.mrf.mxu0
      %v1980 = vadd.f32 0.0, %v1979
      %1981 = vmatmul.f32.gmra.mxu0 %v1867
      %v1982 = vpop.f32.mrf.mxu0
      %v1983 = vadd.f32 0.0, %v1982
      %1984 = vmatmul.f32.gmra.mxu0 %v1870
      %v1985 = vpop.f32.mrf.mxu0
      %v1986 = vadd.f32 0.0, %v1985
      %1987 = vmatmul.f32.gmra.mxu0 %v1873
      %v1988 = vpop.f32.mrf.mxu0
      %v1989 = vadd.f32 0.0, %v1988
      %1990 = vmatmul.f32.gmra.mxu0 %v1876
      %v1991 = vpop.f32.mrf.mxu0
      %v1992 = vadd.f32 0.0, %v1991
      %1993 = vmatmul.f32.gmra.mxu0 %v1879
      %v1994 = vpop.f32.mrf.mxu0
      %v1995 = vadd.f32 0.0, %v1994
      %1996 = vmatmul.f32.gmra.mxu0 %v1882
      %v1997 = vpop.f32.mrf.mxu0
      %v1998 = vadd.f32 0.0, %v1997
      %1999 = vmatmul.f32.gmra.mxu0 %v1885
      %v2000 = vpop.f32.mrf.mxu0
      %v2001 = vadd.f32 0.0, %v2000
      %2002 = vmatmul.f32.gmra.mxu0 %v1888
      %v2003 = vpop.f32.mrf.mxu0
      %v2004 = vadd.f32 0.0, %v2003
      %2005 = vmatmul.f32.gmra.mxu0 %v1891
      %v2006 = vpop.f32.mrf.mxu0
      %v2007 = vadd.f32 0.0, %v2006
      %2008 = vmatmul.f32.gmra.mxu0 %v1894
      %v2009 = vpop.f32.mrf.mxu0
      %v2010 = vadd.f32 0.0, %v2009
      %2011 = vmatmul.f32.gmra.mxu0 %v1897
      %v2012 = vpop.f32.mrf.mxu0
      %v2013 = vadd.f32 0.0, %v2012
      %2014 = vmatmul.f32.gmra.mxu0 %v1900
      %v2015 = vpop.f32.mrf.mxu0
      %v2016 = vadd.f32 0.0, %v2015
      %2017 = vmatmul.f32.gmra.mxu0 %v1903
      %v2018 = vpop.f32.mrf.mxu0
      %v2019 = vadd.f32 0.0, %v2018
      %2020 = vmatmul.f32.gmra.mxu0 %v1906
      %v2021 = vpop.f32.mrf.mxu0
      %v2022 = vadd.f32 0.0, %v2021
      %2023 = vmatmul.f32.gmra.mxu0 %v1909
      %v2024 = vpop.f32.mrf.mxu0
      %v2025 = vadd.f32 0.0, %v2024
      %2026 = vmatmul.f32.gmra.mxu0 %v1912
      %v2027 = vpop.f32.mrf.mxu0
      %v2028 = vadd.f32 0.0, %v2027
      %2029 = vmatmul.f32.gmra.mxu0 %v1915
      %v2030 = vpop.f32.mrf.mxu0
      %v2031 = vadd.f32 0.0, %v2030
      %2032 = vmatmul.f32.gmra.mxu0 %v1918
      %v2033 = vpop.f32.mrf.mxu0
      %v2034 = vadd.f32 0.0, %v2033
      %2035 = vmatmul.f32.gmra.mxu0 %v1921
      %v2036 = vpop.f32.mrf.mxu0
      %v2037 = vadd.f32 0.0, %v2036
      %2038 = vmatmul.f32.gmra.mxu0 %v1924
      %v2039 = vpop.f32.mrf.mxu0
      %v2040 = vadd.f32 0.0, %v2039
      %2041 = vmatmul.f32.gmra.mxu0 %v1927
      %v2042 = vpop.f32.mrf.mxu0
      %v2043 = vadd.f32 0.0, %v2042
      %2044 = vmatmul.f32.gmra.mxu0 %v1930
      %v2045 = vpop.f32.mrf.mxu0
      %v2046 = vadd.f32 0.0, %v2045
      %2047 = vmatmul.f32.gmra.mxu0 %v1933
      %v2048 = vpop.f32.mrf.mxu0
      %v2049 = vadd.f32 0.0, %v2048
      %2050 = vmatmul.f32.gmra.mxu0 %v1936
      %v2051 = vpop.f32.mrf.mxu0
      %v2052 = vadd.f32 0.0, %v2051
      %2053 = vdwg.mxu0
      %v2054 = vadd.f32 %v1771, %v1959
      %v2055 = vadd.f32 %v1772, %v1962
      %v2056 = vadd.f32 %v1773, %v1965
      %v2057 = vadd.f32 %v1774, %v1968
      %v2058 = vadd.f32 %v1775, %v1971
      %v2059 = vadd.f32 %v1776, %v1974
      %v2060 = vadd.f32 %v1777, %v1977
      %v2061 = vadd.f32 %v1778, %v1980
      %v2062 = vadd.f32 %v1779, %v1983
      %v2063 = vadd.f32 %v1780, %v1986
      %v2064 = vadd.f32 %v1781, %v1989
      %v2065 = vadd.f32 %v1782, %v1992
      %v2066 = vadd.f32 %v1783, %v1995
      %v2067 = vadd.f32 %v1784, %v1998
      %v2068 = vadd.f32 %v1785, %v2001
      %v2069 = vadd.f32 %v1786, %v2004
      %v2070 = vadd.f32 %v1787, %v2007
      %v2071 = vadd.f32 %v1788, %v2010
      %v2072 = vadd.f32 %v1789, %v2013
      %v2073 = vadd.f32 %v1790, %v2016
      %v2074 = vadd.f32 %v1791, %v2019
      %v2075 = vadd.f32 %v1792, %v2022
      %v2076 = vadd.f32 %v1793, %v2025
      %v2077 = vadd.f32 %v1794, %v2028
      %v2078 = vadd.f32 %v1795, %v2031
      %v2079 = vadd.f32 %v1796, %v2034
      %v2080 = vadd.f32 %v1797, %v2037
      %v2081 = vadd.f32 %v1798, %v2040
      %v2082 = vadd.f32 %v1799, %v2043
      %v2083 = vadd.f32 %v1800, %v2046
      %v2084 = vadd.f32 %v1801, %v2049
      %v2085 = vadd.f32 %v1802, %v2052
      %v2086 = vld [vmem:[%s1803 + $0x1] sm:$0xff]
      %v2087 = vld [vmem:[%s1803 + $0x9] sm:$0xff]
      %v2088 = vld [vmem:[%s1803 + $0x19] sm:$0xff]
      %v2089 = vld [vmem:[%s1803 + $0x21] sm:$0xff]
      %v2090 = vld [vmem:[%s1803 + $0x31] sm:$0xff]
      %v2091 = vld [vmem:[%s1803 + $0x39] sm:$0xff]
      %v2092 = vld [vmem:[%s1803 + $0x49] sm:$0xff]
      %v2093 = vld [vmem:[%s1803 + $0x51] sm:$0xff]
      %v2094 = vld [vmem:[%s1803 + $0x61] sm:$0xff]
      %v2095 = vld [vmem:[%s1803 + $0x69] sm:$0xff]
      %v2096 = vld [vmem:[%s1803 + $0x79] sm:$0xff]
      %v2097 = vld [vmem:[%s1803 + $0x81] sm:$0xff]
      %v2098 = vld [vmem:[%s1803 + $0x91] sm:$0xff]
      %v2099 = vld [vmem:[%s1803 + $0x99] sm:$0xff]
      %v2100 = vld [vmem:[%s1803 + $0xa9] sm:$0xff]
      %v2101 = vld [vmem:[%s1803 + $0xb1] sm:$0xff]
      %v2102 = vld [vmem:[%s1803 + $0xc1] sm:$0xff]
      %v2103 = vld [vmem:[%s1803 + $0xc9] sm:$0xff]
      %v2104 = vld [vmem:[%s1803 + $0xd9] sm:$0xff]
      %v2105 = vld [vmem:[%s1803 + $0xe1] sm:$0xff]
      %v2106 = vld [vmem:[%s1803 + $0xf1] sm:$0xff]
      %v2107 = vld [vmem:[%s1803 + $0xf9] sm:$0xff]
      %v2108 = vld [vmem:[%s1803 + $0x109] sm:$0xff]
      %v2109 = vld [vmem:[%s1803 + $0x111] sm:$0xff]
      %v2110 = vld [vmem:[%s1803 + $0x121] sm:$0xff]
      %v2111 = vld [vmem:[%s1803 + $0x129] sm:$0xff]
      %v2112 = vld [vmem:[%s1803 + $0x139] sm:$0xff]
      %v2113 = vld [vmem:[%s1803 + $0x141] sm:$0xff]
      %v2114 = vld [vmem:[%s1803 + $0x151] sm:$0xff]
      %v2115 = vld [vmem:[%s1803 + $0x159] sm:$0xff]
      %v2116 = vld [vmem:[%s1803 + $0x169] sm:$0xff]
      %v2117 = vld [vmem:[%s1803 + $0x171] sm:$0xff]
      %s2118 = scalar_lea.vmem %s1, 280
      %v2119 = vld [vmem:[%s2118] sm:$0xff]
      %v2120 = vld [vmem:[%s2118 + $0x8] sm:$0xff]
      %v2121 = vld [vmem:[%s2118 + $0x10] sm:$0xff]
      %v2122 = vld [vmem:[%s2118 + $0x18] sm:$0xff]
      %v2123 = vld [vmem:[%s2118 + $0x20] sm:$0x1]
      %v2125 = vsel %vm248, %v2086, 0
      %v2128 = vsel %vm248, %v2087, 0
      %v2131 = vsel %vm248, %v2088, 0
      %v2134 = vsel %vm248, %v2089, 0
      %v2137 = vsel %vm248, %v2090, 0
      %v2140 = vsel %vm248, %v2091, 0
      %v2143 = vsel %vm248, %v2092, 0
      %v2146 = vsel %vm248, %v2093, 0
      %v2149 = vsel %vm248, %v2094, 0
      %v2152 = vsel %vm248, %v2095, 0
      %v2155 = vsel %vm248, %v2096, 0
      %v2158 = vsel %vm248, %v2097, 0
      %v2161 = vsel %vm248, %v2098, 0
      %v2164 = vsel %vm248, %v2099, 0
      %v2167 = vsel %vm248, %v2100, 0
      %v2170 = vsel %vm248, %v2101, 0
      %v2173 = vsel %vm248, %v2102, 0
      %v2176 = vsel %vm248, %v2103, 0
      %v2179 = vsel %vm248, %v2104, 0
      %v2182 = vsel %vm248, %v2105, 0
      %v2185 = vsel %vm248, %v2106, 0
      %v2188 = vsel %vm248, %v2107, 0
      %v2191 = vsel %vm248, %v2108, 0
      %v2194 = vsel %vm248, %v2109, 0
      %v2197 = vsel %vm248, %v2110, 0
      %v2200 = vsel %vm248, %v2111, 0
      %v2203 = vsel %vm248, %v2112, 0
      %v2206 = vsel %vm248, %v2113, 0
      %v2209 = vsel %vm248, %v2114, 0
      %v2212 = vsel %vm248, %v2115, 0
      %v2215 = vsel %vm248, %v2116, 0
      %v2218 = vsel %vm248, %v2117, 0
      %v2221 = vsel %vm345, %v2123, 0
      %2223 = vmatpush.msra.mxu0 0.0
      %2224 = vmatpush.msra.mxu0 0.0
      %2225 = vmatpush.msra.mxu0 0.0
      %2226 = vmatpush.msra.mxu0 0.0
      %2227 = vmatpush.msra.mxu0 0.0
      %2228 = vmatpush.msra.mxu0 0.0
      %2229 = vmatpush.msra.mxu0 0.0
      %2230 = vmatpush.msra.mxu0 0.0
      %2231 = vmatpush.msra.mxu0 0.0
      %2232 = vmatpush.msra.mxu0 0.0
      %2233 = vmatpush.msra.mxu0 0.0
      %2234 = vmatpush.msra.mxu0 %v2221
      %2235 = vmatpush.msra.mxu0 %v2122
      %2236 = vmatpush.msra.mxu0 %v2121
      %2237 = vmatpush.msra.mxu0 %v2120
      %2238 = vmatpush.msra.mxu0 %v2119
      %2239 = vmatmul.f32.gmra.mxu0 %v2125
      %v2240 = vpop.f32.mrf.mxu0
      %v2241 = vadd.f32 0.0, %v2240
      %2242 = vmatmul.f32.gmra.mxu0 %v2128
      %v2243 = vpop.f32.mrf.mxu0
      %v2244 = vadd.f32 0.0, %v2243
      %2245 = vmatmul.f32.gmra.mxu0 %v2131
      %v2246 = vpop.f32.mrf.mxu0
      %v2247 = vadd.f32 0.0, %v2246
      %2248 = vmatmul.f32.gmra.mxu0 %v2134
      %v2249 = vpop.f32.mrf.mxu0
      %v2250 = vadd.f32 0.0, %v2249
      %2251 = vmatmul.f32.gmra.mxu0 %v2137
      %v2252 = vpop.f32.mrf.mxu0
      %v2253 = vadd.f32 0.0, %v2252
      %2254 = vmatmul.f32.gmra.mxu0 %v2140
      %v2255 = vpop.f32.mrf.mxu0
      %v2256 = vadd.f32 0.0, %v2255
      %2257 = vmatmul.f32.gmra.mxu0 %v2143
      %v2258 = vpop.f32.mrf.mxu0
      %v2259 = vadd.f32 0.0, %v2258
      %2260 = vmatmul.f32.gmra.mxu0 %v2146
      %v2261 = vpop.f32.mrf.mxu0
      %v2262 = vadd.f32 0.0, %v2261
      %2263 = vmatmul.f32.gmra.mxu0 %v2149
      %v2264 = vpop.f32.mrf.mxu0
      %v2265 = vadd.f32 0.0, %v2264
      %2266 = vmatmul.f32.gmra.mxu0 %v2152
      %v2267 = vpop.f32.mrf.mxu0
      %v2268 = vadd.f32 0.0, %v2267
      %2269 = vmatmul.f32.gmra.mxu0 %v2155
      %v2270 = vpop.f32.mrf.mxu0
      %v2271 = vadd.f32 0.0, %v2270
      %2272 = vmatmul.f32.gmra.mxu0 %v2158
      %v2273 = vpop.f32.mrf.mxu0
      %v2274 = vadd.f32 0.0, %v2273
      %2275 = vmatmul.f32.gmra.mxu0 %v2161
      %v2276 = vpop.f32.mrf.mxu0
      %v2277 = vadd.f32 0.0, %v2276
      %2278 = vmatmul.f32.gmra.mxu0 %v2164
      %v2279 = vpop.f32.mrf.mxu0
      %v2280 = vadd.f32 0.0, %v2279
      %2281 = vmatmul.f32.gmra.mxu0 %v2167
      %v2282 = vpop.f32.mrf.mxu0
      %v2283 = vadd.f32 0.0, %v2282
      %2284 = vmatmul.f32.gmra.mxu0 %v2170
      %v2285 = vpop.f32.mrf.mxu0
      %v2286 = vadd.f32 0.0, %v2285
      %2287 = vmatmul.f32.gmra.mxu0 %v2173
      %v2288 = vpop.f32.mrf.mxu0
      %v2289 = vadd.f32 0.0, %v2288
      %2290 = vmatmul.f32.gmra.mxu0 %v2176
      %v2291 = vpop.f32.mrf.mxu0
      %v2292 = vadd.f32 0.0, %v2291
      %2293 = vmatmul.f32.gmra.mxu0 %v2179
      %v2294 = vpop.f32.mrf.mxu0
      %v2295 = vadd.f32 0.0, %v2294
      %2296 = vmatmul.f32.gmra.mxu0 %v2182
      %v2297 = vpop.f32.mrf.mxu0
      %v2298 = vadd.f32 0.0, %v2297
      %2299 = vmatmul.f32.gmra.mxu0 %v2185
      %v2300 = vpop.f32.mrf.mxu0
      %v2301 = vadd.f32 0.0, %v2300
      %2302 = vmatmul.f32.gmra.mxu0 %v2188
      %v2303 = vpop.f32.mrf.mxu0
      %v2304 = vadd.f32 0.0, %v2303
      %2305 = vmatmul.f32.gmra.mxu0 %v2191
      %v2306 = vpop.f32.mrf.mxu0
      %v2307 = vadd.f32 0.0, %v2306
      %2308 = vmatmul.f32.gmra.mxu0 %v2194
      %v2309 = vpop.f32.mrf.mxu0
      %v2310 = vadd.f32 0.0, %v2309
      %2311 = vmatmul.f32.gmra.mxu0 %v2197
      %v2312 = vpop.f32.mrf.mxu0
      %v2313 = vadd.f32 0.0, %v2312
      %2314 = vmatmul.f32.gmra.mxu0 %v2200
      %v2315 = vpop.f32.mrf.mxu0
      %v2316 = vadd.f32 0.0, %v2315
      %2317 = vmatmul.f32.gmra.mxu0 %v2203
      %v2318 = vpop.f32.mrf.mxu0
      %v2319 = vadd.f32 0.0, %v2318
      %2320 = vmatmul.f32.gmra.mxu0 %v2206
      %v2321 = vpop.f32.mrf.mxu0
      %v2322 = vadd.f32 0.0, %v2321
      %2323 = vmatmul.f32.gmra.mxu0 %v2209
      %v2324 = vpop.f32.mrf.mxu0
      %v2325 = vadd.f32 0.0, %v2324
      %2326 = vmatmul.f32.gmra.mxu0 %v2212
      %v2327 = vpop.f32.mrf.mxu0
      %v2328 = vadd.f32 0.0, %v2327
      %2329 = vmatmul.f32.gmra.mxu0 %v2215
      %v2330 = vpop.f32.mrf.mxu0
      %v2331 = vadd.f32 0.0, %v2330
      %2332 = vmatmul.f32.gmra.mxu0 %v2218
      %v2333 = vpop.f32.mrf.mxu0
      %v2334 = vadd.f32 0.0, %v2333
      %2335 = vdwg.mxu0
      %v2336 = vadd.f32 %v2054, %v2241
      %v2337 = vadd.f32 %v2055, %v2244
      %v2338 = vadd.f32 %v2056, %v2247
      %v2339 = vadd.f32 %v2057, %v2250
      %v2340 = vadd.f32 %v2058, %v2253
      %v2341 = vadd.f32 %v2059, %v2256
      %v2342 = vadd.f32 %v2060, %v2259
      %v2343 = vadd.f32 %v2061, %v2262
      %v2344 = vadd.f32 %v2062, %v2265
      %v2345 = vadd.f32 %v2063, %v2268
      %v2346 = vadd.f32 %v2064, %v2271
      %v2347 = vadd.f32 %v2065, %v2274
      %v2348 = vadd.f32 %v2066, %v2277
      %v2349 = vadd.f32 %v2067, %v2280
      %v2350 = vadd.f32 %v2068, %v2283
      %v2351 = vadd.f32 %v2069, %v2286
      %v2352 = vadd.f32 %v2070, %v2289
      %v2353 = vadd.f32 %v2071, %v2292
      %v2354 = vadd.f32 %v2072, %v2295
      %v2355 = vadd.f32 %v2073, %v2298
      %v2356 = vadd.f32 %v2074, %v2301
      %v2357 = vadd.f32 %v2075, %v2304
      %v2358 = vadd.f32 %v2076, %v2307
      %v2359 = vadd.f32 %v2077, %v2310
      %v2360 = vadd.f32 %v2078, %v2313
      %v2361 = vadd.f32 %v2079, %v2316
      %v2362 = vadd.f32 %v2080, %v2319
      %v2363 = vadd.f32 %v2081, %v2322
      %v2364 = vadd.f32 %v2082, %v2325
      %v2365 = vadd.f32 %v2083, %v2328
      %v2366 = vadd.f32 %v2084, %v2331
      %v2367 = vadd.f32 %v2085, %v2334
      %v2368 = vld [vmem:[%s1803 + $0x2] sm:$0xff]
      %v2369 = vld [vmem:[%s1803 + $0xa] sm:$0xff]
      %v2370 = vld [vmem:[%s1803 + $0x1a] sm:$0xff]
      %v2371 = vld [vmem:[%s1803 + $0x22] sm:$0xff]
      %v2372 = vld [vmem:[%s1803 + $0x32] sm:$0xff]
      %v2373 = vld [vmem:[%s1803 + $0x3a] sm:$0xff]
      %v2374 = vld [vmem:[%s1803 + $0x4a] sm:$0xff]
      %v2375 = vld [vmem:[%s1803 + $0x52] sm:$0xff]
      %v2376 = vld [vmem:[%s1803 + $0x62] sm:$0xff]
      %v2377 = vld [vmem:[%s1803 + $0x6a] sm:$0xff]
      %v2378 = vld [vmem:[%s1803 + $0x7a] sm:$0xff]
      %v2379 = vld [vmem:[%s1803 + $0x82] sm:$0xff]
      %v2380 = vld [vmem:[%s1803 + $0x92] sm:$0xff]
      %v2381 = vld [vmem:[%s1803 + $0x9a] sm:$0xff]
      %v2382 = vld [vmem:[%s1803 + $0xaa] sm:$0xff]
      %v2383 = vld [vmem:[%s1803 + $0xb2] sm:$0xff]
      %v2384 = vld [vmem:[%s1803 + $0xc2] sm:$0xff]
      %v2385 = vld [vmem:[%s1803 + $0xca] sm:$0xff]
      %v2386 = vld [vmem:[%s1803 + $0xda] sm:$0xff]
      %v2387 = vld [vmem:[%s1803 + $0xe2] sm:$0xff]
      %v2388 = vld [vmem:[%s1803 + $0xf2] sm:$0xff]
      %v2389 = vld [vmem:[%s1803 + $0xfa] sm:$0xff]
      %v2390 = vld [vmem:[%s1803 + $0x10a] sm:$0xff]
      %v2391 = vld [vmem:[%s1803 + $0x112] sm:$0xff]
      %v2392 = vld [vmem:[%s1803 + $0x122] sm:$0xff]
      %v2393 = vld [vmem:[%s1803 + $0x12a] sm:$0xff]
      %v2394 = vld [vmem:[%s1803 + $0x13a] sm:$0xff]
      %v2395 = vld [vmem:[%s1803 + $0x142] sm:$0xff]
      %v2396 = vld [vmem:[%s1803 + $0x152] sm:$0xff]
      %v2397 = vld [vmem:[%s1803 + $0x15a] sm:$0xff]
      %v2398 = vld [vmem:[%s1803 + $0x16a] sm:$0xff]
      %v2399 = vld [vmem:[%s1803 + $0x172] sm:$0xff]
      %s2400 = scalar_lea.vmem %s1, 320
      %v2401 = vld [vmem:[%s2400] sm:$0xff]
      %v2402 = vld [vmem:[%s2400 + $0x8] sm:$0xff]
      %v2403 = vld [vmem:[%s2400 + $0x10] sm:$0xff]
      %v2404 = vld [vmem:[%s2400 + $0x18] sm:$0xff]
      %v2405 = vld [vmem:[%s2400 + $0x20] sm:$0x1]
      %v2407 = vsel %vm248, %v2368, 0
      %v2410 = vsel %vm248, %v2369, 0
      %v2413 = vsel %vm248, %v2370, 0
      %v2416 = vsel %vm248, %v2371, 0
      %v2419 = vsel %vm248, %v2372, 0
      %v2422 = vsel %vm248, %v2373, 0
      %v2425 = vsel %vm248, %v2374, 0
      %v2428 = vsel %vm248, %v2375, 0
      %v2431 = vsel %vm248, %v2376, 0
      %v2434 = vsel %vm248, %v2377, 0
      %v2437 = vsel %vm248, %v2378, 0
      %v2440 = vsel %vm248, %v2379, 0
      %v2443 = vsel %vm248, %v2380, 0
      %v2446 = vsel %vm248, %v2381, 0
      %v2449 = vsel %vm248, %v2382, 0
      %v2452 = vsel %vm248, %v2383, 0
      %v2455 = vsel %vm248, %v2384, 0
      %v2458 = vsel %vm248, %v2385, 0
      %v2461 = vsel %vm248, %v2386, 0
      %v2464 = vsel %vm248, %v2387, 0
      %v2467 = vsel %vm248, %v2388, 0
      %v2470 = vsel %vm248, %v2389, 0
      %v2473 = vsel %vm248, %v2390, 0
      %v2476 = vsel %vm248, %v2391, 0
      %v2479 = vsel %vm248, %v2392, 0
      %v2482 = vsel %vm248, %v2393, 0
      %v2485 = vsel %vm248, %v2394, 0
      %v2488 = vsel %vm248, %v2395, 0
      %v2491 = vsel %vm248, %v2396, 0
      %v2494 = vsel %vm248, %v2397, 0
      %v2497 = vsel %vm248, %v2398, 0
      %v2500 = vsel %vm248, %v2399, 0
      %v2503 = vsel %vm345, %v2405, 0
      %2505 = vmatpush.msra.mxu0 0.0
      %2506 = vmatpush.msra.mxu0 0.0
      %2507 = vmatpush.msra.mxu0 0.0
      %2508 = vmatpush.msra.mxu0 0.0
      %2509 = vmatpush.msra.mxu0 0.0
      %2510 = vmatpush.msra.mxu0 0.0
      %2511 = vmatpush.msra.mxu0 0.0
      %2512 = vmatpush.msra.mxu0 0.0
      %2513 = vmatpush.msra.mxu0 0.0
      %2514 = vmatpush.msra.mxu0 0.0
      %2515 = vmatpush.msra.mxu0 0.0
      %2516 = vmatpush.msra.mxu0 %v2503
      %2517 = vmatpush.msra.mxu0 %v2404
      %2518 = vmatpush.msra.mxu0 %v2403
      %2519 = vmatpush.msra.mxu0 %v2402
      %2520 = vmatpush.msra.mxu0 %v2401
      %2521 = vmatmul.f32.gmra.mxu0 %v2407
      %v2522 = vpop.f32.mrf.mxu0
      %v2523 = vadd.f32 0.0, %v2522
      %2524 = vmatmul.f32.gmra.mxu0 %v2410
      %v2525 = vpop.f32.mrf.mxu0
      %v2526 = vadd.f32 0.0, %v2525
      %2527 = vmatmul.f32.gmra.mxu0 %v2413
      %v2528 = vpop.f32.mrf.mxu0
      %v2529 = vadd.f32 0.0, %v2528
      %2530 = vmatmul.f32.gmra.mxu0 %v2416
      %v2531 = vpop.f32.mrf.mxu0
      %v2532 = vadd.f32 0.0, %v2531
      %2533 = vmatmul.f32.gmra.mxu0 %v2419
      %v2534 = vpop.f32.mrf.mxu0
      %v2535 = vadd.f32 0.0, %v2534
      %2536 = vmatmul.f32.gmra.mxu0 %v2422
      %v2537 = vpop.f32.mrf.mxu0
      %v2538 = vadd.f32 0.0, %v2537
      %2539 = vmatmul.f32.gmra.mxu0 %v2425
      %v2540 = vpop.f32.mrf.mxu0
      %v2541 = vadd.f32 0.0, %v2540
      %2542 = vmatmul.f32.gmra.mxu0 %v2428
      %v2543 = vpop.f32.mrf.mxu0
      %v2544 = vadd.f32 0.0, %v2543
      %2545 = vmatmul.f32.gmra.mxu0 %v2431
      %v2546 = vpop.f32.mrf.mxu0
      %v2547 = vadd.f32 0.0, %v2546
      %2548 = vmatmul.f32.gmra.mxu0 %v2434
      %v2549 = vpop.f32.mrf.mxu0
      %v2550 = vadd.f32 0.0, %v2549
      %2551 = vmatmul.f32.gmra.mxu0 %v2437
      %v2552 = vpop.f32.mrf.mxu0
      %v2553 = vadd.f32 0.0, %v2552
      %2554 = vmatmul.f32.gmra.mxu0 %v2440
      %v2555 = vpop.f32.mrf.mxu0
      %v2556 = vadd.f32 0.0, %v2555
      %2557 = vmatmul.f32.gmra.mxu0 %v2443
      %v2558 = vpop.f32.mrf.mxu0
      %v2559 = vadd.f32 0.0, %v2558
      %2560 = vmatmul.f32.gmra.mxu0 %v2446
      %v2561 = vpop.f32.mrf.mxu0
      %v2562 = vadd.f32 0.0, %v2561
      %2563 = vmatmul.f32.gmra.mxu0 %v2449
      %v2564 = vpop.f32.mrf.mxu0
      %v2565 = vadd.f32 0.0, %v2564
      %2566 = vmatmul.f32.gmra.mxu0 %v2452
      %v2567 = vpop.f32.mrf.mxu0
      %v2568 = vadd.f32 0.0, %v2567
      %2569 = vmatmul.f32.gmra.mxu0 %v2455
      %v2570 = vpop.f32.mrf.mxu0
      %v2571 = vadd.f32 0.0, %v2570
      %2572 = vmatmul.f32.gmra.mxu0 %v2458
      %v2573 = vpop.f32.mrf.mxu0
      %v2574 = vadd.f32 0.0, %v2573
      %2575 = vmatmul.f32.gmra.mxu0 %v2461
      %v2576 = vpop.f32.mrf.mxu0
      %v2577 = vadd.f32 0.0, %v2576
      %2578 = vmatmul.f32.gmra.mxu0 %v2464
      %v2579 = vpop.f32.mrf.mxu0
      %v2580 = vadd.f32 0.0, %v2579
      %2581 = vmatmul.f32.gmra.mxu0 %v2467
      %v2582 = vpop.f32.mrf.mxu0
      %v2583 = vadd.f32 0.0, %v2582
      %2584 = vmatmul.f32.gmra.mxu0 %v2470
      %v2585 = vpop.f32.mrf.mxu0
      %v2586 = vadd.f32 0.0, %v2585
      %2587 = vmatmul.f32.gmra.mxu0 %v2473
      %v2588 = vpop.f32.mrf.mxu0
      %v2589 = vadd.f32 0.0, %v2588
      %2590 = vmatmul.f32.gmra.mxu0 %v2476
      %v2591 = vpop.f32.mrf.mxu0
      %v2592 = vadd.f32 0.0, %v2591
      %2593 = vmatmul.f32.gmra.mxu0 %v2479
      %v2594 = vpop.f32.mrf.mxu0
      %v2595 = vadd.f32 0.0, %v2594
      %2596 = vmatmul.f32.gmra.mxu0 %v2482
      %v2597 = vpop.f32.mrf.mxu0
      %v2598 = vadd.f32 0.0, %v2597
      %2599 = vmatmul.f32.gmra.mxu0 %v2485
      %v2600 = vpop.f32.mrf.mxu0
      %v2601 = vadd.f32 0.0, %v2600
      %2602 = vmatmul.f32.gmra.mxu0 %v2488
      %v2603 = vpop.f32.mrf.mxu0
      %v2604 = vadd.f32 0.0, %v2603
      %2605 = vmatmul.f32.gmra.mxu0 %v2491
      %v2606 = vpop.f32.mrf.mxu0
      %v2607 = vadd.f32 0.0, %v2606
      %2608 = vmatmul.f32.gmra.mxu0 %v2494
      %v2609 = vpop.f32.mrf.mxu0
      %v2610 = vadd.f32 0.0, %v2609
      %2611 = vmatmul.f32.gmra.mxu0 %v2497
      %v2612 = vpop.f32.mrf.mxu0
      %v2613 = vadd.f32 0.0, %v2612
      %2614 = vmatmul.f32.gmra.mxu0 %v2500
      %v2615 = vpop.f32.mrf.mxu0
      %v2616 = vadd.f32 0.0, %v2615
      %2617 = vdwg.mxu0
      %v2618 = vadd.f32 %v2336, %v2523
      %v2619 = vadd.f32 %v2337, %v2526
      %v2620 = vadd.f32 %v2338, %v2529
      %v2621 = vadd.f32 %v2339, %v2532
      %v2622 = vadd.f32 %v2340, %v2535
      %v2623 = vadd.f32 %v2341, %v2538
      %v2624 = vadd.f32 %v2342, %v2541
      %v2625 = vadd.f32 %v2343, %v2544
      %v2626 = vadd.f32 %v2344, %v2547
      %v2627 = vadd.f32 %v2345, %v2550
      %v2628 = vadd.f32 %v2346, %v2553
      %v2629 = vadd.f32 %v2347, %v2556
      %v2630 = vadd.f32 %v2348, %v2559
      %v2631 = vadd.f32 %v2349, %v2562
      %v2632 = vadd.f32 %v2350, %v2565
      %v2633 = vadd.f32 %v2351, %v2568
      %v2634 = vadd.f32 %v2352, %v2571
      %v2635 = vadd.f32 %v2353, %v2574
      %v2636 = vadd.f32 %v2354, %v2577
      %v2637 = vadd.f32 %v2355, %v2580
      %v2638 = vadd.f32 %v2356, %v2583
      %v2639 = vadd.f32 %v2357, %v2586
      %v2640 = vadd.f32 %v2358, %v2589
      %v2641 = vadd.f32 %v2359, %v2592
      %v2642 = vadd.f32 %v2360, %v2595
      %v2643 = vadd.f32 %v2361, %v2598
      %v2644 = vadd.f32 %v2362, %v2601
      %v2645 = vadd.f32 %v2363, %v2604
      %v2646 = vadd.f32 %v2364, %v2607
      %v2647 = vadd.f32 %v2365, %v2610
      %v2648 = vadd.f32 %v2366, %v2613
      %v2649 = vadd.f32 %v2367, %v2616
      %v2650 = vld [vmem:[#allocation2] sm:$0x1]
      %v2652 = vperm.slane %v2650, 0
      %v2654 = vadd.f32 %v2618, %v2652
      %v2655 = vadd.f32 %v2619, %v2652
      %v2656 = vadd.f32 %v2620, %v2652
      %v2657 = vadd.f32 %v2621, %v2652
      %v2658 = vadd.f32 %v2622, %v2652
      %v2659 = vadd.f32 %v2623, %v2652
      %v2660 = vadd.f32 %v2624, %v2652
      %v2661 = vadd.f32 %v2625, %v2652
      %v2662 = vadd.f32 %v2626, %v2652
      %v2663 = vadd.f32 %v2627, %v2652
      %v2664 = vadd.f32 %v2628, %v2652
      %v2665 = vadd.f32 %v2629, %v2652
      %v2666 = vadd.f32 %v2630, %v2652
      %v2667 = vadd.f32 %v2631, %v2652
      %v2668 = vadd.f32 %v2632, %v2652
      %v2669 = vadd.f32 %v2633, %v2652
      %v2670 = vadd.f32 %v2634, %v2652
      %v2671 = vadd.f32 %v2635, %v2652
      %v2672 = vadd.f32 %v2636, %v2652
      %v2673 = vadd.f32 %v2637, %v2652
      %v2674 = vadd.f32 %v2638, %v2652
      %v2675 = vadd.f32 %v2639, %v2652
      %v2676 = vadd.f32 %v2640, %v2652
      %v2677 = vadd.f32 %v2641, %v2652
      %v2678 = vadd.f32 %v2642, %v2652
      %v2679 = vadd.f32 %v2643, %v2652
      %v2680 = vadd.f32 %v2644, %v2652
      %v2681 = vadd.f32 %v2645, %v2652
      %v2682 = vadd.f32 %v2646, %v2652
      %v2683 = vadd.f32 %v2647, %v2652
      %v2684 = vadd.f32 %v2648, %v2652
      %v2685 = vadd.f32 %v2649, %v2652
      %v2686 = vsub.f32 0.0, %v2654
      %v2687 = vsub.f32 0.0, %v2655
      %v2688 = vsub.f32 0.0, %v2656
      %v2689 = vsub.f32 0.0, %v2657
      %v2690 = vsub.f32 0.0, %v2658
      %v2691 = vsub.f32 0.0, %v2659
      %v2692 = vsub.f32 0.0, %v2660
      %v2693 = vsub.f32 0.0, %v2661
      %v2694 = vsub.f32 0.0, %v2662
      %v2695 = vsub.f32 0.0, %v2663
      %v2696 = vsub.f32 0.0, %v2664
      %v2697 = vsub.f32 0.0, %v2665
      %v2698 = vsub.f32 0.0, %v2666
      %v2699 = vsub.f32 0.0, %v2667
      %v2700 = vsub.f32 0.0, %v2668
      %v2701 = vsub.f32 0.0, %v2669
      %v2702 = vsub.f32 0.0, %v2670
      %v2703 = vsub.f32 0.0, %v2671
      %v2704 = vsub.f32 0.0, %v2672
      %v2705 = vsub.f32 0.0, %v2673
      %v2706 = vsub.f32 0.0, %v2674
      %v2707 = vsub.f32 0.0, %v2675
      %v2708 = vsub.f32 0.0, %v2676
      %v2709 = vsub.f32 0.0, %v2677
      %v2710 = vsub.f32 0.0, %v2678
      %v2711 = vsub.f32 0.0, %v2679
      %v2712 = vsub.f32 0.0, %v2680
      %v2713 = vsub.f32 0.0, %v2681
      %v2714 = vsub.f32 0.0, %v2682
      %v2715 = vsub.f32 0.0, %v2683
      %v2716 = vsub.f32 0.0, %v2684
      %v2717 = vsub.f32 0.0, %v2685
      %v2718 = vmul.f32 %v2686, 1.442695
      %v2719 = vpow.pop %v2718
      %v2720 = vmul.f32 %v2687, 1.442695
      %v2721 = vpow.pop %v2720
      %v2722 = vmul.f32 %v2688, 1.442695
      %v2723 = vpow.pop %v2722
      %v2724 = vmul.f32 %v2689, 1.442695
      %v2725 = vpow.pop %v2724
      %v2726 = vmul.f32 %v2690, 1.442695
      %v2727 = vpow.pop %v2726
      %v2728 = vmul.f32 %v2691, 1.442695
      %v2729 = vpow.pop %v2728
      %v2730 = vmul.f32 %v2692, 1.442695
      %v2731 = vpow.pop %v2730
      %v2732 = vmul.f32 %v2693, 1.442695
      %v2733 = vpow.pop %v2732
      %v2734 = vmul.f32 %v2694, 1.442695
      %v2735 = vpow.pop %v2734
      %v2736 = vmul.f32 %v2695, 1.442695
      %v2737 = vpow.pop %v2736
      %v2738 = vmul.f32 %v2696, 1.442695
      %v2739 = vpow.pop %v2738
      %v2740 = vmul.f32 %v2697, 1.442695
      %v2741 = vpow.pop %v2740
      %v2742 = vmul.f32 %v2698, 1.442695
      %v2743 = vpow.pop %v2742
      %v2744 = vmul.f32 %v2699, 1.442695
      %v2745 = vpow.pop %v2744
      %v2746 = vmul.f32 %v2700, 1.442695
      %v2747 = vpow.pop %v2746
      %v2748 = vmul.f32 %v2701, 1.442695
      %v2749 = vpow.pop %v2748
      %v2750 = vmul.f32 %v2702, 1.442695
      %v2751 = vpow.pop %v2750
      %v2752 = vmul.f32 %v2703, 1.442695
      %v2753 = vpow.pop %v2752
      %v2754 = vmul.f32 %v2704, 1.442695
      %v2755 = vpow.pop %v2754
      %v2756 = vmul.f32 %v2705, 1.442695
      %v2757 = vpow.pop %v2756
      %v2758 = vmul.f32 %v2706, 1.442695
      %v2759 = vpow.pop %v2758
      %v2760 = vmul.f32 %v2707, 1.442695
      %v2761 = vpow.pop %v2760
      %v2762 = vmul.f32 %v2708, 1.442695
      %v2763 = vpow.pop %v2762
      %v2764 = vmul.f32 %v2709, 1.442695
      %v2765 = vpow.pop %v2764
      %v2766 = vmul.f32 %v2710, 1.442695
      %v2767 = vpow.pop %v2766
      %v2768 = vmul.f32 %v2711, 1.442695
      %v2769 = vpow.pop %v2768
      %v2770 = vmul.f32 %v2712, 1.442695
      %v2771 = vpow.pop %v2770
      %v2772 = vmul.f32 %v2713, 1.442695
      %v2773 = vpow.pop %v2772
      %v2774 = vmul.f32 %v2714, 1.442695
      %v2775 = vpow.pop %v2774
      %v2776 = vmul.f32 %v2715, 1.442695
      %v2777 = vpow.pop %v2776
      %v2778 = vmul.f32 %v2716, 1.442695
      %v2779 = vpow.pop %v2778
      %v2780 = vmul.f32 %v2717, 1.442695
      %v2781 = vpow.pop %v2780
      %v2782 = vadd.f32 %v2719, 1.0
      %v2783 = vadd.f32 %v2721, 1.0
      %v2784 = vadd.f32 %v2723, 1.0
      %v2785 = vadd.f32 %v2725, 1.0
      %v2786 = vadd.f32 %v2727, 1.0
      %v2787 = vadd.f32 %v2729, 1.0
      %v2788 = vadd.f32 %v2731, 1.0
      %v2789 = vadd.f32 %v2733, 1.0
      %v2790 = vadd.f32 %v2735, 1.0
      %v2791 = vadd.f32 %v2737, 1.0
      %v2792 = vadd.f32 %v2739, 1.0
      %v2793 = vadd.f32 %v2741, 1.0
      %v2794 = vadd.f32 %v2743, 1.0
      %v2795 = vadd.f32 %v2745, 1.0
      %v2796 = vadd.f32 %v2747, 1.0
      %v2797 = vadd.f32 %v2749, 1.0
      %v2798 = vadd.f32 %v2751, 1.0
      %v2799 = vadd.f32 %v2753, 1.0
      %v2800 = vadd.f32 %v2755, 1.0
      %v2801 = vadd.f32 %v2757, 1.0
      %v2802 = vadd.f32 %v2759, 1.0
      %v2803 = vadd.f32 %v2761, 1.0
      %v2804 = vadd.f32 %v2763, 1.0
      %v2805 = vadd.f32 %v2765, 1.0
      %v2806 = vadd.f32 %v2767, 1.0
      %v2807 = vadd.f32 %v2769, 1.0
      %v2808 = vadd.f32 %v2771, 1.0
      %v2809 = vadd.f32 %v2773, 1.0
      %v2810 = vadd.f32 %v2775, 1.0
      %v2811 = vadd.f32 %v2777, 1.0
      %v2812 = vadd.f32 %v2779, 1.0
      %v2813 = vadd.f32 %v2781, 1.0
      %v2814 = vrcp.pop %v2782
      %v2815 = vmul.f32 %v2782, %v2814
      %v2816 = vsub.f32 1.0, %v2815
      %v2817 = vmul.f32 %v2814, %v2816
      %v2818 = vadd.f32 %v2814, %v2817
      %vm2819 = vweird.f32 %v2782
      %vm2820 = vweird.f32 %v2814
      %vm2821 = vmor %vm2819, %vm2820
      %v2822 = vsel %vm2821, %v2814, %v2818
      %v2823 = vand.u32 2147483647, %v2782
      %vm2824 = vcmp.eq.f32.partialorder %v2823, 8.507059e+37
      %v2825 = vand.u32 %v2782, 2147483648
      %v2826 = vor.u32 1.1754944e-38, %v2825
      %v2827 = vsel %vm2824, %v2826, %v2822
      %v2828 = vmul.f32 1.0, %v2827
      %v2829 = vrcp.pop %v2783
      %v2830 = vmul.f32 %v2783, %v2829
      %v2831 = vsub.f32 1.0, %v2830
      %v2832 = vmul.f32 %v2829, %v2831
      %v2833 = vadd.f32 %v2829, %v2832
      %vm2834 = vweird.f32 %v2783
      %vm2835 = vweird.f32 %v2829
      %vm2836 = vmor %vm2834, %vm2835
      %v2837 = vsel %vm2836, %v2829, %v2833
      %v2838 = vand.u32 2147483647, %v2783
      %vm2839 = vcmp.eq.f32.partialorder %v2838, 8.507059e+37
      %v2840 = vand.u32 %v2783, 2147483648
      %v2841 = vor.u32 1.1754944e-38, %v2840
      %v2842 = vsel %vm2839, %v2841, %v2837
      %v2843 = vmul.f32 1.0, %v2842
      %v2844 = vrcp.pop %v2784
      %v2845 = vmul.f32 %v2784, %v2844
      %v2846 = vsub.f32 1.0, %v2845
      %v2847 = vmul.f32 %v2844, %v2846
      %v2848 = vadd.f32 %v2844, %v2847
      %vm2849 = vweird.f32 %v2784
      %vm2850 = vweird.f32 %v2844
      %vm2851 = vmor %vm2849, %vm2850
      %v2852 = vsel %vm2851, %v2844, %v2848
      %v2853 = vand.u32 2147483647, %v2784
      %vm2854 = vcmp.eq.f32.partialorder %v2853, 8.507059e+37
      %v2855 = vand.u32 %v2784, 2147483648
      %v2856 = vor.u32 1.1754944e-38, %v2855
      %v2857 = vsel %vm2854, %v2856, %v2852
      %v2858 = vmul.f32 1.0, %v2857
      %v2859 = vrcp.pop %v2785
      %v2860 = vmul.f32 %v2785, %v2859
      %v2861 = vsub.f32 1.0, %v2860
      %v2862 = vmul.f32 %v2859, %v2861
      %v2863 = vadd.f32 %v2859, %v2862
      %vm2864 = vweird.f32 %v2785
      %vm2865 = vweird.f32 %v2859
      %vm2866 = vmor %vm2864, %vm2865
      %v2867 = vsel %vm2866, %v2859, %v2863
      %v2868 = vand.u32 2147483647, %v2785
      %vm2869 = vcmp.eq.f32.partialorder %v2868, 8.507059e+37
      %v2870 = vand.u32 %v2785, 2147483648
      %v2871 = vor.u32 1.1754944e-38, %v2870
      %v2872 = vsel %vm2869, %v2871, %v2867
      %v2873 = vmul.f32 1.0, %v2872
      %v2874 = vrcp.pop %v2786
      %v2875 = vmul.f32 %v2786, %v2874
      %v2876 = vsub.f32 1.0, %v2875
      %v2877 = vmul.f32 %v2874, %v2876
      %v2878 = vadd.f32 %v2874, %v2877
      %vm2879 = vweird.f32 %v2786
      %vm2880 = vweird.f32 %v2874
      %vm2881 = vmor %vm2879, %vm2880
      %v2882 = vsel %vm2881, %v2874, %v2878
      %v2883 = vand.u32 2147483647, %v2786
      %vm2884 = vcmp.eq.f32.partialorder %v2883, 8.507059e+37
      %v2885 = vand.u32 %v2786, 2147483648
      %v2886 = vor.u32 1.1754944e-38, %v2885
      %v2887 = vsel %vm2884, %v2886, %v2882
      %v2888 = vmul.f32 1.0, %v2887
      %v2889 = vrcp.pop %v2787
      %v2890 = vmul.f32 %v2787, %v2889
      %v2891 = vsub.f32 1.0, %v2890
      %v2892 = vmul.f32 %v2889, %v2891
      %v2893 = vadd.f32 %v2889, %v2892
      %vm2894 = vweird.f32 %v2787
      %vm2895 = vweird.f32 %v2889
      %vm2896 = vmor %vm2894, %vm2895
      %v2897 = vsel %vm2896, %v2889, %v2893
      %v2898 = vand.u32 2147483647, %v2787
      %vm2899 = vcmp.eq.f32.partialorder %v2898, 8.507059e+37
      %v2900 = vand.u32 %v2787, 2147483648
      %v2901 = vor.u32 1.1754944e-38, %v2900
      %v2902 = vsel %vm2899, %v2901, %v2897
      %v2903 = vmul.f32 1.0, %v2902
      %v2904 = vrcp.pop %v2788
      %v2905 = vmul.f32 %v2788, %v2904
      %v2906 = vsub.f32 1.0, %v2905
      %v2907 = vmul.f32 %v2904, %v2906
      %v2908 = vadd.f32 %v2904, %v2907
      %vm2909 = vweird.f32 %v2788
      %vm2910 = vweird.f32 %v2904
      %vm2911 = vmor %vm2909, %vm2910
      %v2912 = vsel %vm2911, %v2904, %v2908
      %v2913 = vand.u32 2147483647, %v2788
      %vm2914 = vcmp.eq.f32.partialorder %v2913, 8.507059e+37
      %v2915 = vand.u32 %v2788, 2147483648
      %v2916 = vor.u32 1.1754944e-38, %v2915
      %v2917 = vsel %vm2914, %v2916, %v2912
      %v2918 = vmul.f32 1.0, %v2917
      %v2919 = vrcp.pop %v2789
      %v2920 = vmul.f32 %v2789, %v2919
      %v2921 = vsub.f32 1.0, %v2920
      %v2922 = vmul.f32 %v2919, %v2921
      %v2923 = vadd.f32 %v2919, %v2922
      %vm2924 = vweird.f32 %v2789
      %vm2925 = vweird.f32 %v2919
      %vm2926 = vmor %vm2924, %vm2925
      %v2927 = vsel %vm2926, %v2919, %v2923
      %v2928 = vand.u32 2147483647, %v2789
      %vm2929 = vcmp.eq.f32.partialorder %v2928, 8.507059e+37
      %v2930 = vand.u32 %v2789, 2147483648
      %v2931 = vor.u32 1.1754944e-38, %v2930
      %v2932 = vsel %vm2929, %v2931, %v2927
      %v2933 = vmul.f32 1.0, %v2932
      %v2934 = vrcp.pop %v2790
      %v2935 = vmul.f32 %v2790, %v2934
      %v2936 = vsub.f32 1.0, %v2935
      %v2937 = vmul.f32 %v2934, %v2936
      %v2938 = vadd.f32 %v2934, %v2937
      %vm2939 = vweird.f32 %v2790
      %vm2940 = vweird.f32 %v2934
      %vm2941 = vmor %vm2939, %vm2940
      %v2942 = vsel %vm2941, %v2934, %v2938
      %v2943 = vand.u32 2147483647, %v2790
      %vm2944 = vcmp.eq.f32.partialorder %v2943, 8.507059e+37
      %v2945 = vand.u32 %v2790, 2147483648
      %v2946 = vor.u32 1.1754944e-38, %v2945
      %v2947 = vsel %vm2944, %v2946, %v2942
      %v2948 = vmul.f32 1.0, %v2947
      %v2949 = vrcp.pop %v2791
      %v2950 = vmul.f32 %v2791, %v2949
      %v2951 = vsub.f32 1.0, %v2950
      %v2952 = vmul.f32 %v2949, %v2951
      %v2953 = vadd.f32 %v2949, %v2952
      %vm2954 = vweird.f32 %v2791
      %vm2955 = vweird.f32 %v2949
      %vm2956 = vmor %vm2954, %vm2955
      %v2957 = vsel %vm2956, %v2949, %v2953
      %v2958 = vand.u32 2147483647, %v2791
      %vm2959 = vcmp.eq.f32.partialorder %v2958, 8.507059e+37
      %v2960 = vand.u32 %v2791, 2147483648
      %v2961 = vor.u32 1.1754944e-38, %v2960
      %v2962 = vsel %vm2959, %v2961, %v2957
      %v2963 = vmul.f32 1.0, %v2962
      %v2964 = vrcp.pop %v2792
      %v2965 = vmul.f32 %v2792, %v2964
      %v2966 = vsub.f32 1.0, %v2965
      %v2967 = vmul.f32 %v2964, %v2966
      %v2968 = vadd.f32 %v2964, %v2967
      %vm2969 = vweird.f32 %v2792
      %vm2970 = vweird.f32 %v2964
      %vm2971 = vmor %vm2969, %vm2970
      %v2972 = vsel %vm2971, %v2964, %v2968
      %v2973 = vand.u32 2147483647, %v2792
      %vm2974 = vcmp.eq.f32.partialorder %v2973, 8.507059e+37
      %v2975 = vand.u32 %v2792, 2147483648
      %v2976 = vor.u32 1.1754944e-38, %v2975
      %v2977 = vsel %vm2974, %v2976, %v2972
      %v2978 = vmul.f32 1.0, %v2977
      %v2979 = vrcp.pop %v2793
      %v2980 = vmul.f32 %v2793, %v2979
      %v2981 = vsub.f32 1.0, %v2980
      %v2982 = vmul.f32 %v2979, %v2981
      %v2983 = vadd.f32 %v2979, %v2982
      %vm2984 = vweird.f32 %v2793
      %vm2985 = vweird.f32 %v2979
      %vm2986 = vmor %vm2984, %vm2985
      %v2987 = vsel %vm2986, %v2979, %v2983
      %v2988 = vand.u32 2147483647, %v2793
      %vm2989 = vcmp.eq.f32.partialorder %v2988, 8.507059e+37
      %v2990 = vand.u32 %v2793, 2147483648
      %v2991 = vor.u32 1.1754944e-38, %v2990
      %v2992 = vsel %vm2989, %v2991, %v2987
      %v2993 = vmul.f32 1.0, %v2992
      %v2994 = vrcp.pop %v2794
      %v2995 = vmul.f32 %v2794, %v2994
      %v2996 = vsub.f32 1.0, %v2995
      %v2997 = vmul.f32 %v2994, %v2996
      %v2998 = vadd.f32 %v2994, %v2997
      %vm2999 = vweird.f32 %v2794
      %vm3000 = vweird.f32 %v2994
      %vm3001 = vmor %vm2999, %vm3000
      %v3002 = vsel %vm3001, %v2994, %v2998
      %v3003 = vand.u32 2147483647, %v2794
      %vm3004 = vcmp.eq.f32.partialorder %v3003, 8.507059e+37
      %v3005 = vand.u32 %v2794, 2147483648
      %v3006 = vor.u32 1.1754944e-38, %v3005
      %v3007 = vsel %vm3004, %v3006, %v3002
      %v3008 = vmul.f32 1.0, %v3007
      %v3009 = vrcp.pop %v2795
      %v3010 = vmul.f32 %v2795, %v3009
      %v3011 = vsub.f32 1.0, %v3010
      %v3012 = vmul.f32 %v3009, %v3011
      %v3013 = vadd.f32 %v3009, %v3012
      %vm3014 = vweird.f32 %v2795
      %vm3015 = vweird.f32 %v3009
      %vm3016 = vmor %vm3014, %vm3015
      %v3017 = vsel %vm3016, %v3009, %v3013
      %v3018 = vand.u32 2147483647, %v2795
      %vm3019 = vcmp.eq.f32.partialorder %v3018, 8.507059e+37
      %v3020 = vand.u32 %v2795, 2147483648
      %v3021 = vor.u32 1.1754944e-38, %v3020
      %v3022 = vsel %vm3019, %v3021, %v3017
      %v3023 = vmul.f32 1.0, %v3022
      %v3024 = vrcp.pop %v2796
      %v3025 = vmul.f32 %v2796, %v3024
      %v3026 = vsub.f32 1.0, %v3025
      %v3027 = vmul.f32 %v3024, %v3026
      %v3028 = vadd.f32 %v3024, %v3027
      %vm3029 = vweird.f32 %v2796
      %vm3030 = vweird.f32 %v3024
      %vm3031 = vmor %vm3029, %vm3030
      %v3032 = vsel %vm3031, %v3024, %v3028
      %v3033 = vand.u32 2147483647, %v2796
      %vm3034 = vcmp.eq.f32.partialorder %v3033, 8.507059e+37
      %v3035 = vand.u32 %v2796, 2147483648
      %v3036 = vor.u32 1.1754944e-38, %v3035
      %v3037 = vsel %vm3034, %v3036, %v3032
      %v3038 = vmul.f32 1.0, %v3037
      %v3039 = vrcp.pop %v2797
      %v3040 = vmul.f32 %v2797, %v3039
      %v3041 = vsub.f32 1.0, %v3040
      %v3042 = vmul.f32 %v3039, %v3041
      %v3043 = vadd.f32 %v3039, %v3042
      %vm3044 = vweird.f32 %v2797
      %vm3045 = vweird.f32 %v3039
      %vm3046 = vmor %vm3044, %vm3045
      %v3047 = vsel %vm3046, %v3039, %v3043
      %v3048 = vand.u32 2147483647, %v2797
      %vm3049 = vcmp.eq.f32.partialorder %v3048, 8.507059e+37
      %v3050 = vand.u32 %v2797, 2147483648
      %v3051 = vor.u32 1.1754944e-38, %v3050
      %v3052 = vsel %vm3049, %v3051, %v3047
      %v3053 = vmul.f32 1.0, %v3052
      %v3054 = vrcp.pop %v2798
      %v3055 = vmul.f32 %v2798, %v3054
      %v3056 = vsub.f32 1.0, %v3055
      %v3057 = vmul.f32 %v3054, %v3056
      %v3058 = vadd.f32 %v3054, %v3057
      %vm3059 = vweird.f32 %v2798
      %vm3060 = vweird.f32 %v3054
      %vm3061 = vmor %vm3059, %vm3060
      %v3062 = vsel %vm3061, %v3054, %v3058
      %v3063 = vand.u32 2147483647, %v2798
      %vm3064 = vcmp.eq.f32.partialorder %v3063, 8.507059e+37
      %v3065 = vand.u32 %v2798, 2147483648
      %v3066 = vor.u32 1.1754944e-38, %v3065
      %v3067 = vsel %vm3064, %v3066, %v3062
      %v3068 = vmul.f32 1.0, %v3067
      %v3069 = vrcp.pop %v2799
      %v3070 = vmul.f32 %v2799, %v3069
      %v3071 = vsub.f32 1.0, %v3070
      %v3072 = vmul.f32 %v3069, %v3071
      %v3073 = vadd.f32 %v3069, %v3072
      %vm3074 = vweird.f32 %v2799
      %vm3075 = vweird.f32 %v3069
      %vm3076 = vmor %vm3074, %vm3075
      %v3077 = vsel %vm3076, %v3069, %v3073
      %v3078 = vand.u32 2147483647, %v2799
      %vm3079 = vcmp.eq.f32.partialorder %v3078, 8.507059e+37
      %v3080 = vand.u32 %v2799, 2147483648
      %v3081 = vor.u32 1.1754944e-38, %v3080
      %v3082 = vsel %vm3079, %v3081, %v3077
      %v3083 = vmul.f32 1.0, %v3082
      %v3084 = vrcp.pop %v2800
      %v3085 = vmul.f32 %v2800, %v3084
      %v3086 = vsub.f32 1.0, %v3085
      %v3087 = vmul.f32 %v3084, %v3086
      %v3088 = vadd.f32 %v3084, %v3087
      %vm3089 = vweird.f32 %v2800
      %vm3090 = vweird.f32 %v3084
      %vm3091 = vmor %vm3089, %vm3090
      %v3092 = vsel %vm3091, %v3084, %v3088
      %v3093 = vand.u32 2147483647, %v2800
      %vm3094 = vcmp.eq.f32.partialorder %v3093, 8.507059e+37
      %v3095 = vand.u32 %v2800, 2147483648
      %v3096 = vor.u32 1.1754944e-38, %v3095
      %v3097 = vsel %vm3094, %v3096, %v3092
      %v3098 = vmul.f32 1.0, %v3097
      %v3099 = vrcp.pop %v2801
      %v3100 = vmul.f32 %v2801, %v3099
      %v3101 = vsub.f32 1.0, %v3100
      %v3102 = vmul.f32 %v3099, %v3101
      %v3103 = vadd.f32 %v3099, %v3102
      %vm3104 = vweird.f32 %v2801
      %vm3105 = vweird.f32 %v3099
      %vm3106 = vmor %vm3104, %vm3105
      %v3107 = vsel %vm3106, %v3099, %v3103
      %v3108 = vand.u32 2147483647, %v2801
      %vm3109 = vcmp.eq.f32.partialorder %v3108, 8.507059e+37
      %v3110 = vand.u32 %v2801, 2147483648
      %v3111 = vor.u32 1.1754944e-38, %v3110
      %v3112 = vsel %vm3109, %v3111, %v3107
      %v3113 = vmul.f32 1.0, %v3112
      %v3114 = vrcp.pop %v2802
      %v3115 = vmul.f32 %v2802, %v3114
      %v3116 = vsub.f32 1.0, %v3115
      %v3117 = vmul.f32 %v3114, %v3116
      %v3118 = vadd.f32 %v3114, %v3117
      %vm3119 = vweird.f32 %v2802
      %vm3120 = vweird.f32 %v3114
      %vm3121 = vmor %vm3119, %vm3120
      %v3122 = vsel %vm3121, %v3114, %v3118
      %v3123 = vand.u32 2147483647, %v2802
      %vm3124 = vcmp.eq.f32.partialorder %v3123, 8.507059e+37
      %v3125 = vand.u32 %v2802, 2147483648
      %v3126 = vor.u32 1.1754944e-38, %v3125
      %v3127 = vsel %vm3124, %v3126, %v3122
      %v3128 = vmul.f32 1.0, %v3127
      %v3129 = vrcp.pop %v2803
      %v3130 = vmul.f32 %v2803, %v3129
      %v3131 = vsub.f32 1.0, %v3130
      %v3132 = vmul.f32 %v3129, %v3131
      %v3133 = vadd.f32 %v3129, %v3132
      %vm3134 = vweird.f32 %v2803
      %vm3135 = vweird.f32 %v3129
      %vm3136 = vmor %vm3134, %vm3135
      %v3137 = vsel %vm3136, %v3129, %v3133
      %v3138 = vand.u32 2147483647, %v2803
      %vm3139 = vcmp.eq.f32.partialorder %v3138, 8.507059e+37
      %v3140 = vand.u32 %v2803, 2147483648
      %v3141 = vor.u32 1.1754944e-38, %v3140
      %v3142 = vsel %vm3139, %v3141, %v3137
      %v3143 = vmul.f32 1.0, %v3142
      %v3144 = vrcp.pop %v2804
      %v3145 = vmul.f32 %v2804, %v3144
      %v3146 = vsub.f32 1.0, %v3145
      %v3147 = vmul.f32 %v3144, %v3146
      %v3148 = vadd.f32 %v3144, %v3147
      %vm3149 = vweird.f32 %v2804
      %vm3150 = vweird.f32 %v3144
      %vm3151 = vmor %vm3149, %vm3150
      %v3152 = vsel %vm3151, %v3144, %v3148
      %v3153 = vand.u32 2147483647, %v2804
      %vm3154 = vcmp.eq.f32.partialorder %v3153, 8.507059e+37
      %v3155 = vand.u32 %v2804, 2147483648
      %v3156 = vor.u32 1.1754944e-38, %v3155
      %v3157 = vsel %vm3154, %v3156, %v3152
      %v3158 = vmul.f32 1.0, %v3157
      %v3159 = vrcp.pop %v2805
      %v3160 = vmul.f32 %v2805, %v3159
      %v3161 = vsub.f32 1.0, %v3160
      %v3162 = vmul.f32 %v3159, %v3161
      %v3163 = vadd.f32 %v3159, %v3162
      %vm3164 = vweird.f32 %v2805
      %vm3165 = vweird.f32 %v3159
      %vm3166 = vmor %vm3164, %vm3165
      %v3167 = vsel %vm3166, %v3159, %v3163
      %v3168 = vand.u32 2147483647, %v2805
      %vm3169 = vcmp.eq.f32.partialorder %v3168, 8.507059e+37
      %v3170 = vand.u32 %v2805, 2147483648
      %v3171 = vor.u32 1.1754944e-38, %v3170
      %v3172 = vsel %vm3169, %v3171, %v3167
      %v3173 = vmul.f32 1.0, %v3172
      %v3174 = vrcp.pop %v2806
      %v3175 = vmul.f32 %v2806, %v3174
      %v3176 = vsub.f32 1.0, %v3175
      %v3177 = vmul.f32 %v3174, %v3176
      %v3178 = vadd.f32 %v3174, %v3177
      %vm3179 = vweird.f32 %v2806
      %vm3180 = vweird.f32 %v3174
      %vm3181 = vmor %vm3179, %vm3180
      %v3182 = vsel %vm3181, %v3174, %v3178
      %v3183 = vand.u32 2147483647, %v2806
      %vm3184 = vcmp.eq.f32.partialorder %v3183, 8.507059e+37
      %v3185 = vand.u32 %v2806, 2147483648
      %v3186 = vor.u32 1.1754944e-38, %v3185
      %v3187 = vsel %vm3184, %v3186, %v3182
      %v3188 = vmul.f32 1.0, %v3187
      %v3189 = vrcp.pop %v2807
      %v3190 = vmul.f32 %v2807, %v3189
      %v3191 = vsub.f32 1.0, %v3190
      %v3192 = vmul.f32 %v3189, %v3191
      %v3193 = vadd.f32 %v3189, %v3192
      %vm3194 = vweird.f32 %v2807
      %vm3195 = vweird.f32 %v3189
      %vm3196 = vmor %vm3194, %vm3195
      %v3197 = vsel %vm3196, %v3189, %v3193
      %v3198 = vand.u32 2147483647, %v2807
      %vm3199 = vcmp.eq.f32.partialorder %v3198, 8.507059e+37
      %v3200 = vand.u32 %v2807, 2147483648
      %v3201 = vor.u32 1.1754944e-38, %v3200
      %v3202 = vsel %vm3199, %v3201, %v3197
      %v3203 = vmul.f32 1.0, %v3202
      %v3204 = vrcp.pop %v2808
      %v3205 = vmul.f32 %v2808, %v3204
      %v3206 = vsub.f32 1.0, %v3205
      %v3207 = vmul.f32 %v3204, %v3206
      %v3208 = vadd.f32 %v3204, %v3207
      %vm3209 = vweird.f32 %v2808
      %vm3210 = vweird.f32 %v3204
      %vm3211 = vmor %vm3209, %vm3210
      %v3212 = vsel %vm3211, %v3204, %v3208
      %v3213 = vand.u32 2147483647, %v2808
      %vm3214 = vcmp.eq.f32.partialorder %v3213, 8.507059e+37
      %v3215 = vand.u32 %v2808, 2147483648
      %v3216 = vor.u32 1.1754944e-38, %v3215
      %v3217 = vsel %vm3214, %v3216, %v3212
      %v3218 = vmul.f32 1.0, %v3217
      %v3219 = vrcp.pop %v2809
      %v3220 = vmul.f32 %v2809, %v3219
      %v3221 = vsub.f32 1.0, %v3220
      %v3222 = vmul.f32 %v3219, %v3221
      %v3223 = vadd.f32 %v3219, %v3222
      %vm3224 = vweird.f32 %v2809
      %vm3225 = vweird.f32 %v3219
      %vm3226 = vmor %vm3224, %vm3225
      %v3227 = vsel %vm3226, %v3219, %v3223
      %v3228 = vand.u32 2147483647, %v2809
      %vm3229 = vcmp.eq.f32.partialorder %v3228, 8.507059e+37
      %v3230 = vand.u32 %v2809, 2147483648
      %v3231 = vor.u32 1.1754944e-38, %v3230
      %v3232 = vsel %vm3229, %v3231, %v3227
      %v3233 = vmul.f32 1.0, %v3232
      %v3234 = vrcp.pop %v2810
      %v3235 = vmul.f32 %v2810, %v3234
      %v3236 = vsub.f32 1.0, %v3235
      %v3237 = vmul.f32 %v3234, %v3236
      %v3238 = vadd.f32 %v3234, %v3237
      %vm3239 = vweird.f32 %v2810
      %vm3240 = vweird.f32 %v3234
      %vm3241 = vmor %vm3239, %vm3240
      %v3242 = vsel %vm3241, %v3234, %v3238
      %v3243 = vand.u32 2147483647, %v2810
      %vm3244 = vcmp.eq.f32.partialorder %v3243, 8.507059e+37
      %v3245 = vand.u32 %v2810, 2147483648
      %v3246 = vor.u32 1.1754944e-38, %v3245
      %v3247 = vsel %vm3244, %v3246, %v3242
      %v3248 = vmul.f32 1.0, %v3247
      %v3249 = vrcp.pop %v2811
      %v3250 = vmul.f32 %v2811, %v3249
      %v3251 = vsub.f32 1.0, %v3250
      %v3252 = vmul.f32 %v3249, %v3251
      %v3253 = vadd.f32 %v3249, %v3252
      %vm3254 = vweird.f32 %v2811
      %vm3255 = vweird.f32 %v3249
      %vm3256 = vmor %vm3254, %vm3255
      %v3257 = vsel %vm3256, %v3249, %v3253
      %v3258 = vand.u32 2147483647, %v2811
      %vm3259 = vcmp.eq.f32.partialorder %v3258, 8.507059e+37
      %v3260 = vand.u32 %v2811, 2147483648
      %v3261 = vor.u32 1.1754944e-38, %v3260
      %v3262 = vsel %vm3259, %v3261, %v3257
      %v3263 = vmul.f32 1.0, %v3262
      %v3264 = vrcp.pop %v2812
      %v3265 = vmul.f32 %v2812, %v3264
      %v3266 = vsub.f32 1.0, %v3265
      %v3267 = vmul.f32 %v3264, %v3266
      %v3268 = vadd.f32 %v3264, %v3267
      %vm3269 = vweird.f32 %v2812
      %vm3270 = vweird.f32 %v3264
      %vm3271 = vmor %vm3269, %vm3270
      %v3272 = vsel %vm3271, %v3264, %v3268
      %v3273 = vand.u32 2147483647, %v2812
      %vm3274 = vcmp.eq.f32.partialorder %v3273, 8.507059e+37
      %v3275 = vand.u32 %v2812, 2147483648
      %v3276 = vor.u32 1.1754944e-38, %v3275
      %v3277 = vsel %vm3274, %v3276, %v3272
      %v3278 = vmul.f32 1.0, %v3277
      %v3279 = vrcp.pop %v2813
      %v3280 = vmul.f32 %v2813, %v3279
      %v3281 = vsub.f32 1.0, %v3280
      %v3282 = vmul.f32 %v3279, %v3281
      %v3283 = vadd.f32 %v3279, %v3282
      %vm3284 = vweird.f32 %v2813
      %vm3285 = vweird.f32 %v3279
      %vm3286 = vmor %vm3284, %vm3285
      %v3287 = vsel %vm3286, %v3279, %v3283
      %v3288 = vand.u32 2147483647, %v2813
      %vm3289 = vcmp.eq.f32.partialorder %v3288, 8.507059e+37
      %v3290 = vand.u32 %v2813, 2147483648
      %v3291 = vor.u32 1.1754944e-38, %v3290
      %v3292 = vsel %vm3289, %v3291, %v3287
      %v3293 = vmul.f32 1.0, %v3292
      %vm3294 = vcmask 7168
      %3295 = vst.msk [vmem:[%s172] sm:$0xff] %vm3294, %v2828
      %3296 = vst.msk [vmem:[%s172 + $0x8] sm:$0xff] %vm3294, %v2843
      %3297 = vst.msk [vmem:[%s172 + $0x10] sm:$0xff] %vm3294, %v2858
      %3298 = vst.msk [vmem:[%s172 + $0x18] sm:$0xff] %vm3294, %v2873
      %3299 = vst.msk [vmem:[%s172 + $0x20] sm:$0xff] %vm3294, %v2888
      %3300 = vst.msk [vmem:[%s172 + $0x28] sm:$0xff] %vm3294, %v2903
      %3301 = vst.msk [vmem:[%s172 + $0x30] sm:$0xff] %vm3294, %v2918
      %3302 = vst.msk [vmem:[%s172 + $0x38] sm:$0xff] %vm3294, %v2933
      %3303 = vst.msk [vmem:[%s172 + $0x40] sm:$0xff] %vm3294, %v2948
      %3304 = vst.msk [vmem:[%s172 + $0x48] sm:$0xff] %vm3294, %v2963
      %3305 = vst.msk [vmem:[%s172 + $0x50] sm:$0xff] %vm3294, %v2978
      %3306 = vst.msk [vmem:[%s172 + $0x58] sm:$0xff] %vm3294, %v2993
      %3307 = vst.msk [vmem:[%s172 + $0x60] sm:$0xff] %vm3294, %v3008
      %3308 = vst.msk [vmem:[%s172 + $0x68] sm:$0xff] %vm3294, %v3023
      %3309 = vst.msk [vmem:[%s172 + $0x70] sm:$0xff] %vm3294, %v3038
      %3310 = vst.msk [vmem:[%s172 + $0x78] sm:$0xff] %vm3294, %v3053
      %3311 = vst.msk [vmem:[%s172 + $0x80] sm:$0xff] %vm3294, %v3068
      %3312 = vst.msk [vmem:[%s172 + $0x88] sm:$0xff] %vm3294, %v3083
      %3313 = vst.msk [vmem:[%s172 + $0x90] sm:$0xff] %vm3294, %v3098
      %3314 = vst.msk [vmem:[%s172 + $0x98] sm:$0xff] %vm3294, %v3113
      %3315 = vst.msk [vmem:[%s172 + $0xa0] sm:$0xff] %vm3294, %v3128
      %3316 = vst.msk [vmem:[%s172 + $0xa8] sm:$0xff] %vm3294, %v3143
      %3317 = vst.msk [vmem:[%s172 + $0xb0] sm:$0xff] %vm3294, %v3158
      %3318 = vst.msk [vmem:[%s172 + $0xb8] sm:$0xff] %vm3294, %v3173
      %3319 = vst.msk [vmem:[%s172 + $0xc0] sm:$0xff] %vm3294, %v3188
      %3320 = vst.msk [vmem:[%s172 + $0xc8] sm:$0xff] %vm3294, %v3203
      %3321 = vst.msk [vmem:[%s172 + $0xd0] sm:$0xff] %vm3294, %v3218
      %3322 = vst.msk [vmem:[%s172 + $0xd8] sm:$0xff] %vm3294, %v3233
      %3323 = vst.msk [vmem:[%s172 + $0xe0] sm:$0xff] %vm3294, %v3248
      %3324 = vst.msk [vmem:[%s172 + $0xe8] sm:$0xff] %vm3294, %v3263
      %3325 = vst.msk [vmem:[%s172 + $0xf0] sm:$0xff] %vm3294, %v3278
      %3326 = vst.msk [vmem:[%s172 + $0xf8] sm:$0xff] %vm3294, %v3293
      %p3327 = scmp.lt.s32.totalorder %s16, 1
      %s3328 = scalar_select %p3327, %s16, 1
      %s3329 = smul.addr %s3328, 32
      %s3330 = smul.addr %s3329, 8
      %s3331 = scalar_lea.vmem %s3, %s3330
      // Predicated region
      $region33: #{esf_forward.6} parent=31 // pred_check
        %p3332 = pneg %p102
      $region34: #{esf_forward.6} parent=31 // pred_check_branch
        %3334 = sbr.rel (%p3332) target = $region36
      $region35: #{esf_forward.6} parent=31 // pred_region
        _
      $region36: #{esf_forward.6} parent=31 // pred_fallthru
        _
    $region32: #{esf_forward.6} parent=5 // pred_fallthru
      _
    %p3335 = scmp.le.s32.totalorder 2, %s11
    // Predicated region
    $region37: #{esf_forward.6} parent=5 // pred_check
      %p3336 = pneg %p3335
    $region38: #{esf_forward.6} parent=5 // pred_check_branch
      %3338 = sbr.rel (%p3336) target = $region40
    $region39: #{esf_forward.6} parent=5 // pred_region
      %s3339 = ssub.s32 %s11, 2
      // Predicated region
      $region41: #{esf_forward.6} parent=39 // pred_check
        %p3340 = pneg %p108
      $region42: #{esf_forward.6} parent=39 // pred_check_branch
        %3342 = sbr.rel (%p3340) target = $region44
      $region43: #{esf_forward.6} parent=39 // pred_region
        %p3343 = scmp.lt.s32.totalorder %s17, 1
        %s3344 = scalar_select %p3343, %s17, 1
        %s3345 = smul.addr %s3344, 32
        %s3346 = smul.addr %s3345, 8
        %s3347 = scalar_lea.vmem %s3, %s3346
      $region44: #{esf_forward.6} parent=39 // pred_fallthru
        _
    $region40: #{esf_forward.6} parent=5 // pred_fallthru
      _
  $region6: #{esf_forward.6} parent=0 // loop_footer
    %s15 = sadd.s32 1, %s11
  $region7: #{esf_forward.6} parent=0 // loop_footer_branch
    %10 = sbr.rel target = $region3
  $region8: #{esf_forward.6} parent=0 // loop_exit
    _

// kernel: esf_forward.9
$region0: #{esf_forward.9}
  #allocation0 [shape = 'u32[]', space=smem, size = 0x4, offset = 0x4, fixed_abs, tag = 'smem constant byte address 0x4 - core index']
  #allocation1 [shape = 'u32[72,128]{1,0:T(1,128)}', space=vmem, size = 0x9000, scoped, tag = 'internal scratch']
  %s0 = inlined_call_operand.vmem [shape: f32[2,18,18,32], index: 0, kind: input, shape index: {}]
  %s1 = inlined_call_operand.vmem [shape: bf16[9,32,32], index: 1, kind: input, shape index: {}]
  %s2 = inlined_call_operand.vmem [shape: f32[1,32], index: 2, kind: input, shape index: {}]
  %s3 = inlined_call_operand.hbm [shape: f32[2,256,32], index: 3, kind: output, shape index: {}]
  %s4 = sld [smem:[#allocation0]]
  $region45: #{esf_forward.9} parent=0
    _
  %s6 = ssub.s32 1, %s4
  %s7 = scalar_select 0, %s6, %s4
  $region1: #{esf_forward.9} parent=0
    #allocation2 [shape = 'u8[262144]{0}', space=vmem, size = 0x40000, scoped, tag = 'output window, operand 0']
    #allocation3 [shape = 's32[2]{0}', space=sflag, size = 0x8, scoped, tag = 'scoped memory for esf_forward.9']
    %8 = vsyncpa [#allocation3], 0
    %s9 = scalar_lea.sflag [#allocation3], 1
    %10 = vsyncpa %s9, 0
    loop: start=0, step=1, limit=4
    $region2: #{esf_forward.9} parent=1 // loop_pre_header
      _
    $region3: #{esf_forward.9} parent=1 // loop_header
      %s12 = sphi 0, %s16
      %p13 = scmp.ge.s32.totalorder %s12, 4
      %s22 = sphi 0, %s24
      %s25 = sphi 0, %s22
      %s26 = sphi 0, %s25
      %s42 = sphi 0, %s26
      %s46 = sphi 0, %s46
      %s48 = sphi 0, %s46
      %s49 = sphi 0, %s48
      %s63 = sphi 0, %s49
      %s67 = sphi 0, %s67
      %s69 = sphi 0, %s67
      %s70 = sphi 0, %s69
      %s84 = sphi 0, %s70
      %s90 = sphi 0, %s92
      %s93 = sphi 0, %s90
      %s94 = sphi 0, %s93
      %s110 = sphi 0, %s94
    $region4: #{esf_forward.9} parent=1 // loop_header_branch
      %15 = sbr.rel (%p13) target = $region8
    $region5: #{esf_forward.9} parent=1 // loop_body
      %s17 = ssub.s32 %s12, 1
      %s18 = ssub.s32 %s12, 2
      %s19 = sadd.s32 %s12, 1
      %s20 = ssub.s32 %s12, %s19
      %p21 = scmp.eq.s32.totalorder %s20, 0
      %s23 = sadd.s32 %s22, 1
      %s24 = scalar_select %p21, %s22, %s23
      %p27 = pneg %p21
      %p28 = scmp.eq.s32.totalorder %s12, 1
      %p29 = por %p27, %p28
      %p30 = scmp.ne.s32.totalorder %s22, %s25
      %p31 = scmp.eq.s32.totalorder %s12, 0
      %p32 = por %p30, %p31
      %p33 = scmp.ne.s32.totalorder %s22, %s25
      %p34 = scmp.eq.s32.totalorder %s17, 1
      %p35 = por %p33, %p34
      %p36 = scmp.ne.s32.totalorder %s25, %s26
      %p37 = scmp.eq.s32.totalorder %s17, 0
      %p38 = por %p36, %p37
      %p39 = scmp.ne.s32.totalorder %s25, %s26
      %p40 = scmp.eq.s32.totalorder %s18, 1
      %p41 = por %p39, %p40
      %p43 = scmp.ne.s32.totalorder %s26, %s42
      %p44 = scmp.eq.s32.totalorder %s18, 0
      %p45 = por %p43, %p44
      %s47 = sadd.s32 %s46, 1
      %p50 = scmp.eq.s32.totalorder %s12, 1
      %p51 = scmp.ne.s32.totalorder %s46, %s48
      %p52 = scmp.eq.s32.totalorder %s12, 0
      %p53 = por %p51, %p52
      %p54 = scmp.ne.s32.totalorder %s46, %s48
      %p55 = scmp.eq.s32.totalorder %s17, 1
      %p56 = por %p54, %p55
      %p57 = scmp.ne.s32.totalorder %s48, %s49
      %p58 = scmp.eq.s32.totalorder %s17, 0
      %p59 = por %p57, %p58
      %p60 = scmp.ne.s32.totalorder %s48, %s49
      %p61 = scmp.eq.s32.totalorder %s18, 1
      %p62 = por %p60, %p61
      %p64 = scmp.ne.s32.totalorder %s49, %s63
      %p65 = scmp.eq.s32.totalorder %s18, 0
      %p66 = por %p64, %p65
      %s68 = sadd.s32 %s67, 1
      %p71 = scmp.eq.s32.totalorder %s12, 1
      %p72 = scmp.ne.s32.totalorder %s67, %s69
      %p73 = scmp.eq.s32.totalorder %s12, 0
      %p74 = por %p72, %p73
      %p75 = scmp.ne.s32.totalorder %s67, %s69
      %p76 = scmp.eq.s32.totalorder %s17, 1
      %p77 = por %p75, %p76
      %p78 = scmp.ne.s32.totalorder %s69, %s70
      %p79 = scmp.eq.s32.totalorder %s17, 0
      %p80 = por %p78, %p79
      %p81 = scmp.ne.s32.totalorder %s69, %s70
      %p82 = scmp.eq.s32.totalorder %s18, 1
      %p83 = por %p81, %p82
      %p85 = scmp.ne.s32.totalorder %s70, %s84
      %p86 = scmp.eq.s32.totalorder %s18, 0
      %p87 = por %p85, %p86
      %s88 = ssub.s32 %s12, %s19
      %p89 = scmp.eq.s32.totalorder %s88, 0
      %s91 = sadd.s32 %s90, 1
      %s92 = scalar_select %p89, %s90, %s91
      %p95 = pneg %p89
      %p96 = scmp.eq.s32.totalorder %s12, 1
      %p97 = por %p95, %p96
      %p98 = scmp.ne.s32.totalorder %s90, %s93
      %p99 = scmp.eq.s32.totalorder %s12, 0
      %p100 = por %p98, %p99
      %p101 = scmp.ne.s32.totalorder %s90, %s93
      %p102 = scmp.eq.s32.totalorder %s17, 1
      %p103 = por %p101, %p102
      %p104 = scmp.ne.s32.totalorder %s93, %s94
      %p105 = scmp.eq.s32.totalorder %s17, 0
      %p106 = por %p104, %p105
      %p107 = scmp.ne.s32.totalorder %s93, %s94
      %p108 = scmp.eq.s32.totalorder %s18, 1
      %p109 = por %p107, %p108
      %p111 = scmp.ne.s32.totalorder %s94, %s110
      %p112 = scmp.eq.s32.totalorder %s18, 0
      %p113 = por %p111, %p112
      %p114 = scmp.le.s32.totalorder 1, %s12
      %p115 = scmp.lt.s32.totalorder %s12, 3
      %p116 = pnand %p114, %p115
      %p117 = pneg %p116
      // Predicated region
      $region9: #{esf_forward.9} parent=5 // pred_check
        _
      $region10: #{esf_forward.9} parent=5 // pred_check_branch
        %119 = sbr.rel (%p116) target = $region12
      $region11: #{esf_forward.9} parent=5 // pred_region
        %s120 = ssub.s32 %s12, 1
        // Predicated region
        $region13: #{esf_forward.9} parent=11 // pred_check
          %p121 = pneg %p59
        $region14: #{esf_forward.9} parent=11 // pred_check_branch
          %123 = sbr.rel (%p121) target = $region16
        $region15: #{esf_forward.9} parent=11 // pred_region
          _
        $region16: #{esf_forward.9} parent=11 // pred_fallthru
          _
        // Predicated region
        $region17: #{esf_forward.9} parent=11 // pred_check
          %p124 = pneg %p80
        $region18: #{esf_forward.9} parent=11 // pred_check_branch
          %126 = sbr.rel (%p124) target = $region20
        $region19: #{esf_forward.9} parent=11 // pred_region
          _
        $region20: #{esf_forward.9} parent=11 // pred_fallthru
          _
      $region12: #{esf_forward.9} parent=5 // pred_fallthru
        _
      %p127 = scmp.lt.s32.totalorder %s12, 2
      // Predicated region
      $region21: #{esf_forward.9} parent=5 // pred_check
        %p128 = pneg %p127
      $region22: #{esf_forward.9} parent=5 // pred_check_branch
        %130 = sbr.rel (%p128) target = $region24
      $region23: #{esf_forward.9} parent=5 // pred_region
        // Predicated region
        $region25: #{esf_forward.9} parent=23 // pred_check
          %p131 = pneg %p32
        $region26: #{esf_forward.9} parent=23 // pred_check_branch
          %133 = sbr.rel (%p131) target = $region28
        $region27: #{esf_forward.9} parent=23 // pred_region
          %p134 = scmp.lt.s32.totalorder %s12, 1
          %s135 = scalar_select %p134, %s12, 1
          %s136 = smul.addr %s135, 54
          %s137 = smul.addr %s136, 8
          %s138 = scalar_lea.vmem %s0, %s137
        $region28: #{esf_forward.9} parent=23 // pred_fallthru
          _
      $region24: #{esf_forward.9} parent=5 // pred_fallthru
        _
      %p139 = scmp.le.s32.totalorder 1, %s12
      %p140 = scmp.lt.s32.totalorder %s12, 3
      %p141 = pnand %p139, %p140
      %p142 = pneg %p141
      // Predicated region
      $region29: #{esf_forward.9} parent=5 // pred_check
        _
      $region30: #{esf_forward.9} parent=5 // pred_check_branch
        %144 = sbr.rel (%p141) target = $region32
      $region31: #{esf_forward.9} parent=5 // pred_region
        %s145 = ssub.s32 %s12, 1
        %p146 = scmp.lt.s32.totalorder %s17, 1
        %s147 = scalar_select %p146, %s17, 1
        %s148 = smul.addr %s147, 54
        %s149 = smul.addr %s148, 8
        %s150 = scalar_lea.vmem %s0, %s149
        %p151 = pneg %p38
        %p152 = pneg %p35
        %p153 = pneg %p59
        %p154 = pneg %p56
        %p155 = pneg %p80
        %p156 = pneg %p77
        %p157 = pneg %p106
        %p158 = pneg %p103
        %s159 = sand.u32 %s93, 1
        %s160 = scalar_lea.sflag [#allocation3], %s159
        %s161 = sand.u32 %s93, 1
        %s162 = smul.addr %s161, 256
        %s163 = scalar_lea.vmem [#allocation2], %s162
        %p164 = scmp.lt.s32.totalorder %s17, 1
        %s165 = scalar_select %p164, %s17, 1
        %s166 = smul.addr %s165, 54
        %s167 = smul.addr %s166, 8
        %s168 = scalar_lea.vmem %s0, %s167
        %v170 = vld [vmem:[%s168] sm:$0xff]
        %v171 = vld [vmem:[%s168 + $0x8] sm:$0xff]
        %v172 = vld [vmem:[%s168 + $0x18] sm:$0xff]
        %v173 = vld [vmem:[%s168 + $0x20] sm:$0xff]
        %v174 = vld [vmem:[%s168 + $0x30] sm:$0xff]
        %v175 = vld [vmem:[%s168 + $0x38] sm:$0xff]
        %v176 = vld [vmem:[%s168 + $0x48] sm:$0xff]
        %v177 = vld [vmem:[%s168 + $0x50] sm:$0xff]
        %v178 = vld [vmem:[%s168 + $0x60] sm:$0xff]
        %v179 = vld [vmem:[%s168 + $0x68] sm:$0xff]
        %v180 = vld [vmem:[%s168 + $0x78] sm:$0xff]
        %v181 = vld [vmem:[%s168 + $0x80] sm:$0xff]
        %v182 = vld [vmem:[%s168 + $0x90] sm:$0xff]
        %v183 = vld [vmem:[%s168 + $0x98] sm:$0xff]
        %v184 = vld [vmem:[%s168 + $0xa8] sm:$0xff]
        %v185 = vld [vmem:[%s168 + $0xb0] sm:$0xff]
        %v186 = vld [vmem:[%s168 + $0xc0] sm:$0xff]
        %v187 = vld [vmem:[%s168 + $0xc8] sm:$0xff]
        %v188 = vld [vmem:[%s168 + $0xd8] sm:$0xff]
        %v189 = vld [vmem:[%s168 + $0xe0] sm:$0xff]
        %v190 = vld [vmem:[%s168 + $0xf0] sm:$0xff]
        %v191 = vld [vmem:[%s168 + $0xf8] sm:$0xff]
        %v192 = vld [vmem:[%s168 + $0x108] sm:$0xff]
        %v193 = vld [vmem:[%s168 + $0x110] sm:$0xff]
        %v194 = vld [vmem:[%s168 + $0x120] sm:$0xff]
        %v195 = vld [vmem:[%s168 + $0x128] sm:$0xff]
        %v196 = vld [vmem:[%s168 + $0x138] sm:$0xff]
        %v197 = vld [vmem:[%s168 + $0x140] sm:$0xff]
        %v198 = vld [vmem:[%s168 + $0x150] sm:$0xff]
        %v199 = vld [vmem:[%s168 + $0x158] sm:$0xff]
        %v200 = vld [vmem:[%s168 + $0x168] sm:$0xff]
        %v201 = vld [vmem:[%s168 + $0x170] sm:$0xff]
        %v202 = vpack.c.bf16 %v171, %v170
        %v203 = vpack.c.bf16 %v173, %v172
        %v204 = vpack.c.bf16 %v175, %v174
        %v205 = vpack.c.bf16 %v177, %v176
        %v206 = vpack.c.bf16 %v179, %v178
        %v207 = vpack.c.bf16 %v181, %v180
        %v208 = vpack.c.bf16 %v183, %v182
        %v209 = vpack.c.bf16 %v185, %v184
        %v210 = vpack.c.bf16 %v187, %v186
        %v211 = vpack.c.bf16 %v189, %v188
        %v212 = vpack.c.bf16 %v191, %v190
        %v213 = vpack.c.bf16 %v193, %v192
        %v214 = vpack.c.bf16 %v195, %v194
        %v215 = vpack.c.bf16 %v197, %v196
        %v216 = vpack.c.bf16 %v199, %v198
        %v217 = vpack.c.bf16 %v201, %v200
        %v218 = vld [vmem:[%s1] sm:$0xf]
        %v219 = vld [vmem:[%s1 + $0x4] sm:$0xf]
        %v220 = vld [vmem:[%s1 + $0x8] sm:$0xf]
        %v221 = vld [vmem:[%s1 + $0xc] sm:$0xf]
        %v222 = vld [vmem:[%s168 + $0x1] sm:$0xff]
        %v223 = vld [vmem:[%s168 + $0x9] sm:$0xff]
        %v224 = vld [vmem:[%s168 + $0x19] sm:$0xff]
        %v225 = vld [vmem:[%s168 + $0x21] sm:$0xff]
        %v226 = vld [vmem:[%s168 + $0x31] sm:$0xff]
        %v227 = vld [vmem:[%s168 + $0x39] sm:$0xff]
        %v228 = vld [vmem:[%s168 + $0x49] sm:$0xff]
        %v229 = vld [vmem:[%s168 + $0x51] sm:$0xff]
        %v230 = vld [vmem:[%s168 + $0x61] sm:$0xff]
        %v231 = vld [vmem:[%s168 + $0x69] sm:$0xff]
        %v232 = vld [vmem:[%s168 + $0x79] sm:$0xff]
        %v233 = vld [vmem:[%s168 + $0x81] sm:$0xff]
        %v234 = vld [vmem:[%s168 + $0x91] sm:$0xff]
        %v235 = vld [vmem:[%s168 + $0x99] sm:$0xff]
        %v236 = vld [vmem:[%s168 + $0xa9] sm:$0xff]
        %v237 = vld [vmem:[%s168 + $0xb1] sm:$0xff]
        %v238 = vld [vmem:[%s168 + $0xc1] sm:$0xff]
        %v239 = vld [vmem:[%s168 + $0xc9] sm:$0xff]
        %v240 = vld [vmem:[%s168 + $0xd9] sm:$0xff]
        %v241 = vld [vmem:[%s168 + $0xe1] sm:$0xff]
        %v242 = vld [vmem:[%s168 + $0xf1] sm:$0xff]
        %v243 = vld [vmem:[%s168 + $0xf9] sm:$0xff]
        %v244 = vld [vmem:[%s168 + $0x109] sm:$0xff]
        %v245 = vld [vmem:[%s168 + $0x111] sm:$0xff]
        %v246 = vld [vmem:[%s168 + $0x121] sm:$0xff]
        %v247 = vld [vmem:[%s168 + $0x129] sm:$0xff]
        %v248 = vld [vmem:[%s168 + $0x139] sm:$0xff]
        %v249 = vld [vmem:[%s168 + $0x141] sm:$0xff]
        %v250 = vld [vmem:[%s168 + $0x151] sm:$0xff]
        %v251 = vld [vmem:[%s168 + $0x159] sm:$0xff]
        %v252 = vld [vmem:[%s168 + $0x169] sm:$0xff]
        %v253 = vld [vmem:[%s168 + $0x171] sm:$0xff]
        %v254 = vpack.c.bf16 %v223, %v222
        %v255 = vpack.c.bf16 %v225, %v224
        %v256 = vpack.c.bf16 %v227, %v226
        %v257 = vpack.c.bf16 %v229, %v228
        %v258 = vpack.c.bf16 %v231, %v230
        %v259 = vpack.c.bf16 %v233, %v232
        %v260 = vpack.c.bf16 %v235, %v234
        %v261 = vpack.c.bf16 %v237, %v236
        %v262 = vpack.c.bf16 %v239, %v238
        %v263 = vpack.c.bf16 %v241, %v240
        %v264 = vpack.c.bf16 %v243, %v242
        %v265 = vpack.c.bf16 %v245, %v244
        %v266 = vpack.c.bf16 %v247, %v246
        %v267 = vpack.c.bf16 %v249, %v248
        %v268 = vpack.c.bf16 %v251, %v250
        %v269 = vpack.c.bf16 %v253, %v252
        %s270 = scalar_lea.vmem %s1, 16
        %v271 = vld [vmem:[%s270] sm:$0xf]
        %v272 = vld [vmem:[%s270 + $0x4] sm:$0xf]
        %v273 = vld [vmem:[%s270 + $0x8] sm:$0xf]
        %v274 = vld [vmem:[%s270 + $0xc] sm:$0xf]
        %v279 = vunpack.c.l.b16 %v271
        %v280 = vunpack.c.l.b16 %v272
        %v281 = vunpack.c.l.b16 %v273
        %v282 = vunpack.c.l.b16 %v274
        %v283 = vpack.c.b16 %v280, %v279
        %v284 = vpack.c.b16 %v282, %v281
        %vm287 = vcmask 261120
        %v289 = vsel %vm287, %v254, 0
        %v292 = vsel %vm287, %v255, 0
        %v295 = vsel %vm287, %v256, 0
        %v298 = vsel %vm287, %v257, 0
        %v301 = vsel %vm287, %v258, 0
        %v304 = vsel %vm287, %v259, 0
        %v307 = vsel %vm287, %v260, 0
        %v310 = vsel %vm287, %v261, 0
        %v313 = vsel %vm287, %v262, 0
        %v316 = vsel %vm287, %v263, 0
        %v319 = vsel %vm287, %v264, 0
        %v322 = vsel %vm287, %v265, 0
        %v325 = vsel %vm287, %v266, 0
        %v328 = vsel %vm287, %v267, 0
        %v331 = vsel %vm287, %v268, 0
        %v334 = vsel %vm287, %v269, 0
        %336 = vmatpush.bf16.msra.mxu0 0
        %337 = vmatpush.bf16.msra.mxu0 0
        %338 = vmatpush.bf16.msra.mxu0 0
        %339 = vmatpush.bf16.msra.mxu0 0
        %340 = vmatpush.bf16.msra.mxu0 0
        %341 = vmatpush.bf16.msra.mxu0 0
        %342 = vmatpush.bf16.msra.mxu0 %v284
        %343 = vmatpush.bf16.msra.mxu0 %v283
        %344 = vmatmul.bf16.gmra.mxu0 %v289
        %v345 = vpop.f32.mrf.mxu0
        %v346 = vadd.f32 0.0, %v345
        %v347 = vpop.f32.mrf.mxu0
        %v348 = vadd.f32 0.0, %v347
        %349 = vmatmul.bf16.gmra.mxu0 %v292
        %v350 = vpop.f32.mrf.mxu0
        %v351 = vadd.f32 0.0, %v350
        %v352 = vpop.f32.mrf.mxu0
        %v353 = vadd.f32 0.0, %v352
        %354 = vmatmul.bf16.gmra.mxu0 %v295
        %v355 = vpop.f32.mrf.mxu0
        %v356 = vadd.f32 0.0, %v355
        %v357 = vpop.f32.mrf.mxu0
        %v358 = vadd.f32 0.0, %v357
        %359 = vmatmul.bf16.gmra.mxu0 %v298
        %v360 = vpop.f32.mrf.mxu0
        %v361 = vadd.f32 0.0, %v360
        %v362 = vpop.f32.mrf.mxu0
        %v363 = vadd.f32 0.0, %v362
        %364 = vmatmul.bf16.gmra.mxu0 %v301
        %v365 = vpop.f32.mrf.mxu0
        %v366 = vadd.f32 0.0, %v365
        %v367 = vpop.f32.mrf.mxu0
        %v368 = vadd.f32 0.0, %v367
        %369 = vmatmul.bf16.gmra.mxu0 %v304
        %v370 = vpop.f32.mrf.mxu0
        %v371 = vadd.f32 0.0, %v370
        %v372 = vpop.f32.mrf.mxu0
        %v373 = vadd.f32 0.0, %v372
        %374 = vmatmul.bf16.gmra.mxu0 %v307
        %v375 = vpop.f32.mrf.mxu0
        %v376 = vadd.f32 0.0, %v375
        %v377 = vpop.f32.mrf.mxu0
        %v378 = vadd.f32 0.0, %v377
        %379 = vmatmul.bf16.gmra.mxu0 %v310
        %v380 = vpop.f32.mrf.mxu0
        %v381 = vadd.f32 0.0, %v380
        %v382 = vpop.f32.mrf.mxu0
        %v383 = vadd.f32 0.0, %v382
        %384 = vmatmul.bf16.gmra.mxu0 %v313
        %v385 = vpop.f32.mrf.mxu0
        %v386 = vadd.f32 0.0, %v385
        %v387 = vpop.f32.mrf.mxu0
        %v388 = vadd.f32 0.0, %v387
        %389 = vmatmul.bf16.gmra.mxu0 %v316
        %v390 = vpop.f32.mrf.mxu0
        %v391 = vadd.f32 0.0, %v390
        %v392 = vpop.f32.mrf.mxu0
        %v393 = vadd.f32 0.0, %v392
        %394 = vmatmul.bf16.gmra.mxu0 %v319
        %v395 = vpop.f32.mrf.mxu0
        %v396 = vadd.f32 0.0, %v395
        %v397 = vpop.f32.mrf.mxu0
        %v398 = vadd.f32 0.0, %v397
        %399 = vmatmul.bf16.gmra.mxu0 %v322
        %v400 = vpop.f32.mrf.mxu0
        %v401 = vadd.f32 0.0, %v400
        %v402 = vpop.f32.mrf.mxu0
        %v403 = vadd.f32 0.0, %v402
        %404 = vmatmul.bf16.gmra.mxu0 %v325
        %v405 = vpop.f32.mrf.mxu0
        %v406 = vadd.f32 0.0, %v405
        %v407 = vpop.f32.mrf.mxu0
        %v408 = vadd.f32 0.0, %v407
        %409 = vmatmul.bf16.gmra.mxu0 %v328
        %v410 = vpop.f32.mrf.mxu0
        %v411 = vadd.f32 0.0, %v410
        %v412 = vpop.f32.mrf.mxu0
        %v413 = vadd.f32 0.0, %v412
        %414 = vmatmul.bf16.gmra.mxu0 %v331
        %v415 = vpop.f32.mrf.mxu0
        %v416 = vadd.f32 0.0, %v415
        %v417 = vpop.f32.mrf.mxu0
        %v418 = vadd.f32 0.0, %v417
        %419 = vmatmul.bf16.gmra.mxu0 %v334
        %v420 = vpop.f32.mrf.mxu0
        %v421 = vadd.f32 0.0, %v420
        %v422 = vpop.f32.mrf.mxu0
        %v423 = vadd.f32 0.0, %v422
        %424 = vdwg.mxu0
        %v429 = vunpack.c.l.b16 %v218
        %v430 = vunpack.c.l.b16 %v219
        %v431 = vunpack.c.l.b16 %v220
        %v432 = vunpack.c.l.b16 %v221
        %v433 = vpack.c.b16 %v430, %v429
        %v434 = vpack.c.b16 %v432, %v431
        %v438 = vsel %vm287, %v202, 0
        %v441 = vsel %vm287, %v203, 0
        %v444 = vsel %vm287, %v204, 0
        %v447 = vsel %vm287, %v205, 0
        %v450 = vsel %vm287, %v206, 0
        %v453 = vsel %vm287, %v207, 0
        %v456 = vsel %vm287, %v208, 0
        %v459 = vsel %vm287, %v209, 0
        %v462 = vsel %vm287, %v210, 0
        %v465 = vsel %vm287, %v211, 0
        %v468 = vsel %vm287, %v212, 0
        %v471 = vsel %vm287, %v213, 0
        %v474 = vsel %vm287, %v214, 0
        %v477 = vsel %vm287, %v215, 0
        %v480 = vsel %vm287, %v216, 0
        %v483 = vsel %vm287, %v217, 0
        %485 = vmatpush.bf16.msra.mxu0 0
        %486 = vmatpush.bf16.msra.mxu0 0
        %487 = vmatpush.bf16.msra.mxu0 0
        %488 = vmatpush.bf16.msra.mxu0 0
        %489 = vmatpush.bf16.msra.mxu0 0
        %490 = vmatpush.bf16.msra.mxu0 0
        %491 = vmatpush.bf16.msra.mxu0 %v434
        %492 = vmatpush.bf16.msra.mxu0 %v433
        %493 = vmatmul.bf16.gmra.mxu0 %v438
        %v494 = vpop.f32.mrf.mxu0
        %v495 = vadd.f32 %v346, %v494
        %v496 = vpop.f32.mrf.mxu0
        %v497 = vadd.f32 %v348, %v496
        %498 = vmatmul.bf16.gmra.mxu0 %v441
        %v499 = vpop.f32.mrf.mxu0
        %v500 = vadd.f32 %v351, %v499
        %v501 = vpop.f32.mrf.mxu0
        %v502 = vadd.f32 %v353, %v501
        %503 = vmatmul.bf16.gmra.mxu0 %v444
        %v504 = vpop.f32.mrf.mxu0
        %v505 = vadd.f32 %v356, %v504
        %v506 = vpop.f32.mrf.mxu0
        %v507 = vadd.f32 %v358, %v506
        %508 = vmatmul.bf16.gmra.mxu0 %v447
        %v509 = vpop.f32.mrf.mxu0
        %v510 = vadd.f32 %v361, %v509
        %v511 = vpop.f32.mrf.mxu0
        %v512 = vadd.f32 %v363, %v511
        %513 = vmatmul.bf16.gmra.mxu0 %v450
        %v514 = vpop.f32.mrf.mxu0
        %v515 = vadd.f32 %v366, %v514
        %v516 = vpop.f32.mrf.mxu0
        %v517 = vadd.f32 %v368, %v516
        %518 = vmatmul.bf16.gmra.mxu0 %v453
        %v519 = vpop.f32.mrf.mxu0
        %v520 = vadd.f32 %v371, %v519
        %v521 = vpop.f32.mrf.mxu0
        %v522 = vadd.f32 %v373, %v521
        %523 = vmatmul.bf16.gmra.mxu0 %v456
        %v524 = vpop.f32.mrf.mxu0
        %v525 = vadd.f32 %v376, %v524
        %v526 = vpop.f32.mrf.mxu0
        %v527 = vadd.f32 %v378, %v526
        %528 = vmatmul.bf16.gmra.mxu0 %v459
        %v529 = vpop.f32.mrf.mxu0
        %v530 = vadd.f32 %v381, %v529
        %v531 = vpop.f32.mrf.mxu0
        %v532 = vadd.f32 %v383, %v531
        %533 = vmatmul.bf16.gmra.mxu0 %v462
        %v534 = vpop.f32.mrf.mxu0
        %v535 = vadd.f32 %v386, %v534
        %v536 = vpop.f32.mrf.mxu0
        %v537 = vadd.f32 %v388, %v536
        %538 = vmatmul.bf16.gmra.mxu0 %v465
        %v539 = vpop.f32.mrf.mxu0
        %v540 = vadd.f32 %v391, %v539
        %v541 = vpop.f32.mrf.mxu0
        %v542 = vadd.f32 %v393, %v541
        %543 = vmatmul.bf16.gmra.mxu0 %v468
        %v544 = vpop.f32.mrf.mxu0
        %v545 = vadd.f32 %v396, %v544
        %v546 = vpop.f32.mrf.mxu0
        %v547 = vadd.f32 %v398, %v546
        %548 = vmatmul.bf16.gmra.mxu0 %v471
        %v549 = vpop.f32.mrf.mxu0
        %v550 = vadd.f32 %v401, %v549
        %v551 = vpop.f32.mrf.mxu0
        %v552 = vadd.f32 %v403, %v551
        %553 = vmatmul.bf16.gmra.mxu0 %v474
        %v554 = vpop.f32.mrf.mxu0
        %v555 = vadd.f32 %v406, %v554
        %v556 = vpop.f32.mrf.mxu0
        %v557 = vadd.f32 %v408, %v556
        %558 = vmatmul.bf16.gmra.mxu0 %v477
        %v559 = vpop.f32.mrf.mxu0
        %v560 = vadd.f32 %v411, %v559
        %v561 = vpop.f32.mrf.mxu0
        %v562 = vadd.f32 %v413, %v561
        %563 = vmatmul.bf16.gmra.mxu0 %v480
        %v564 = vpop.f32.mrf.mxu0
        %v565 = vadd.f32 %v416, %v564
        %v566 = vpop.f32.mrf.mxu0
        %v567 = vadd.f32 %v418, %v566
        %568 = vmatmul.bf16.gmra.mxu0 %v483
        %v569 = vpop.f32.mrf.mxu0
        %v570 = vadd.f32 %v421, %v569
        %v571 = vpop.f32.mrf.mxu0
        %v572 = vadd.f32 %v423, %v571
        %573 = vdwg.mxu0
        %v574 = vld [vmem:[%s168 + $0x2] sm:$0xff]
        %v575 = vld [vmem:[%s168 + $0xa] sm:$0xff]
        %v576 = vld [vmem:[%s168 + $0x1a] sm:$0xff]
        %v577 = vld [vmem:[%s168 + $0x22] sm:$0xff]
        %v578 = vld [vmem:[%s168 + $0x32] sm:$0xff]
        %v579 = vld [vmem:[%s168 + $0x3a] sm:$0xff]
        %v580 = vld [vmem:[%s168 + $0x4a] sm:$0xff]
        %v581 = vld [vmem:[%s168 + $0x52] sm:$0xff]
        %v582 = vld [vmem:[%s168 + $0x62] sm:$0xff]
        %v583 = vld [vmem:[%s168 + $0x6a] sm:$0xff]
        %v584 = vld [vmem:[%s168 + $0x7a] sm:$0xff]
        %v585 = vld [vmem:[%s168 + $0x82] sm:$0xff]
        %v586 = vld [vmem:[%s168 + $0x92] sm:$0xff]
        %v587 = vld [vmem:[%s168 + $0x9a] sm:$0xff]
        %v588 = vld [vmem:[%s168 + $0xaa] sm:$0xff]
        %v589 = vld [vmem:[%s168 + $0xb2] sm:$0xff]
        %v590 = vld [vmem:[%s168 + $0xc2] sm:$0xff]
        %v591 = vld [vmem:[%s168 + $0xca] sm:$0xff]
        %v592 = vld [vmem:[%s168 + $0xda] sm:$0xff]
        %v593 = vld [vmem:[%s168 + $0xe2] sm:$0xff]
        %v594 = vld [vmem:[%s168 + $0xf2] sm:$0xff]
        %v595 = vld [vmem:[%s168 + $0xfa] sm:$0xff]
        %v596 = vld [vmem:[%s168 + $0x10a] sm:$0xff]
        %v597 = vld [vmem:[%s168 + $0x112] sm:$0xff]
        %v598 = vld [vmem:[%s168 + $0x122] sm:$0xff]
        %v599 = vld [vmem:[%s168 + $0x12a] sm:$0xff]
        %v600 = vld [vmem:[%s168 + $0x13a] sm:$0xff]
        %v601 = vld [vmem:[%s168 + $0x142] sm:$0xff]
        %v602 = vld [vmem:[%s168 + $0x152] sm:$0xff]
        %v603 = vld [vmem:[%s168 + $0x15a] sm:$0xff]
        %v604 = vld [vmem:[%s168 + $0x16a] sm:$0xff]
        %v605 = vld [vmem:[%s168 + $0x172] sm:$0xff]
        %v606 = vpack.c.bf16 %v575, %v574
        %v607 = vpack.c.bf16 %v577, %v576
        %v608 = vpack.c.bf16 %v579, %v578
        %v609 = vpack.c.bf16 %v581, %v580
        %v610 = vpack.c.bf16 %v583, %v582
        %v611 = vpack.c.bf16 %v585, %v584
        %v612 = vpack.c.bf16 %v587, %v586
        %v613 = vpack.c.bf16 %v589, %v588
        %v614 = vpack.c.bf16 %v591, %v590
        %v615 = vpack.c.bf16 %v593, %v592
        %v616 = vpack.c.bf16 %v595, %v594
        %v617 = vpack.c.bf16 %v597, %v596
        %v618 = vpack.c.bf16 %v599, %v598
        %v619 = vpack.c.bf16 %v601, %v600
        %v620 = vpack.c.bf16 %v603, %v602
        %v621 = vpack.c.bf16 %v605, %v604
        %s622 = scalar_lea.vmem %s1, 32
        %v623 = vld [vmem:[%s622] sm:$0xf]
        %v624 = vld [vmem:[%s622 + $0x4] sm:$0xf]
        %v625 = vld [vmem:[%s622 + $0x8] sm:$0xf]
        %v626 = vld [vmem:[%s622 + $0xc] sm:$0xf]
        %v631 = vunpack.c.l.b16 %v623
        %v632 = vunpack.c.l.b16 %v624
        %v633 = vunpack.c.l.b16 %v625
        %v634 = vunpack.c.l.b16 %v626
        %v635 = vpack.c.b16 %v632, %v631
        %v636 = vpack.c.b16 %v634, %v633
        %v640 = vsel %vm287, %v606, 0
        %v643 = vsel %vm287, %v607, 0
        %v646 = vsel %vm287, %v608, 0
        %v649 = vsel %vm287, %v609, 0
        %v652 = vsel %vm287, %v610, 0
        %v655 = vsel %vm287, %v611, 0
        %v658 = vsel %vm287, %v612, 0
        %v661 = vsel %vm287, %v613, 0
        %v664 = vsel %vm287, %v614, 0
        %v667 = vsel %vm287, %v615, 0
        %v670 = vsel %vm287, %v616, 0
        %v673 = vsel %vm287, %v617, 0
        %v676 = vsel %vm287, %v618, 0
        %v679 = vsel %vm287, %v619, 0
        %v682 = vsel %vm287, %v620, 0
        %v685 = vsel %vm287, %v621, 0
        %687 = vmatpush.bf16.msra.mxu0 0
        %688 = vmatpush.bf16.msra.mxu0 0
        %689 = vmatpush.bf16.msra.mxu0 0
        %690 = vmatpush.bf16.msra.mxu0 0
        %691 = vmatpush.bf16.msra.mxu0 0
        %692 = vmatpush.bf16.msra.mxu0 0
        %693 = vmatpush.bf16.msra.mxu0 %v636
        %694 = vmatpush.bf16.msra.mxu0 %v635
        %695 = vmatmul.bf16.gmra.mxu0 %v640
        %v696 = vpop.f32.mrf.mxu0
        %v697 = vadd.f32 0.0, %v696
        %v698 = vpop.f32.mrf.mxu0
        %v699 = vadd.f32 0.0, %v698
        %700 = vmatmul.bf16.gmra.mxu0 %v643
        %v701 = vpop.f32.mrf.mxu0
        %v702 = vadd.f32 0.0, %v701
        %v703 = vpop.f32.mrf.mxu0
        %v704 = vadd.f32 0.0, %v703
        %705 = vmatmul.bf16.gmra.mxu0 %v646
        %v706 = vpop.f32.mrf.mxu0
        %v707 = vadd.f32 0.0, %v706
        %v708 = vpop.f32.mrf.mxu0
        %v709 = vadd.f32 0.0, %v708
        %710 = vmatmul.bf16.gmra.mxu0 %v649
        %v711 = vpop.f32.mrf.mxu0
        %v712 = vadd.f32 0.0, %v711
        %v713 = vpop.f32.mrf.mxu0
        %v714 = vadd.f32 0.0, %v713
        %715 = vmatmul.bf16.gmra.mxu0 %v652
        %v716 = vpop.f32.mrf.mxu0
        %v717 = vadd.f32 0.0, %v716
        %v718 = vpop.f32.mrf.mxu0
        %v719 = vadd.f32 0.0, %v718
        %720 = vmatmul.bf16.gmra.mxu0 %v655
        %v721 = vpop.f32.mrf.mxu0
        %v722 = vadd.f32 0.0, %v721
        %v723 = vpop.f32.mrf.mxu0
        %v724 = vadd.f32 0.0, %v723
        %725 = vmatmul.bf16.gmra.mxu0 %v658
        %v726 = vpop.f32.mrf.mxu0
        %v727 = vadd.f32 0.0, %v726
        %v728 = vpop.f32.mrf.mxu0
        %v729 = vadd.f32 0.0, %v728
        %730 = vmatmul.bf16.gmra.mxu0 %v661
        %v731 = vpop.f32.mrf.mxu0
        %v732 = vadd.f32 0.0, %v731
        %v733 = vpop.f32.mrf.mxu0
        %v734 = vadd.f32 0.0, %v733
        %735 = vmatmul.bf16.gmra.mxu0 %v664
        %v736 = vpop.f32.mrf.mxu0
        %v737 = vadd.f32 0.0, %v736
        %v738 = vpop.f32.mrf.mxu0
        %v739 = vadd.f32 0.0, %v738
        %740 = vmatmul.bf16.gmra.mxu0 %v667
        %v741 = vpop.f32.mrf.mxu0
        %v742 = vadd.f32 0.0, %v741
        %v743 = vpop.f32.mrf.mxu0
        %v744 = vadd.f32 0.0, %v743
        %745 = vmatmul.bf16.gmra.mxu0 %v670
        %v746 = vpop.f32.mrf.mxu0
        %v747 = vadd.f32 0.0, %v746
        %v748 = vpop.f32.mrf.mxu0
        %v749 = vadd.f32 0.0, %v748
        %750 = vmatmul.bf16.gmra.mxu0 %v673
        %v751 = vpop.f32.mrf.mxu0
        %v752 = vadd.f32 0.0, %v751
        %v753 = vpop.f32.mrf.mxu0
        %v754 = vadd.f32 0.0, %v753
        %755 = vmatmul.bf16.gmra.mxu0 %v676
        %v756 = vpop.f32.mrf.mxu0
        %v757 = vadd.f32 0.0, %v756
        %v758 = vpop.f32.mrf.mxu0
        %v759 = vadd.f32 0.0, %v758
        %760 = vmatmul.bf16.gmra.mxu0 %v679
        %v761 = vpop.f32.mrf.mxu0
        %v762 = vadd.f32 0.0, %v761
        %v763 = vpop.f32.mrf.mxu0
        %v764 = vadd.f32 0.0, %v763
        %765 = vmatmul.bf16.gmra.mxu0 %v682
        %v766 = vpop.f32.mrf.mxu0
        %v767 = vadd.f32 0.0, %v766
        %v768 = vpop.f32.mrf.mxu0
        %v769 = vadd.f32 0.0, %v768
        %770 = vmatmul.bf16.gmra.mxu0 %v685
        %v771 = vpop.f32.mrf.mxu0
        %v772 = vadd.f32 0.0, %v771
        %v773 = vpop.f32.mrf.mxu0
        %v774 = vadd.f32 0.0, %v773
        %775 = vdwg.mxu0
        %v776 = vadd.f32 %v495, %v697
        %v777 = vadd.f32 %v497, %v699
        %v778 = vadd.f32 %v500, %v702
        %v779 = vadd.f32 %v502, %v704
        %v780 = vadd.f32 %v505, %v707
        %v781 = vadd.f32 %v507, %v709
        %v782 = vadd.f32 %v510, %v712
        %v783 = vadd.f32 %v512, %v714
        %v784 = vadd.f32 %v515, %v717
        %v785 = vadd.f32 %v517, %v719
        %v786 = vadd.f32 %v520, %v722
        %v787 = vadd.f32 %v522, %v724
        %v788 = vadd.f32 %v525, %v727
        %v789 = vadd.f32 %v527, %v729
        %v790 = vadd.f32 %v530, %v732
        %v791 = vadd.f32 %v532, %v734
        %v792 = vadd.f32 %v535, %v737
        %v793 = vadd.f32 %v537, %v739
        %v794 = vadd.f32 %v540, %v742
        %v795 = vadd.f32 %v542, %v744
        %v796 = vadd.f32 %v545, %v747
        %v797 = vadd.f32 %v547, %v749
        %v798 = vadd.f32 %v550, %v752
        %v799 = vadd.f32 %v552, %v754
        %v800 = vadd.f32 %v555, %v757
        %v801 = vadd.f32 %v557, %v759
        %v802 = vadd.f32 %v560, %v762
        %v803 = vadd.f32 %v562, %v764
        %v804 = vadd.f32 %v565, %v767
        %v805 = vadd.f32 %v567, %v769
        %v806 = vadd.f32 %v570, %v772
        %v807 = vadd.f32 %v572, %v774
        %s808 = scalar_lea.vmem %s168, 24
        %v809 = vld [vmem:[%s808] sm:$0xff]
        %v810 = vld [vmem:[%s808 + $0x8] sm:$0xff]
        %v811 = vld [vmem:[%s808 + $0x18] sm:$0xff]
        %v812 = vld [vmem:[%s808 + $0x20] sm:$0xff]
        %v813 = vld [vmem:[%s808 + $0x30] sm:$0xff]
        %v814 = vld [vmem:[%s808 + $0x38] sm:$0xff]
        %v815 = vld [vmem:[%s808 + $0x48] sm:$0xff]
        %v816 = vld [vmem:[%s808 + $0x50] sm:$0xff]
        %v817 = vld [vmem:[%s808 + $0x60] sm:$0xff]
        %v818 = vld [vmem:[%s808 + $0x68] sm:$0xff]
        %v819 = vld [vmem:[%s808 + $0x78] sm:$0xff]
        %v820 = vld [vmem:[%s808 + $0x80] sm:$0xff]
        %v821 = vld [vmem:[%s808 + $0x90] sm:$0xff]
        %v822 = vld [vmem:[%s808 + $0x98] sm:$0xff]
        %v823 = vld [vmem:[%s808 + $0xa8] sm:$0xff]
        %v824 = vld [vmem:[%s808 + $0xb0] sm:$0xff]
        %v825 = vld [vmem:[%s808 + $0xc0] sm:$0xff]
        %v826 = vld [vmem:[%s808 + $0xc8] sm:$0xff]
        %v827 = vld [vmem:[%s808 + $0xd8] sm:$0xff]
        %v828 = vld [vmem:[%s808 + $0xe0] sm:$0xff]
        %v829 = vld [vmem:[%s808 + $0xf0] sm:$0xff]
        %v830 = vld [vmem:[%s808 + $0xf8] sm:$0xff]
        %v831 = vld [vmem:[%s808 + $0x108] sm:$0xff]
        %v832 = vld [vmem:[%s808 + $0x110] sm:$0xff]
        %v833 = vld [vmem:[%s808 + $0x120] sm:$0xff]
        %v834 = vld [vmem:[%s808 + $0x128] sm:$0xff]
        %v835 = vld [vmem:[%s808 + $0x138] sm:$0xff]
        %v836 = vld [vmem:[%s808 + $0x140] sm:$0xff]
        %v837 = vld [vmem:[%s808 + $0x150] sm:$0xff]
        %v838 = vld [vmem:[%s808 + $0x158] sm:$0xff]
        %v839 = vld [vmem:[%s808 + $0x168] sm:$0xff]
        %v840 = vld [vmem:[%s808 + $0x170] sm:$0xff]
        %v841 = vpack.c.bf16 %v810, %v809
        %v842 = vpack.c.bf16 %v812, %v811
        %v843 = vpack.c.bf16 %v814, %v813
        %v844 = vpack.c.bf16 %v816, %v815
        %v845 = vpack.c.bf16 %v818, %v817
        %v846 = vpack.c.bf16 %v820, %v819
        %v847 = vpack.c.bf16 %v822, %v821
        %v848 = vpack.c.bf16 %v824, %v823
        %v849 = vpack.c.bf16 %v826, %v825
        %v850 = vpack.c.bf16 %v828, %v827
        %v851 = vpack.c.bf16 %v830, %v829
        %v852 = vpack.c.bf16 %v832, %v831
        %v853 = vpack.c.bf16 %v834, %v833
        %v854 = vpack.c.bf16 %v836, %v835
        %v855 = vpack.c.bf16 %v838, %v837
        %v856 = vpack.c.bf16 %v840, %v839
        %s857 = scalar_lea.vmem %s1, 48
        %v858 = vld [vmem:[%s857] sm:$0xf]
        %v859 = vld [vmem:[%s857 + $0x4] sm:$0xf]
        %v860 = vld [vmem:[%s857 + $0x8] sm:$0xf]
        %v861 = vld [vmem:[%s857 + $0xc] sm:$0xf]
        %v866 = vunpack.c.l.b16 %v858
        %v867 = vunpack.c.l.b16 %v859
        %v868 = vunpack.c.l.b16 %v860
        %v869 = vunpack.c.l.b16 %v861
        %v870 = vpack.c.b16 %v867, %v866
        %v871 = vpack.c.b16 %v869, %v868
        %v875 = vsel %vm287, %v841, 0
        %v878 = vsel %vm287, %v842, 0
        %v881 = vsel %vm287, %v843, 0
        %v884 = vsel %vm287, %v844, 0
        %v887 = vsel %vm287, %v845, 0
        %v890 = vsel %vm287, %v846, 0
        %v893 = vsel %vm287, %v847, 0
        %v896 = vsel %vm287, %v848, 0
        %v899 = vsel %vm287, %v849, 0
        %v902 = vsel %vm287, %v850, 0
        %v905 = vsel %vm287, %v851, 0
        %v908 = vsel %vm287, %v852, 0
        %v911 = vsel %vm287, %v853, 0
        %v914 = vsel %vm287, %v854, 0
        %v917 = vsel %vm287, %v855, 0
        %v920 = vsel %vm287, %v856, 0
        %922 = vmatpush.bf16.msra.mxu0 0
        %923 = vmatpush.bf16.msra.mxu0 0
        %924 = vmatpush.bf16.msra.mxu0 0
        %925 = vmatpush.bf16.msra.mxu0 0
        %926 = vmatpush.bf16.msra.mxu0 0
        %927 = vmatpush.bf16.msra.mxu0 0
        %928 = vmatpush.bf16.msra.mxu0 %v871
        %929 = vmatpush.bf16.msra.mxu0 %v870
        %930 = vmatmul.bf16.gmra.mxu0 %v875
        %v931 = vpop.f32.mrf.mxu0
        %v932 = vadd.f32 0.0, %v931
        %v933 = vpop.f32.mrf.mxu0
        %v934 = vadd.f32 0.0, %v933
        %935 = vmatmul.bf16.gmra.mxu0 %v878
        %v936 = vpop.f32.mrf.mxu0
        %v937 = vadd.f32 0.0, %v936
        %v938 = vpop.f32.mrf.mxu0
        %v939 = vadd.f32 0.0, %v938
        %940 = vmatmul.bf16.gmra.mxu0 %v881
        %v941 = vpop.f32.mrf.mxu0
        %v942 = vadd.f32 0.0, %v941
        %v943 = vpop.f32.mrf.mxu0
        %v944 = vadd.f32 0.0, %v943
        %945 = vmatmul.bf16.gmra.mxu0 %v884
        %v946 = vpop.f32.mrf.mxu0
        %v947 = vadd.f32 0.0, %v946
        %v948 = vpop.f32.mrf.mxu0
        %v949 = vadd.f32 0.0, %v948
        %950 = vmatmul.bf16.gmra.mxu0 %v887
        %v951 = vpop.f32.mrf.mxu0
        %v952 = vadd.f32 0.0, %v951
        %v953 = vpop.f32.mrf.mxu0
        %v954 = vadd.f32 0.0, %v953
        %955 = vmatmul.bf16.gmra.mxu0 %v890
        %v956 = vpop.f32.mrf.mxu0
        %v957 = vadd.f32 0.0, %v956
        %v958 = vpop.f32.mrf.mxu0
        %v959 = vadd.f32 0.0, %v958
        %960 = vmatmul.bf16.gmra.mxu0 %v893
        %v961 = vpop.f32.mrf.mxu0
        %v962 = vadd.f32 0.0, %v961
        %v963 = vpop.f32.mrf.mxu0
        %v964 = vadd.f32 0.0, %v963
        %965 = vmatmul.bf16.gmra.mxu0 %v896
        %v966 = vpop.f32.mrf.mxu0
        %v967 = vadd.f32 0.0, %v966
        %v968 = vpop.f32.mrf.mxu0
        %v969 = vadd.f32 0.0, %v968
        %970 = vmatmul.bf16.gmra.mxu0 %v899
        %v971 = vpop.f32.mrf.mxu0
        %v972 = vadd.f32 0.0, %v971
        %v973 = vpop.f32.mrf.mxu0
        %v974 = vadd.f32 0.0, %v973
        %975 = vmatmul.bf16.gmra.mxu0 %v902
        %v976 = vpop.f32.mrf.mxu0
        %v977 = vadd.f32 0.0, %v976
        %v978 = vpop.f32.mrf.mxu0
        %v979 = vadd.f32 0.0, %v978
        %980 = vmatmul.bf16.gmra.mxu0 %v905
        %v981 = vpop.f32.mrf.mxu0
        %v982 = vadd.f32 0.0, %v981
        %v983 = vpop.f32.mrf.mxu0
        %v984 = vadd.f32 0.0, %v983
        %985 = vmatmul.bf16.gmra.mxu0 %v908
        %v986 = vpop.f32.mrf.mxu0
        %v987 = vadd.f32 0.0, %v986
        %v988 = vpop.f32.mrf.mxu0
        %v989 = vadd.f32 0.0, %v988
        %990 = vmatmul.bf16.gmra.mxu0 %v911
        %v991 = vpop.f32.mrf.mxu0
        %v992 = vadd.f32 0.0, %v991
        %v993 = vpop.f32.mrf.mxu0
        %v994 = vadd.f32 0.0, %v993
        %995 = vmatmul.bf16.gmra.mxu0 %v914
        %v996 = vpop.f32.mrf.mxu0
        %v997 = vadd.f32 0.0, %v996
        %v998 = vpop.f32.mrf.mxu0
        %v999 = vadd.f32 0.0, %v998
        %1000 = vmatmul.bf16.gmra.mxu0 %v917
        %v1001 = vpop.f32.mrf.mxu0
        %v1002 = vadd.f32 0.0, %v1001
        %v1003 = vpop.f32.mrf.mxu0
        %v1004 = vadd.f32 0.0, %v1003
        %1005 = vmatmul.bf16.gmra.mxu0 %v920
        %v1006 = vpop.f32.mrf.mxu0
        %v1007 = vadd.f32 0.0, %v1006
        %v1008 = vpop.f32.mrf.mxu0
        %v1009 = vadd.f32 0.0, %v1008
        %1010 = vdwg.mxu0
        %v1011 = vadd.f32 %v776, %v932
        %v1012 = vadd.f32 %v777, %v934
        %v1013 = vadd.f32 %v778, %v937
        %v1014 = vadd.f32 %v779, %v939
        %v1015 = vadd.f32 %v780, %v942
        %v1016 = vadd.f32 %v781, %v944
        %v1017 = vadd.f32 %v782, %v947
        %v1018 = vadd.f32 %v783, %v949
        %v1019 = vadd.f32 %v784, %v952
        %v1020 = vadd.f32 %v785, %v954
        %v1021 = vadd.f32 %v786, %v957
        %v1022 = vadd.f32 %v787, %v959
        %v1023 = vadd.f32 %v788, %v962
        %v1024 = vadd.f32 %v789, %v964
        %v1025 = vadd.f32 %v790, %v967
        %v1026 = vadd.f32 %v791, %v969
        %v1027 = vadd.f32 %v792, %v972
        %v1028 = vadd.f32 %v793, %v974
        %v1029 = vadd.f32 %v794, %v977
        %v1030 = vadd.f32 %v795, %v979
        %v1031 = vadd.f32 %v796, %v982
        %v1032 = vadd.f32 %v797, %v984
        %v1033 = vadd.f32 %v798, %v987
        %v1034 = vadd.f32 %v799, %v989
        %v1035 = vadd.f32 %v800, %v992
        %v1036 = vadd.f32 %v801, %v994
        %v1037 = vadd.f32 %v802, %v997
        %v1038 = vadd.f32 %v803, %v999
        %v1039 = vadd.f32 %v804, %v1002
        %v1040 = vadd.f32 %v805, %v1004
        %v1041 = vadd.f32 %v806, %v1007
        %v1042 = vadd.f32 %v807, %v1009
        %v1043 = vld [vmem:[%s808 + $0x1] sm:$0xff]
        %v1044 = vld [vmem:[%s808 + $0x9] sm:$0xff]
        %v1045 = vld [vmem:[%s808 + $0x19] sm:$0xff]
        %v1046 = vld [vmem:[%s808 + $0x21] sm:$0xff]
        %v1047 = vld [vmem:[%s808 + $0x31] sm:$0xff]
        %v1048 = vld [vmem:[%s808 + $0x39] sm:$0xff]
        %v1049 = vld [vmem:[%s808 + $0x49] sm:$0xff]
        %v1050 = vld [vmem:[%s808 + $0x51] sm:$0xff]
        %v1051 = vld [vmem:[%s808 + $0x61] sm:$0xff]
        %v1052 = vld [vmem:[%s808 + $0x69] sm:$0xff]
        %v1053 = vld [vmem:[%s808 + $0x79] sm:$0xff]
        %v1054 = vld [vmem:[%s808 + $0x81] sm:$0xff]
        %v1055 = vld [vmem:[%s808 + $0x91] sm:$0xff]
        %v1056 = vld [vmem:[%s808 + $0x99] sm:$0xff]
        %v1057 = vld [vmem:[%s808 + $0xa9] sm:$0xff]
        %v1058 = vld [vmem:[%s808 + $0xb1] sm:$0xff]
        %v1059 = vld [vmem:[%s808 + $0xc1] sm:$0xff]
        %v1060 = vld [vmem:[%s808 + $0xc9] sm:$0xff]
        %v1061 = vld [vmem:[%s808 + $0xd9] sm:$0xff]
        %v1062 = vld [vmem:[%s808 + $0xe1] sm:$0xff]
        %v1063 = vld [vmem:[%s808 + $0xf1] sm:$0xff]
        %v1064 = vld [vmem:[%s808 + $0xf9] sm:$0xff]
        %v1065 = vld [vmem:[%s808 + $0x109] sm:$0xff]
        %v1066 = vld [vmem:[%s808 + $0x111] sm:$0xff]
        %v1067 = vld [vmem:[%s808 + $0x121] sm:$0xff]
        %v1068 = vld [vmem:[%s808 + $0x129] sm:$0xff]
        %v1069 = vld [vmem:[%s808 + $0x139] sm:$0xff]
        %v1070 = vld [vmem:[%s808 + $0x141] sm:$0xff]
        %v1071 = vld [vmem:[%s808 + $0x151] sm:$0xff]
        %v1072 = vld [vmem:[%s808 + $0x159] sm:$0xff]
        %v1073 = vld [vmem:[%s808 + $0x169] sm:$0xff]
        %v1074 = vld [vmem:[%s808 + $0x171] sm:$0xff]
        %v1075 = vpack.c.bf16 %v1044, %v1043
        %v1076 = vpack.c.bf16 %v1046, %v1045
        %v1077 = vpack.c.bf16 %v1048, %v1047
        %v1078 = vpack.c.bf16 %v1050, %v1049
        %v1079 = vpack.c.bf16 %v1052, %v1051
        %v1080 = vpack.c.bf16 %v1054, %v1053
        %v1081 = vpack.c.bf16 %v1056, %v1055
        %v1082 = vpack.c.bf16 %v1058, %v1057
        %v1083 = vpack.c.bf16 %v1060, %v1059
        %v1084 = vpack.c.bf16 %v1062, %v1061
        %v1085 = vpack.c.bf16 %v1064, %v1063
        %v1086 = vpack.c.bf16 %v1066, %v1065
        %v1087 = vpack.c.bf16 %v1068, %v1067
        %v1088 = vpack.c.bf16 %v1070, %v1069
        %v1089 = vpack.c.bf16 %v1072, %v1071
        %v1090 = vpack.c.bf16 %v1074, %v1073
        %s1091 = scalar_lea.vmem %s1, 64
        %v1092 = vld [vmem:[%s1091] sm:$0xf]
        %v1093 = vld [vmem:[%s1091 + $0x4] sm:$0xf]
        %v1094 = vld [vmem:[%s1091 + $0x8] sm:$0xf]
        %v1095 = vld [vmem:[%s1091 + $0xc] sm:$0xf]
        %v1100 = vunpack.c.l.b16 %v1092
        %v1101 = vunpack.c.l.b16 %v1093
        %v1102 = vunpack.c.l.b16 %v1094
        %v1103 = vunpack.c.l.b16 %v1095
        %v1104 = vpack.c.b16 %v1101, %v1100
        %v1105 = vpack.c.b16 %v1103, %v1102
        %v1109 = vsel %vm287, %v1075, 0
        %v1112 = vsel %vm287, %v1076, 0
        %v1115 = vsel %vm287, %v1077, 0
        %v1118 = vsel %vm287, %v1078, 0
        %v1121 = vsel %vm287, %v1079, 0
        %v1124 = vsel %vm287, %v1080, 0
        %v1127 = vsel %vm287, %v1081, 0
        %v1130 = vsel %vm287, %v1082, 0
        %v1133 = vsel %vm287, %v1083, 0
        %v1136 = vsel %vm287, %v1084, 0
        %v1139 = vsel %vm287, %v1085, 0
        %v1142 = vsel %vm287, %v1086, 0
        %v1145 = vsel %vm287, %v1087, 0
        %v1148 = vsel %vm287, %v1088, 0
        %v1151 = vsel %vm287, %v1089, 0
        %v1154 = vsel %vm287, %v1090, 0
        %1156 = vmatpush.bf16.msra.mxu0 0
        %1157 = vmatpush.bf16.msra.mxu0 0
        %1158 = vmatpush.bf16.msra.mxu0 0
        %1159 = vmatpush.bf16.msra.mxu0 0
        %1160 = vmatpush.bf16.msra.mxu0 0
        %1161 = vmatpush.bf16.msra.mxu0 0
        %1162 = vmatpush.bf16.msra.mxu0 %v1105
        %1163 = vmatpush.bf16.msra.mxu0 %v1104
        %1164 = vmatmul.bf16.gmra.mxu0 %v1109
        %v1165 = vpop.f32.mrf.mxu0
        %v1166 = vadd.f32 0.0, %v1165
        %v1167 = vpop.f32.mrf.mxu0
        %v1168 = vadd.f32 0.0, %v1167
        %1169 = vmatmul.bf16.gmra.mxu0 %v1112
        %v1170 = vpop.f32.mrf.mxu0
        %v1171 = vadd.f32 0.0, %v1170
        %v1172 = vpop.f32.mrf.mxu0
        %v1173 = vadd.f32 0.0, %v1172
        %1174 = vmatmul.bf16.gmra.mxu0 %v1115
        %v1175 = vpop.f32.mrf.mxu0
        %v1176 = vadd.f32 0.0, %v1175
        %v1177 = vpop.f32.mrf.mxu0
        %v1178 = vadd.f32 0.0, %v1177
        %1179 = vmatmul.bf16.gmra.mxu0 %v1118
        %v1180 = vpop.f32.mrf.mxu0
        %v1181 = vadd.f32 0.0, %v1180
        %v1182 = vpop.f32.mrf.mxu0
        %v1183 = vadd.f32 0.0, %v1182
        %1184 = vmatmul.bf16.gmra.mxu0 %v1121
        %v1185 = vpop.f32.mrf.mxu0
        %v1186 = vadd.f32 0.0, %v1185
        %v1187 = vpop.f32.mrf.mxu0
        %v1188 = vadd.f32 0.0, %v1187
        %1189 = vmatmul.bf16.gmra.mxu0 %v1124
        %v1190 = vpop.f32.mrf.mxu0
        %v1191 = vadd.f32 0.0, %v1190
        %v1192 = vpop.f32.mrf.mxu0
        %v1193 = vadd.f32 0.0, %v1192
        %1194 = vmatmul.bf16.gmra.mxu0 %v1127
        %v1195 = vpop.f32.mrf.mxu0
        %v1196 = vadd.f32 0.0, %v1195
        %v1197 = vpop.f32.mrf.mxu0
        %v1198 = vadd.f32 0.0, %v1197
        %1199 = vmatmul.bf16.gmra.mxu0 %v1130
        %v1200 = vpop.f32.mrf.mxu0
        %v1201 = vadd.f32 0.0, %v1200
        %v1202 = vpop.f32.mrf.mxu0
        %v1203 = vadd.f32 0.0, %v1202
        %1204 = vmatmul.bf16.gmra.mxu0 %v1133
        %v1205 = vpop.f32.mrf.mxu0
        %v1206 = vadd.f32 0.0, %v1205
        %v1207 = vpop.f32.mrf.mxu0
        %v1208 = vadd.f32 0.0, %v1207
        %1209 = vmatmul.bf16.gmra.mxu0 %v1136
        %v1210 = vpop.f32.mrf.mxu0
        %v1211 = vadd.f32 0.0, %v1210
        %v1212 = vpop.f32.mrf.mxu0
        %v1213 = vadd.f32 0.0, %v1212
        %1214 = vmatmul.bf16.gmra.mxu0 %v1139
        %v1215 = vpop.f32.mrf.mxu0
        %v1216 = vadd.f32 0.0, %v1215
        %v1217 = vpop.f32.mrf.mxu0
        %v1218 = vadd.f32 0.0, %v1217
        %1219 = vmatmul.bf16.gmra.mxu0 %v1142
        %v1220 = vpop.f32.mrf.mxu0
        %v1221 = vadd.f32 0.0, %v1220
        %v1222 = vpop.f32.mrf.mxu0
        %v1223 = vadd.f32 0.0, %v1222
        %1224 = vmatmul.bf16.gmra.mxu0 %v1145
        %v1225 = vpop.f32.mrf.mxu0
        %v1226 = vadd.f32 0.0, %v1225
        %v1227 = vpop.f32.mrf.mxu0
        %v1228 = vadd.f32 0.0, %v1227
        %1229 = vmatmul.bf16.gmra.mxu0 %v1148
        %v1230 = vpop.f32.mrf.mxu0
        %v1231 = vadd.f32 0.0, %v1230
        %v1232 = vpop.f32.mrf.mxu0
        %v1233 = vadd.f32 0.0, %v1232
        %1234 = vmatmul.bf16.gmra.mxu0 %v1151
        %v1235 = vpop.f32.mrf.mxu0
        %v1236 = vadd.f32 0.0, %v1235
        %v1237 = vpop.f32.mrf.mxu0
        %v1238 = vadd.f32 0.0, %v1237
        %1239 = vmatmul.bf16.gmra.mxu0 %v1154
        %v1240 = vpop.f32.mrf.mxu0
        %v1241 = vadd.f32 0.0, %v1240
        %v1242 = vpop.f32.mrf.mxu0
        %v1243 = vadd.f32 0.0, %v1242
        %1244 = vdwg.mxu0
        %v1245 = vadd.f32 %v1011, %v1166
        %v1246 = vadd.f32 %v1012, %v1168
        %v1247 = vadd.f32 %v1013, %v1171
        %v1248 = vadd.f32 %v1014, %v1173
        %v1249 = vadd.f32 %v1015, %v1176
        %v1250 = vadd.f32 %v1016, %v1178
        %v1251 = vadd.f32 %v1017, %v1181
        %v1252 = vadd.f32 %v1018, %v1183
        %v1253 = vadd.f32 %v1019, %v1186
        %v1254 = vadd.f32 %v1020, %v1188
        %v1255 = vadd.f32 %v1021, %v1191
        %v1256 = vadd.f32 %v1022, %v1193
        %v1257 = vadd.f32 %v1023, %v1196
        %v1258 = vadd.f32 %v1024, %v1198
        %v1259 = vadd.f32 %v1025, %v1201
        %v1260 = vadd.f32 %v1026, %v1203
        %v1261 = vadd.f32 %v1027, %v1206
        %v1262 = vadd.f32 %v1028, %v1208
        %v1263 = vadd.f32 %v1029, %v1211
        %v1264 = vadd.f32 %v1030, %v1213
        %v1265 = vadd.f32 %v1031, %v1216
        %v1266 = vadd.f32 %v1032, %v1218
        %v1267 = vadd.f32 %v1033, %v1221
        %v1268 = vadd.f32 %v1034, %v1223
        %v1269 = vadd.f32 %v1035, %v1226
        %v1270 = vadd.f32 %v1036, %v1228
        %v1271 = vadd.f32 %v1037, %v1231
        %v1272 = vadd.f32 %v1038, %v1233
        %v1273 = vadd.f32 %v1039, %v1236
        %v1274 = vadd.f32 %v1040, %v1238
        %v1275 = vadd.f32 %v1041, %v1241
        %v1276 = vadd.f32 %v1042, %v1243
        %v1277 = vld [vmem:[%s808 + $0x2] sm:$0xff]
        %v1278 = vld [vmem:[%s808 + $0xa] sm:$0xff]
        %v1279 = vld [vmem:[%s808 + $0x1a] sm:$0xff]
        %v1280 = vld [vmem:[%s808 + $0x22] sm:$0xff]
        %v1281 = vld [vmem:[%s808 + $0x32] sm:$0xff]
        %v1282 = vld [vmem:[%s808 + $0x3a] sm:$0xff]
        %v1283 = vld [vmem:[%s808 + $0x4a] sm:$0xff]
        %v1284 = vld [vmem:[%s808 + $0x52] sm:$0xff]
        %v1285 = vld [vmem:[%s808 + $0x62] sm:$0xff]
        %v1286 = vld [vmem:[%s808 + $0x6a] sm:$0xff]
        %v1287 = vld [vmem:[%s808 + $0x7a] sm:$0xff]
        %v1288 = vld [vmem:[%s808 + $0x82] sm:$0xff]
        %v1289 = vld [vmem:[%s808 + $0x92] sm:$0xff]
        %v1290 = vld [vmem:[%s808 + $0x9a] sm:$0xff]
        %v1291 = vld [vmem:[%s808 + $0xaa] sm:$0xff]
        %v1292 = vld [vmem:[%s808 + $0xb2] sm:$0xff]
        %v1293 = vld [vmem:[%s808 + $0xc2] sm:$0xff]
        %v1294 = vld [vmem:[%s808 + $0xca] sm:$0xff]
        %v1295 = vld [vmem:[%s808 + $0xda] sm:$0xff]
        %v1296 = vld [vmem:[%s808 + $0xe2] sm:$0xff]
        %v1297 = vld [vmem:[%s808 + $0xf2] sm:$0xff]
        %v1298 = vld [vmem:[%s808 + $0xfa] sm:$0xff]
        %v1299 = vld [vmem:[%s808 + $0x10a] sm:$0xff]
        %v1300 = vld [vmem:[%s808 + $0x112] sm:$0xff]
        %v1301 = vld [vmem:[%s808 + $0x122] sm:$0xff]
        %v1302 = vld [vmem:[%s808 + $0x12a] sm:$0xff]
        %v1303 = vld [vmem:[%s808 + $0x13a] sm:$0xff]
        %v1304 = vld [vmem:[%s808 + $0x142] sm:$0xff]
        %v1305 = vld [vmem:[%s808 + $0x152] sm:$0xff]
        %v1306 = vld [vmem:[%s808 + $0x15a] sm:$0xff]
        %v1307 = vld [vmem:[%s808 + $0x16a] sm:$0xff]
        %v1308 = vld [vmem:[%s808 + $0x172] sm:$0xff]
        %v1309 = vpack.c.bf16 %v1278, %v1277
        %v1310 = vpack.c.bf16 %v1280, %v1279
        %v1311 = vpack.c.bf16 %v1282, %v1281
        %v1312 = vpack.c.bf16 %v1284, %v1283
        %v1313 = vpack.c.bf16 %v1286, %v1285
        %v1314 = vpack.c.bf16 %v1288, %v1287
        %v1315 = vpack.c.bf16 %v1290, %v1289
        %v1316 = vpack.c.bf16 %v1292, %v1291
        %v1317 = vpack.c.bf16 %v1294, %v1293
        %v1318 = vpack.c.bf16 %v1296, %v1295
        %v1319 = vpack.c.bf16 %v1298, %v1297
        %v1320 = vpack.c.bf16 %v1300, %v1299
        %v1321 = vpack.c.bf16 %v1302, %v1301
        %v1322 = vpack.c.bf16 %v1304, %v1303
        %v1323 = vpack.c.bf16 %v1306, %v1305
        %v1324 = vpack.c.bf16 %v1308, %v1307
        %s1325 = scalar_lea.vmem %s1, 80
        %v1326 = vld [vmem:[%s1325] sm:$0xf]
        %v1327 = vld [vmem:[%s1325 + $0x4] sm:$0xf]
        %v1328 = vld [vmem:[%s1325 + $0x8] sm:$0xf]
        %v1329 = vld [vmem:[%s1325 + $0xc] sm:$0xf]
        %v1334 = vunpack.c.l.b16 %v1326
        %v1335 = vunpack.c.l.b16 %v1327
        %v1336 = vunpack.c.l.b16 %v1328
        %v1337 = vunpack.c.l.b16 %v1329
        %v1338 = vpack.c.b16 %v1335, %v1334
        %v1339 = vpack.c.b16 %v1337, %v1336
        %v1343 = vsel %vm287, %v1309, 0
        %v1346 = vsel %vm287, %v1310, 0
        %v1349 = vsel %vm287, %v1311, 0
        %v1352 = vsel %vm287, %v1312, 0
        %v1355 = vsel %vm287, %v1313, 0
        %v1358 = vsel %vm287, %v1314, 0
        %v1361 = vsel %vm287, %v1315, 0
        %v1364 = vsel %vm287, %v1316, 0
        %v1367 = vsel %vm287, %v1317, 0
        %v1370 = vsel %vm287, %v1318, 0
        %v1373 = vsel %vm287, %v1319, 0
        %v1376 = vsel %vm287, %v1320, 0
        %v1379 = vsel %vm287, %v1321, 0
        %v1382 = vsel %vm287, %v1322, 0
        %v1385 = vsel %vm287, %v1323, 0
        %v1388 = vsel %vm287, %v1324, 0
        %1390 = vmatpush.bf16.msra.mxu0 0
        %1391 = vmatpush.bf16.msra.mxu0 0
        %1392 = vmatpush.bf16.msra.mxu0 0
        %1393 = vmatpush.bf16.msra.mxu0 0
        %1394 = vmatpush.bf16.msra.mxu0 0
        %1395 = vmatpush.bf16.msra.mxu0 0
        %1396 = vmatpush.bf16.msra.mxu0 %v1339
        %1397 = vmatpush.bf16.msra.mxu0 %v1338
        %1398 = vmatmul.bf16.gmra.mxu0 %v1343
        %v1399 = vpop.f32.mrf.mxu0
        %v1400 = vadd.f32 0.0, %v1399
        %v1401 = vpop.f32.mrf.mxu0
        %v1402 = vadd.f32 0.0, %v1401
        %1403 = vmatmul.bf16.gmra.mxu0 %v1346
        %v1404 = vpop.f32.mrf.mxu0
        %v1405 = vadd.f32 0.0, %v1404
        %v1406 = vpop.f32.mrf.mxu0
        %v1407 = vadd.f32 0.0, %v1406
        %1408 = vmatmul.bf16.gmra.mxu0 %v1349
        %v1409 = vpop.f32.mrf.mxu0
        %v1410 = vadd.f32 0.0, %v1409
        %v1411 = vpop.f32.mrf.mxu0
        %v1412 = vadd.f32 0.0, %v1411
        %1413 = vmatmul.bf16.gmra.mxu0 %v1352
        %v1414 = vpop.f32.mrf.mxu0
        %v1415 = vadd.f32 0.0, %v1414
        %v1416 = vpop.f32.mrf.mxu0
        %v1417 = vadd.f32 0.0, %v1416
        %1418 = vmatmul.bf16.gmra.mxu0 %v1355
        %v1419 = vpop.f32.mrf.mxu0
        %v1420 = vadd.f32 0.0, %v1419
        %v1421 = vpop.f32.mrf.mxu0
        %v1422 = vadd.f32 0.0, %v1421
        %1423 = vmatmul.bf16.gmra.mxu0 %v1358
        %v1424 = vpop.f32.mrf.mxu0
        %v1425 = vadd.f32 0.0, %v1424
        %v1426 = vpop.f32.mrf.mxu0
        %v1427 = vadd.f32 0.0, %v1426
        %1428 = vmatmul.bf16.gmra.mxu0 %v1361
        %v1429 = vpop.f32.mrf.mxu0
        %v1430 = vadd.f32 0.0, %v1429
        %v1431 = vpop.f32.mrf.mxu0
        %v1432 = vadd.f32 0.0, %v1431
        %1433 = vmatmul.bf16.gmra.mxu0 %v1364
        %v1434 = vpop.f32.mrf.mxu0
        %v1435 = vadd.f32 0.0, %v1434
        %v1436 = vpop.f32.mrf.mxu0
        %v1437 = vadd.f32 0.0, %v1436
        %1438 = vmatmul.bf16.gmra.mxu0 %v1367
        %v1439 = vpop.f32.mrf.mxu0
        %v1440 = vadd.f32 0.0, %v1439
        %v1441 = vpop.f32.mrf.mxu0
        %v1442 = vadd.f32 0.0, %v1441
        %1443 = vmatmul.bf16.gmra.mxu0 %v1370
        %v1444 = vpop.f32.mrf.mxu0
        %v1445 = vadd.f32 0.0, %v1444
        %v1446 = vpop.f32.mrf.mxu0
        %v1447 = vadd.f32 0.0, %v1446
        %1448 = vmatmul.bf16.gmra.mxu0 %v1373
        %v1449 = vpop.f32.mrf.mxu0
        %v1450 = vadd.f32 0.0, %v1449
        %v1451 = vpop.f32.mrf.mxu0
        %v1452 = vadd.f32 0.0, %v1451
        %1453 = vmatmul.bf16.gmra.mxu0 %v1376
        %v1454 = vpop.f32.mrf.mxu0
        %v1455 = vadd.f32 0.0, %v1454
        %v1456 = vpop.f32.mrf.mxu0
        %v1457 = vadd.f32 0.0, %v1456
        %1458 = vmatmul.bf16.gmra.mxu0 %v1379
        %v1459 = vpop.f32.mrf.mxu0
        %v1460 = vadd.f32 0.0, %v1459
        %v1461 = vpop.f32.mrf.mxu0
        %v1462 = vadd.f32 0.0, %v1461
        %1463 = vmatmul.bf16.gmra.mxu0 %v1382
        %v1464 = vpop.f32.mrf.mxu0
        %v1465 = vadd.f32 0.0, %v1464
        %v1466 = vpop.f32.mrf.mxu0
        %v1467 = vadd.f32 0.0, %v1466
        %1468 = vmatmul.bf16.gmra.mxu0 %v1385
        %v1469 = vpop.f32.mrf.mxu0
        %v1470 = vadd.f32 0.0, %v1469
        %v1471 = vpop.f32.mrf.mxu0
        %v1472 = vadd.f32 0.0, %v1471
        %1473 = vmatmul.bf16.gmra.mxu0 %v1388
        %v1474 = vpop.f32.mrf.mxu0
        %v1475 = vadd.f32 0.0, %v1474
        %v1476 = vpop.f32.mrf.mxu0
        %v1477 = vadd.f32 0.0, %v1476
        %1478 = vdwg.mxu0
        %v1479 = vadd.f32 %v1245, %v1400
        %v1480 = vadd.f32 %v1246, %v1402
        %v1481 = vadd.f32 %v1247, %v1405
        %v1482 = vadd.f32 %v1248, %v1407
        %v1483 = vadd.f32 %v1249, %v1410
        %v1484 = vadd.f32 %v1250, %v1412
        %v1485 = vadd.f32 %v1251, %v1415
        %v1486 = vadd.f32 %v1252, %v1417
        %v1487 = vadd.f32 %v1253, %v1420
        %v1488 = vadd.f32 %v1254, %v1422
        %v1489 = vadd.f32 %v1255, %v1425
        %v1490 = vadd.f32 %v1256, %v1427
        %v1491 = vadd.f32 %v1257, %v1430
        %v1492 = vadd.f32 %v1258, %v1432
        %v1493 = vadd.f32 %v1259, %v1435
        %v1494 = vadd.f32 %v1260, %v1437
        %v1495 = vadd.f32 %v1261, %v1440
        %v1496 = vadd.f32 %v1262, %v1442
        %v1497 = vadd.f32 %v1263, %v1445
        %v1498 = vadd.f32 %v1264, %v1447
        %v1499 = vadd.f32 %v1265, %v1450
        %v1500 = vadd.f32 %v1266, %v1452
        %v1501 = vadd.f32 %v1267, %v1455
        %v1502 = vadd.f32 %v1268, %v1457
        %v1503 = vadd.f32 %v1269, %v1460
        %v1504 = vadd.f32 %v1270, %v1462
        %v1505 = vadd.f32 %v1271, %v1465
        %v1506 = vadd.f32 %v1272, %v1467
        %v1507 = vadd.f32 %v1273, %v1470
        %v1508 = vadd.f32 %v1274, %v1472
        %v1509 = vadd.f32 %v1275, %v1475
        %v1510 = vadd.f32 %v1276, %v1477
        %s1511 = scalar_lea.vmem %s168, 48
        %v1512 = vld [vmem:[%s1511] sm:$0xff]
        %v1513 = vld [vmem:[%s1511 + $0x8] sm:$0xff]
        %v1514 = vld [vmem:[%s1511 + $0x18] sm:$0xff]
        %v1515 = vld [vmem:[%s1511 + $0x20] sm:$0xff]
        %v1516 = vld [vmem:[%s1511 + $0x30] sm:$0xff]
        %v1517 = vld [vmem:[%s1511 + $0x38] sm:$0xff]
        %v1518 = vld [vmem:[%s1511 + $0x48] sm:$0xff]
        %v1519 = vld [vmem:[%s1511 + $0x50] sm:$0xff]
        %v1520 = vld [vmem:[%s1511 + $0x60] sm:$0xff]
        %v1521 = vld [vmem:[%s1511 + $0x68] sm:$0xff]
        %v1522 = vld [vmem:[%s1511 + $0x78] sm:$0xff]
        %v1523 = vld [vmem:[%s1511 + $0x80] sm:$0xff]
        %v1524 = vld [vmem:[%s1511 + $0x90] sm:$0xff]
        %v1525 = vld [vmem:[%s1511 + $0x98] sm:$0xff]
        %v1526 = vld [vmem:[%s1511 + $0xa8] sm:$0xff]
        %v1527 = vld [vmem:[%s1511 + $0xb0] sm:$0xff]
        %v1528 = vld [vmem:[%s1511 + $0xc0] sm:$0xff]
        %v1529 = vld [vmem:[%s1511 + $0xc8] sm:$0xff]
        %v1530 = vld [vmem:[%s1511 + $0xd8] sm:$0xff]
        %v1531 = vld [vmem:[%s1511 + $0xe0] sm:$0xff]
        %v1532 = vld [vmem:[%s1511 + $0xf0] sm:$0xff]
        %v1533 = vld [vmem:[%s1511 + $0xf8] sm:$0xff]
        %v1534 = vld [vmem:[%s1511 + $0x108] sm:$0xff]
        %v1535 = vld [vmem:[%s1511 + $0x110] sm:$0xff]
        %v1536 = vld [vmem:[%s1511 + $0x120] sm:$0xff]
        %v1537 = vld [vmem:[%s1511 + $0x128] sm:$0xff]
        %v1538 = vld [vmem:[%s1511 + $0x138] sm:$0xff]
        %v1539 = vld [vmem:[%s1511 + $0x140] sm:$0xff]
        %v1540 = vld [vmem:[%s1511 + $0x150] sm:$0xff]
        %v1541 = vld [vmem:[%s1511 + $0x158] sm:$0xff]
        %v1542 = vld [vmem:[%s1511 + $0x168] sm:$0xff]
        %v1543 = vld [vmem:[%s1511 + $0x170] sm:$0xff]
        %v1544 = vpack.c.bf16 %v1513, %v1512
        %v1545 = vpack.c.bf16 %v1515, %v1514
        %v1546 = vpack.c.bf16 %v1517, %v1516
        %v1547 = vpack.c.bf16 %v1519, %v1518
        %v1548 = vpack.c.bf16 %v1521, %v1520
        %v1549 = vpack.c.bf16 %v1523, %v1522
        %v1550 = vpack.c.bf16 %v1525, %v1524
        %v1551 = vpack.c.bf16 %v1527, %v1526
        %v1552 = vpack.c.bf16 %v1529, %v1528
        %v1553 = vpack.c.bf16 %v1531, %v1530
        %v1554 = vpack.c.bf16 %v1533, %v1532
        %v1555 = vpack.c.bf16 %v1535, %v1534
        %v1556 = vpack.c.bf16 %v1537, %v1536
        %v1557 = vpack.c.bf16 %v1539, %v1538
        %v1558 = vpack.c.bf16 %v1541, %v1540
        %v1559 = vpack.c.bf16 %v1543, %v1542
        %s1560 = scalar_lea.vmem %s1, 96
        %v1561 = vld [vmem:[%s1560] sm:$0xf]
        %v1562 = vld [vmem:[%s1560 + $0x4] sm:$0xf]
        %v1563 = vld [vmem:[%s1560 + $0x8] sm:$0xf]
        %v1564 = vld [vmem:[%s1560 + $0xc] sm:$0xf]
        %v1569 = vunpack.c.l.b16 %v1561
        %v1570 = vunpack.c.l.b16 %v1562
        %v1571 = vunpack.c.l.b16 %v1563
        %v1572 = vunpack.c.l.b16 %v1564
        %v1573 = vpack.c.b16 %v1570, %v1569
        %v1574 = vpack.c.b16 %v1572, %v1571
        %v1578 = vsel %vm287, %v1544, 0
        %v1581 = vsel %vm287, %v1545, 0
        %v1584 = vsel %vm287, %v1546, 0
        %v1587 = vsel %vm287, %v1547, 0
        %v1590 = vsel %vm287, %v1548, 0
        %v1593 = vsel %vm287, %v1549, 0
        %v1596 = vsel %vm287, %v1550, 0
        %v1599 = vsel %vm287, %v1551, 0
        %v1602 = vsel %vm287, %v1552, 0
        %v1605 = vsel %vm287, %v1553, 0
        %v1608 = vsel %vm287, %v1554, 0
        %v1611 = vsel %vm287, %v1555, 0
        %v1614 = vsel %vm287, %v1556, 0
        %v1617 = vsel %vm287, %v1557, 0
        %v1620 = vsel %vm287, %v1558, 0
        %v1623 = vsel %vm287, %v1559, 0
        %1625 = vmatpush.bf16.msra.mxu0 0
        %1626 = vmatpush.bf16.msra.mxu0 0
        %1627 = vmatpush.bf16.msra.mxu0 0
        %1628 = vmatpush.bf16.msra.mxu0 0
        %1629 = vmatpush.bf16.msra.mxu0 0
        %1630 = vmatpush.bf16.msra.mxu0 0
        %1631 = vmatpush.bf16.msra.mxu0 %v1574
        %1632 = vmatpush.bf16.msra.mxu0 %v1573
        %1633 = vmatmul.bf16.gmra.mxu0 %v1578
        %v1634 = vpop.f32.mrf.mxu0
        %v1635 = vadd.f32 0.0, %v1634
        %v1636 = vpop.f32.mrf.mxu0
        %v1637 = vadd.f32 0.0, %v1636
        %1638 = vmatmul.bf16.gmra.mxu0 %v1581
        %v1639 = vpop.f32.mrf.mxu0
        %v1640 = vadd.f32 0.0, %v1639
        %v1641 = vpop.f32.mrf.mxu0
        %v1642 = vadd.f32 0.0, %v1641
        %1643 = vmatmul.bf16.gmra.mxu0 %v1584
        %v1644 = vpop.f32.mrf.mxu0
        %v1645 = vadd.f32 0.0, %v1644
        %v1646 = vpop.f32.mrf.mxu0
        %v1647 = vadd.f32 0.0, %v1646
        %1648 = vmatmul.bf16.gmra.mxu0 %v1587
        %v1649 = vpop.f32.mrf.mxu0
        %v1650 = vadd.f32 0.0, %v1649
        %v1651 = vpop.f32.mrf.mxu0
        %v1652 = vadd.f32 0.0, %v1651
        %1653 = vmatmul.bf16.gmra.mxu0 %v1590
        %v1654 = vpop.f32.mrf.mxu0
        %v1655 = vadd.f32 0.0, %v1654
        %v1656 = vpop.f32.mrf.mxu0
        %v1657 = vadd.f32 0.0, %v1656
        %1658 = vmatmul.bf16.gmra.mxu0 %v1593
        %v1659 = vpop.f32.mrf.mxu0
        %v1660 = vadd.f32 0.0, %v1659
        %v1661 = vpop.f32.mrf.mxu0
        %v1662 = vadd.f32 0.0, %v1661
        %1663 = vmatmul.bf16.gmra.mxu0 %v1596
        %v1664 = vpop.f32.mrf.mxu0
        %v1665 = vadd.f32 0.0, %v1664
        %v1666 = vpop.f32.mrf.mxu0
        %v1667 = vadd.f32 0.0, %v1666
        %1668 = vmatmul.bf16.gmra.mxu0 %v1599
        %v1669 = vpop.f32.mrf.mxu0
        %v1670 = vadd.f32 0.0, %v1669
        %v1671 = vpop.f32.mrf.mxu0
        %v1672 = vadd.f32 0.0, %v1671
        %1673 = vmatmul.bf16.gmra.mxu0 %v1602
        %v1674 = vpop.f32.mrf.mxu0
        %v1675 = vadd.f32 0.0, %v1674
        %v1676 = vpop.f32.mrf.mxu0
        %v1677 = vadd.f32 0.0, %v1676
        %1678 = vmatmul.bf16.gmra.mxu0 %v1605
        %v1679 = vpop.f32.mrf.mxu0
        %v1680 = vadd.f32 0.0, %v1679
        %v1681 = vpop.f32.mrf.mxu0
        %v1682 = vadd.f32 0.0, %v1681
        %1683 = vmatmul.bf16.gmra.mxu0 %v1608
        %v1684 = vpop.f32.mrf.mxu0
        %v1685 = vadd.f32 0.0, %v1684
        %v1686 = vpop.f32.mrf.mxu0
        %v1687 = vadd.f32 0.0, %v1686
        %1688 = vmatmul.bf16.gmra.mxu0 %v1611
        %v1689 = vpop.f32.mrf.mxu0
        %v1690 = vadd.f32 0.0, %v1689
        %v1691 = vpop.f32.mrf.mxu0
        %v1692 = vadd.f32 0.0, %v1691
        %1693 = vmatmul.bf16.gmra.mxu0 %v1614
        %v1694 = vpop.f32.mrf.mxu0
        %v1695 = vadd.f32 0.0, %v1694
        %v1696 = vpop.f32.mrf.mxu0
        %v1697 = vadd.f32 0.0, %v1696
        %1698 = vmatmul.bf16.gmra.mxu0 %v1617
        %v1699 = vpop.f32.mrf.mxu0
        %v1700 = vadd.f32 0.0, %v1699
        %v1701 = vpop.f32.mrf.mxu0
        %v1702 = vadd.f32 0.0, %v1701
        %1703 = vmatmul.bf16.gmra.mxu0 %v1620
        %v1704 = vpop.f32.mrf.mxu0
        %v1705 = vadd.f32 0.0, %v1704
        %v1706 = vpop.f32.mrf.mxu0
        %v1707 = vadd.f32 0.0, %v1706
        %1708 = vmatmul.bf16.gmra.mxu0 %v1623
        %v1709 = vpop.f32.mrf.mxu0
        %v1710 = vadd.f32 0.0, %v1709
        %v1711 = vpop.f32.mrf.mxu0
        %v1712 = vadd.f32 0.0, %v1711
        %1713 = vdwg.mxu0
        %v1714 = vadd.f32 %v1479, %v1635
        %v1715 = vadd.f32 %v1480, %v1637
        %v1716 = vadd.f32 %v1481, %v1640
        %v1717 = vadd.f32 %v1482, %v1642
        %v1718 = vadd.f32 %v1483, %v1645
        %v1719 = vadd.f32 %v1484, %v1647
        %v1720 = vadd.f32 %v1485, %v1650
        %v1721 = vadd.f32 %v1486, %v1652
        %v1722 = vadd.f32 %v1487, %v1655
        %v1723 = vadd.f32 %v1488, %v1657
        %v1724 = vadd.f32 %v1489, %v1660
        %v1725 = vadd.f32 %v1490, %v1662
        %v1726 = vadd.f32 %v1491, %v1665
        %v1727 = vadd.f32 %v1492, %v1667
        %v1728 = vadd.f32 %v1493, %v1670
        %v1729 = vadd.f32 %v1494, %v1672
        %v1730 = vadd.f32 %v1495, %v1675
        %v1731 = vadd.f32 %v1496, %v1677
        %v1732 = vadd.f32 %v1497, %v1680
        %v1733 = vadd.f32 %v1498, %v1682
        %v1734 = vadd.f32 %v1499, %v1685
        %v1735 = vadd.f32 %v1500, %v1687
        %v1736 = vadd.f32 %v1501, %v1690
        %v1737 = vadd.f32 %v1502, %v1692
        %v1738 = vadd.f32 %v1503, %v1695
        %v1739 = vadd.f32 %v1504, %v1697
        %v1740 = vadd.f32 %v1505, %v1700
        %v1741 = vadd.f32 %v1506, %v1702
        %v1742 = vadd.f32 %v1507, %v1705
        %v1743 = vadd.f32 %v1508, %v1707
        %v1744 = vadd.f32 %v1509, %v1710
        %v1745 = vadd.f32 %v1510, %v1712
        %v1746 = vld [vmem:[%s1511 + $0x1] sm:$0xff]
        %v1747 = vld [vmem:[%s1511 + $0x9] sm:$0xff]
        %v1748 = vld [vmem:[%s1511 + $0x19] sm:$0xff]
        %v1749 = vld [vmem:[%s1511 + $0x21] sm:$0xff]
        %v1750 = vld [vmem:[%s1511 + $0x31] sm:$0xff]
        %v1751 = vld [vmem:[%s1511 + $0x39] sm:$0xff]
        %v1752 = vld [vmem:[%s1511 + $0x49] sm:$0xff]
        %v1753 = vld [vmem:[%s1511 + $0x51] sm:$0xff]
        %v1754 = vld [vmem:[%s1511 + $0x61] sm:$0xff]
        %v1755 = vld [vmem:[%s1511 + $0x69] sm:$0xff]
        %v1756 = vld [vmem:[%s1511 + $0x79] sm:$0xff]
        %v1757 = vld [vmem:[%s1511 + $0x81] sm:$0xff]
        %v1758 = vld [vmem:[%s1511 + $0x91] sm:$0xff]
        %v1759 = vld [vmem:[%s1511 + $0x99] sm:$0xff]
        %v1760 = vld [vmem:[%s1511 + $0xa9] sm:$0xff]
        %v1761 = vld [vmem:[%s1511 + $0xb1] sm:$0xff]
        %v1762 = vld [vmem:[%s1511 + $0xc1] sm:$0xff]
        %v1763 = vld [vmem:[%s1511 + $0xc9] sm:$0xff]
        %v1764 = vld [vmem:[%s1511 + $0xd9] sm:$0xff]
        %v1765 = vld [vmem:[%s1511 + $0xe1] sm:$0xff]
        %v1766 = vld [vmem:[%s1511 + $0xf1] sm:$0xff]
        %v1767 = vld [vmem:[%s1511 + $0xf9] sm:$0xff]
        %v1768 = vld [vmem:[%s1511 + $0x109] sm:$0xff]
        %v1769 = vld [vmem:[%s1511 + $0x111] sm:$0xff]
        %v1770 = vld [vmem:[%s1511 + $0x121] sm:$0xff]
        %v1771 = vld [vmem:[%s1511 + $0x129] sm:$0xff]
        %v1772 = vld [vmem:[%s1511 + $0x139] sm:$0xff]
        %v1773 = vld [vmem:[%s1511 + $0x141] sm:$0xff]
        %v1774 = vld [vmem:[%s1511 + $0x151] sm:$0xff]
        %v1775 = vld [vmem:[%s1511 + $0x159] sm:$0xff]
        %v1776 = vld [vmem:[%s1511 + $0x169] sm:$0xff]
        %v1777 = vld [vmem:[%s1511 + $0x171] sm:$0xff]
        %v1778 = vpack.c.bf16 %v1747, %v1746
        %v1779 = vpack.c.bf16 %v1749, %v1748
        %v1780 = vpack.c.bf16 %v1751, %v1750
        %v1781 = vpack.c.bf16 %v1753, %v1752
        %v1782 = vpack.c.bf16 %v1755, %v1754
        %v1783 = vpack.c.bf16 %v1757, %v1756
        %v1784 = vpack.c.bf16 %v1759, %v1758
        %v1785 = vpack.c.bf16 %v1761, %v1760
        %v1786 = vpack.c.bf16 %v1763, %v1762
        %v1787 = vpack.c.bf16 %v1765, %v1764
        %v1788 = vpack.c.bf16 %v1767, %v1766
        %v1789 = vpack.c.bf16 %v1769, %v1768
        %v1790 = vpack.c.bf16 %v1771, %v1770
        %v1791 = vpack.c.bf16 %v1773, %v1772
        %v1792 = vpack.c.bf16 %v1775, %v1774
        %v1793 = vpack.c.bf16 %v1777, %v1776
        %s1794 = scalar_lea.vmem %s1, 112
        %v1795 = vld [vmem:[%s1794] sm:$0xf]
        %v1796 = vld [vmem:[%s1794 + $0x4] sm:$0xf]
        %v1797 = vld [vmem:[%s1794 + $0x8] sm:$0xf]
        %v1798 = vld [vmem:[%s1794 + $0xc] sm:$0xf]
        %v1803 = vunpack.c.l.b16 %v1795
        %v1804 = vunpack.c.l.b16 %v1796
        %v1805 = vunpack.c.l.b16 %v1797
        %v1806 = vunpack.c.l.b16 %v1798
        %v1807 = vpack.c.b16 %v1804, %v1803
        %v1808 = vpack.c.b16 %v1806, %v1805
        %v1812 = vsel %vm287, %v1778, 0
        %v1815 = vsel %vm287, %v1779, 0
        %v1818 = vsel %vm287, %v1780, 0
        %v1821 = vsel %vm287, %v1781, 0
        %v1824 = vsel %vm287, %v1782, 0
        %v1827 = vsel %vm287, %v1783, 0
        %v1830 = vsel %vm287, %v1784, 0
        %v1833 = vsel %vm287, %v1785, 0
        %v1836 = vsel %vm287, %v1786, 0
        %v1839 = vsel %vm287, %v1787, 0
        %v1842 = vsel %vm287, %v1788, 0
        %v1845 = vsel %vm287, %v1789, 0
        %v1848 = vsel %vm287, %v1790, 0
        %v1851 = vsel %vm287, %v1791, 0
        %v1854 = vsel %vm287, %v1792, 0
        %v1857 = vsel %vm287, %v1793, 0
        %1859 = vmatpush.bf16.msra.mxu0 0
        %1860 = vmatpush.bf16.msra.mxu0 0
        %1861 = vmatpush.bf16.msra.mxu0 0
        %1862 = vmatpush.bf16.msra.mxu0 0
        %1863 = vmatpush.bf16.msra.mxu0 0
        %1864 = vmatpush.bf16.msra.mxu0 0
        %1865 = vmatpush.bf16.msra.mxu0 %v1808
        %1866 = vmatpush.bf16.msra.mxu0 %v1807
        %1867 = vmatmul.bf16.gmra.mxu0 %v1812
        %v1868 = vpop.f32.mrf.mxu0
        %v1869 = vadd.f32 0.0, %v1868
        %v1870 = vpop.f32.mrf.mxu0
        %v1871 = vadd.f32 0.0, %v1870
        %1872 = vmatmul.bf16.gmra.mxu0 %v1815
        %v1873 = vpop.f32.mrf.mxu0
        %v1874 = vadd.f32 0.0, %v1873
        %v1875 = vpop.f32.mrf.mxu0
        %v1876 = vadd.f32 0.0, %v1875
        %1877 = vmatmul.bf16.gmra.mxu0 %v1818
        %v1878 = vpop.f32.mrf.mxu0
        %v1879 = vadd.f32 0.0, %v1878
        %v1880 = vpop.f32.mrf.mxu0
        %v1881 = vadd.f32 0.0, %v1880
        %1882 = vmatmul.bf16.gmra.mxu0 %v1821
        %v1883 = vpop.f32.mrf.mxu0
        %v1884 = vadd.f32 0.0, %v1883
        %v1885 = vpop.f32.mrf.mxu0
        %v1886 = vadd.f32 0.0, %v1885
        %1887 = vmatmul.bf16.gmra.mxu0 %v1824
        %v1888 = vpop.f32.mrf.mxu0
        %v1889 = vadd.f32 0.0, %v1888
        %v1890 = vpop.f32.mrf.mxu0
        %v1891 = vadd.f32 0.0, %v1890
        %1892 = vmatmul.bf16.gmra.mxu0 %v1827
        %v1893 = vpop.f32.mrf.mxu0
        %v1894 = vadd.f32 0.0, %v1893
        %v1895 = vpop.f32.mrf.mxu0
        %v1896 = vadd.f32 0.0, %v1895
        %1897 = vmatmul.bf16.gmra.mxu0 %v1830
        %v1898 = vpop.f32.mrf.mxu0
        %v1899 = vadd.f32 0.0, %v1898
        %v1900 = vpop.f32.mrf.mxu0
        %v1901 = vadd.f32 0.0, %v1900
        %1902 = vmatmul.bf16.gmra.mxu0 %v1833
        %v1903 = vpop.f32.mrf.mxu0
        %v1904 = vadd.f32 0.0, %v1903
        %v1905 = vpop.f32.mrf.mxu0
        %v1906 = vadd.f32 0.0, %v1905
        %1907 = vmatmul.bf16.gmra.mxu0 %v1836
        %v1908 = vpop.f32.mrf.mxu0
        %v1909 = vadd.f32 0.0, %v1908
        %v1910 = vpop.f32.mrf.mxu0
        %v1911 = vadd.f32 0.0, %v1910
        %1912 = vmatmul.bf16.gmra.mxu0 %v1839
        %v1913 = vpop.f32.mrf.mxu0
        %v1914 = vadd.f32 0.0, %v1913
        %v1915 = vpop.f32.mrf.mxu0
        %v1916 = vadd.f32 0.0, %v1915
        %1917 = vmatmul.bf16.gmra.mxu0 %v1842
        %v1918 = vpop.f32.mrf.mxu0
        %v1919 = vadd.f32 0.0, %v1918
        %v1920 = vpop.f32.mrf.mxu0
        %v1921 = vadd.f32 0.0, %v1920
        %1922 = vmatmul.bf16.gmra.mxu0 %v1845
        %v1923 = vpop.f32.mrf.mxu0
        %v1924 = vadd.f32 0.0, %v1923
        %v1925 = vpop.f32.mrf.mxu0
        %v1926 = vadd.f32 0.0, %v1925
        %1927 = vmatmul.bf16.gmra.mxu0 %v1848
        %v1928 = vpop.f32.mrf.mxu0
        %v1929 = vadd.f32 0.0, %v1928
        %v1930 = vpop.f32.mrf.mxu0
        %v1931 = vadd.f32 0.0, %v1930
        %1932 = vmatmul.bf16.gmra.mxu0 %v1851
        %v1933 = vpop.f32.mrf.mxu0
        %v1934 = vadd.f32 0.0, %v1933
        %v1935 = vpop.f32.mrf.mxu0
        %v1936 = vadd.f32 0.0, %v1935
        %1937 = vmatmul.bf16.gmra.mxu0 %v1854
        %v1938 = vpop.f32.mrf.mxu0
        %v1939 = vadd.f32 0.0, %v1938
        %v1940 = vpop.f32.mrf.mxu0
        %v1941 = vadd.f32 0.0, %v1940
        %1942 = vmatmul.bf16.gmra.mxu0 %v1857
        %v1943 = vpop.f32.mrf.mxu0
        %v1944 = vadd.f32 0.0, %v1943
        %v1945 = vpop.f32.mrf.mxu0
        %v1946 = vadd.f32 0.0, %v1945
        %1947 = vdwg.mxu0
        %v1948 = vadd.f32 %v1714, %v1869
        %v1949 = vadd.f32 %v1715, %v1871
        %v1950 = vadd.f32 %v1716, %v1874
        %v1951 = vadd.f32 %v1717, %v1876
        %v1952 = vadd.f32 %v1718, %v1879
        %v1953 = vadd.f32 %v1719, %v1881
        %v1954 = vadd.f32 %v1720, %v1884
        %v1955 = vadd.f32 %v1721, %v1886
        %v1956 = vadd.f32 %v1722, %v1889
        %v1957 = vadd.f32 %v1723, %v1891
        %v1958 = vadd.f32 %v1724, %v1894
        %v1959 = vadd.f32 %v1725, %v1896
        %v1960 = vadd.f32 %v1726, %v1899
        %v1961 = vadd.f32 %v1727, %v1901
        %v1962 = vadd.f32 %v1728, %v1904
        %v1963 = vadd.f32 %v1729, %v1906
        %v1964 = vadd.f32 %v1730, %v1909
        %v1965 = vadd.f32 %v1731, %v1911
        %v1966 = vadd.f32 %v1732, %v1914
        %v1967 = vadd.f32 %v1733, %v1916
        %v1968 = vadd.f32 %v1734, %v1919
        %v1969 = vadd.f32 %v1735, %v1921
        %v1970 = vadd.f32 %v1736, %v1924
        %v1971 = vadd.f32 %v1737, %v1926
        %v1972 = vadd.f32 %v1738, %v1929
        %v1973 = vadd.f32 %v1739, %v1931
        %v1974 = vadd.f32 %v1740, %v1934
        %v1975 = vadd.f32 %v1741, %v1936
        %v1976 = vadd.f32 %v1742, %v1939
        %v1977 = vadd.f32 %v1743, %v1941
        %v1978 = vadd.f32 %v1744, %v1944
        %v1979 = vadd.f32 %v1745, %v1946
        %v1980 = vld [vmem:[%s1511 + $0x2] sm:$0xff]
        %v1981 = vld [vmem:[%s1511 + $0xa] sm:$0xff]
        %v1982 = vld [vmem:[%s1511 + $0x1a] sm:$0xff]
        %v1983 = vld [vmem:[%s1511 + $0x22] sm:$0xff]
        %v1984 = vld [vmem:[%s1511 + $0x32] sm:$0xff]
        %v1985 = vld [vmem:[%s1511 + $0x3a] sm:$0xff]
        %v1986 = vld [vmem:[%s1511 + $0x4a] sm:$0xff]
        %v1987 = vld [vmem:[%s1511 + $0x52] sm:$0xff]
        %v1988 = vld [vmem:[%s1511 + $0x62] sm:$0xff]
        %v1989 = vld [vmem:[%s1511 + $0x6a] sm:$0xff]
        %v1990 = vld [vmem:[%s1511 + $0x7a] sm:$0xff]
        %v1991 = vld [vmem:[%s1511 + $0x82] sm:$0xff]
        %v1992 = vld [vmem:[%s1511 + $0x92] sm:$0xff]
        %v1993 = vld [vmem:[%s1511 + $0x9a] sm:$0xff]
        %v1994 = vld [vmem:[%s1511 + $0xaa] sm:$0xff]
        %v1995 = vld [vmem:[%s1511 + $0xb2] sm:$0xff]
        %v1996 = vld [vmem:[%s1511 + $0xc2] sm:$0xff]
        %v1997 = vld [vmem:[%s1511 + $0xca] sm:$0xff]
        %v1998 = vld [vmem:[%s1511 + $0xda] sm:$0xff]
        %v1999 = vld [vmem:[%s1511 + $0xe2] sm:$0xff]
        %v2000 = vld [vmem:[%s1511 + $0xf2] sm:$0xff]
        %v2001 = vld [vmem:[%s1511 + $0xfa] sm:$0xff]
        %v2002 = vld [vmem:[%s1511 + $0x10a] sm:$0xff]
        %v2003 = vld [vmem:[%s1511 + $0x112] sm:$0xff]
        %v2004 = vld [vmem:[%s1511 + $0x122] sm:$0xff]
        %v2005 = vld [vmem:[%s1511 + $0x12a] sm:$0xff]
        %v2006 = vld [vmem:[%s1511 + $0x13a] sm:$0xff]
        %v2007 = vld [vmem:[%s1511 + $0x142] sm:$0xff]
        %v2008 = vld [vmem:[%s1511 + $0x152] sm:$0xff]
        %v2009 = vld [vmem:[%s1511 + $0x15a] sm:$0xff]
        %v2010 = vld [vmem:[%s1511 + $0x16a] sm:$0xff]
        %v2011 = vld [vmem:[%s1511 + $0x172] sm:$0xff]
        %v2012 = vpack.c.bf16 %v1981, %v1980
        %v2013 = vpack.c.bf16 %v1983, %v1982
        %v2014 = vpack.c.bf16 %v1985, %v1984
        %v2015 = vpack.c.bf16 %v1987, %v1986
        %v2016 = vpack.c.bf16 %v1989, %v1988
        %v2017 = vpack.c.bf16 %v1991, %v1990
        %v2018 = vpack.c.bf16 %v1993, %v1992
        %v2019 = vpack.c.bf16 %v1995, %v1994
        %v2020 = vpack.c.bf16 %v1997, %v1996
        %v2021 = vpack.c.bf16 %v1999, %v1998
        %v2022 = vpack.c.bf16 %v2001, %v2000
        %v2023 = vpack.c.bf16 %v2003, %v2002
        %v2024 = vpack.c.bf16 %v2005, %v2004
        %v2025 = vpack.c.bf16 %v2007, %v2006
        %v2026 = vpack.c.bf16 %v2009, %v2008
        %v2027 = vpack.c.bf16 %v2011, %v2010
        %s2028 = scalar_lea.vmem %s1, 128
        %v2029 = vld [vmem:[%s2028] sm:$0xf]
        %v2030 = vld [vmem:[%s2028 + $0x4] sm:$0xf]
        %v2031 = vld [vmem:[%s2028 + $0x8] sm:$0xf]
        %v2032 = vld [vmem:[%s2028 + $0xc] sm:$0xf]
        %v2037 = vunpack.c.l.b16 %v2029
        %v2038 = vunpack.c.l.b16 %v2030
        %v2039 = vunpack.c.l.b16 %v2031
        %v2040 = vunpack.c.l.b16 %v2032
        %v2041 = vpack.c.b16 %v2038, %v2037
        %v2042 = vpack.c.b16 %v2040, %v2039
        %v2046 = vsel %vm287, %v2012, 0
        %v2049 = vsel %vm287, %v2013, 0
        %v2052 = vsel %vm287, %v2014, 0
        %v2055 = vsel %vm287, %v2015, 0
        %v2058 = vsel %vm287, %v2016, 0
        %v2061 = vsel %vm287, %v2017, 0
        %v2064 = vsel %vm287, %v2018, 0
        %v2067 = vsel %vm287, %v2019, 0
        %v2070 = vsel %vm287, %v2020, 0
        %v2073 = vsel %vm287, %v2021, 0
        %v2076 = vsel %vm287, %v2022, 0
        %v2079 = vsel %vm287, %v2023, 0
        %v2082 = vsel %vm287, %v2024, 0
        %v2085 = vsel %vm287, %v2025, 0
        %v2088 = vsel %vm287, %v2026, 0
        %v2091 = vsel %vm287, %v2027, 0
        %2093 = vmatpush.bf16.msra.mxu0 0
        %2094 = vmatpush.bf16.msra.mxu0 0
        %2095 = vmatpush.bf16.msra.mxu0 0
        %2096 = vmatpush.bf16.msra.mxu0 0
        %2097 = vmatpush.bf16.msra.mxu0 0
        %2098 = vmatpush.bf16.msra.mxu0 0
        %2099 = vmatpush.bf16.msra.mxu0 %v2042
        %2100 = vmatpush.bf16.msra.mxu0 %v2041
        %2101 = vmatmul.bf16.gmra.mxu0 %v2046
        %v2102 = vpop.f32.mrf.mxu0
        %v2103 = vadd.f32 0.0, %v2102
        %v2104 = vpop.f32.mrf.mxu0
        %v2105 = vadd.f32 0.0, %v2104
        %2106 = vmatmul.bf16.gmra.mxu0 %v2049
        %v2107 = vpop.f32.mrf.mxu0
        %v2108 = vadd.f32 0.0, %v2107
        %v2109 = vpop.f32.mrf.mxu0
        %v2110 = vadd.f32 0.0, %v2109
        %2111 = vmatmul.bf16.gmra.mxu0 %v2052
        %v2112 = vpop.f32.mrf.mxu0
        %v2113 = vadd.f32 0.0, %v2112
        %v2114 = vpop.f32.mrf.mxu0
        %v2115 = vadd.f32 0.0, %v2114
        %2116 = vmatmul.bf16.gmra.mxu0 %v2055
        %v2117 = vpop.f32.mrf.mxu0
        %v2118 = vadd.f32 0.0, %v2117
        %v2119 = vpop.f32.mrf.mxu0
        %v2120 = vadd.f32 0.0, %v2119
        %2121 = vmatmul.bf16.gmra.mxu0 %v2058
        %v2122 = vpop.f32.mrf.mxu0
        %v2123 = vadd.f32 0.0, %v2122
        %v2124 = vpop.f32.mrf.mxu0
        %v2125 = vadd.f32 0.0, %v2124
        %2126 = vmatmul.bf16.gmra.mxu0 %v2061
        %v2127 = vpop.f32.mrf.mxu0
        %v2128 = vadd.f32 0.0, %v2127
        %v2129 = vpop.f32.mrf.mxu0
        %v2130 = vadd.f32 0.0, %v2129
        %2131 = vmatmul.bf16.gmra.mxu0 %v2064
        %v2132 = vpop.f32.mrf.mxu0
        %v2133 = vadd.f32 0.0, %v2132
        %v2134 = vpop.f32.mrf.mxu0
        %v2135 = vadd.f32 0.0, %v2134
        %2136 = vmatmul.bf16.gmra.mxu0 %v2067
        %v2137 = vpop.f32.mrf.mxu0
        %v2138 = vadd.f32 0.0, %v2137
        %v2139 = vpop.f32.mrf.mxu0
        %v2140 = vadd.f32 0.0, %v2139
        %2141 = vmatmul.bf16.gmra.mxu0 %v2070
        %v2142 = vpop.f32.mrf.mxu0
        %v2143 = vadd.f32 0.0, %v2142
        %v2144 = vpop.f32.mrf.mxu0
        %v2145 = vadd.f32 0.0, %v2144
        %2146 = vmatmul.bf16.gmra.mxu0 %v2073
        %v2147 = vpop.f32.mrf.mxu0
        %v2148 = vadd.f32 0.0, %v2147
        %v2149 = vpop.f32.mrf.mxu0
        %v2150 = vadd.f32 0.0, %v2149
        %2151 = vmatmul.bf16.gmra.mxu0 %v2076
        %v2152 = vpop.f32.mrf.mxu0
        %v2153 = vadd.f32 0.0, %v2152
        %v2154 = vpop.f32.mrf.mxu0
        %v2155 = vadd.f32 0.0, %v2154
        %2156 = vmatmul.bf16.gmra.mxu0 %v2079
        %v2157 = vpop.f32.mrf.mxu0
        %v2158 = vadd.f32 0.0, %v2157
        %v2159 = vpop.f32.mrf.mxu0
        %v2160 = vadd.f32 0.0, %v2159
        %2161 = vmatmul.bf16.gmra.mxu0 %v2082
        %v2162 = vpop.f32.mrf.mxu0
        %v2163 = vadd.f32 0.0, %v2162
        %v2164 = vpop.f32.mrf.mxu0
        %v2165 = vadd.f32 0.0, %v2164
        %2166 = vmatmul.bf16.gmra.mxu0 %v2085
        %v2167 = vpop.f32.mrf.mxu0
        %v2168 = vadd.f32 0.0, %v2167
        %v2169 = vpop.f32.mrf.mxu0
        %v2170 = vadd.f32 0.0, %v2169
        %2171 = vmatmul.bf16.gmra.mxu0 %v2088
        %v2172 = vpop.f32.mrf.mxu0
        %v2173 = vadd.f32 0.0, %v2172
        %v2174 = vpop.f32.mrf.mxu0
        %v2175 = vadd.f32 0.0, %v2174
        %2176 = vmatmul.bf16.gmra.mxu0 %v2091
        %v2177 = vpop.f32.mrf.mxu0
        %v2178 = vadd.f32 0.0, %v2177
        %v2179 = vpop.f32.mrf.mxu0
        %v2180 = vadd.f32 0.0, %v2179
        %2181 = vdwg.mxu0
        %v2182 = vadd.f32 %v1948, %v2103
        %v2183 = vadd.f32 %v1949, %v2105
        %v2184 = vadd.f32 %v1950, %v2108
        %v2185 = vadd.f32 %v1951, %v2110
        %v2186 = vadd.f32 %v1952, %v2113
        %v2187 = vadd.f32 %v1953, %v2115
        %v2188 = vadd.f32 %v1954, %v2118
        %v2189 = vadd.f32 %v1955, %v2120
        %v2190 = vadd.f32 %v1956, %v2123
        %v2191 = vadd.f32 %v1957, %v2125
        %v2192 = vadd.f32 %v1958, %v2128
        %v2193 = vadd.f32 %v1959, %v2130
        %v2194 = vadd.f32 %v1960, %v2133
        %v2195 = vadd.f32 %v1961, %v2135
        %v2196 = vadd.f32 %v1962, %v2138
        %v2197 = vadd.f32 %v1963, %v2140
        %v2198 = vadd.f32 %v1964, %v2143
        %v2199 = vadd.f32 %v1965, %v2145
        %v2200 = vadd.f32 %v1966, %v2148
        %v2201 = vadd.f32 %v1967, %v2150
        %v2202 = vadd.f32 %v1968, %v2153
        %v2203 = vadd.f32 %v1969, %v2155
        %v2204 = vadd.f32 %v1970, %v2158
        %v2205 = vadd.f32 %v1971, %v2160
        %v2206 = vadd.f32 %v1972, %v2163
        %v2207 = vadd.f32 %v1973, %v2165
        %v2208 = vadd.f32 %v1974, %v2168
        %v2209 = vadd.f32 %v1975, %v2170
        %v2210 = vadd.f32 %v1976, %v2173
        %v2211 = vadd.f32 %v1977, %v2175
        %v2212 = vadd.f32 %v1978, %v2178
        %v2213 = vadd.f32 %v1979, %v2180
        %v2214 = vld [vmem:[%s2] sm:$0x1]
        %v2216 = vperm.slane %v2214, 0
        %v2218 = vadd.f32 %v2182, %v2216
        %v2219 = vadd.f32 %v2183, %v2216
        %v2220 = vadd.f32 %v2184, %v2216
        %v2221 = vadd.f32 %v2185, %v2216
        %v2222 = vadd.f32 %v2186, %v2216
        %v2223 = vadd.f32 %v2187, %v2216
        %v2224 = vadd.f32 %v2188, %v2216
        %v2225 = vadd.f32 %v2189, %v2216
        %v2226 = vadd.f32 %v2190, %v2216
        %v2227 = vadd.f32 %v2191, %v2216
        %v2228 = vadd.f32 %v2192, %v2216
        %v2229 = vadd.f32 %v2193, %v2216
        %v2230 = vadd.f32 %v2194, %v2216
        %v2231 = vadd.f32 %v2195, %v2216
        %v2232 = vadd.f32 %v2196, %v2216
        %v2233 = vadd.f32 %v2197, %v2216
        %v2234 = vadd.f32 %v2198, %v2216
        %v2235 = vadd.f32 %v2199, %v2216
        %v2236 = vadd.f32 %v2200, %v2216
        %v2237 = vadd.f32 %v2201, %v2216
        %v2238 = vadd.f32 %v2202, %v2216
        %v2239 = vadd.f32 %v2203, %v2216
        %v2240 = vadd.f32 %v2204, %v2216
        %v2241 = vadd.f32 %v2205, %v2216
        %v2242 = vadd.f32 %v2206, %v2216
        %v2243 = vadd.f32 %v2207, %v2216
        %v2244 = vadd.f32 %v2208, %v2216
        %v2245 = vadd.f32 %v2209, %v2216
        %v2246 = vadd.f32 %v2210, %v2216
        %v2247 = vadd.f32 %v2211, %v2216
        %v2248 = vadd.f32 %v2212, %v2216
        %v2249 = vadd.f32 %v2213, %v2216
        %2250 = vst.msk [vmem:[%s163] sm:$0xff] %vm287, %v2218
        %2251 = vst.msk [vmem:[%s163 + $0x8] sm:$0xff] %vm287, %v2219
        %2252 = vst.msk [vmem:[%s163 + $0x10] sm:$0xff] %vm287, %v2220
        %2253 = vst.msk [vmem:[%s163 + $0x18] sm:$0xff] %vm287, %v2221
        %2254 = vst.msk [vmem:[%s163 + $0x20] sm:$0xff] %vm287, %v2222
        %2255 = vst.msk [vmem:[%s163 + $0x28] sm:$0xff] %vm287, %v2223
        %2256 = vst.msk [vmem:[%s163 + $0x30] sm:$0xff] %vm287, %v2224
        %2257 = vst.msk [vmem:[%s163 + $0x38] sm:$0xff] %vm287, %v2225
        %2258 = vst.msk [vmem:[%s163 + $0x40] sm:$0xff] %vm287, %v2226
        %2259 = vst.msk [vmem:[%s163 + $0x48] sm:$0xff] %vm287, %v2227
        %2260 = vst.msk [vmem:[%s163 + $0x50] sm:$0xff] %vm287, %v2228
        %2261 = vst.msk [vmem:[%s163 + $0x58] sm:$0xff] %vm287, %v2229
        %2262 = vst.msk [vmem:[%s163 + $0x60] sm:$0xff] %vm287, %v2230
        %2263 = vst.msk [vmem:[%s163 + $0x68] sm:$0xff] %vm287, %v2231
        %2264 = vst.msk [vmem:[%s163 + $0x70] sm:$0xff] %vm287, %v2232
        %2265 = vst.msk [vmem:[%s163 + $0x78] sm:$0xff] %vm287, %v2233
        %2266 = vst.msk [vmem:[%s163 + $0x80] sm:$0xff] %vm287, %v2234
        %2267 = vst.msk [vmem:[%s163 + $0x88] sm:$0xff] %vm287, %v2235
        %2268 = vst.msk [vmem:[%s163 + $0x90] sm:$0xff] %vm287, %v2236
        %2269 = vst.msk [vmem:[%s163 + $0x98] sm:$0xff] %vm287, %v2237
        %2270 = vst.msk [vmem:[%s163 + $0xa0] sm:$0xff] %vm287, %v2238
        %2271 = vst.msk [vmem:[%s163 + $0xa8] sm:$0xff] %vm287, %v2239
        %2272 = vst.msk [vmem:[%s163 + $0xb0] sm:$0xff] %vm287, %v2240
        %2273 = vst.msk [vmem:[%s163 + $0xb8] sm:$0xff] %vm287, %v2241
        %2274 = vst.msk [vmem:[%s163 + $0xc0] sm:$0xff] %vm287, %v2242
        %2275 = vst.msk [vmem:[%s163 + $0xc8] sm:$0xff] %vm287, %v2243
        %2276 = vst.msk [vmem:[%s163 + $0xd0] sm:$0xff] %vm287, %v2244
        %2277 = vst.msk [vmem:[%s163 + $0xd8] sm:$0xff] %vm287, %v2245
        %2278 = vst.msk [vmem:[%s163 + $0xe0] sm:$0xff] %vm287, %v2246
        %2279 = vst.msk [vmem:[%s163 + $0xe8] sm:$0xff] %vm287, %v2247
        %2280 = vst.msk [vmem:[%s163 + $0xf0] sm:$0xff] %vm287, %v2248
        %2281 = vst.msk [vmem:[%s163 + $0xf8] sm:$0xff] %vm287, %v2249
        %s2282 = sand.u32 %s93, 1
        %s2283 = scalar_lea.sflag [#allocation3], %s2282
        %s2284 = sand.u32 %s93, 1
        %s2285 = smul.addr %s2284, 256
        %s2286 = scalar_lea.vmem [#allocation2], %s2285
        // Predicated region
        $region33: #{esf_forward.9} parent=31 // pred_check
          %p2287 = pneg %p103
        $region34: #{esf_forward.9} parent=31 // pred_check_branch
          %2289 = sbr.rel (%p2287) target = $region36
        $region35: #{esf_forward.9} parent=31 // pred_region
          %2291 = vsyncadd %s2283, 0
          %s2292 = smul.addr %s17, 32
          %s2293 = smul.addr %s2292, 8
          %s2294 = scalar_lea.hbm %s3, %s2293
          %s2295 = sshll.u32 %s2286, 4
          %s2296 = int_to_ptr.vmem [resolvable:$true] %s2295
          %s2297 = sshll.u32 %s2294, 4
          %s2298 = int_to_ptr.hbm [resolvable:$true] %s2297
          %2303 = dma.vmem_to_hbm [thread:$0]  %s2296, 4096, %s2298, %s2283, 128, 128, 8
        $region36: #{esf_forward.9} parent=31 // pred_fallthru
          _
      $region32: #{esf_forward.9} parent=5 // pred_fallthru
        _
      %p2304 = scmp.le.s32.totalorder 2, %s12
      // Predicated region
      $region37: #{esf_forward.9} parent=5 // pred_check
        %p2305 = pneg %p2304
      $region38: #{esf_forward.9} parent=5 // pred_check_branch
        %2307 = sbr.rel (%p2305) target = $region40
      $region39: #{esf_forward.9} parent=5 // pred_region
        %s2308 = ssub.s32 %s12, 2
        // Predicated region
        $region41: #{esf_forward.9} parent=39 // pred_check
          %p2309 = pneg %p109
        $region42: #{esf_forward.9} parent=39 // pred_check_branch
          %2311 = sbr.rel (%p2309) target = $region44
        $region43: #{esf_forward.9} parent=39 // pred_region
          %s2312 = sand.u32 %s94, 1
          %s2313 = scalar_lea.sflag [#allocation3], %s2312
          %s2314 = sand.u32 %s94, 1
          %s2315 = smul.addr %s2314, 256
          %s2316 = scalar_lea.vmem [#allocation2], %s2315
          %2318 = dma.done %s2313, 4096
        $region44: #{esf_forward.9} parent=39 // pred_fallthru
          _
      $region40: #{esf_forward.9} parent=5 // pred_fallthru
        _
    $region6: #{esf_forward.9} parent=1 // loop_footer
      %s16 = sadd.s32 1, %s12
    $region7: #{esf_forward.9} parent=1 // loop_footer_branch
      %11 = sbr.rel target = $region3
    $region8: #{esf_forward.9} parent=1 // loop_exit
      _
    %2319 = vsyncpa [#allocation3], 1
    %s2320 = scalar_lea.sflag [#allocation3], 1
    %2321 = vsyncpa %s2320, 1

</llo_original>
